<compile_context>
chip_gen: v7x
topology: tpu7x:2x2x1
jax: 0.10.0
libtpu: 0.0.40
codegen_flags: <defaults>
</compile_context>

<pallas_src>
import functools

import jax
import jax.numpy as jnp
from jax.experimental import pallas as pl
from jax.experimental.pallas import tpu as pltpu

# Module dimensions (from ComplexVarEncoder.__init__).
D_IN = 220500
H1 = 250
H1P = 256                                   # lane-dense padding of H1
H2 = 100
Z = 50

TK = 12288                                  # K-tile for the big first matmul
K_PAD = ((D_IN + TK - 1) // TK) * TK        # 221184 (18 grid steps)


def _encoder_kernel(x_ref, w1t_ref, b1_ref, w2t_ref, b2_ref,
                    wmut_ref, bmu_ref, wlst_ref, bls_ref,
                    mu_ref, ls_ref, acc_ref):
    k = pl.program_id(0)

    @pl.when(k == 0)
    def _():
        acc_ref[...] = jnp.zeros_like(acc_ref)

    # Layer 1 partial product over this K tile.  W1 is streamed as bf16; cast
    # the (tiny) x tile to bf16 so the MXU runs bf16 x bf16 -> f32 accumulate.
    acc_ref[...] += jnp.dot(x_ref[...].astype(jnp.bfloat16), w1t_ref[...],
                            preferred_element_type=jnp.float32)

    @pl.when(k == pl.num_programs(0) - 1)
    def _():
        # ReLU(Linear1); columns 250..255 of acc/b1 are zero by construction.
        h1 = jnp.maximum(acc_ref[...] + b1_ref[...], 0.0)           # (B, 256)
        # ReLU(Linear2); W2^T rows 250..255 are zero-padded, no slicing needed.
        h2 = jnp.dot(h1, w2t_ref[...], preferred_element_type=jnp.float32)
        h2 = jnp.maximum(h2 + b2_ref[...], 0.0)                     # (B, 100)
        # mu head
        mu = jnp.dot(h2, wmut_ref[...], preferred_element_type=jnp.float32)
        mu_ref[...] = mu + bmu_ref[...]
        # logstd head, clamped to [-20, 2]
        ls = jnp.dot(h2, wlst_ref[...], preferred_element_type=jnp.float32)
        ls_ref[...] = jnp.clip(ls + bls_ref[...], -20.0, 2.0)


def prepare_encoder_params(w1t, b1, w2t, b2, wmut, bmu, wlst, bls):
    """One-time parameter prep (call once, OUTSIDE the per-call forward):

      * W1^T: zero-pad K 220500 -> 221184 and N 250 -> 256, cast to bf16
        (the streamed operand — halves HBM traffic; accumulation stays f32).
      * b1:   zero-pad 250 -> 256.
      * W2^T: zero-pad rows 250 -> 256 so the padded h1 columns contribute 0.
    """
    w1t_p = jnp.zeros((K_PAD, H1P), jnp.bfloat16)
    w1t_p = w1t_p.at[:D_IN, :H1].set(w1t.astype(jnp.bfloat16))
    b1_p = jnp.zeros((1, H1P), jnp.float32).at[:, :H1].set(b1)
    w2t_p = jnp.zeros((H1P, H2), jnp.float32).at[:H1, :].set(w2t)
    return (w1t_p, b1_p, w2t_p, b2, wmut, bmu, wlst, bls)


@jax.jit
def complex_var_encoder(x, w1t_p, b1_p, w2t_p, b2, wmut, bmu, wlst, bls):
    """x: (B, 220500) f32, params from prepare_encoder_params.

    Returns (mu, logstd), each (B, 50) f32.
    """
    B = x.shape[0]

    # Zero-pad the reduction axis of x so it tiles by TK (padding x is cheap,
    # ~1.7 MB; the big W1 pad happens once in prepare_encoder_params).
    x_p = jnp.pad(x, ((0, 0), (0, K_PAD - D_IN)))

    n_k = K_PAD // TK
    const = lambda k: (0, 0)  # small operands: single full-array block

    mu, logstd = pl.pallas_call(
        _encoder_kernel,
        out_shape=(jax.ShapeDtypeStruct((B, Z), jnp.float32),
                   jax.ShapeDtypeStruct((B, Z), jnp.float32)),
        grid_spec=pltpu.PrefetchScalarGridSpec(
            num_scalar_prefetch=0,
            grid=(n_k,),
            in_specs=[
                pl.BlockSpec((B, TK), lambda k: (0, k)),     # x tile (f32)
                pl.BlockSpec((TK, H1P), lambda k: (k, 0)),   # W1^T tile (bf16)
                pl.BlockSpec((1, H1P), const),               # b1 (padded)
                pl.BlockSpec((H1P, H2), const),              # W2^T (padded)
                pl.BlockSpec((1, H2), const),                # b2
                pl.BlockSpec((H2, Z), const),                # Wmu^T
                pl.BlockSpec((1, Z), const),                 # bmu
                pl.BlockSpec((H2, Z), const),                # Wlogstd^T
                pl.BlockSpec((1, Z), const),                 # blogstd
            ],
            out_specs=[
                pl.BlockSpec((B, Z), const),                 # mu
                pl.BlockSpec((B, Z), const),                 # logstd
            ],
            scratch_shapes=[pltpu.VMEM((B, H1P), jnp.float32)],
        ),
        compiler_params=pltpu.CompilerParams(
            dimension_semantics=("arbitrary",),
            # ~13 MB double-buffered W1 + x tiles + residents; raise the scoped
            # limit well above that (v5e default is 16 MiB) but stay far under
            # v7x's 64 MiB physical VMEM.
            vmem_limit_bytes=40 * 1024 * 1024,
        ),
    )(x_p, w1t_p, b1_p, w2t_p, b2, wmut, bmu, wlst, bls)
    return mu, logstd


def _init_linear(key, fan_in, fan_out):
    """Deterministic PyTorch-style init; weight returned as (fan_in, fan_out)."""
    kw, kb = jax.random.split(key)
    bound = 1.0 / jnp.sqrt(jnp.float32(fan_in))
    w_t = jax.random.uniform(kw, (fan_in, fan_out), jnp.float32, -bound, bound)
    b = jax.random.uniform(kb, (1, fan_out), jnp.float32, -bound, bound)
    return w_t, b


def _reference(x, w1t, b1, w2t, b2, wmut, bmu, wlst, bls):
    h1 = jnp.maximum(x @ w1t + b1, 0.0)
    h2 = jnp.maximum(h1 @ w2t + b2, 0.0)
    mu = h2 @ wmut + bmu
    ls = jnp.clip(h2 @ wlst + bls, -20.0, 2.0)
    return mu, ls


if __name__ == "__main__":
    key = jax.random.PRNGKey(0)
    k_x, k1, k2, k3, k4 = jax.random.split(key, 5)

    B = 2  # small batch; feature dims are fixed by the module definition
    x = jax.random.normal(k_x, (B, D_IN), jnp.float32)

    w1t, b1 = _init_linear(k1, D_IN, H1)
    w2t, b2 = _init_linear(k2, H1, H2)
    wmut, bmu = _init_linear(k3, H2, Z)
    wlst, bls = _init_linear(k4, H2, Z)

    # One-time weight prep (pad + bf16 cast) — NOT part of the per-call path.
    params = jax.block_until_ready(
        prepare_encoder_params(w1t, b1, w2t, b2, wmut, bmu, wlst, bls))

    mu, logstd = complex_var_encoder(x, *params)
    jax.block_until_ready((mu, logstd))

    mu_ref, ls_ref = _reference(x, w1t, b1, w2t, b2, wmut, bmu, wlst, bls)
    assert mu.shape == (B, Z) and logstd.shape == (B, Z)
    # Tolerance accounts for streaming W1 (and the x tile) in bf16 while
    # accumulating in f32; the f32 reference is otherwise matched exactly.
    assert jnp.allclose(mu, mu_ref, rtol=5e-3, atol=5e-3)
    assert jnp.allclose(logstd, ls_ref, rtol=5e-3, atol=5e-3)

    print("KERNEL_OK")
</pallas_src>

<mosaic_0001>
module attributes {stable_mosaic.version = 11 : i64} {
  func.func @_encoder_kernel(%arg0: i32, %arg1: memref<2x12288xf32, #tpu.memory_space<vmem>>, %arg2: memref<12288x256xbf16, #tpu.memory_space<vmem>>, %arg3: memref<1x256xf32, #tpu.memory_space<vmem>>, %arg4: memref<256x100xf32, #tpu.memory_space<vmem>>, %arg5: memref<1x100xf32, #tpu.memory_space<vmem>>, %arg6: memref<100x50xf32, #tpu.memory_space<vmem>>, %arg7: memref<1x50xf32, #tpu.memory_space<vmem>>, %arg8: memref<100x50xf32, #tpu.memory_space<vmem>>, %arg9: memref<1x50xf32, #tpu.memory_space<vmem>>, %arg10: memref<2x50xf32, #tpu.memory_space<vmem>>, %arg11: memref<2x50xf32, #tpu.memory_space<vmem>>, %arg12: memref<2x256xf32, #tpu.memory_space<vmem>>) attributes {dimension_semantics = [#tpu.dimension_semantics<arbitrary>], iteration_bounds = array<i64: 18>, scalar_prefetch = 0 : i64, scratch_operands = 1 : i64, tpu.core_type = #tpu.core_type<tc>, window_params = [{transform_indices = @transform_0, window_bounds = array<i64: 2, 12288>}, {transform_indices = @transform_1, window_bounds = array<i64: 12288, 256>}, {pipeline_mode = #tpu.pipeline_mode<synchronous>, transform_indices = @transform_2, window_bounds = array<i64: 1, 256>}, {pipeline_mode = #tpu.pipeline_mode<synchronous>, transform_indices = @transform_3, window_bounds = array<i64: 256, 100>}, {pipeline_mode = #tpu.pipeline_mode<synchronous>, transform_indices = @transform_4, window_bounds = array<i64: 1, 100>}, {pipeline_mode = #tpu.pipeline_mode<synchronous>, transform_indices = @transform_5, window_bounds = array<i64: 100, 50>}, {pipeline_mode = #tpu.pipeline_mode<synchronous>, transform_indices = @transform_6, window_bounds = array<i64: 1, 50>}, {pipeline_mode = #tpu.pipeline_mode<synchronous>, transform_indices = @transform_7, window_bounds = array<i64: 100, 50>}, {pipeline_mode = #tpu.pipeline_mode<synchronous>, transform_indices = @transform_8, window_bounds = array<i64: 1, 50>}, {pipeline_mode = #tpu.pipeline_mode<synchronous>, transform_indices = @transform_9, window_bounds = array<i64: 2, 50>}, {pipeline_mode = #tpu.pipeline_mode<synchronous>, transform_indices = @transform_10, window_bounds = array<i64: 2, 50>}]} {
    %c0_i32 = arith.constant 0 : i32
    %0 = arith.cmpi eq, %arg0, %c0_i32 : i32
    %1 = arith.extui %0 : i1 to i32
    %c0_i32_0 = arith.constant 0 : i32
    %2 = arith.cmpi ne, %1, %c0_i32_0 : i32
    scf.if %2 {
      %cst_9 = arith.constant 0.000000e+00 : f32
      %13 = vector.broadcast %cst_9 : f32 to vector<2x256xf32>
      %c0_10 = arith.constant 0 : index
      %c0_11 = arith.constant 0 : index
      %14 = vector.load %arg12[%c0_10, %c0_11] : memref<2x256xf32, #tpu.memory_space<vmem>>, vector<2x256xf32>
      tpu.vector_store %arg12[%c0_10, %c0_11], %13 {strides = array<i32>} : memref<2x256xf32, #tpu.memory_space<vmem>>, vector<2x256xf32>,
    } else {
    }
    %c0 = arith.constant 0 : index
    %c0_1 = arith.constant 0 : index
    %3 = vector.load %arg12[%c0, %c0_1] : memref<2x256xf32, #tpu.memory_space<vmem>>, vector<2x256xf32>
    %c0_2 = arith.constant 0 : index
    %c0_3 = arith.constant 0 : index
    %4 = vector.load %arg1[%c0_2, %c0_3] : memref<2x12288xf32, #tpu.memory_space<vmem>>, vector<2x12288xf32>
    %5 = arith.truncf %4 : vector<2x12288xf32> to vector<2x12288xbf16>
    %c0_4 = arith.constant 0 : index
    %c0_5 = arith.constant 0 : index
    %6 = vector.load %arg2[%c0_4, %c0_5] : memref<12288x256xbf16, #tpu.memory_space<vmem>>, vector<12288x256xbf16>
    %cst = arith.constant dense<0.000000e+00> : vector<2x256xf32>
    %7 = tpu.matmul %5, %6, %cst {dimension_numbers = #tpu.dot_dimension_numbers<[1], [0], [0], [1], [0, 0, 1, 1], [], []>} : vector<2x12288xbf16>, vector<12288x256xbf16>, vector<2x256xf32> -> vector<2x256xf32>
    %8 = arith.addf %3, %7 : vector<2x256xf32>
    %c0_6 = arith.constant 0 : index
    %c0_7 = arith.constant 0 : index
    %9 = vector.load %arg12[%c0_6, %c0_7] : memref<2x256xf32, #tpu.memory_space<vmem>>, vector<2x256xf32>
    tpu.vector_store %arg12[%c0_6, %c0_7], %8 {strides = array<i32>} : memref<2x256xf32, #tpu.memory_space<vmem>>, vector<2x256xf32>,
    %c17_i32 = arith.constant 17 : i32
    %10 = arith.cmpi eq, %arg0, %c17_i32 : i32
    %11 = arith.extui %10 : i1 to i32
    %c0_i32_8 = arith.constant 0 : i32
    %12 = arith.cmpi ne, %11, %c0_i32_8 : i32
    scf.if %12 {
      %c0_9 = arith.constant 0 : index
      %c0_10 = arith.constant 0 : index
      %13 = vector.load %arg12[%c0_9, %c0_10] : memref<2x256xf32, #tpu.memory_space<vmem>>, vector<2x256xf32>
      %c0_11 = arith.constant 0 : index
      %c0_12 = arith.constant 0 : index
      %14 = vector.load %arg3[%c0_11, %c0_12] : memref<1x256xf32, #tpu.memory_space<vmem>>, vector<1x256xf32>
      %15 = vector.broadcast %14 : vector<1x256xf32> to vector<2x256xf32>
      %16 = arith.addf %13, %15 : vector<2x256xf32>
      %cst_13 = arith.constant 0.000000e+00 : f32
      %17 = vector.broadcast %cst_13 : f32 to vector<2x256xf32>
      %18 = arith.maximumf %16, %17 : vector<2x256xf32>
      %c0_14 = arith.constant 0 : index
      %c0_15 = arith.constant 0 : index
      %19 = vector.load %arg4[%c0_14, %c0_15] : memref<256x100xf32, #tpu.memory_space<vmem>>, vector<256x100xf32>
      %cst_16 = arith.constant dense<0.000000e+00> : vector<2x100xf32>
      %20 = tpu.matmul %18, %19, %cst_16 {dimension_numbers = #tpu.dot_dimension_numbers<[1], [0], [0], [1], [0, 0, 1, 1], [], []>} : vector<2x256xf32>, vector<256x100xf32>, vector<2x100xf32> -> vector<2x100xf32>
      %c0_17 = arith.constant 0 : index
      %c0_18 = arith.constant 0 : index
      %21 = vector.load %arg5[%c0_17, %c0_18] : memref<1x100xf32, #tpu.memory_space<vmem>>, vector<1x100xf32>
      %22 = vector.broadcast %21 : vector<1x100xf32> to vector<2x100xf32>
      %23 = arith.addf %20, %22 : vector<2x100xf32>
      %cst_19 = arith.constant 0.000000e+00 : f32
      %24 = vector.broadcast %cst_19 : f32 to vector<2x100xf32>
      %25 = arith.maximumf %23, %24 : vector<2x100xf32>
      %c0_20 = arith.constant 0 : index
      %c0_21 = arith.constant 0 : index
      %26 = vector.load %arg6[%c0_20, %c0_21] : memref<100x50xf32, #tpu.memory_space<vmem>>, vector<100x50xf32>
      %cst_22 = arith.constant dense<0.000000e+00> : vector<2x50xf32>
      %27 = tpu.matmul %25, %26, %cst_22 {dimension_numbers = #tpu.dot_dimension_numbers<[1], [0], [0], [1], [0, 0, 1, 1], [], []>} : vector<2x100xf32>, vector<100x50xf32>, vector<2x50xf32> -> vector<2x50xf32>
      %c0_23 = arith.constant 0 : index
      %c0_24 = arith.constant 0 : index
      %28 = vector.load %arg7[%c0_23, %c0_24] : memref<1x50xf32, #tpu.memory_space<vmem>>, vector<1x50xf32>
      %29 = vector.broadcast %28 : vector<1x50xf32> to vector<2x50xf32>
      %30 = arith.addf %27, %29 : vector<2x50xf32>
      %c0_25 = arith.constant 0 : index
      %c0_26 = arith.constant 0 : index
      %31 = vector.load %arg10[%c0_25, %c0_26] : memref<2x50xf32, #tpu.memory_space<vmem>>, vector<2x50xf32>
      tpu.vector_store %arg10[%c0_25, %c0_26], %30 {strides = array<i32>} : memref<2x50xf32, #tpu.memory_space<vmem>>, vector<2x50xf32>,
      %c0_27 = arith.constant 0 : index
      %c0_28 = arith.constant 0 : index
      %32 = vector.load %arg8[%c0_27, %c0_28] : memref<100x50xf32, #tpu.memory_space<vmem>>, vector<100x50xf32>
      %cst_29 = arith.constant dense<0.000000e+00> : vector<2x50xf32>
      %33 = tpu.matmul %25, %32, %cst_29 {dimension_numbers = #tpu.dot_dimension_numbers<[1], [0], [0], [1], [0, 0, 1, 1], [], []>} : vector<2x100xf32>, vector<100x50xf32>, vector<2x50xf32> -> vector<2x50xf32>
      %c0_30 = arith.constant 0 : index
      %c0_31 = arith.constant 0 : index
      %34 = vector.load %arg9[%c0_30, %c0_31] : memref<1x50xf32, #tpu.memory_space<vmem>>, vector<1x50xf32>
      %35 = vector.broadcast %34 : vector<1x50xf32> to vector<2x50xf32>
      %36 = arith.addf %33, %35 : vector<2x50xf32>
      %cst_32 = arith.constant -2.000000e+01 : f32
      %cst_33 = arith.constant 2.000000e+00 : f32
      %37 = vector.broadcast %cst_32 : f32 to vector<2x50xf32>
      %38 = arith.maximumf %37, %36 : vector<2x50xf32>
      %39 = vector.broadcast %cst_33 : f32 to vector<2x50xf32>
      %40 = arith.minimumf %39, %38 : vector<2x50xf32>
      %c0_34 = arith.constant 0 : index
      %c0_35 = arith.constant 0 : index
      %41 = vector.load %arg11[%c0_34, %c0_35] : memref<2x50xf32, #tpu.memory_space<vmem>>, vector<2x50xf32>
      tpu.vector_store %arg11[%c0_34, %c0_35], %40 {strides = array<i32>} : memref<2x50xf32, #tpu.memory_space<vmem>>, vector<2x50xf32>,
    } else {
    }
    return
  }
  func.func @transform_0(%arg0: i32) -> (i32, i32) {
    %c0_i32 = arith.constant 0 : i32
    %c0_i32_0 = arith.constant 0 : i32
    return %c0_i32, %arg0 : i32, i32
  }
  func.func @transform_1(%arg0: i32) -> (i32, i32) {
    %c0_i32 = arith.constant 0 : i32
    %c0_i32_0 = arith.constant 0 : i32
    return %arg0, %c0_i32 : i32, i32
  }
  func.func @transform_2(%arg0: i32) -> (i32, i32) {
    %c0_i32 = arith.constant 0 : i32
    %c0_i32_0 = arith.constant 0 : i32
    %c0_i32_1 = arith.constant 0 : i32
    return %c0_i32, %c0_i32_0 : i32, i32
  }
  func.func @transform_3(%arg0: i32) -> (i32, i32) {
    %c0_i32 = arith.constant 0 : i32
    %c0_i32_0 = arith.constant 0 : i32
    %c0_i32_1 = arith.constant 0 : i32
    return %c0_i32, %c0_i32_0 : i32, i32
  }
  func.func @transform_4(%arg0: i32) -> (i32, i32) {
    %c0_i32 = arith.constant 0 : i32
    %c0_i32_0 = arith.constant 0 : i32
    %c0_i32_1 = arith.constant 0 : i32
    return %c0_i32, %c0_i32_0 : i32, i32
  }
  func.func @transform_5(%arg0: i32) -> (i32, i32) {
    %c0_i32 = arith.constant 0 : i32
    %c0_i32_0 = arith.constant 0 : i32
    %c0_i32_1 = arith.constant 0 : i32
    return %c0_i32, %c0_i32_0 : i32, i32
  }
  func.func @transform_6(%arg0: i32) -> (i32, i32) {
    %c0_i32 = arith.constant 0 : i32
    %c0_i32_0 = arith.constant 0 : i32
    %c0_i32_1 = arith.constant 0 : i32
    return %c0_i32, %c0_i32_0 : i32, i32
  }
  func.func @transform_7(%arg0: i32) -> (i32, i32) {
    %c0_i32 = arith.constant 0 : i32
    %c0_i32_0 = arith.constant 0 : i32
    %c0_i32_1 = arith.constant 0 : i32
    return %c0_i32, %c0_i32_0 : i32, i32
  }
  func.func @transform_8(%arg0: i32) -> (i32, i32) {
    %c0_i32 = arith.constant 0 : i32
    %c0_i32_0 = arith.constant 0 : i32
    %c0_i32_1 = arith.constant 0 : i32
    return %c0_i32, %c0_i32_0 : i32, i32
  }
  func.func @transform_9(%arg0: i32) -> (i32, i32) {
    %c0_i32 = arith.constant 0 : i32
    %c0_i32_0 = arith.constant 0 : i32
    %c0_i32_1 = arith.constant 0 : i32
    return %c0_i32, %c0_i32_0 : i32, i32
  }
  func.func @transform_10(%arg0: i32) -> (i32, i32) {
    %c0_i32 = arith.constant 0 : i32
    %c0_i32_0 = arith.constant 0 : i32
    %c0_i32_1 = arith.constant 0 : i32
    return %c0_i32, %c0_i32_0 : i32, i32
  }
}

</mosaic_0001>

<llo_original>
// kernel: complex_var_encoder.1
$region0: #{complex_var_encoder.1}
  #allocation0 [shape = 'u32[]', space=smem, size = 0x4, offset = 0x4, fixed_abs, tag = 'smem constant byte address 0x4 - core index']
  #allocation1 [shape = 'u32[144,128]{1,0:T(1,128)}', space=vmem, size = 0x12000, scoped, tag = 'internal scratch']
  #allocation2 [shape = 'f32[2,256]{1,0:T(2,128)}', space=vmem, size = 0x800, scoped, tag = 'scratch operand']
  %s0 = inlined_call_operand.vmem [shape: f32[2,221184], index: 0, kind: input, shape index: {}]
  %s1 = inlined_call_operand.hbm [shape: bf16[221184,256], index: 1, kind: input, shape index: {}]
  %s2 = inlined_call_operand.vmem [shape: f32[1,256], index: 2, kind: input, shape index: {}]
  %s3 = inlined_call_operand.vmem [shape: f32[256,100], index: 3, kind: input, shape index: {}]
  %s4 = inlined_call_operand.vmem [shape: f32[1,100], index: 4, kind: input, shape index: {}]
  %s5 = inlined_call_operand.vmem [shape: f32[100,50], index: 5, kind: input, shape index: {}]
  %s6 = inlined_call_operand.vmem [shape: f32[1,50], index: 6, kind: input, shape index: {}]
  %s7 = inlined_call_operand.vmem [shape: f32[100,50], index: 7, kind: input, shape index: {}]
  %s8 = inlined_call_operand.vmem [shape: f32[1,50], index: 8, kind: input, shape index: {}]
  %s9 = inlined_call_operand.hbm [shape: f32[2,50], index: 9, kind: output, shape index: {0}]
  %s10 = inlined_call_operand.hbm [shape: f32[2,50], index: 10, kind: output, shape index: {1}]
  %11 = xla_tuple %s9, %s10
  %s12 = sld [smem:[#allocation0]]
  $region89: #{complex_var_encoder.1} parent=0
    _
  %s14 = ssub.s32 1, %s12
  %s15 = scalar_select 0, %s14, %s12
  $region1: #{complex_var_encoder.1} parent=0
    #allocation3 [shape = 'u8[12582912]{0}', space=vmem, size = 0xc00000, scoped, tag = 'input window, operand 1']
    #allocation4 [shape = 's32[2]{0}', space=sflag, size = 0x8, scoped, tag = 'scoped memory for complex_var_encoder.1']
    #allocation5 [shape = 's32[2]{0}', space=sflag, size = 0x8, scoped, tag = 'scoped memory for complex_var_encoder.1']
    #allocation6 [shape = 'u8[1024]{0}', space=vmem, size = 0x400, scoped, tag = 'output window, operand 0, single buffered']
    #allocation7 [shape = 'u8[1024]{0}', space=vmem, size = 0x400, scoped, tag = 'output window, operand 1, single buffered']
    #allocation8 [shape = 's32[1]{0}', space=sflag, size = 0x4, scoped, tag = 'scoped memory for complex_var_encoder.1']
    %16 = vsyncpa [#allocation4], 0
    %s17 = scalar_lea.sflag [#allocation4], 1
    %18 = vsyncpa %s17, 0
    %19 = vsyncpa [#allocation5], 0
    %20 = vsyncpa [#allocation8], 0
    loop: start=0, step=1, limit=20
    $region2: #{complex_var_encoder.1} parent=1 // loop_pre_header
      _
    $region3: #{complex_var_encoder.1} parent=1 // loop_header
      %s22 = sphi 0, %s26
      %p23 = scmp.ge.s32.totalorder %s22, 20
      %s32 = sphi 0, %s34
      %s35 = sphi 0, %s32
      %s36 = sphi 0, %s35
      %s52 = sphi 0, %s36
      %s58 = sphi 0, %s60
      %s61 = sphi 0, %s58
      %s62 = sphi 0, %s61
      %s78 = sphi 0, %s62
      %s82 = sphi 0, %s82
      %s84 = sphi 0, %s82
      %s85 = sphi 0, %s84
      %s99 = sphi 0, %s85
      %s103 = sphi 0, %s103
      %s105 = sphi 0, %s103
      %s106 = sphi 0, %s105
      %s120 = sphi 0, %s106
      %s124 = sphi 0, %s124
      %s126 = sphi 0, %s124
      %s127 = sphi 0, %s126
      %s141 = sphi 0, %s127
      %s145 = sphi 0, %s145
      %s147 = sphi 0, %s145
      %s148 = sphi 0, %s147
      %s162 = sphi 0, %s148
      %s166 = sphi 0, %s166
      %s168 = sphi 0, %s166
      %s169 = sphi 0, %s168
      %s183 = sphi 0, %s169
      %s187 = sphi 0, %s187
      %s189 = sphi 0, %s187
      %s190 = sphi 0, %s189
      %s204 = sphi 0, %s190
      %s208 = sphi 0, %s208
      %s210 = sphi 0, %s208
      %s211 = sphi 0, %s210
      %s225 = sphi 0, %s211
      %s229 = sphi 0, %s229
      %s231 = sphi 0, %s229
      %s232 = sphi 0, %s231
      %s246 = sphi 0, %s232
      %s250 = sphi 0, %s250
      %s252 = sphi 0, %s250
      %s253 = sphi 0, %s252
      %s267 = sphi 0, %s253
    $region4: #{complex_var_encoder.1} parent=1 // loop_header_branch
      %25 = sbr.rel (%p23) target = $region8
    $region5: #{complex_var_encoder.1} parent=1 // loop_body
      %s27 = ssub.s32 %s22, 1
      %s28 = ssub.s32 %s22, 2
      %s29 = sadd.s32 %s22, 1
      %s30 = ssub.s32 %s22, %s29
      %p31 = scmp.eq.s32.totalorder %s30, 0
      %s33 = sadd.s32 %s32, 1
      %s34 = scalar_select %p31, %s32, %s33
      %p37 = pneg %p31
      %p38 = scmp.eq.s32.totalorder %s22, 17
      %p39 = por %p37, %p38
      %p40 = scmp.ne.s32.totalorder %s32, %s35
      %p41 = scmp.eq.s32.totalorder %s22, 0
      %p42 = por %p40, %p41
      %p43 = scmp.ne.s32.totalorder %s32, %s35
      %p44 = scmp.eq.s32.totalorder %s27, 17
      %p45 = por %p43, %p44
      %p46 = scmp.ne.s32.totalorder %s35, %s36
      %p47 = scmp.eq.s32.totalorder %s27, 0
      %p48 = por %p46, %p47
      %p49 = scmp.ne.s32.totalorder %s35, %s36
      %p50 = scmp.eq.s32.totalorder %s28, 17
      %p51 = por %p49, %p50
      %p53 = scmp.ne.s32.totalorder %s36, %s52
      %p54 = scmp.eq.s32.totalorder %s28, 0
      %p55 = por %p53, %p54
      %s56 = ssub.s32 %s22, %s29
      %p57 = scmp.eq.s32.totalorder %s56, 0
      %s59 = sadd.s32 %s58, 1
      %s60 = scalar_select %p57, %s58, %s59
      %p63 = pneg %p57
      %p64 = scmp.eq.s32.totalorder %s22, 17
      %p65 = por %p63, %p64
      %p66 = scmp.ne.s32.totalorder %s58, %s61
      %p67 = scmp.eq.s32.totalorder %s22, 0
      %p68 = por %p66, %p67
      %p69 = scmp.ne.s32.totalorder %s58, %s61
      %p70 = scmp.eq.s32.totalorder %s27, 17
      %p71 = por %p69, %p70
      %p72 = scmp.ne.s32.totalorder %s61, %s62
      %p73 = scmp.eq.s32.totalorder %s27, 0
      %p74 = por %p72, %p73
      %p75 = scmp.ne.s32.totalorder %s61, %s62
      %p76 = scmp.eq.s32.totalorder %s28, 17
      %p77 = por %p75, %p76
      %p79 = scmp.ne.s32.totalorder %s62, %s78
      %p80 = scmp.eq.s32.totalorder %s28, 0
      %p81 = por %p79, %p80
      %s83 = sadd.s32 %s82, 1
      %p86 = scmp.eq.s32.totalorder %s22, 17
      %p87 = scmp.ne.s32.totalorder %s82, %s84
      %p88 = scmp.eq.s32.totalorder %s22, 0
      %p89 = por %p87, %p88
      %p90 = scmp.ne.s32.totalorder %s82, %s84
      %p91 = scmp.eq.s32.totalorder %s27, 17
      %p92 = por %p90, %p91
      %p93 = scmp.ne.s32.totalorder %s84, %s85
      %p94 = scmp.eq.s32.totalorder %s27, 0
      %p95 = por %p93, %p94
      %p96 = scmp.ne.s32.totalorder %s84, %s85
      %p97 = scmp.eq.s32.totalorder %s28, 17
      %p98 = por %p96, %p97
      %p100 = scmp.ne.s32.totalorder %s85, %s99
      %p101 = scmp.eq.s32.totalorder %s28, 0
      %p102 = por %p100, %p101
      %s104 = sadd.s32 %s103, 1
      %p107 = scmp.eq.s32.totalorder %s22, 17
      %p108 = scmp.ne.s32.totalorder %s103, %s105
      %p109 = scmp.eq.s32.totalorder %s22, 0
      %p110 = por %p108, %p109
      %p111 = scmp.ne.s32.totalorder %s103, %s105
      %p112 = scmp.eq.s32.totalorder %s27, 17
      %p113 = por %p111, %p112
      %p114 = scmp.ne.s32.totalorder %s105, %s106
      %p115 = scmp.eq.s32.totalorder %s27, 0
      %p116 = por %p114, %p115
      %p117 = scmp.ne.s32.totalorder %s105, %s106
      %p118 = scmp.eq.s32.totalorder %s28, 17
      %p119 = por %p117, %p118
      %p121 = scmp.ne.s32.totalorder %s106, %s120
      %p122 = scmp.eq.s32.totalorder %s28, 0
      %p123 = por %p121, %p122
      %s125 = sadd.s32 %s124, 1
      %p128 = scmp.eq.s32.totalorder %s22, 17
      %p129 = scmp.ne.s32.totalorder %s124, %s126
      %p130 = scmp.eq.s32.totalorder %s22, 0
      %p131 = por %p129, %p130
      %p132 = scmp.ne.s32.totalorder %s124, %s126
      %p133 = scmp.eq.s32.totalorder %s27, 17
      %p134 = por %p132, %p133
      %p135 = scmp.ne.s32.totalorder %s126, %s127
      %p136 = scmp.eq.s32.totalorder %s27, 0
      %p137 = por %p135, %p136
      %p138 = scmp.ne.s32.totalorder %s126, %s127
      %p139 = scmp.eq.s32.totalorder %s28, 17
      %p140 = por %p138, %p139
      %p142 = scmp.ne.s32.totalorder %s127, %s141
      %p143 = scmp.eq.s32.totalorder %s28, 0
      %p144 = por %p142, %p143
      %s146 = sadd.s32 %s145, 1
      %p149 = scmp.eq.s32.totalorder %s22, 17
      %p150 = scmp.ne.s32.totalorder %s145, %s147
      %p151 = scmp.eq.s32.totalorder %s22, 0
      %p152 = por %p150, %p151
      %p153 = scmp.ne.s32.totalorder %s145, %s147
      %p154 = scmp.eq.s32.totalorder %s27, 17
      %p155 = por %p153, %p154
      %p156 = scmp.ne.s32.totalorder %s147, %s148
      %p157 = scmp.eq.s32.totalorder %s27, 0
      %p158 = por %p156, %p157
      %p159 = scmp.ne.s32.totalorder %s147, %s148
      %p160 = scmp.eq.s32.totalorder %s28, 17
      %p161 = por %p159, %p160
      %p163 = scmp.ne.s32.totalorder %s148, %s162
      %p164 = scmp.eq.s32.totalorder %s28, 0
      %p165 = por %p163, %p164
      %s167 = sadd.s32 %s166, 1
      %p170 = scmp.eq.s32.totalorder %s22, 17
      %p171 = scmp.ne.s32.totalorder %s166, %s168
      %p172 = scmp.eq.s32.totalorder %s22, 0
      %p173 = por %p171, %p172
      %p174 = scmp.ne.s32.totalorder %s166, %s168
      %p175 = scmp.eq.s32.totalorder %s27, 17
      %p176 = por %p174, %p175
      %p177 = scmp.ne.s32.totalorder %s168, %s169
      %p178 = scmp.eq.s32.totalorder %s27, 0
      %p179 = por %p177, %p178
      %p180 = scmp.ne.s32.totalorder %s168, %s169
      %p181 = scmp.eq.s32.totalorder %s28, 17
      %p182 = por %p180, %p181
      %p184 = scmp.ne.s32.totalorder %s169, %s183
      %p185 = scmp.eq.s32.totalorder %s28, 0
      %p186 = por %p184, %p185
      %s188 = sadd.s32 %s187, 1
      %p191 = scmp.eq.s32.totalorder %s22, 17
      %p192 = scmp.ne.s32.totalorder %s187, %s189
      %p193 = scmp.eq.s32.totalorder %s22, 0
      %p194 = por %p192, %p193
      %p195 = scmp.ne.s32.totalorder %s187, %s189
      %p196 = scmp.eq.s32.totalorder %s27, 17
      %p197 = por %p195, %p196
      %p198 = scmp.ne.s32.totalorder %s189, %s190
      %p199 = scmp.eq.s32.totalorder %s27, 0
      %p200 = por %p198, %p199
      %p201 = scmp.ne.s32.totalorder %s189, %s190
      %p202 = scmp.eq.s32.totalorder %s28, 17
      %p203 = por %p201, %p202
      %p205 = scmp.ne.s32.totalorder %s190, %s204
      %p206 = scmp.eq.s32.totalorder %s28, 0
      %p207 = por %p205, %p206
      %s209 = sadd.s32 %s208, 1
      %p212 = scmp.eq.s32.totalorder %s22, 17
      %p213 = scmp.ne.s32.totalorder %s208, %s210
      %p214 = scmp.eq.s32.totalorder %s22, 0
      %p215 = por %p213, %p214
      %p216 = scmp.ne.s32.totalorder %s208, %s210
      %p217 = scmp.eq.s32.totalorder %s27, 17
      %p218 = por %p216, %p217
      %p219 = scmp.ne.s32.totalorder %s210, %s211
      %p220 = scmp.eq.s32.totalorder %s27, 0
      %p221 = por %p219, %p220
      %p222 = scmp.ne.s32.totalorder %s210, %s211
      %p223 = scmp.eq.s32.totalorder %s28, 17
      %p224 = por %p222, %p223
      %p226 = scmp.ne.s32.totalorder %s211, %s225
      %p227 = scmp.eq.s32.totalorder %s28, 0
      %p228 = por %p226, %p227
      %s230 = sadd.s32 %s229, 1
      %p233 = scmp.eq.s32.totalorder %s22, 17
      %p234 = scmp.ne.s32.totalorder %s229, %s231
      %p235 = scmp.eq.s32.totalorder %s22, 0
      %p236 = por %p234, %p235
      %p237 = scmp.ne.s32.totalorder %s229, %s231
      %p238 = scmp.eq.s32.totalorder %s27, 17
      %p239 = por %p237, %p238
      %p240 = scmp.ne.s32.totalorder %s231, %s232
      %p241 = scmp.eq.s32.totalorder %s27, 0
      %p242 = por %p240, %p241
      %p243 = scmp.ne.s32.totalorder %s231, %s232
      %p244 = scmp.eq.s32.totalorder %s28, 17
      %p245 = por %p243, %p244
      %p247 = scmp.ne.s32.totalorder %s232, %s246
      %p248 = scmp.eq.s32.totalorder %s28, 0
      %p249 = por %p247, %p248
      %s251 = sadd.s32 %s250, 1
      %p254 = scmp.eq.s32.totalorder %s22, 17
      %p255 = scmp.ne.s32.totalorder %s250, %s252
      %p256 = scmp.eq.s32.totalorder %s22, 0
      %p257 = por %p255, %p256
      %p258 = scmp.ne.s32.totalorder %s250, %s252
      %p259 = scmp.eq.s32.totalorder %s27, 17
      %p260 = por %p258, %p259
      %p261 = scmp.ne.s32.totalorder %s252, %s253
      %p262 = scmp.eq.s32.totalorder %s27, 0
      %p263 = por %p261, %p262
      %p264 = scmp.ne.s32.totalorder %s252, %s253
      %p265 = scmp.eq.s32.totalorder %s28, 17
      %p266 = por %p264, %p265
      %p268 = scmp.ne.s32.totalorder %s253, %s267
      %p269 = scmp.eq.s32.totalorder %s28, 0
      %p270 = por %p268, %p269
      %p271 = scmp.le.s32.totalorder 1, %s22
      %p272 = scmp.lt.s32.totalorder %s22, 19
      %p273 = pnand %p271, %p272
      %p274 = pneg %p273
      // Predicated region
      $region9: #{complex_var_encoder.1} parent=5 // pred_check
        _
      $region10: #{complex_var_encoder.1} parent=5 // pred_check_branch
        %276 = sbr.rel (%p273) target = $region12
      $region11: #{complex_var_encoder.1} parent=5 // pred_region
        %s277 = ssub.s32 %s22, 1
        // Predicated region
        $region13: #{complex_var_encoder.1} parent=11 // pred_check
          %p278 = pneg %p95
        $region14: #{complex_var_encoder.1} parent=11 // pred_check_branch
          %280 = sbr.rel (%p278) target = $region16
        $region15: #{complex_var_encoder.1} parent=11 // pred_region
          _
        $region16: #{complex_var_encoder.1} parent=11 // pred_fallthru
          _
        // Predicated region
        $region17: #{complex_var_encoder.1} parent=11 // pred_check
          %p281 = pneg %p116
        $region18: #{complex_var_encoder.1} parent=11 // pred_check_branch
          %283 = sbr.rel (%p281) target = $region20
        $region19: #{complex_var_encoder.1} parent=11 // pred_region
          _
        $region20: #{complex_var_encoder.1} parent=11 // pred_fallthru
          _
        // Predicated region
        $region21: #{complex_var_encoder.1} parent=11 // pred_check
          %p284 = pneg %p137
        $region22: #{complex_var_encoder.1} parent=11 // pred_check_branch
          %286 = sbr.rel (%p284) target = $region24
        $region23: #{complex_var_encoder.1} parent=11 // pred_region
          _
        $region24: #{complex_var_encoder.1} parent=11 // pred_fallthru
          _
        // Predicated region
        $region25: #{complex_var_encoder.1} parent=11 // pred_check
          %p287 = pneg %p158
        $region26: #{complex_var_encoder.1} parent=11 // pred_check_branch
          %289 = sbr.rel (%p287) target = $region28
        $region27: #{complex_var_encoder.1} parent=11 // pred_region
          _
        $region28: #{complex_var_encoder.1} parent=11 // pred_fallthru
          _
        // Predicated region
        $region29: #{complex_var_encoder.1} parent=11 // pred_check
          %p290 = pneg %p179
        $region30: #{complex_var_encoder.1} parent=11 // pred_check_branch
          %292 = sbr.rel (%p290) target = $region32
        $region31: #{complex_var_encoder.1} parent=11 // pred_region
          _
        $region32: #{complex_var_encoder.1} parent=11 // pred_fallthru
          _
        // Predicated region
        $region33: #{complex_var_encoder.1} parent=11 // pred_check
          %p293 = pneg %p200
        $region34: #{complex_var_encoder.1} parent=11 // pred_check_branch
          %295 = sbr.rel (%p293) target = $region36
        $region35: #{complex_var_encoder.1} parent=11 // pred_region
          _
        $region36: #{complex_var_encoder.1} parent=11 // pred_fallthru
          _
        // Predicated region
        $region37: #{complex_var_encoder.1} parent=11 // pred_check
          %p296 = pneg %p221
        $region38: #{complex_var_encoder.1} parent=11 // pred_check_branch
          %298 = sbr.rel (%p296) target = $region40
        $region39: #{complex_var_encoder.1} parent=11 // pred_region
          _
        $region40: #{complex_var_encoder.1} parent=11 // pred_fallthru
          _
      $region12: #{complex_var_encoder.1} parent=5 // pred_fallthru
        _
      %p299 = scmp.lt.s32.totalorder %s22, 18
      // Predicated region
      $region41: #{complex_var_encoder.1} parent=5 // pred_check
        %p300 = pneg %p299
      $region42: #{complex_var_encoder.1} parent=5 // pred_check_branch
        %302 = sbr.rel (%p300) target = $region44
      $region43: #{complex_var_encoder.1} parent=5 // pred_region
        // Predicated region
        $region45: #{complex_var_encoder.1} parent=43 // pred_check
          %p303 = pneg %p42
        $region46: #{complex_var_encoder.1} parent=43 // pred_check_branch
          %305 = sbr.rel (%p303) target = $region48
        $region47: #{complex_var_encoder.1} parent=43 // pred_region
          %s306 = smul.u32 96, %s22
          %p307 = scmp.lt.s32.totalorder %s306, 1727
          %s308 = scalar_select %p307, %s306, 1727
          %s309 = smul.addr %s308, 2
          %s310 = scalar_lea.vmem %s0, %s309
          %s311 = smul.u32 96, %s22
        $region48: #{complex_var_encoder.1} parent=43 // pred_fallthru
          _
        // Predicated region
        $region49: #{complex_var_encoder.1} parent=43 // pred_check
          %p312 = pneg %p68
        $region50: #{complex_var_encoder.1} parent=43 // pred_check_branch
          %314 = sbr.rel (%p312) target = $region52
        $region51: #{complex_var_encoder.1} parent=43 // pred_region
          %s315 = sand.u32 %s58, 1
          %s316 = scalar_lea.sflag [#allocation4], %s315
          %s317 = sand.u32 %s58, 1
          %s318 = smul.addr %s317, 12288
          %s319 = scalar_lea.vmem [#allocation3], %s318
          %s320 = smul.u32 1536, %s22
          %s322 = ssub.s32 196608, 196608
          %323 = vsyncadd %s316, %s322
          %s324 = smul.addr %s320, 2
          %s325 = smul.addr %s324, 64
          %s326 = scalar_lea.hbm %s1, %s325
          %s327 = sshll.u32 %s319, 4
          %s328 = int_to_ptr.vmem [resolvable:$true] %s327
          %333 = dma.hbm_to_vmem [thread:$0]  %s326, 196608, %s328, %s316, 128, 128, 8
        $region52: #{complex_var_encoder.1} parent=43 // pred_fallthru
          _
      $region44: #{complex_var_encoder.1} parent=5 // pred_fallthru
        _
      %p334 = scmp.le.s32.totalorder 1, %s22
      %p335 = scmp.lt.s32.totalorder %s22, 19
      %p336 = pnand %p334, %p335
      %p337 = pneg %p336
      // Predicated region
      $region53: #{complex_var_encoder.1} parent=5 // pred_check
        _
      $region54: #{complex_var_encoder.1} parent=5 // pred_check_branch
        %339 = sbr.rel (%p336) target = $region56
      $region55: #{complex_var_encoder.1} parent=5 // pred_region
        %s340 = ssub.s32 %s22, 1
        %s341 = sand.u32 %s61, 1
        %s342 = scalar_lea.sflag [#allocation4], %s341
        %s343 = sand.u32 %s61, 1
        %s344 = smul.addr %s343, 12288
        %s345 = scalar_lea.vmem [#allocation3], %s344
        // Predicated region
        $region57: #{complex_var_encoder.1} parent=55 // pred_check
          %p346 = pneg %p74
        $region58: #{complex_var_encoder.1} parent=55 // pred_check_branch
          %348 = sbr.rel (%p346) target = $region60
        $region59: #{complex_var_encoder.1} parent=55 // pred_region
          %349 = dma.done %s342, 196608
        $region60: #{complex_var_encoder.1} parent=55 // pred_fallthru
          _
        %s350 = smul.u32 96, %s27
        %p351 = scmp.lt.s32.totalorder %s350, 1727
        %s352 = scalar_select %p351, %s350, 1727
        %s353 = smul.addr %s352, 2
        %s354 = scalar_lea.vmem %s0, %s353
        %p355 = pneg %p48
        %p356 = pneg %p45
        %s357 = sand.u32 %s61, 1
        %s358 = scalar_lea.sflag [#allocation4], %s357
        %s359 = sand.u32 %s61, 1
        %s360 = smul.addr %s359, 12288
        %s361 = scalar_lea.vmem [#allocation3], %s360
        %p362 = pneg %p74
        %p363 = pneg %p71
        %p364 = pneg %p95
        %p365 = pneg %p92
        %p366 = pneg %p116
        %p367 = pneg %p113
        %p368 = pneg %p137
        %p369 = pneg %p134
        %p370 = pneg %p158
        %p371 = pneg %p155
        %p372 = pneg %p179
        %p373 = pneg %p176
        %p374 = pneg %p200
        %p375 = pneg %p197
        %p376 = pneg %p221
        %p377 = pneg %p218
        %p378 = pneg %p242
        %p379 = pneg %p239
        %p380 = pneg %p263
        %p381 = pneg %p260
        %s382 = smul.u32 96, %s27
        %p383 = scmp.lt.s32.totalorder %s382, 1727
        %s384 = scalar_select %p383, %s382, 1727
        %s385 = smul.addr %s384, 2
        %s386 = scalar_lea.vmem %s0, %s385
        %s387 = smul.u32 96, %s27
        %s388 = smul.u32 1536, %s27
        %p389 = scmp.eq.s32.totalorder %s27, 0
        // Predicated region
        $region61: #{complex_var_encoder.1} parent=55 // pred_check
          %p390 = pneg %p389
        $region62: #{complex_var_encoder.1} parent=55 // pred_check_branch
          %392 = sbr.rel (%p390) target = $region64
        $region63: #{complex_var_encoder.1} parent=55 // pred_region
          %393 = vst [vmem:[#allocation2] sm:$0xf] 0.0
        $region64: #{complex_var_encoder.1} parent=55 // pred_fallthru
          _
        %v394 = vld [vmem:[#allocation2] sm:$0xf]
        %v395 = vld [vmem:[%s386] sm:$0xff]
        %v396 = vld [vmem:[%s386 + $0x8] sm:$0xff]
        %v397 = vld [vmem:[%s386 + $0x10] sm:$0xff]
        %v398 = vld [vmem:[%s386 + $0x18] sm:$0xff]
        %v399 = vld [vmem:[%s386 + $0x20] sm:$0xff]
        %v400 = vld [vmem:[%s386 + $0x28] sm:$0xff]
        %v401 = vld [vmem:[%s386 + $0x30] sm:$0xff]
        %v402 = vld [vmem:[%s386 + $0x38] sm:$0xff]
        %v403 = vld [vmem:[%s386 + $0x40] sm:$0xff]
        %v404 = vld [vmem:[%s386 + $0x48] sm:$0xff]
        %v405 = vld [vmem:[%s386 + $0x50] sm:$0xff]
        %v406 = vld [vmem:[%s386 + $0x58] sm:$0xff]
        %v407 = vld [vmem:[%s386 + $0x60] sm:$0xff]
        %v408 = vld [vmem:[%s386 + $0x68] sm:$0xff]
        %v409 = vld [vmem:[%s386 + $0x70] sm:$0xff]
        %v410 = vld [vmem:[%s386 + $0x78] sm:$0xff]
        %v411 = vld [vmem:[%s386 + $0x80] sm:$0xff]
        %v412 = vld [vmem:[%s386 + $0x88] sm:$0xff]
        %v413 = vld [vmem:[%s386 + $0x90] sm:$0xff]
        %v414 = vld [vmem:[%s386 + $0x98] sm:$0xff]
        %v415 = vld [vmem:[%s386 + $0xa0] sm:$0xff]
        %v416 = vld [vmem:[%s386 + $0xa8] sm:$0xff]
        %v417 = vld [vmem:[%s386 + $0xb0] sm:$0xff]
        %v418 = vld [vmem:[%s386 + $0xb8] sm:$0xff]
        %v443 = vcombine.high %v395, %v395
        %v445 = vunpack.c.l.s4 1983009808
        %v446 = vunpack.c.0.s8 %v445
        %v447 = vlaneseq
        %v448 = vshrl.u32 %v447, 7
        %v449 = vsub.s32 %v446, %v448
        %v450 = vrot.slane %v395, %v449
        %v452 = vunpack.c.l.s4 1983009808
        %v453 = vunpack.c.0.s8 %v452
        %v454 = vlaneseq
        %v455 = vshrl.u32 %v454, 7
        %v456 = vsub.s32 %v453, %v455
        %v457 = vrot.slane %v443, %v456
        %v458 = vcombine.high %v450, %v450
        %v459 = vcombine.high %v457, %v457
        %v460 = vcombine.high %v396, %v396
        %v462 = vunpack.c.l.s4 1983009808
        %v463 = vunpack.c.0.s8 %v462
        %v464 = vlaneseq
        %v465 = vshrl.u32 %v464, 7
        %v466 = vsub.s32 %v463, %v465
        %v467 = vrot.slane %v396, %v466
        %v469 = vunpack.c.l.s4 1983009808
        %v470 = vunpack.c.0.s8 %v469
        %v471 = vlaneseq
        %v472 = vshrl.u32 %v471, 7
        %v473 = vsub.s32 %v470, %v472
        %v474 = vrot.slane %v460, %v473
        %v475 = vcombine.high %v467, %v467
        %v476 = vcombine.high %v474, %v474
        %v477 = vcombine.high %v397, %v397
        %v479 = vunpack.c.l.s4 1983009808
        %v480 = vunpack.c.0.s8 %v479
        %v481 = vlaneseq
        %v482 = vshrl.u32 %v481, 7
        %v483 = vsub.s32 %v480, %v482
        %v484 = vrot.slane %v397, %v483
        %v486 = vunpack.c.l.s4 1983009808
        %v487 = vunpack.c.0.s8 %v486
        %v488 = vlaneseq
        %v489 = vshrl.u32 %v488, 7
        %v490 = vsub.s32 %v487, %v489
        %v491 = vrot.slane %v477, %v490
        %v492 = vcombine.high %v484, %v484
        %v493 = vcombine.high %v491, %v491
        %v494 = vcombine.high %v398, %v398
        %v496 = vunpack.c.l.s4 1983009808
        %v497 = vunpack.c.0.s8 %v496
        %v498 = vlaneseq
        %v499 = vshrl.u32 %v498, 7
        %v500 = vsub.s32 %v497, %v499
        %v501 = vrot.slane %v398, %v500
        %v503 = vunpack.c.l.s4 1983009808
        %v504 = vunpack.c.0.s8 %v503
        %v505 = vlaneseq
        %v506 = vshrl.u32 %v505, 7
        %v507 = vsub.s32 %v504, %v506
        %v508 = vrot.slane %v494, %v507
        %v509 = vcombine.high %v501, %v501
        %v510 = vcombine.high %v508, %v508
        %v511 = vcombine.high %v399, %v399
        %v513 = vunpack.c.l.s4 1983009808
        %v514 = vunpack.c.0.s8 %v513
        %v515 = vlaneseq
        %v516 = vshrl.u32 %v515, 7
        %v517 = vsub.s32 %v514, %v516
        %v518 = vrot.slane %v399, %v517
        %v520 = vunpack.c.l.s4 1983009808
        %v521 = vunpack.c.0.s8 %v520
        %v522 = vlaneseq
        %v523 = vshrl.u32 %v522, 7
        %v524 = vsub.s32 %v521, %v523
        %v525 = vrot.slane %v511, %v524
        %v526 = vcombine.high %v518, %v518
        %v527 = vcombine.high %v525, %v525
        %v528 = vcombine.high %v400, %v400
        %v530 = vunpack.c.l.s4 1983009808
        %v531 = vunpack.c.0.s8 %v530
        %v532 = vlaneseq
        %v533 = vshrl.u32 %v532, 7
        %v534 = vsub.s32 %v531, %v533
        %v535 = vrot.slane %v400, %v534
        %v537 = vunpack.c.l.s4 1983009808
        %v538 = vunpack.c.0.s8 %v537
        %v539 = vlaneseq
        %v540 = vshrl.u32 %v539, 7
        %v541 = vsub.s32 %v538, %v540
        %v542 = vrot.slane %v528, %v541
        %v543 = vcombine.high %v535, %v535
        %v544 = vcombine.high %v542, %v542
        %v545 = vcombine.high %v401, %v401
        %v547 = vunpack.c.l.s4 1983009808
        %v548 = vunpack.c.0.s8 %v547
        %v549 = vlaneseq
        %v550 = vshrl.u32 %v549, 7
        %v551 = vsub.s32 %v548, %v550
        %v552 = vrot.slane %v401, %v551
        %v554 = vunpack.c.l.s4 1983009808
        %v555 = vunpack.c.0.s8 %v554
        %v556 = vlaneseq
        %v557 = vshrl.u32 %v556, 7
        %v558 = vsub.s32 %v555, %v557
        %v559 = vrot.slane %v545, %v558
        %v560 = vcombine.high %v552, %v552
        %v561 = vcombine.high %v559, %v559
        %v562 = vcombine.high %v402, %v402
        %v564 = vunpack.c.l.s4 1983009808
        %v565 = vunpack.c.0.s8 %v564
        %v566 = vlaneseq
        %v567 = vshrl.u32 %v566, 7
        %v568 = vsub.s32 %v565, %v567
        %v569 = vrot.slane %v402, %v568
        %v571 = vunpack.c.l.s4 1983009808
        %v572 = vunpack.c.0.s8 %v571
        %v573 = vlaneseq
        %v574 = vshrl.u32 %v573, 7
        %v575 = vsub.s32 %v572, %v574
        %v576 = vrot.slane %v562, %v575
        %v577 = vcombine.high %v569, %v569
        %v578 = vcombine.high %v576, %v576
        %v579 = vcombine.high %v403, %v403
        %v581 = vunpack.c.l.s4 1983009808
        %v582 = vunpack.c.0.s8 %v581
        %v583 = vlaneseq
        %v584 = vshrl.u32 %v583, 7
        %v585 = vsub.s32 %v582, %v584
        %v586 = vrot.slane %v403, %v585
        %v588 = vunpack.c.l.s4 1983009808
        %v589 = vunpack.c.0.s8 %v588
        %v590 = vlaneseq
        %v591 = vshrl.u32 %v590, 7
        %v592 = vsub.s32 %v589, %v591
        %v593 = vrot.slane %v579, %v592
        %v594 = vcombine.high %v586, %v586
        %v595 = vcombine.high %v593, %v593
        %v596 = vcombine.high %v404, %v404
        %v598 = vunpack.c.l.s4 1983009808
        %v599 = vunpack.c.0.s8 %v598
        %v600 = vlaneseq
        %v601 = vshrl.u32 %v600, 7
        %v602 = vsub.s32 %v599, %v601
        %v603 = vrot.slane %v404, %v602
        %v605 = vunpack.c.l.s4 1983009808
        %v606 = vunpack.c.0.s8 %v605
        %v607 = vlaneseq
        %v608 = vshrl.u32 %v607, 7
        %v609 = vsub.s32 %v606, %v608
        %v610 = vrot.slane %v596, %v609
        %v611 = vcombine.high %v603, %v603
        %v612 = vcombine.high %v610, %v610
        %v613 = vcombine.high %v405, %v405
        %v615 = vunpack.c.l.s4 1983009808
        %v616 = vunpack.c.0.s8 %v615
        %v617 = vlaneseq
        %v618 = vshrl.u32 %v617, 7
        %v619 = vsub.s32 %v616, %v618
        %v620 = vrot.slane %v405, %v619
        %v622 = vunpack.c.l.s4 1983009808
        %v623 = vunpack.c.0.s8 %v622
        %v624 = vlaneseq
        %v625 = vshrl.u32 %v624, 7
        %v626 = vsub.s32 %v623, %v625
        %v627 = vrot.slane %v613, %v626
        %v628 = vcombine.high %v620, %v620
        %v629 = vcombine.high %v627, %v627
        %v630 = vcombine.high %v406, %v406
        %v632 = vunpack.c.l.s4 1983009808
        %v633 = vunpack.c.0.s8 %v632
        %v634 = vlaneseq
        %v635 = vshrl.u32 %v634, 7
        %v636 = vsub.s32 %v633, %v635
        %v637 = vrot.slane %v406, %v636
        %v639 = vunpack.c.l.s4 1983009808
        %v640 = vunpack.c.0.s8 %v639
        %v641 = vlaneseq
        %v642 = vshrl.u32 %v641, 7
        %v643 = vsub.s32 %v640, %v642
        %v644 = vrot.slane %v630, %v643
        %v645 = vcombine.high %v637, %v637
        %v646 = vcombine.high %v644, %v644
        %v647 = vcombine.high %v407, %v407
        %v649 = vunpack.c.l.s4 1983009808
        %v650 = vunpack.c.0.s8 %v649
        %v651 = vlaneseq
        %v652 = vshrl.u32 %v651, 7
        %v653 = vsub.s32 %v650, %v652
        %v654 = vrot.slane %v407, %v653
        %v656 = vunpack.c.l.s4 1983009808
        %v657 = vunpack.c.0.s8 %v656
        %v658 = vlaneseq
        %v659 = vshrl.u32 %v658, 7
        %v660 = vsub.s32 %v657, %v659
        %v661 = vrot.slane %v647, %v660
        %v662 = vcombine.high %v654, %v654
        %v663 = vcombine.high %v661, %v661
        %v664 = vcombine.high %v408, %v408
        %v666 = vunpack.c.l.s4 1983009808
        %v667 = vunpack.c.0.s8 %v666
        %v668 = vlaneseq
        %v669 = vshrl.u32 %v668, 7
        %v670 = vsub.s32 %v667, %v669
        %v671 = vrot.slane %v408, %v670
        %v673 = vunpack.c.l.s4 1983009808
        %v674 = vunpack.c.0.s8 %v673
        %v675 = vlaneseq
        %v676 = vshrl.u32 %v675, 7
        %v677 = vsub.s32 %v674, %v676
        %v678 = vrot.slane %v664, %v677
        %v679 = vcombine.high %v671, %v671
        %v680 = vcombine.high %v678, %v678
        %v681 = vcombine.high %v409, %v409
        %v683 = vunpack.c.l.s4 1983009808
        %v684 = vunpack.c.0.s8 %v683
        %v685 = vlaneseq
        %v686 = vshrl.u32 %v685, 7
        %v687 = vsub.s32 %v684, %v686
        %v688 = vrot.slane %v409, %v687
        %v690 = vunpack.c.l.s4 1983009808
        %v691 = vunpack.c.0.s8 %v690
        %v692 = vlaneseq
        %v693 = vshrl.u32 %v692, 7
        %v694 = vsub.s32 %v691, %v693
        %v695 = vrot.slane %v681, %v694
        %v696 = vcombine.high %v688, %v688
        %v697 = vcombine.high %v695, %v695
        %v698 = vcombine.high %v410, %v410
        %v700 = vunpack.c.l.s4 1983009808
        %v701 = vunpack.c.0.s8 %v700
        %v702 = vlaneseq
        %v703 = vshrl.u32 %v702, 7
        %v704 = vsub.s32 %v701, %v703
        %v705 = vrot.slane %v410, %v704
        %v707 = vunpack.c.l.s4 1983009808
        %v708 = vunpack.c.0.s8 %v707
        %v709 = vlaneseq
        %v710 = vshrl.u32 %v709, 7
        %v711 = vsub.s32 %v708, %v710
        %v712 = vrot.slane %v698, %v711
        %v713 = vcombine.high %v705, %v705
        %v714 = vcombine.high %v712, %v712
        %v715 = vcombine.high %v411, %v411
        %v717 = vunpack.c.l.s4 1983009808
        %v718 = vunpack.c.0.s8 %v717
        %v719 = vlaneseq
        %v720 = vshrl.u32 %v719, 7
        %v721 = vsub.s32 %v718, %v720
        %v722 = vrot.slane %v411, %v721
        %v724 = vunpack.c.l.s4 1983009808
        %v725 = vunpack.c.0.s8 %v724
        %v726 = vlaneseq
        %v727 = vshrl.u32 %v726, 7
        %v728 = vsub.s32 %v725, %v727
        %v729 = vrot.slane %v715, %v728
        %v730 = vcombine.high %v722, %v722
        %v731 = vcombine.high %v729, %v729
        %v732 = vcombine.high %v412, %v412
        %v734 = vunpack.c.l.s4 1983009808
        %v735 = vunpack.c.0.s8 %v734
        %v736 = vlaneseq
        %v737 = vshrl.u32 %v736, 7
        %v738 = vsub.s32 %v735, %v737
        %v739 = vrot.slane %v412, %v738
        %v741 = vunpack.c.l.s4 1983009808
        %v742 = vunpack.c.0.s8 %v741
        %v743 = vlaneseq
        %v744 = vshrl.u32 %v743, 7
        %v745 = vsub.s32 %v742, %v744
        %v746 = vrot.slane %v732, %v745
        %v747 = vcombine.high %v739, %v739
        %v748 = vcombine.high %v746, %v746
        %v749 = vcombine.high %v413, %v413
        %v751 = vunpack.c.l.s4 1983009808
        %v752 = vunpack.c.0.s8 %v751
        %v753 = vlaneseq
        %v754 = vshrl.u32 %v753, 7
        %v755 = vsub.s32 %v752, %v754
        %v756 = vrot.slane %v413, %v755
        %v758 = vunpack.c.l.s4 1983009808
        %v759 = vunpack.c.0.s8 %v758
        %v760 = vlaneseq
        %v761 = vshrl.u32 %v760, 7
        %v762 = vsub.s32 %v759, %v761
        %v763 = vrot.slane %v749, %v762
        %v764 = vcombine.high %v756, %v756
        %v765 = vcombine.high %v763, %v763
        %v766 = vcombine.high %v414, %v414
        %v768 = vunpack.c.l.s4 1983009808
        %v769 = vunpack.c.0.s8 %v768
        %v770 = vlaneseq
        %v771 = vshrl.u32 %v770, 7
        %v772 = vsub.s32 %v769, %v771
        %v773 = vrot.slane %v414, %v772
        %v775 = vunpack.c.l.s4 1983009808
        %v776 = vunpack.c.0.s8 %v775
        %v777 = vlaneseq
        %v778 = vshrl.u32 %v777, 7
        %v779 = vsub.s32 %v776, %v778
        %v780 = vrot.slane %v766, %v779
        %v781 = vcombine.high %v773, %v773
        %v782 = vcombine.high %v780, %v780
        %v783 = vcombine.high %v415, %v415
        %v785 = vunpack.c.l.s4 1983009808
        %v786 = vunpack.c.0.s8 %v785
        %v787 = vlaneseq
        %v788 = vshrl.u32 %v787, 7
        %v789 = vsub.s32 %v786, %v788
        %v790 = vrot.slane %v415, %v789
        %v792 = vunpack.c.l.s4 1983009808
        %v793 = vunpack.c.0.s8 %v792
        %v794 = vlaneseq
        %v795 = vshrl.u32 %v794, 7
        %v796 = vsub.s32 %v793, %v795
        %v797 = vrot.slane %v783, %v796
        %v798 = vcombine.high %v790, %v790
        %v799 = vcombine.high %v797, %v797
        %v800 = vcombine.high %v416, %v416
        %v802 = vunpack.c.l.s4 1983009808
        %v803 = vunpack.c.0.s8 %v802
        %v804 = vlaneseq
        %v805 = vshrl.u32 %v804, 7
        %v806 = vsub.s32 %v803, %v805
        %v807 = vrot.slane %v416, %v806
        %v809 = vunpack.c.l.s4 1983009808
        %v810 = vunpack.c.0.s8 %v809
        %v811 = vlaneseq
        %v812 = vshrl.u32 %v811, 7
        %v813 = vsub.s32 %v810, %v812
        %v814 = vrot.slane %v800, %v813
        %v815 = vcombine.high %v807, %v807
        %v816 = vcombine.high %v814, %v814
        %v817 = vcombine.high %v417, %v417
        %v819 = vunpack.c.l.s4 1983009808
        %v820 = vunpack.c.0.s8 %v819
        %v821 = vlaneseq
        %v822 = vshrl.u32 %v821, 7
        %v823 = vsub.s32 %v820, %v822
        %v824 = vrot.slane %v417, %v823
        %v826 = vunpack.c.l.s4 1983009808
        %v827 = vunpack.c.0.s8 %v826
        %v828 = vlaneseq
        %v829 = vshrl.u32 %v828, 7
        %v830 = vsub.s32 %v827, %v829
        %v831 = vrot.slane %v817, %v830
        %v832 = vcombine.high %v824, %v824
        %v833 = vcombine.high %v831, %v831
        %v834 = vcombine.high %v418, %v418
        %v836 = vunpack.c.l.s4 1983009808
        %v837 = vunpack.c.0.s8 %v836
        %v838 = vlaneseq
        %v839 = vshrl.u32 %v838, 7
        %v840 = vsub.s32 %v837, %v839
        %v841 = vrot.slane %v418, %v840
        %v843 = vunpack.c.l.s4 1983009808
        %v844 = vunpack.c.0.s8 %v843
        %v845 = vlaneseq
        %v846 = vshrl.u32 %v845, 7
        %v847 = vsub.s32 %v844, %v846
        %v848 = vrot.slane %v834, %v847
        %v849 = vcombine.high %v841, %v841
        %v850 = vcombine.high %v848, %v848
        %v947 = vpack.c.bf16 %v450, %v450
        %v948 = vpack.c.bf16 %v458, %v458
        %v949 = vpack.c.bf16 %v457, %v457
        %v950 = vpack.c.bf16 %v459, %v459
        %v951 = vpack.c.bf16 %v467, %v467
        %v952 = vpack.c.bf16 %v475, %v475
        %v953 = vpack.c.bf16 %v474, %v474
        %v954 = vpack.c.bf16 %v476, %v476
        %v955 = vpack.c.bf16 %v484, %v484
        %v956 = vpack.c.bf16 %v492, %v492
        %v957 = vpack.c.bf16 %v491, %v491
        %v958 = vpack.c.bf16 %v493, %v493
        %v959 = vpack.c.bf16 %v501, %v501
        %v960 = vpack.c.bf16 %v509, %v509
        %v961 = vpack.c.bf16 %v508, %v508
        %v962 = vpack.c.bf16 %v510, %v510
        %v963 = vpack.c.bf16 %v518, %v518
        %v964 = vpack.c.bf16 %v526, %v526
        %v965 = vpack.c.bf16 %v525, %v525
        %v966 = vpack.c.bf16 %v527, %v527
        %v967 = vpack.c.bf16 %v535, %v535
        %v968 = vpack.c.bf16 %v543, %v543
        %v969 = vpack.c.bf16 %v542, %v542
        %v970 = vpack.c.bf16 %v544, %v544
        %v971 = vpack.c.bf16 %v552, %v552
        %v972 = vpack.c.bf16 %v560, %v560
        %v973 = vpack.c.bf16 %v559, %v559
        %v974 = vpack.c.bf16 %v561, %v561
        %v975 = vpack.c.bf16 %v569, %v569
        %v976 = vpack.c.bf16 %v577, %v577
        %v977 = vpack.c.bf16 %v576, %v576
        %v978 = vpack.c.bf16 %v578, %v578
        %v979 = vpack.c.bf16 %v586, %v586
        %v980 = vpack.c.bf16 %v594, %v594
        %v981 = vpack.c.bf16 %v593, %v593
        %v982 = vpack.c.bf16 %v595, %v595
        %v983 = vpack.c.bf16 %v603, %v603
        %v984 = vpack.c.bf16 %v611, %v611
        %v985 = vpack.c.bf16 %v610, %v610
        %v986 = vpack.c.bf16 %v612, %v612
        %v987 = vpack.c.bf16 %v620, %v620
        %v988 = vpack.c.bf16 %v628, %v628
        %v989 = vpack.c.bf16 %v627, %v627
        %v990 = vpack.c.bf16 %v629, %v629
        %v991 = vpack.c.bf16 %v637, %v637
        %v992 = vpack.c.bf16 %v645, %v645
        %v993 = vpack.c.bf16 %v644, %v644
        %v994 = vpack.c.bf16 %v646, %v646
        %v995 = vpack.c.bf16 %v654, %v654
        %v996 = vpack.c.bf16 %v662, %v662
        %v997 = vpack.c.bf16 %v661, %v661
        %v998 = vpack.c.bf16 %v663, %v663
        %v999 = vpack.c.bf16 %v671, %v671
        %v1000 = vpack.c.bf16 %v679, %v679
        %v1001 = vpack.c.bf16 %v678, %v678
        %v1002 = vpack.c.bf16 %v680, %v680
        %v1003 = vpack.c.bf16 %v688, %v688
        %v1004 = vpack.c.bf16 %v696, %v696
        %v1005 = vpack.c.bf16 %v695, %v695
        %v1006 = vpack.c.bf16 %v697, %v697
        %v1007 = vpack.c.bf16 %v705, %v705
        %v1008 = vpack.c.bf16 %v713, %v713
        %v1009 = vpack.c.bf16 %v712, %v712
        %v1010 = vpack.c.bf16 %v714, %v714
        %v1011 = vpack.c.bf16 %v722, %v722
        %v1012 = vpack.c.bf16 %v730, %v730
        %v1013 = vpack.c.bf16 %v729, %v729
        %v1014 = vpack.c.bf16 %v731, %v731
        %v1015 = vpack.c.bf16 %v739, %v739
        %v1016 = vpack.c.bf16 %v747, %v747
        %v1017 = vpack.c.bf16 %v746, %v746
        %v1018 = vpack.c.bf16 %v748, %v748
        %v1019 = vpack.c.bf16 %v756, %v756
        %v1020 = vpack.c.bf16 %v764, %v764
        %v1021 = vpack.c.bf16 %v763, %v763
        %v1022 = vpack.c.bf16 %v765, %v765
        %v1023 = vpack.c.bf16 %v773, %v773
        %v1024 = vpack.c.bf16 %v781, %v781
        %v1025 = vpack.c.bf16 %v780, %v780
        %v1026 = vpack.c.bf16 %v782, %v782
        %v1027 = vpack.c.bf16 %v790, %v790
        %v1028 = vpack.c.bf16 %v798, %v798
        %v1029 = vpack.c.bf16 %v797, %v797
        %v1030 = vpack.c.bf16 %v799, %v799
        %v1031 = vpack.c.bf16 %v807, %v807
        %v1032 = vpack.c.bf16 %v815, %v815
        %v1033 = vpack.c.bf16 %v814, %v814
        %v1034 = vpack.c.bf16 %v816, %v816
        %v1035 = vpack.c.bf16 %v824, %v824
        %v1036 = vpack.c.bf16 %v832, %v832
        %v1037 = vpack.c.bf16 %v831, %v831
        %v1038 = vpack.c.bf16 %v833, %v833
        %v1039 = vpack.c.bf16 %v841, %v841
        %v1040 = vpack.c.bf16 %v849, %v849
        %v1041 = vpack.c.bf16 %v848, %v848
        %v1042 = vpack.c.bf16 %v850, %v850
        %v1043 = vld [vmem:[%s345] sm:$0xff]
        %v1044 = vld [vmem:[%s345 + $0x8] sm:$0xff]
        %v1045 = vld [vmem:[%s345 + $0x10] sm:$0xff]
        %v1046 = vld [vmem:[%s345 + $0x18] sm:$0xff]
        %v1047 = vld [vmem:[%s345 + $0x20] sm:$0xff]
        %v1048 = vld [vmem:[%s345 + $0x28] sm:$0xff]
        %v1049 = vld [vmem:[%s345 + $0x30] sm:$0xff]
        %v1050 = vld [vmem:[%s345 + $0x38] sm:$0xff]
        %v1051 = vld [vmem:[%s345 + $0x40] sm:$0xff]
        %v1052 = vld [vmem:[%s345 + $0x48] sm:$0xff]
        %v1053 = vld [vmem:[%s345 + $0x50] sm:$0xff]
        %v1054 = vld [vmem:[%s345 + $0x58] sm:$0xff]
        %v1055 = vld [vmem:[%s345 + $0x60] sm:$0xff]
        %v1056 = vld [vmem:[%s345 + $0x68] sm:$0xff]
        %v1057 = vld [vmem:[%s345 + $0x70] sm:$0xff]
        %v1058 = vld [vmem:[%s345 + $0x78] sm:$0xff]
        %v1059 = vld [vmem:[%s345 + $0x80] sm:$0xff]
        %v1060 = vld [vmem:[%s345 + $0x88] sm:$0xff]
        %v1061 = vld [vmem:[%s345 + $0x90] sm:$0xff]
        %v1062 = vld [vmem:[%s345 + $0x98] sm:$0xff]
        %v1063 = vld [vmem:[%s345 + $0xa0] sm:$0xff]
        %v1064 = vld [vmem:[%s345 + $0xa8] sm:$0xff]
        %v1065 = vld [vmem:[%s345 + $0xb0] sm:$0xff]
        %v1066 = vld [vmem:[%s345 + $0xb8] sm:$0xff]
        %v1067 = vld [vmem:[%s345 + $0xc0] sm:$0xff]
        %v1068 = vld [vmem:[%s345 + $0xc8] sm:$0xff]
        %v1069 = vld [vmem:[%s345 + $0xd0] sm:$0xff]
        %v1070 = vld [vmem:[%s345 + $0xd8] sm:$0xff]
        %v1071 = vld [vmem:[%s345 + $0xe0] sm:$0xff]
        %v1072 = vld [vmem:[%s345 + $0xe8] sm:$0xff]
        %v1073 = vld [vmem:[%s345 + $0xf0] sm:$0xff]
        %v1074 = vld [vmem:[%s345 + $0xf8] sm:$0xff]
        %v1075 = vld [vmem:[%s345 + $0x100] sm:$0xff]
        %v1076 = vld [vmem:[%s345 + $0x108] sm:$0xff]
        %v1077 = vld [vmem:[%s345 + $0x110] sm:$0xff]
        %v1078 = vld [vmem:[%s345 + $0x118] sm:$0xff]
        %v1079 = vld [vmem:[%s345 + $0x120] sm:$0xff]
        %v1080 = vld [vmem:[%s345 + $0x128] sm:$0xff]
        %v1081 = vld [vmem:[%s345 + $0x130] sm:$0xff]
        %v1082 = vld [vmem:[%s345 + $0x138] sm:$0xff]
        %v1083 = vld [vmem:[%s345 + $0x140] sm:$0xff]
        %v1084 = vld [vmem:[%s345 + $0x148] sm:$0xff]
        %v1085 = vld [vmem:[%s345 + $0x150] sm:$0xff]
        %v1086 = vld [vmem:[%s345 + $0x158] sm:$0xff]
        %v1087 = vld [vmem:[%s345 + $0x160] sm:$0xff]
        %v1088 = vld [vmem:[%s345 + $0x168] sm:$0xff]
        %v1089 = vld [vmem:[%s345 + $0x170] sm:$0xff]
        %v1090 = vld [vmem:[%s345 + $0x178] sm:$0xff]
        %v1091 = vld [vmem:[%s345 + $0x180] sm:$0xff]
        %v1092 = vld [vmem:[%s345 + $0x188] sm:$0xff]
        %v1093 = vld [vmem:[%s345 + $0x190] sm:$0xff]
        %v1094 = vld [vmem:[%s345 + $0x198] sm:$0xff]
        %v1095 = vld [vmem:[%s345 + $0x1a0] sm:$0xff]
        %v1096 = vld [vmem:[%s345 + $0x1a8] sm:$0xff]
        %v1097 = vld [vmem:[%s345 + $0x1b0] sm:$0xff]
        %v1098 = vld [vmem:[%s345 + $0x1b8] sm:$0xff]
        %v1099 = vld [vmem:[%s345 + $0x1c0] sm:$0xff]
        %v1100 = vld [vmem:[%s345 + $0x1c8] sm:$0xff]
        %v1101 = vld [vmem:[%s345 + $0x1d0] sm:$0xff]
        %v1102 = vld [vmem:[%s345 + $0x1d8] sm:$0xff]
        %v1103 = vld [vmem:[%s345 + $0x1e0] sm:$0xff]
        %v1104 = vld [vmem:[%s345 + $0x1e8] sm:$0xff]
        %v1105 = vld [vmem:[%s345 + $0x1f0] sm:$0xff]
        %v1106 = vld [vmem:[%s345 + $0x1f8] sm:$0xff]
        %v1107 = vld [vmem:[%s345 + $0x200] sm:$0xff]
        %v1108 = vld [vmem:[%s345 + $0x208] sm:$0xff]
        %v1109 = vld [vmem:[%s345 + $0x210] sm:$0xff]
        %v1110 = vld [vmem:[%s345 + $0x218] sm:$0xff]
        %v1111 = vld [vmem:[%s345 + $0x220] sm:$0xff]
        %v1112 = vld [vmem:[%s345 + $0x228] sm:$0xff]
        %v1113 = vld [vmem:[%s345 + $0x230] sm:$0xff]
        %v1114 = vld [vmem:[%s345 + $0x238] sm:$0xff]
        %v1115 = vld [vmem:[%s345 + $0x240] sm:$0xff]
        %v1116 = vld [vmem:[%s345 + $0x248] sm:$0xff]
        %v1117 = vld [vmem:[%s345 + $0x250] sm:$0xff]
        %v1118 = vld [vmem:[%s345 + $0x258] sm:$0xff]
        %v1119 = vld [vmem:[%s345 + $0x260] sm:$0xff]
        %v1120 = vld [vmem:[%s345 + $0x268] sm:$0xff]
        %v1121 = vld [vmem:[%s345 + $0x270] sm:$0xff]
        %v1122 = vld [vmem:[%s345 + $0x278] sm:$0xff]
        %v1123 = vld [vmem:[%s345 + $0x280] sm:$0xff]
        %v1124 = vld [vmem:[%s345 + $0x288] sm:$0xff]
        %v1125 = vld [vmem:[%s345 + $0x290] sm:$0xff]
        %v1126 = vld [vmem:[%s345 + $0x298] sm:$0xff]
        %v1127 = vld [vmem:[%s345 + $0x2a0] sm:$0xff]
        %v1128 = vld [vmem:[%s345 + $0x2a8] sm:$0xff]
        %v1129 = vld [vmem:[%s345 + $0x2b0] sm:$0xff]
        %v1130 = vld [vmem:[%s345 + $0x2b8] sm:$0xff]
        %v1131 = vld [vmem:[%s345 + $0x2c0] sm:$0xff]
        %v1132 = vld [vmem:[%s345 + $0x2c8] sm:$0xff]
        %v1133 = vld [vmem:[%s345 + $0x2d0] sm:$0xff]
        %v1134 = vld [vmem:[%s345 + $0x2d8] sm:$0xff]
        %v1135 = vld [vmem:[%s345 + $0x2e0] sm:$0xff]
        %v1136 = vld [vmem:[%s345 + $0x2e8] sm:$0xff]
        %v1137 = vld [vmem:[%s345 + $0x2f0] sm:$0xff]
        %v1138 = vld [vmem:[%s345 + $0x2f8] sm:$0xff]
        %v1139 = vld [vmem:[%s345 + $0x300] sm:$0xff]
        %v1140 = vld [vmem:[%s345 + $0x308] sm:$0xff]
        %v1141 = vld [vmem:[%s345 + $0x310] sm:$0xff]
        %v1142 = vld [vmem:[%s345 + $0x318] sm:$0xff]
        %v1143 = vld [vmem:[%s345 + $0x320] sm:$0xff]
        %v1144 = vld [vmem:[%s345 + $0x328] sm:$0xff]
        %v1145 = vld [vmem:[%s345 + $0x330] sm:$0xff]
        %v1146 = vld [vmem:[%s345 + $0x338] sm:$0xff]
        %v1147 = vld [vmem:[%s345 + $0x340] sm:$0xff]
        %v1148 = vld [vmem:[%s345 + $0x348] sm:$0xff]
        %v1149 = vld [vmem:[%s345 + $0x350] sm:$0xff]
        %v1150 = vld [vmem:[%s345 + $0x358] sm:$0xff]
        %v1151 = vld [vmem:[%s345 + $0x360] sm:$0xff]
        %v1152 = vld [vmem:[%s345 + $0x368] sm:$0xff]
        %v1153 = vld [vmem:[%s345 + $0x370] sm:$0xff]
        %v1154 = vld [vmem:[%s345 + $0x378] sm:$0xff]
        %v1155 = vld [vmem:[%s345 + $0x380] sm:$0xff]
        %v1156 = vld [vmem:[%s345 + $0x388] sm:$0xff]
        %v1157 = vld [vmem:[%s345 + $0x390] sm:$0xff]
        %v1158 = vld [vmem:[%s345 + $0x398] sm:$0xff]
        %v1159 = vld [vmem:[%s345 + $0x3a0] sm:$0xff]
        %v1160 = vld [vmem:[%s345 + $0x3a8] sm:$0xff]
        %v1161 = vld [vmem:[%s345 + $0x3b0] sm:$0xff]
        %v1162 = vld [vmem:[%s345 + $0x3b8] sm:$0xff]
        %v1163 = vld [vmem:[%s345 + $0x3c0] sm:$0xff]
        %v1164 = vld [vmem:[%s345 + $0x3c8] sm:$0xff]
        %v1165 = vld [vmem:[%s345 + $0x3d0] sm:$0xff]
        %v1166 = vld [vmem:[%s345 + $0x3d8] sm:$0xff]
        %v1167 = vld [vmem:[%s345 + $0x3e0] sm:$0xff]
        %v1168 = vld [vmem:[%s345 + $0x3e8] sm:$0xff]
        %v1169 = vld [vmem:[%s345 + $0x3f0] sm:$0xff]
        %v1170 = vld [vmem:[%s345 + $0x3f8] sm:$0xff]
        %v1171 = vld [vmem:[%s345 + $0x400] sm:$0xff]
        %v1172 = vld [vmem:[%s345 + $0x408] sm:$0xff]
        %v1173 = vld [vmem:[%s345 + $0x410] sm:$0xff]
        %v1174 = vld [vmem:[%s345 + $0x418] sm:$0xff]
        %v1175 = vld [vmem:[%s345 + $0x420] sm:$0xff]
        %v1176 = vld [vmem:[%s345 + $0x428] sm:$0xff]
        %v1177 = vld [vmem:[%s345 + $0x430] sm:$0xff]
        %v1178 = vld [vmem:[%s345 + $0x438] sm:$0xff]
        %v1179 = vld [vmem:[%s345 + $0x440] sm:$0xff]
        %v1180 = vld [vmem:[%s345 + $0x448] sm:$0xff]
        %v1181 = vld [vmem:[%s345 + $0x450] sm:$0xff]
        %v1182 = vld [vmem:[%s345 + $0x458] sm:$0xff]
        %v1183 = vld [vmem:[%s345 + $0x460] sm:$0xff]
        %v1184 = vld [vmem:[%s345 + $0x468] sm:$0xff]
        %v1185 = vld [vmem:[%s345 + $0x470] sm:$0xff]
        %v1186 = vld [vmem:[%s345 + $0x478] sm:$0xff]
        %v1187 = vld [vmem:[%s345 + $0x480] sm:$0xff]
        %v1188 = vld [vmem:[%s345 + $0x488] sm:$0xff]
        %v1189 = vld [vmem:[%s345 + $0x490] sm:$0xff]
        %v1190 = vld [vmem:[%s345 + $0x498] sm:$0xff]
        %v1191 = vld [vmem:[%s345 + $0x4a0] sm:$0xff]
        %v1192 = vld [vmem:[%s345 + $0x4a8] sm:$0xff]
        %v1193 = vld [vmem:[%s345 + $0x4b0] sm:$0xff]
        %v1194 = vld [vmem:[%s345 + $0x4b8] sm:$0xff]
        %v1195 = vld [vmem:[%s345 + $0x4c0] sm:$0xff]
        %v1196 = vld [vmem:[%s345 + $0x4c8] sm:$0xff]
        %v1197 = vld [vmem:[%s345 + $0x4d0] sm:$0xff]
        %v1198 = vld [vmem:[%s345 + $0x4d8] sm:$0xff]
        %v1199 = vld [vmem:[%s345 + $0x4e0] sm:$0xff]
        %v1200 = vld [vmem:[%s345 + $0x4e8] sm:$0xff]
        %v1201 = vld [vmem:[%s345 + $0x4f0] sm:$0xff]
        %v1202 = vld [vmem:[%s345 + $0x4f8] sm:$0xff]
        %v1203 = vld [vmem:[%s345 + $0x500] sm:$0xff]
        %v1204 = vld [vmem:[%s345 + $0x508] sm:$0xff]
        %v1205 = vld [vmem:[%s345 + $0x510] sm:$0xff]
        %v1206 = vld [vmem:[%s345 + $0x518] sm:$0xff]
        %v1207 = vld [vmem:[%s345 + $0x520] sm:$0xff]
        %v1208 = vld [vmem:[%s345 + $0x528] sm:$0xff]
        %v1209 = vld [vmem:[%s345 + $0x530] sm:$0xff]
        %v1210 = vld [vmem:[%s345 + $0x538] sm:$0xff]
        %v1211 = vld [vmem:[%s345 + $0x540] sm:$0xff]
        %v1212 = vld [vmem:[%s345 + $0x548] sm:$0xff]
        %v1213 = vld [vmem:[%s345 + $0x550] sm:$0xff]
        %v1214 = vld [vmem:[%s345 + $0x558] sm:$0xff]
        %v1215 = vld [vmem:[%s345 + $0x560] sm:$0xff]
        %v1216 = vld [vmem:[%s345 + $0x568] sm:$0xff]
        %v1217 = vld [vmem:[%s345 + $0x570] sm:$0xff]
        %v1218 = vld [vmem:[%s345 + $0x578] sm:$0xff]
        %v1219 = vld [vmem:[%s345 + $0x580] sm:$0xff]
        %v1220 = vld [vmem:[%s345 + $0x588] sm:$0xff]
        %v1221 = vld [vmem:[%s345 + $0x590] sm:$0xff]
        %v1222 = vld [vmem:[%s345 + $0x598] sm:$0xff]
        %v1223 = vld [vmem:[%s345 + $0x5a0] sm:$0xff]
        %v1224 = vld [vmem:[%s345 + $0x5a8] sm:$0xff]
        %v1225 = vld [vmem:[%s345 + $0x5b0] sm:$0xff]
        %v1226 = vld [vmem:[%s345 + $0x5b8] sm:$0xff]
        %v1227 = vld [vmem:[%s345 + $0x5c0] sm:$0xff]
        %v1228 = vld [vmem:[%s345 + $0x5c8] sm:$0xff]
        %v1229 = vld [vmem:[%s345 + $0x5d0] sm:$0xff]
        %v1230 = vld [vmem:[%s345 + $0x5d8] sm:$0xff]
        %v1231 = vld [vmem:[%s345 + $0x5e0] sm:$0xff]
        %v1232 = vld [vmem:[%s345 + $0x5e8] sm:$0xff]
        %v1233 = vld [vmem:[%s345 + $0x5f0] sm:$0xff]
        %v1234 = vld [vmem:[%s345 + $0x5f8] sm:$0xff]
        %v1235 = vld [vmem:[%s345 + $0x600] sm:$0xff]
        %v1236 = vld [vmem:[%s345 + $0x608] sm:$0xff]
        %v1237 = vld [vmem:[%s345 + $0x610] sm:$0xff]
        %v1238 = vld [vmem:[%s345 + $0x618] sm:$0xff]
        %v1239 = vld [vmem:[%s345 + $0x620] sm:$0xff]
        %v1240 = vld [vmem:[%s345 + $0x628] sm:$0xff]
        %v1241 = vld [vmem:[%s345 + $0x630] sm:$0xff]
        %v1242 = vld [vmem:[%s345 + $0x638] sm:$0xff]
        %v1243 = vld [vmem:[%s345 + $0x640] sm:$0xff]
        %v1244 = vld [vmem:[%s345 + $0x648] sm:$0xff]
        %v1245 = vld [vmem:[%s345 + $0x650] sm:$0xff]
        %v1246 = vld [vmem:[%s345 + $0x658] sm:$0xff]
        %v1247 = vld [vmem:[%s345 + $0x660] sm:$0xff]
        %v1248 = vld [vmem:[%s345 + $0x668] sm:$0xff]
        %v1249 = vld [vmem:[%s345 + $0x670] sm:$0xff]
        %v1250 = vld [vmem:[%s345 + $0x678] sm:$0xff]
        %v1251 = vld [vmem:[%s345 + $0x680] sm:$0xff]
        %v1252 = vld [vmem:[%s345 + $0x688] sm:$0xff]
        %v1253 = vld [vmem:[%s345 + $0x690] sm:$0xff]
        %v1254 = vld [vmem:[%s345 + $0x698] sm:$0xff]
        %v1255 = vld [vmem:[%s345 + $0x6a0] sm:$0xff]
        %v1256 = vld [vmem:[%s345 + $0x6a8] sm:$0xff]
        %v1257 = vld [vmem:[%s345 + $0x6b0] sm:$0xff]
        %v1258 = vld [vmem:[%s345 + $0x6b8] sm:$0xff]
        %v1259 = vld [vmem:[%s345 + $0x6c0] sm:$0xff]
        %v1260 = vld [vmem:[%s345 + $0x6c8] sm:$0xff]
        %v1261 = vld [vmem:[%s345 + $0x6d0] sm:$0xff]
        %v1262 = vld [vmem:[%s345 + $0x6d8] sm:$0xff]
        %v1263 = vld [vmem:[%s345 + $0x6e0] sm:$0xff]
        %v1264 = vld [vmem:[%s345 + $0x6e8] sm:$0xff]
        %v1265 = vld [vmem:[%s345 + $0x6f0] sm:$0xff]
        %v1266 = vld [vmem:[%s345 + $0x6f8] sm:$0xff]
        %v1267 = vld [vmem:[%s345 + $0x700] sm:$0xff]
        %v1268 = vld [vmem:[%s345 + $0x708] sm:$0xff]
        %v1269 = vld [vmem:[%s345 + $0x710] sm:$0xff]
        %v1270 = vld [vmem:[%s345 + $0x718] sm:$0xff]
        %v1271 = vld [vmem:[%s345 + $0x720] sm:$0xff]
        %v1272 = vld [vmem:[%s345 + $0x728] sm:$0xff]
        %v1273 = vld [vmem:[%s345 + $0x730] sm:$0xff]
        %v1274 = vld [vmem:[%s345 + $0x738] sm:$0xff]
        %v1275 = vld [vmem:[%s345 + $0x740] sm:$0xff]
        %v1276 = vld [vmem:[%s345 + $0x748] sm:$0xff]
        %v1277 = vld [vmem:[%s345 + $0x750] sm:$0xff]
        %v1278 = vld [vmem:[%s345 + $0x758] sm:$0xff]
        %v1279 = vld [vmem:[%s345 + $0x760] sm:$0xff]
        %v1280 = vld [vmem:[%s345 + $0x768] sm:$0xff]
        %v1281 = vld [vmem:[%s345 + $0x770] sm:$0xff]
        %v1282 = vld [vmem:[%s345 + $0x778] sm:$0xff]
        %v1283 = vld [vmem:[%s345 + $0x780] sm:$0xff]
        %v1284 = vld [vmem:[%s345 + $0x788] sm:$0xff]
        %v1285 = vld [vmem:[%s345 + $0x790] sm:$0xff]
        %v1286 = vld [vmem:[%s345 + $0x798] sm:$0xff]
        %v1287 = vld [vmem:[%s345 + $0x7a0] sm:$0xff]
        %v1288 = vld [vmem:[%s345 + $0x7a8] sm:$0xff]
        %v1289 = vld [vmem:[%s345 + $0x7b0] sm:$0xff]
        %v1290 = vld [vmem:[%s345 + $0x7b8] sm:$0xff]
        %v1291 = vld [vmem:[%s345 + $0x7c0] sm:$0xff]
        %v1292 = vld [vmem:[%s345 + $0x7c8] sm:$0xff]
        %v1293 = vld [vmem:[%s345 + $0x7d0] sm:$0xff]
        %v1294 = vld [vmem:[%s345 + $0x7d8] sm:$0xff]
        %v1295 = vld [vmem:[%s345 + $0x7e0] sm:$0xff]
        %v1296 = vld [vmem:[%s345 + $0x7e8] sm:$0xff]
        %v1297 = vld [vmem:[%s345 + $0x7f0] sm:$0xff]
        %v1298 = vld [vmem:[%s345 + $0x7f8] sm:$0xff]
        %v1299 = vld [vmem:[%s345 + $0x800] sm:$0xff]
        %v1300 = vld [vmem:[%s345 + $0x808] sm:$0xff]
        %v1301 = vld [vmem:[%s345 + $0x810] sm:$0xff]
        %v1302 = vld [vmem:[%s345 + $0x818] sm:$0xff]
        %v1303 = vld [vmem:[%s345 + $0x820] sm:$0xff]
        %v1304 = vld [vmem:[%s345 + $0x828] sm:$0xff]
        %v1305 = vld [vmem:[%s345 + $0x830] sm:$0xff]
        %v1306 = vld [vmem:[%s345 + $0x838] sm:$0xff]
        %v1307 = vld [vmem:[%s345 + $0x840] sm:$0xff]
        %v1308 = vld [vmem:[%s345 + $0x848] sm:$0xff]
        %v1309 = vld [vmem:[%s345 + $0x850] sm:$0xff]
        %v1310 = vld [vmem:[%s345 + $0x858] sm:$0xff]
        %v1311 = vld [vmem:[%s345 + $0x860] sm:$0xff]
        %v1312 = vld [vmem:[%s345 + $0x868] sm:$0xff]
        %v1313 = vld [vmem:[%s345 + $0x870] sm:$0xff]
        %v1314 = vld [vmem:[%s345 + $0x878] sm:$0xff]
        %v1315 = vld [vmem:[%s345 + $0x880] sm:$0xff]
        %v1316 = vld [vmem:[%s345 + $0x888] sm:$0xff]
        %v1317 = vld [vmem:[%s345 + $0x890] sm:$0xff]
        %v1318 = vld [vmem:[%s345 + $0x898] sm:$0xff]
        %v1319 = vld [vmem:[%s345 + $0x8a0] sm:$0xff]
        %v1320 = vld [vmem:[%s345 + $0x8a8] sm:$0xff]
        %v1321 = vld [vmem:[%s345 + $0x8b0] sm:$0xff]
        %v1322 = vld [vmem:[%s345 + $0x8b8] sm:$0xff]
        %v1323 = vld [vmem:[%s345 + $0x8c0] sm:$0xff]
        %v1324 = vld [vmem:[%s345 + $0x8c8] sm:$0xff]
        %v1325 = vld [vmem:[%s345 + $0x8d0] sm:$0xff]
        %v1326 = vld [vmem:[%s345 + $0x8d8] sm:$0xff]
        %v1327 = vld [vmem:[%s345 + $0x8e0] sm:$0xff]
        %v1328 = vld [vmem:[%s345 + $0x8e8] sm:$0xff]
        %v1329 = vld [vmem:[%s345 + $0x8f0] sm:$0xff]
        %v1330 = vld [vmem:[%s345 + $0x8f8] sm:$0xff]
        %v1331 = vld [vmem:[%s345 + $0x900] sm:$0xff]
        %v1332 = vld [vmem:[%s345 + $0x908] sm:$0xff]
        %v1333 = vld [vmem:[%s345 + $0x910] sm:$0xff]
        %v1334 = vld [vmem:[%s345 + $0x918] sm:$0xff]
        %v1335 = vld [vmem:[%s345 + $0x920] sm:$0xff]
        %v1336 = vld [vmem:[%s345 + $0x928] sm:$0xff]
        %v1337 = vld [vmem:[%s345 + $0x930] sm:$0xff]
        %v1338 = vld [vmem:[%s345 + $0x938] sm:$0xff]
        %v1339 = vld [vmem:[%s345 + $0x940] sm:$0xff]
        %v1340 = vld [vmem:[%s345 + $0x948] sm:$0xff]
        %v1341 = vld [vmem:[%s345 + $0x950] sm:$0xff]
        %v1342 = vld [vmem:[%s345 + $0x958] sm:$0xff]
        %v1343 = vld [vmem:[%s345 + $0x960] sm:$0xff]
        %v1344 = vld [vmem:[%s345 + $0x968] sm:$0xff]
        %v1345 = vld [vmem:[%s345 + $0x970] sm:$0xff]
        %v1346 = vld [vmem:[%s345 + $0x978] sm:$0xff]
        %v1347 = vld [vmem:[%s345 + $0x980] sm:$0xff]
        %v1348 = vld [vmem:[%s345 + $0x988] sm:$0xff]
        %v1349 = vld [vmem:[%s345 + $0x990] sm:$0xff]
        %v1350 = vld [vmem:[%s345 + $0x998] sm:$0xff]
        %v1351 = vld [vmem:[%s345 + $0x9a0] sm:$0xff]
        %v1352 = vld [vmem:[%s345 + $0x9a8] sm:$0xff]
        %v1353 = vld [vmem:[%s345 + $0x9b0] sm:$0xff]
        %v1354 = vld [vmem:[%s345 + $0x9b8] sm:$0xff]
        %v1355 = vld [vmem:[%s345 + $0x9c0] sm:$0xff]
        %v1356 = vld [vmem:[%s345 + $0x9c8] sm:$0xff]
        %v1357 = vld [vmem:[%s345 + $0x9d0] sm:$0xff]
        %v1358 = vld [vmem:[%s345 + $0x9d8] sm:$0xff]
        %v1359 = vld [vmem:[%s345 + $0x9e0] sm:$0xff]
        %v1360 = vld [vmem:[%s345 + $0x9e8] sm:$0xff]
        %v1361 = vld [vmem:[%s345 + $0x9f0] sm:$0xff]
        %v1362 = vld [vmem:[%s345 + $0x9f8] sm:$0xff]
        %v1363 = vld [vmem:[%s345 + $0xa00] sm:$0xff]
        %v1364 = vld [vmem:[%s345 + $0xa08] sm:$0xff]
        %v1365 = vld [vmem:[%s345 + $0xa10] sm:$0xff]
        %v1366 = vld [vmem:[%s345 + $0xa18] sm:$0xff]
        %v1367 = vld [vmem:[%s345 + $0xa20] sm:$0xff]
        %v1368 = vld [vmem:[%s345 + $0xa28] sm:$0xff]
        %v1369 = vld [vmem:[%s345 + $0xa30] sm:$0xff]
        %v1370 = vld [vmem:[%s345 + $0xa38] sm:$0xff]
        %v1371 = vld [vmem:[%s345 + $0xa40] sm:$0xff]
        %v1372 = vld [vmem:[%s345 + $0xa48] sm:$0xff]
        %v1373 = vld [vmem:[%s345 + $0xa50] sm:$0xff]
        %v1374 = vld [vmem:[%s345 + $0xa58] sm:$0xff]
        %v1375 = vld [vmem:[%s345 + $0xa60] sm:$0xff]
        %v1376 = vld [vmem:[%s345 + $0xa68] sm:$0xff]
        %v1377 = vld [vmem:[%s345 + $0xa70] sm:$0xff]
        %v1378 = vld [vmem:[%s345 + $0xa78] sm:$0xff]
        %v1379 = vld [vmem:[%s345 + $0xa80] sm:$0xff]
        %v1380 = vld [vmem:[%s345 + $0xa88] sm:$0xff]
        %v1381 = vld [vmem:[%s345 + $0xa90] sm:$0xff]
        %v1382 = vld [vmem:[%s345 + $0xa98] sm:$0xff]
        %v1383 = vld [vmem:[%s345 + $0xaa0] sm:$0xff]
        %v1384 = vld [vmem:[%s345 + $0xaa8] sm:$0xff]
        %v1385 = vld [vmem:[%s345 + $0xab0] sm:$0xff]
        %v1386 = vld [vmem:[%s345 + $0xab8] sm:$0xff]
        %v1387 = vld [vmem:[%s345 + $0xac0] sm:$0xff]
        %v1388 = vld [vmem:[%s345 + $0xac8] sm:$0xff]
        %v1389 = vld [vmem:[%s345 + $0xad0] sm:$0xff]
        %v1390 = vld [vmem:[%s345 + $0xad8] sm:$0xff]
        %v1391 = vld [vmem:[%s345 + $0xae0] sm:$0xff]
        %v1392 = vld [vmem:[%s345 + $0xae8] sm:$0xff]
        %v1393 = vld [vmem:[%s345 + $0xaf0] sm:$0xff]
        %v1394 = vld [vmem:[%s345 + $0xaf8] sm:$0xff]
        %v1395 = vld [vmem:[%s345 + $0xb00] sm:$0xff]
        %v1396 = vld [vmem:[%s345 + $0xb08] sm:$0xff]
        %v1397 = vld [vmem:[%s345 + $0xb10] sm:$0xff]
        %v1398 = vld [vmem:[%s345 + $0xb18] sm:$0xff]
        %v1399 = vld [vmem:[%s345 + $0xb20] sm:$0xff]
        %v1400 = vld [vmem:[%s345 + $0xb28] sm:$0xff]
        %v1401 = vld [vmem:[%s345 + $0xb30] sm:$0xff]
        %v1402 = vld [vmem:[%s345 + $0xb38] sm:$0xff]
        %v1403 = vld [vmem:[%s345 + $0xb40] sm:$0xff]
        %v1404 = vld [vmem:[%s345 + $0xb48] sm:$0xff]
        %v1405 = vld [vmem:[%s345 + $0xb50] sm:$0xff]
        %v1406 = vld [vmem:[%s345 + $0xb58] sm:$0xff]
        %v1407 = vld [vmem:[%s345 + $0xb60] sm:$0xff]
        %v1408 = vld [vmem:[%s345 + $0xb68] sm:$0xff]
        %v1409 = vld [vmem:[%s345 + $0xb70] sm:$0xff]
        %v1410 = vld [vmem:[%s345 + $0xb78] sm:$0xff]
        %v1411 = vld [vmem:[%s345 + $0xb80] sm:$0xff]
        %v1412 = vld [vmem:[%s345 + $0xb88] sm:$0xff]
        %v1413 = vld [vmem:[%s345 + $0xb90] sm:$0xff]
        %v1414 = vld [vmem:[%s345 + $0xb98] sm:$0xff]
        %v1415 = vld [vmem:[%s345 + $0xba0] sm:$0xff]
        %v1416 = vld [vmem:[%s345 + $0xba8] sm:$0xff]
        %v1417 = vld [vmem:[%s345 + $0xbb0] sm:$0xff]
        %v1418 = vld [vmem:[%s345 + $0xbb8] sm:$0xff]
        %v1419 = vld [vmem:[%s345 + $0xbc0] sm:$0xff]
        %v1420 = vld [vmem:[%s345 + $0xbc8] sm:$0xff]
        %v1421 = vld [vmem:[%s345 + $0xbd0] sm:$0xff]
        %v1422 = vld [vmem:[%s345 + $0xbd8] sm:$0xff]
        %v1423 = vld [vmem:[%s345 + $0xbe0] sm:$0xff]
        %v1424 = vld [vmem:[%s345 + $0xbe8] sm:$0xff]
        %v1425 = vld [vmem:[%s345 + $0xbf0] sm:$0xff]
        %v1426 = vld [vmem:[%s345 + $0xbf8] sm:$0xff]
        %v1427 = vld [vmem:[%s345 + $0xc00] sm:$0xff]
        %v1428 = vld [vmem:[%s345 + $0xc08] sm:$0xff]
        %v1429 = vld [vmem:[%s345 + $0xc10] sm:$0xff]
        %v1430 = vld [vmem:[%s345 + $0xc18] sm:$0xff]
        %v1431 = vld [vmem:[%s345 + $0xc20] sm:$0xff]
        %v1432 = vld [vmem:[%s345 + $0xc28] sm:$0xff]
        %v1433 = vld [vmem:[%s345 + $0xc30] sm:$0xff]
        %v1434 = vld [vmem:[%s345 + $0xc38] sm:$0xff]
        %v1435 = vld [vmem:[%s345 + $0xc40] sm:$0xff]
        %v1436 = vld [vmem:[%s345 + $0xc48] sm:$0xff]
        %v1437 = vld [vmem:[%s345 + $0xc50] sm:$0xff]
        %v1438 = vld [vmem:[%s345 + $0xc58] sm:$0xff]
        %v1439 = vld [vmem:[%s345 + $0xc60] sm:$0xff]
        %v1440 = vld [vmem:[%s345 + $0xc68] sm:$0xff]
        %v1441 = vld [vmem:[%s345 + $0xc70] sm:$0xff]
        %v1442 = vld [vmem:[%s345 + $0xc78] sm:$0xff]
        %v1443 = vld [vmem:[%s345 + $0xc80] sm:$0xff]
        %v1444 = vld [vmem:[%s345 + $0xc88] sm:$0xff]
        %v1445 = vld [vmem:[%s345 + $0xc90] sm:$0xff]
        %v1446 = vld [vmem:[%s345 + $0xc98] sm:$0xff]
        %v1447 = vld [vmem:[%s345 + $0xca0] sm:$0xff]
        %v1448 = vld [vmem:[%s345 + $0xca8] sm:$0xff]
        %v1449 = vld [vmem:[%s345 + $0xcb0] sm:$0xff]
        %v1450 = vld [vmem:[%s345 + $0xcb8] sm:$0xff]
        %v1451 = vld [vmem:[%s345 + $0xcc0] sm:$0xff]
        %v1452 = vld [vmem:[%s345 + $0xcc8] sm:$0xff]
        %v1453 = vld [vmem:[%s345 + $0xcd0] sm:$0xff]
        %v1454 = vld [vmem:[%s345 + $0xcd8] sm:$0xff]
        %v1455 = vld [vmem:[%s345 + $0xce0] sm:$0xff]
        %v1456 = vld [vmem:[%s345 + $0xce8] sm:$0xff]
        %v1457 = vld [vmem:[%s345 + $0xcf0] sm:$0xff]
        %v1458 = vld [vmem:[%s345 + $0xcf8] sm:$0xff]
        %v1459 = vld [vmem:[%s345 + $0xd00] sm:$0xff]
        %v1460 = vld [vmem:[%s345 + $0xd08] sm:$0xff]
        %v1461 = vld [vmem:[%s345 + $0xd10] sm:$0xff]
        %v1462 = vld [vmem:[%s345 + $0xd18] sm:$0xff]
        %v1463 = vld [vmem:[%s345 + $0xd20] sm:$0xff]
        %v1464 = vld [vmem:[%s345 + $0xd28] sm:$0xff]
        %v1465 = vld [vmem:[%s345 + $0xd30] sm:$0xff]
        %v1466 = vld [vmem:[%s345 + $0xd38] sm:$0xff]
        %v1467 = vld [vmem:[%s345 + $0xd40] sm:$0xff]
        %v1468 = vld [vmem:[%s345 + $0xd48] sm:$0xff]
        %v1469 = vld [vmem:[%s345 + $0xd50] sm:$0xff]
        %v1470 = vld [vmem:[%s345 + $0xd58] sm:$0xff]
        %v1471 = vld [vmem:[%s345 + $0xd60] sm:$0xff]
        %v1472 = vld [vmem:[%s345 + $0xd68] sm:$0xff]
        %v1473 = vld [vmem:[%s345 + $0xd70] sm:$0xff]
        %v1474 = vld [vmem:[%s345 + $0xd78] sm:$0xff]
        %v1475 = vld [vmem:[%s345 + $0xd80] sm:$0xff]
        %v1476 = vld [vmem:[%s345 + $0xd88] sm:$0xff]
        %v1477 = vld [vmem:[%s345 + $0xd90] sm:$0xff]
        %v1478 = vld [vmem:[%s345 + $0xd98] sm:$0xff]
        %v1479 = vld [vmem:[%s345 + $0xda0] sm:$0xff]
        %v1480 = vld [vmem:[%s345 + $0xda8] sm:$0xff]
        %v1481 = vld [vmem:[%s345 + $0xdb0] sm:$0xff]
        %v1482 = vld [vmem:[%s345 + $0xdb8] sm:$0xff]
        %v1483 = vld [vmem:[%s345 + $0xdc0] sm:$0xff]
        %v1484 = vld [vmem:[%s345 + $0xdc8] sm:$0xff]
        %v1485 = vld [vmem:[%s345 + $0xdd0] sm:$0xff]
        %v1486 = vld [vmem:[%s345 + $0xdd8] sm:$0xff]
        %v1487 = vld [vmem:[%s345 + $0xde0] sm:$0xff]
        %v1488 = vld [vmem:[%s345 + $0xde8] sm:$0xff]
        %v1489 = vld [vmem:[%s345 + $0xdf0] sm:$0xff]
        %v1490 = vld [vmem:[%s345 + $0xdf8] sm:$0xff]
        %v1491 = vld [vmem:[%s345 + $0xe00] sm:$0xff]
        %v1492 = vld [vmem:[%s345 + $0xe08] sm:$0xff]
        %v1493 = vld [vmem:[%s345 + $0xe10] sm:$0xff]
        %v1494 = vld [vmem:[%s345 + $0xe18] sm:$0xff]
        %v1495 = vld [vmem:[%s345 + $0xe20] sm:$0xff]
        %v1496 = vld [vmem:[%s345 + $0xe28] sm:$0xff]
        %v1497 = vld [vmem:[%s345 + $0xe30] sm:$0xff]
        %v1498 = vld [vmem:[%s345 + $0xe38] sm:$0xff]
        %v1499 = vld [vmem:[%s345 + $0xe40] sm:$0xff]
        %v1500 = vld [vmem:[%s345 + $0xe48] sm:$0xff]
        %v1501 = vld [vmem:[%s345 + $0xe50] sm:$0xff]
        %v1502 = vld [vmem:[%s345 + $0xe58] sm:$0xff]
        %v1503 = vld [vmem:[%s345 + $0xe60] sm:$0xff]
        %v1504 = vld [vmem:[%s345 + $0xe68] sm:$0xff]
        %v1505 = vld [vmem:[%s345 + $0xe70] sm:$0xff]
        %v1506 = vld [vmem:[%s345 + $0xe78] sm:$0xff]
        %v1507 = vld [vmem:[%s345 + $0xe80] sm:$0xff]
        %v1508 = vld [vmem:[%s345 + $0xe88] sm:$0xff]
        %v1509 = vld [vmem:[%s345 + $0xe90] sm:$0xff]
        %v1510 = vld [vmem:[%s345 + $0xe98] sm:$0xff]
        %v1511 = vld [vmem:[%s345 + $0xea0] sm:$0xff]
        %v1512 = vld [vmem:[%s345 + $0xea8] sm:$0xff]
        %v1513 = vld [vmem:[%s345 + $0xeb0] sm:$0xff]
        %v1514 = vld [vmem:[%s345 + $0xeb8] sm:$0xff]
        %v1515 = vld [vmem:[%s345 + $0xec0] sm:$0xff]
        %v1516 = vld [vmem:[%s345 + $0xec8] sm:$0xff]
        %v1517 = vld [vmem:[%s345 + $0xed0] sm:$0xff]
        %v1518 = vld [vmem:[%s345 + $0xed8] sm:$0xff]
        %v1519 = vld [vmem:[%s345 + $0xee0] sm:$0xff]
        %v1520 = vld [vmem:[%s345 + $0xee8] sm:$0xff]
        %v1521 = vld [vmem:[%s345 + $0xef0] sm:$0xff]
        %v1522 = vld [vmem:[%s345 + $0xef8] sm:$0xff]
        %v1523 = vld [vmem:[%s345 + $0xf00] sm:$0xff]
        %v1524 = vld [vmem:[%s345 + $0xf08] sm:$0xff]
        %v1525 = vld [vmem:[%s345 + $0xf10] sm:$0xff]
        %v1526 = vld [vmem:[%s345 + $0xf18] sm:$0xff]
        %v1527 = vld [vmem:[%s345 + $0xf20] sm:$0xff]
        %v1528 = vld [vmem:[%s345 + $0xf28] sm:$0xff]
        %v1529 = vld [vmem:[%s345 + $0xf30] sm:$0xff]
        %v1530 = vld [vmem:[%s345 + $0xf38] sm:$0xff]
        %v1531 = vld [vmem:[%s345 + $0xf40] sm:$0xff]
        %v1532 = vld [vmem:[%s345 + $0xf48] sm:$0xff]
        %v1533 = vld [vmem:[%s345 + $0xf50] sm:$0xff]
        %v1534 = vld [vmem:[%s345 + $0xf58] sm:$0xff]
        %v1535 = vld [vmem:[%s345 + $0xf60] sm:$0xff]
        %v1536 = vld [vmem:[%s345 + $0xf68] sm:$0xff]
        %v1537 = vld [vmem:[%s345 + $0xf70] sm:$0xff]
        %v1538 = vld [vmem:[%s345 + $0xf78] sm:$0xff]
        %v1539 = vld [vmem:[%s345 + $0xf80] sm:$0xff]
        %v1540 = vld [vmem:[%s345 + $0xf88] sm:$0xff]
        %v1541 = vld [vmem:[%s345 + $0xf90] sm:$0xff]
        %v1542 = vld [vmem:[%s345 + $0xf98] sm:$0xff]
        %v1543 = vld [vmem:[%s345 + $0xfa0] sm:$0xff]
        %v1544 = vld [vmem:[%s345 + $0xfa8] sm:$0xff]
        %v1545 = vld [vmem:[%s345 + $0xfb0] sm:$0xff]
        %v1546 = vld [vmem:[%s345 + $0xfb8] sm:$0xff]
        %v1547 = vld [vmem:[%s345 + $0xfc0] sm:$0xff]
        %v1548 = vld [vmem:[%s345 + $0xfc8] sm:$0xff]
        %v1549 = vld [vmem:[%s345 + $0xfd0] sm:$0xff]
        %v1550 = vld [vmem:[%s345 + $0xfd8] sm:$0xff]
        %v1551 = vld [vmem:[%s345 + $0xfe0] sm:$0xff]
        %v1552 = vld [vmem:[%s345 + $0xfe8] sm:$0xff]
        %v1553 = vld [vmem:[%s345 + $0xff0] sm:$0xff]
        %v1554 = vld [vmem:[%s345 + $0xff8] sm:$0xff]
        %v1555 = vld [vmem:[%s345 + $0x1000] sm:$0xff]
        %v1556 = vld [vmem:[%s345 + $0x1008] sm:$0xff]
        %v1557 = vld [vmem:[%s345 + $0x1010] sm:$0xff]
        %v1558 = vld [vmem:[%s345 + $0x1018] sm:$0xff]
        %v1559 = vld [vmem:[%s345 + $0x1020] sm:$0xff]
        %v1560 = vld [vmem:[%s345 + $0x1028] sm:$0xff]
        %v1561 = vld [vmem:[%s345 + $0x1030] sm:$0xff]
        %v1562 = vld [vmem:[%s345 + $0x1038] sm:$0xff]
        %v1563 = vld [vmem:[%s345 + $0x1040] sm:$0xff]
        %v1564 = vld [vmem:[%s345 + $0x1048] sm:$0xff]
        %v1565 = vld [vmem:[%s345 + $0x1050] sm:$0xff]
        %v1566 = vld [vmem:[%s345 + $0x1058] sm:$0xff]
        %v1567 = vld [vmem:[%s345 + $0x1060] sm:$0xff]
        %v1568 = vld [vmem:[%s345 + $0x1068] sm:$0xff]
        %v1569 = vld [vmem:[%s345 + $0x1070] sm:$0xff]
        %v1570 = vld [vmem:[%s345 + $0x1078] sm:$0xff]
        %v1571 = vld [vmem:[%s345 + $0x1080] sm:$0xff]
        %v1572 = vld [vmem:[%s345 + $0x1088] sm:$0xff]
        %v1573 = vld [vmem:[%s345 + $0x1090] sm:$0xff]
        %v1574 = vld [vmem:[%s345 + $0x1098] sm:$0xff]
        %v1575 = vld [vmem:[%s345 + $0x10a0] sm:$0xff]
        %v1576 = vld [vmem:[%s345 + $0x10a8] sm:$0xff]
        %v1577 = vld [vmem:[%s345 + $0x10b0] sm:$0xff]
        %v1578 = vld [vmem:[%s345 + $0x10b8] sm:$0xff]
        %v1579 = vld [vmem:[%s345 + $0x10c0] sm:$0xff]
        %v1580 = vld [vmem:[%s345 + $0x10c8] sm:$0xff]
        %v1581 = vld [vmem:[%s345 + $0x10d0] sm:$0xff]
        %v1582 = vld [vmem:[%s345 + $0x10d8] sm:$0xff]
        %v1583 = vld [vmem:[%s345 + $0x10e0] sm:$0xff]
        %v1584 = vld [vmem:[%s345 + $0x10e8] sm:$0xff]
        %v1585 = vld [vmem:[%s345 + $0x10f0] sm:$0xff]
        %v1586 = vld [vmem:[%s345 + $0x10f8] sm:$0xff]
        %v1587 = vld [vmem:[%s345 + $0x1100] sm:$0xff]
        %v1588 = vld [vmem:[%s345 + $0x1108] sm:$0xff]
        %v1589 = vld [vmem:[%s345 + $0x1110] sm:$0xff]
        %v1590 = vld [vmem:[%s345 + $0x1118] sm:$0xff]
        %v1591 = vld [vmem:[%s345 + $0x1120] sm:$0xff]
        %v1592 = vld [vmem:[%s345 + $0x1128] sm:$0xff]
        %v1593 = vld [vmem:[%s345 + $0x1130] sm:$0xff]
        %v1594 = vld [vmem:[%s345 + $0x1138] sm:$0xff]
        %v1595 = vld [vmem:[%s345 + $0x1140] sm:$0xff]
        %v1596 = vld [vmem:[%s345 + $0x1148] sm:$0xff]
        %v1597 = vld [vmem:[%s345 + $0x1150] sm:$0xff]
        %v1598 = vld [vmem:[%s345 + $0x1158] sm:$0xff]
        %v1599 = vld [vmem:[%s345 + $0x1160] sm:$0xff]
        %v1600 = vld [vmem:[%s345 + $0x1168] sm:$0xff]
        %v1601 = vld [vmem:[%s345 + $0x1170] sm:$0xff]
        %v1602 = vld [vmem:[%s345 + $0x1178] sm:$0xff]
        %v1603 = vld [vmem:[%s345 + $0x1180] sm:$0xff]
        %v1604 = vld [vmem:[%s345 + $0x1188] sm:$0xff]
        %v1605 = vld [vmem:[%s345 + $0x1190] sm:$0xff]
        %v1606 = vld [vmem:[%s345 + $0x1198] sm:$0xff]
        %v1607 = vld [vmem:[%s345 + $0x11a0] sm:$0xff]
        %v1608 = vld [vmem:[%s345 + $0x11a8] sm:$0xff]
        %v1609 = vld [vmem:[%s345 + $0x11b0] sm:$0xff]
        %v1610 = vld [vmem:[%s345 + $0x11b8] sm:$0xff]
        %v1611 = vld [vmem:[%s345 + $0x11c0] sm:$0xff]
        %v1612 = vld [vmem:[%s345 + $0x11c8] sm:$0xff]
        %v1613 = vld [vmem:[%s345 + $0x11d0] sm:$0xff]
        %v1614 = vld [vmem:[%s345 + $0x11d8] sm:$0xff]
        %v1615 = vld [vmem:[%s345 + $0x11e0] sm:$0xff]
        %v1616 = vld [vmem:[%s345 + $0x11e8] sm:$0xff]
        %v1617 = vld [vmem:[%s345 + $0x11f0] sm:$0xff]
        %v1618 = vld [vmem:[%s345 + $0x11f8] sm:$0xff]
        %v1619 = vld [vmem:[%s345 + $0x1200] sm:$0xff]
        %v1620 = vld [vmem:[%s345 + $0x1208] sm:$0xff]
        %v1621 = vld [vmem:[%s345 + $0x1210] sm:$0xff]
        %v1622 = vld [vmem:[%s345 + $0x1218] sm:$0xff]
        %v1623 = vld [vmem:[%s345 + $0x1220] sm:$0xff]
        %v1624 = vld [vmem:[%s345 + $0x1228] sm:$0xff]
        %v1625 = vld [vmem:[%s345 + $0x1230] sm:$0xff]
        %v1626 = vld [vmem:[%s345 + $0x1238] sm:$0xff]
        %v1627 = vld [vmem:[%s345 + $0x1240] sm:$0xff]
        %v1628 = vld [vmem:[%s345 + $0x1248] sm:$0xff]
        %v1629 = vld [vmem:[%s345 + $0x1250] sm:$0xff]
        %v1630 = vld [vmem:[%s345 + $0x1258] sm:$0xff]
        %v1631 = vld [vmem:[%s345 + $0x1260] sm:$0xff]
        %v1632 = vld [vmem:[%s345 + $0x1268] sm:$0xff]
        %v1633 = vld [vmem:[%s345 + $0x1270] sm:$0xff]
        %v1634 = vld [vmem:[%s345 + $0x1278] sm:$0xff]
        %v1635 = vld [vmem:[%s345 + $0x1280] sm:$0xff]
        %v1636 = vld [vmem:[%s345 + $0x1288] sm:$0xff]
        %v1637 = vld [vmem:[%s345 + $0x1290] sm:$0xff]
        %v1638 = vld [vmem:[%s345 + $0x1298] sm:$0xff]
        %v1639 = vld [vmem:[%s345 + $0x12a0] sm:$0xff]
        %v1640 = vld [vmem:[%s345 + $0x12a8] sm:$0xff]
        %v1641 = vld [vmem:[%s345 + $0x12b0] sm:$0xff]
        %v1642 = vld [vmem:[%s345 + $0x12b8] sm:$0xff]
        %v1643 = vld [vmem:[%s345 + $0x12c0] sm:$0xff]
        %v1644 = vld [vmem:[%s345 + $0x12c8] sm:$0xff]
        %v1645 = vld [vmem:[%s345 + $0x12d0] sm:$0xff]
        %v1646 = vld [vmem:[%s345 + $0x12d8] sm:$0xff]
        %v1647 = vld [vmem:[%s345 + $0x12e0] sm:$0xff]
        %v1648 = vld [vmem:[%s345 + $0x12e8] sm:$0xff]
        %v1649 = vld [vmem:[%s345 + $0x12f0] sm:$0xff]
        %v1650 = vld [vmem:[%s345 + $0x12f8] sm:$0xff]
        %v1651 = vld [vmem:[%s345 + $0x1300] sm:$0xff]
        %v1652 = vld [vmem:[%s345 + $0x1308] sm:$0xff]
        %v1653 = vld [vmem:[%s345 + $0x1310] sm:$0xff]
        %v1654 = vld [vmem:[%s345 + $0x1318] sm:$0xff]
        %v1655 = vld [vmem:[%s345 + $0x1320] sm:$0xff]
        %v1656 = vld [vmem:[%s345 + $0x1328] sm:$0xff]
        %v1657 = vld [vmem:[%s345 + $0x1330] sm:$0xff]
        %v1658 = vld [vmem:[%s345 + $0x1338] sm:$0xff]
        %v1659 = vld [vmem:[%s345 + $0x1340] sm:$0xff]
        %v1660 = vld [vmem:[%s345 + $0x1348] sm:$0xff]
        %v1661 = vld [vmem:[%s345 + $0x1350] sm:$0xff]
        %v1662 = vld [vmem:[%s345 + $0x1358] sm:$0xff]
        %v1663 = vld [vmem:[%s345 + $0x1360] sm:$0xff]
        %v1664 = vld [vmem:[%s345 + $0x1368] sm:$0xff]
        %v1665 = vld [vmem:[%s345 + $0x1370] sm:$0xff]
        %v1666 = vld [vmem:[%s345 + $0x1378] sm:$0xff]
        %v1667 = vld [vmem:[%s345 + $0x1380] sm:$0xff]
        %v1668 = vld [vmem:[%s345 + $0x1388] sm:$0xff]
        %v1669 = vld [vmem:[%s345 + $0x1390] sm:$0xff]
        %v1670 = vld [vmem:[%s345 + $0x1398] sm:$0xff]
        %v1671 = vld [vmem:[%s345 + $0x13a0] sm:$0xff]
        %v1672 = vld [vmem:[%s345 + $0x13a8] sm:$0xff]
        %v1673 = vld [vmem:[%s345 + $0x13b0] sm:$0xff]
        %v1674 = vld [vmem:[%s345 + $0x13b8] sm:$0xff]
        %v1675 = vld [vmem:[%s345 + $0x13c0] sm:$0xff]
        %v1676 = vld [vmem:[%s345 + $0x13c8] sm:$0xff]
        %v1677 = vld [vmem:[%s345 + $0x13d0] sm:$0xff]
        %v1678 = vld [vmem:[%s345 + $0x13d8] sm:$0xff]
        %v1679 = vld [vmem:[%s345 + $0x13e0] sm:$0xff]
        %v1680 = vld [vmem:[%s345 + $0x13e8] sm:$0xff]
        %v1681 = vld [vmem:[%s345 + $0x13f0] sm:$0xff]
        %v1682 = vld [vmem:[%s345 + $0x13f8] sm:$0xff]
        %v1683 = vld [vmem:[%s345 + $0x1400] sm:$0xff]
        %v1684 = vld [vmem:[%s345 + $0x1408] sm:$0xff]
        %v1685 = vld [vmem:[%s345 + $0x1410] sm:$0xff]
        %v1686 = vld [vmem:[%s345 + $0x1418] sm:$0xff]
        %v1687 = vld [vmem:[%s345 + $0x1420] sm:$0xff]
        %v1688 = vld [vmem:[%s345 + $0x1428] sm:$0xff]
        %v1689 = vld [vmem:[%s345 + $0x1430] sm:$0xff]
        %v1690 = vld [vmem:[%s345 + $0x1438] sm:$0xff]
        %v1691 = vld [vmem:[%s345 + $0x1440] sm:$0xff]
        %v1692 = vld [vmem:[%s345 + $0x1448] sm:$0xff]
        %v1693 = vld [vmem:[%s345 + $0x1450] sm:$0xff]
        %v1694 = vld [vmem:[%s345 + $0x1458] sm:$0xff]
        %v1695 = vld [vmem:[%s345 + $0x1460] sm:$0xff]
        %v1696 = vld [vmem:[%s345 + $0x1468] sm:$0xff]
        %v1697 = vld [vmem:[%s345 + $0x1470] sm:$0xff]
        %v1698 = vld [vmem:[%s345 + $0x1478] sm:$0xff]
        %v1699 = vld [vmem:[%s345 + $0x1480] sm:$0xff]
        %v1700 = vld [vmem:[%s345 + $0x1488] sm:$0xff]
        %v1701 = vld [vmem:[%s345 + $0x1490] sm:$0xff]
        %v1702 = vld [vmem:[%s345 + $0x1498] sm:$0xff]
        %v1703 = vld [vmem:[%s345 + $0x14a0] sm:$0xff]
        %v1704 = vld [vmem:[%s345 + $0x14a8] sm:$0xff]
        %v1705 = vld [vmem:[%s345 + $0x14b0] sm:$0xff]
        %v1706 = vld [vmem:[%s345 + $0x14b8] sm:$0xff]
        %v1707 = vld [vmem:[%s345 + $0x14c0] sm:$0xff]
        %v1708 = vld [vmem:[%s345 + $0x14c8] sm:$0xff]
        %v1709 = vld [vmem:[%s345 + $0x14d0] sm:$0xff]
        %v1710 = vld [vmem:[%s345 + $0x14d8] sm:$0xff]
        %v1711 = vld [vmem:[%s345 + $0x14e0] sm:$0xff]
        %v1712 = vld [vmem:[%s345 + $0x14e8] sm:$0xff]
        %v1713 = vld [vmem:[%s345 + $0x14f0] sm:$0xff]
        %v1714 = vld [vmem:[%s345 + $0x14f8] sm:$0xff]
        %v1715 = vld [vmem:[%s345 + $0x1500] sm:$0xff]
        %v1716 = vld [vmem:[%s345 + $0x1508] sm:$0xff]
        %v1717 = vld [vmem:[%s345 + $0x1510] sm:$0xff]
        %v1718 = vld [vmem:[%s345 + $0x1518] sm:$0xff]
        %v1719 = vld [vmem:[%s345 + $0x1520] sm:$0xff]
        %v1720 = vld [vmem:[%s345 + $0x1528] sm:$0xff]
        %v1721 = vld [vmem:[%s345 + $0x1530] sm:$0xff]
        %v1722 = vld [vmem:[%s345 + $0x1538] sm:$0xff]
        %v1723 = vld [vmem:[%s345 + $0x1540] sm:$0xff]
        %v1724 = vld [vmem:[%s345 + $0x1548] sm:$0xff]
        %v1725 = vld [vmem:[%s345 + $0x1550] sm:$0xff]
        %v1726 = vld [vmem:[%s345 + $0x1558] sm:$0xff]
        %v1727 = vld [vmem:[%s345 + $0x1560] sm:$0xff]
        %v1728 = vld [vmem:[%s345 + $0x1568] sm:$0xff]
        %v1729 = vld [vmem:[%s345 + $0x1570] sm:$0xff]
        %v1730 = vld [vmem:[%s345 + $0x1578] sm:$0xff]
        %v1731 = vld [vmem:[%s345 + $0x1580] sm:$0xff]
        %v1732 = vld [vmem:[%s345 + $0x1588] sm:$0xff]
        %v1733 = vld [vmem:[%s345 + $0x1590] sm:$0xff]
        %v1734 = vld [vmem:[%s345 + $0x1598] sm:$0xff]
        %v1735 = vld [vmem:[%s345 + $0x15a0] sm:$0xff]
        %v1736 = vld [vmem:[%s345 + $0x15a8] sm:$0xff]
        %v1737 = vld [vmem:[%s345 + $0x15b0] sm:$0xff]
        %v1738 = vld [vmem:[%s345 + $0x15b8] sm:$0xff]
        %v1739 = vld [vmem:[%s345 + $0x15c0] sm:$0xff]
        %v1740 = vld [vmem:[%s345 + $0x15c8] sm:$0xff]
        %v1741 = vld [vmem:[%s345 + $0x15d0] sm:$0xff]
        %v1742 = vld [vmem:[%s345 + $0x15d8] sm:$0xff]
        %v1743 = vld [vmem:[%s345 + $0x15e0] sm:$0xff]
        %v1744 = vld [vmem:[%s345 + $0x15e8] sm:$0xff]
        %v1745 = vld [vmem:[%s345 + $0x15f0] sm:$0xff]
        %v1746 = vld [vmem:[%s345 + $0x15f8] sm:$0xff]
        %v1747 = vld [vmem:[%s345 + $0x1600] sm:$0xff]
        %v1748 = vld [vmem:[%s345 + $0x1608] sm:$0xff]
        %v1749 = vld [vmem:[%s345 + $0x1610] sm:$0xff]
        %v1750 = vld [vmem:[%s345 + $0x1618] sm:$0xff]
        %v1751 = vld [vmem:[%s345 + $0x1620] sm:$0xff]
        %v1752 = vld [vmem:[%s345 + $0x1628] sm:$0xff]
        %v1753 = vld [vmem:[%s345 + $0x1630] sm:$0xff]
        %v1754 = vld [vmem:[%s345 + $0x1638] sm:$0xff]
        %v1755 = vld [vmem:[%s345 + $0x1640] sm:$0xff]
        %v1756 = vld [vmem:[%s345 + $0x1648] sm:$0xff]
        %v1757 = vld [vmem:[%s345 + $0x1650] sm:$0xff]
        %v1758 = vld [vmem:[%s345 + $0x1658] sm:$0xff]
        %v1759 = vld [vmem:[%s345 + $0x1660] sm:$0xff]
        %v1760 = vld [vmem:[%s345 + $0x1668] sm:$0xff]
        %v1761 = vld [vmem:[%s345 + $0x1670] sm:$0xff]
        %v1762 = vld [vmem:[%s345 + $0x1678] sm:$0xff]
        %v1763 = vld [vmem:[%s345 + $0x1680] sm:$0xff]
        %v1764 = vld [vmem:[%s345 + $0x1688] sm:$0xff]
        %v1765 = vld [vmem:[%s345 + $0x1690] sm:$0xff]
        %v1766 = vld [vmem:[%s345 + $0x1698] sm:$0xff]
        %v1767 = vld [vmem:[%s345 + $0x16a0] sm:$0xff]
        %v1768 = vld [vmem:[%s345 + $0x16a8] sm:$0xff]
        %v1769 = vld [vmem:[%s345 + $0x16b0] sm:$0xff]
        %v1770 = vld [vmem:[%s345 + $0x16b8] sm:$0xff]
        %v1771 = vld [vmem:[%s345 + $0x16c0] sm:$0xff]
        %v1772 = vld [vmem:[%s345 + $0x16c8] sm:$0xff]
        %v1773 = vld [vmem:[%s345 + $0x16d0] sm:$0xff]
        %v1774 = vld [vmem:[%s345 + $0x16d8] sm:$0xff]
        %v1775 = vld [vmem:[%s345 + $0x16e0] sm:$0xff]
        %v1776 = vld [vmem:[%s345 + $0x16e8] sm:$0xff]
        %v1777 = vld [vmem:[%s345 + $0x16f0] sm:$0xff]
        %v1778 = vld [vmem:[%s345 + $0x16f8] sm:$0xff]
        %v1779 = vld [vmem:[%s345 + $0x1700] sm:$0xff]
        %v1780 = vld [vmem:[%s345 + $0x1708] sm:$0xff]
        %v1781 = vld [vmem:[%s345 + $0x1710] sm:$0xff]
        %v1782 = vld [vmem:[%s345 + $0x1718] sm:$0xff]
        %v1783 = vld [vmem:[%s345 + $0x1720] sm:$0xff]
        %v1784 = vld [vmem:[%s345 + $0x1728] sm:$0xff]
        %v1785 = vld [vmem:[%s345 + $0x1730] sm:$0xff]
        %v1786 = vld [vmem:[%s345 + $0x1738] sm:$0xff]
        %v1787 = vld [vmem:[%s345 + $0x1740] sm:$0xff]
        %v1788 = vld [vmem:[%s345 + $0x1748] sm:$0xff]
        %v1789 = vld [vmem:[%s345 + $0x1750] sm:$0xff]
        %v1790 = vld [vmem:[%s345 + $0x1758] sm:$0xff]
        %v1791 = vld [vmem:[%s345 + $0x1760] sm:$0xff]
        %v1792 = vld [vmem:[%s345 + $0x1768] sm:$0xff]
        %v1793 = vld [vmem:[%s345 + $0x1770] sm:$0xff]
        %v1794 = vld [vmem:[%s345 + $0x1778] sm:$0xff]
        %v1795 = vld [vmem:[%s345 + $0x1780] sm:$0xff]
        %v1796 = vld [vmem:[%s345 + $0x1788] sm:$0xff]
        %v1797 = vld [vmem:[%s345 + $0x1790] sm:$0xff]
        %v1798 = vld [vmem:[%s345 + $0x1798] sm:$0xff]
        %v1799 = vld [vmem:[%s345 + $0x17a0] sm:$0xff]
        %v1800 = vld [vmem:[%s345 + $0x17a8] sm:$0xff]
        %v1801 = vld [vmem:[%s345 + $0x17b0] sm:$0xff]
        %v1802 = vld [vmem:[%s345 + $0x17b8] sm:$0xff]
        %v1803 = vld [vmem:[%s345 + $0x17c0] sm:$0xff]
        %v1804 = vld [vmem:[%s345 + $0x17c8] sm:$0xff]
        %v1805 = vld [vmem:[%s345 + $0x17d0] sm:$0xff]
        %v1806 = vld [vmem:[%s345 + $0x17d8] sm:$0xff]
        %v1807 = vld [vmem:[%s345 + $0x17e0] sm:$0xff]
        %v1808 = vld [vmem:[%s345 + $0x17e8] sm:$0xff]
        %v1809 = vld [vmem:[%s345 + $0x17f0] sm:$0xff]
        %v1810 = vld [vmem:[%s345 + $0x17f8] sm:$0xff]
        %v1811 = vld [vmem:[%s345 + $0x1800] sm:$0xff]
        %v1812 = vld [vmem:[%s345 + $0x1808] sm:$0xff]
        %v1813 = vld [vmem:[%s345 + $0x1810] sm:$0xff]
        %v1814 = vld [vmem:[%s345 + $0x1818] sm:$0xff]
        %v1815 = vld [vmem:[%s345 + $0x1820] sm:$0xff]
        %v1816 = vld [vmem:[%s345 + $0x1828] sm:$0xff]
        %v1817 = vld [vmem:[%s345 + $0x1830] sm:$0xff]
        %v1818 = vld [vmem:[%s345 + $0x1838] sm:$0xff]
        %v1819 = vld [vmem:[%s345 + $0x1840] sm:$0xff]
        %v1820 = vld [vmem:[%s345 + $0x1848] sm:$0xff]
        %v1821 = vld [vmem:[%s345 + $0x1850] sm:$0xff]
        %v1822 = vld [vmem:[%s345 + $0x1858] sm:$0xff]
        %v1823 = vld [vmem:[%s345 + $0x1860] sm:$0xff]
        %v1824 = vld [vmem:[%s345 + $0x1868] sm:$0xff]
        %v1825 = vld [vmem:[%s345 + $0x1870] sm:$0xff]
        %v1826 = vld [vmem:[%s345 + $0x1878] sm:$0xff]
        %v1827 = vld [vmem:[%s345 + $0x1880] sm:$0xff]
        %v1828 = vld [vmem:[%s345 + $0x1888] sm:$0xff]
        %v1829 = vld [vmem:[%s345 + $0x1890] sm:$0xff]
        %v1830 = vld [vmem:[%s345 + $0x1898] sm:$0xff]
        %v1831 = vld [vmem:[%s345 + $0x18a0] sm:$0xff]
        %v1832 = vld [vmem:[%s345 + $0x18a8] sm:$0xff]
        %v1833 = vld [vmem:[%s345 + $0x18b0] sm:$0xff]
        %v1834 = vld [vmem:[%s345 + $0x18b8] sm:$0xff]
        %v1835 = vld [vmem:[%s345 + $0x18c0] sm:$0xff]
        %v1836 = vld [vmem:[%s345 + $0x18c8] sm:$0xff]
        %v1837 = vld [vmem:[%s345 + $0x18d0] sm:$0xff]
        %v1838 = vld [vmem:[%s345 + $0x18d8] sm:$0xff]
        %v1839 = vld [vmem:[%s345 + $0x18e0] sm:$0xff]
        %v1840 = vld [vmem:[%s345 + $0x18e8] sm:$0xff]
        %v1841 = vld [vmem:[%s345 + $0x18f0] sm:$0xff]
        %v1842 = vld [vmem:[%s345 + $0x18f8] sm:$0xff]
        %v1843 = vld [vmem:[%s345 + $0x1900] sm:$0xff]
        %v1844 = vld [vmem:[%s345 + $0x1908] sm:$0xff]
        %v1845 = vld [vmem:[%s345 + $0x1910] sm:$0xff]
        %v1846 = vld [vmem:[%s345 + $0x1918] sm:$0xff]
        %v1847 = vld [vmem:[%s345 + $0x1920] sm:$0xff]
        %v1848 = vld [vmem:[%s345 + $0x1928] sm:$0xff]
        %v1849 = vld [vmem:[%s345 + $0x1930] sm:$0xff]
        %v1850 = vld [vmem:[%s345 + $0x1938] sm:$0xff]
        %v1851 = vld [vmem:[%s345 + $0x1940] sm:$0xff]
        %v1852 = vld [vmem:[%s345 + $0x1948] sm:$0xff]
        %v1853 = vld [vmem:[%s345 + $0x1950] sm:$0xff]
        %v1854 = vld [vmem:[%s345 + $0x1958] sm:$0xff]
        %v1855 = vld [vmem:[%s345 + $0x1960] sm:$0xff]
        %v1856 = vld [vmem:[%s345 + $0x1968] sm:$0xff]
        %v1857 = vld [vmem:[%s345 + $0x1970] sm:$0xff]
        %v1858 = vld [vmem:[%s345 + $0x1978] sm:$0xff]
        %v1859 = vld [vmem:[%s345 + $0x1980] sm:$0xff]
        %v1860 = vld [vmem:[%s345 + $0x1988] sm:$0xff]
        %v1861 = vld [vmem:[%s345 + $0x1990] sm:$0xff]
        %v1862 = vld [vmem:[%s345 + $0x1998] sm:$0xff]
        %v1863 = vld [vmem:[%s345 + $0x19a0] sm:$0xff]
        %v1864 = vld [vmem:[%s345 + $0x19a8] sm:$0xff]
        %v1865 = vld [vmem:[%s345 + $0x19b0] sm:$0xff]
        %v1866 = vld [vmem:[%s345 + $0x19b8] sm:$0xff]
        %v1867 = vld [vmem:[%s345 + $0x19c0] sm:$0xff]
        %v1868 = vld [vmem:[%s345 + $0x19c8] sm:$0xff]
        %v1869 = vld [vmem:[%s345 + $0x19d0] sm:$0xff]
        %v1870 = vld [vmem:[%s345 + $0x19d8] sm:$0xff]
        %v1871 = vld [vmem:[%s345 + $0x19e0] sm:$0xff]
        %v1872 = vld [vmem:[%s345 + $0x19e8] sm:$0xff]
        %v1873 = vld [vmem:[%s345 + $0x19f0] sm:$0xff]
        %v1874 = vld [vmem:[%s345 + $0x19f8] sm:$0xff]
        %v1875 = vld [vmem:[%s345 + $0x1a00] sm:$0xff]
        %v1876 = vld [vmem:[%s345 + $0x1a08] sm:$0xff]
        %v1877 = vld [vmem:[%s345 + $0x1a10] sm:$0xff]
        %v1878 = vld [vmem:[%s345 + $0x1a18] sm:$0xff]
        %v1879 = vld [vmem:[%s345 + $0x1a20] sm:$0xff]
        %v1880 = vld [vmem:[%s345 + $0x1a28] sm:$0xff]
        %v1881 = vld [vmem:[%s345 + $0x1a30] sm:$0xff]
        %v1882 = vld [vmem:[%s345 + $0x1a38] sm:$0xff]
        %v1883 = vld [vmem:[%s345 + $0x1a40] sm:$0xff]
        %v1884 = vld [vmem:[%s345 + $0x1a48] sm:$0xff]
        %v1885 = vld [vmem:[%s345 + $0x1a50] sm:$0xff]
        %v1886 = vld [vmem:[%s345 + $0x1a58] sm:$0xff]
        %v1887 = vld [vmem:[%s345 + $0x1a60] sm:$0xff]
        %v1888 = vld [vmem:[%s345 + $0x1a68] sm:$0xff]
        %v1889 = vld [vmem:[%s345 + $0x1a70] sm:$0xff]
        %v1890 = vld [vmem:[%s345 + $0x1a78] sm:$0xff]
        %v1891 = vld [vmem:[%s345 + $0x1a80] sm:$0xff]
        %v1892 = vld [vmem:[%s345 + $0x1a88] sm:$0xff]
        %v1893 = vld [vmem:[%s345 + $0x1a90] sm:$0xff]
        %v1894 = vld [vmem:[%s345 + $0x1a98] sm:$0xff]
        %v1895 = vld [vmem:[%s345 + $0x1aa0] sm:$0xff]
        %v1896 = vld [vmem:[%s345 + $0x1aa8] sm:$0xff]
        %v1897 = vld [vmem:[%s345 + $0x1ab0] sm:$0xff]
        %v1898 = vld [vmem:[%s345 + $0x1ab8] sm:$0xff]
        %v1899 = vld [vmem:[%s345 + $0x1ac0] sm:$0xff]
        %v1900 = vld [vmem:[%s345 + $0x1ac8] sm:$0xff]
        %v1901 = vld [vmem:[%s345 + $0x1ad0] sm:$0xff]
        %v1902 = vld [vmem:[%s345 + $0x1ad8] sm:$0xff]
        %v1903 = vld [vmem:[%s345 + $0x1ae0] sm:$0xff]
        %v1904 = vld [vmem:[%s345 + $0x1ae8] sm:$0xff]
        %v1905 = vld [vmem:[%s345 + $0x1af0] sm:$0xff]
        %v1906 = vld [vmem:[%s345 + $0x1af8] sm:$0xff]
        %v1907 = vld [vmem:[%s345 + $0x1b00] sm:$0xff]
        %v1908 = vld [vmem:[%s345 + $0x1b08] sm:$0xff]
        %v1909 = vld [vmem:[%s345 + $0x1b10] sm:$0xff]
        %v1910 = vld [vmem:[%s345 + $0x1b18] sm:$0xff]
        %v1911 = vld [vmem:[%s345 + $0x1b20] sm:$0xff]
        %v1912 = vld [vmem:[%s345 + $0x1b28] sm:$0xff]
        %v1913 = vld [vmem:[%s345 + $0x1b30] sm:$0xff]
        %v1914 = vld [vmem:[%s345 + $0x1b38] sm:$0xff]
        %v1915 = vld [vmem:[%s345 + $0x1b40] sm:$0xff]
        %v1916 = vld [vmem:[%s345 + $0x1b48] sm:$0xff]
        %v1917 = vld [vmem:[%s345 + $0x1b50] sm:$0xff]
        %v1918 = vld [vmem:[%s345 + $0x1b58] sm:$0xff]
        %v1919 = vld [vmem:[%s345 + $0x1b60] sm:$0xff]
        %v1920 = vld [vmem:[%s345 + $0x1b68] sm:$0xff]
        %v1921 = vld [vmem:[%s345 + $0x1b70] sm:$0xff]
        %v1922 = vld [vmem:[%s345 + $0x1b78] sm:$0xff]
        %v1923 = vld [vmem:[%s345 + $0x1b80] sm:$0xff]
        %v1924 = vld [vmem:[%s345 + $0x1b88] sm:$0xff]
        %v1925 = vld [vmem:[%s345 + $0x1b90] sm:$0xff]
        %v1926 = vld [vmem:[%s345 + $0x1b98] sm:$0xff]
        %v1927 = vld [vmem:[%s345 + $0x1ba0] sm:$0xff]
        %v1928 = vld [vmem:[%s345 + $0x1ba8] sm:$0xff]
        %v1929 = vld [vmem:[%s345 + $0x1bb0] sm:$0xff]
        %v1930 = vld [vmem:[%s345 + $0x1bb8] sm:$0xff]
        %v1931 = vld [vmem:[%s345 + $0x1bc0] sm:$0xff]
        %v1932 = vld [vmem:[%s345 + $0x1bc8] sm:$0xff]
        %v1933 = vld [vmem:[%s345 + $0x1bd0] sm:$0xff]
        %v1934 = vld [vmem:[%s345 + $0x1bd8] sm:$0xff]
        %v1935 = vld [vmem:[%s345 + $0x1be0] sm:$0xff]
        %v1936 = vld [vmem:[%s345 + $0x1be8] sm:$0xff]
        %v1937 = vld [vmem:[%s345 + $0x1bf0] sm:$0xff]
        %v1938 = vld [vmem:[%s345 + $0x1bf8] sm:$0xff]
        %v1939 = vld [vmem:[%s345 + $0x1c00] sm:$0xff]
        %v1940 = vld [vmem:[%s345 + $0x1c08] sm:$0xff]
        %v1941 = vld [vmem:[%s345 + $0x1c10] sm:$0xff]
        %v1942 = vld [vmem:[%s345 + $0x1c18] sm:$0xff]
        %v1943 = vld [vmem:[%s345 + $0x1c20] sm:$0xff]
        %v1944 = vld [vmem:[%s345 + $0x1c28] sm:$0xff]
        %v1945 = vld [vmem:[%s345 + $0x1c30] sm:$0xff]
        %v1946 = vld [vmem:[%s345 + $0x1c38] sm:$0xff]
        %v1947 = vld [vmem:[%s345 + $0x1c40] sm:$0xff]
        %v1948 = vld [vmem:[%s345 + $0x1c48] sm:$0xff]
        %v1949 = vld [vmem:[%s345 + $0x1c50] sm:$0xff]
        %v1950 = vld [vmem:[%s345 + $0x1c58] sm:$0xff]
        %v1951 = vld [vmem:[%s345 + $0x1c60] sm:$0xff]
        %v1952 = vld [vmem:[%s345 + $0x1c68] sm:$0xff]
        %v1953 = vld [vmem:[%s345 + $0x1c70] sm:$0xff]
        %v1954 = vld [vmem:[%s345 + $0x1c78] sm:$0xff]
        %v1955 = vld [vmem:[%s345 + $0x1c80] sm:$0xff]
        %v1956 = vld [vmem:[%s345 + $0x1c88] sm:$0xff]
        %v1957 = vld [vmem:[%s345 + $0x1c90] sm:$0xff]
        %v1958 = vld [vmem:[%s345 + $0x1c98] sm:$0xff]
        %v1959 = vld [vmem:[%s345 + $0x1ca0] sm:$0xff]
        %v1960 = vld [vmem:[%s345 + $0x1ca8] sm:$0xff]
        %v1961 = vld [vmem:[%s345 + $0x1cb0] sm:$0xff]
        %v1962 = vld [vmem:[%s345 + $0x1cb8] sm:$0xff]
        %v1963 = vld [vmem:[%s345 + $0x1cc0] sm:$0xff]
        %v1964 = vld [vmem:[%s345 + $0x1cc8] sm:$0xff]
        %v1965 = vld [vmem:[%s345 + $0x1cd0] sm:$0xff]
        %v1966 = vld [vmem:[%s345 + $0x1cd8] sm:$0xff]
        %v1967 = vld [vmem:[%s345 + $0x1ce0] sm:$0xff]
        %v1968 = vld [vmem:[%s345 + $0x1ce8] sm:$0xff]
        %v1969 = vld [vmem:[%s345 + $0x1cf0] sm:$0xff]
        %v1970 = vld [vmem:[%s345 + $0x1cf8] sm:$0xff]
        %v1971 = vld [vmem:[%s345 + $0x1d00] sm:$0xff]
        %v1972 = vld [vmem:[%s345 + $0x1d08] sm:$0xff]
        %v1973 = vld [vmem:[%s345 + $0x1d10] sm:$0xff]
        %v1974 = vld [vmem:[%s345 + $0x1d18] sm:$0xff]
        %v1975 = vld [vmem:[%s345 + $0x1d20] sm:$0xff]
        %v1976 = vld [vmem:[%s345 + $0x1d28] sm:$0xff]
        %v1977 = vld [vmem:[%s345 + $0x1d30] sm:$0xff]
        %v1978 = vld [vmem:[%s345 + $0x1d38] sm:$0xff]
        %v1979 = vld [vmem:[%s345 + $0x1d40] sm:$0xff]
        %v1980 = vld [vmem:[%s345 + $0x1d48] sm:$0xff]
        %v1981 = vld [vmem:[%s345 + $0x1d50] sm:$0xff]
        %v1982 = vld [vmem:[%s345 + $0x1d58] sm:$0xff]
        %v1983 = vld [vmem:[%s345 + $0x1d60] sm:$0xff]
        %v1984 = vld [vmem:[%s345 + $0x1d68] sm:$0xff]
        %v1985 = vld [vmem:[%s345 + $0x1d70] sm:$0xff]
        %v1986 = vld [vmem:[%s345 + $0x1d78] sm:$0xff]
        %v1987 = vld [vmem:[%s345 + $0x1d80] sm:$0xff]
        %v1988 = vld [vmem:[%s345 + $0x1d88] sm:$0xff]
        %v1989 = vld [vmem:[%s345 + $0x1d90] sm:$0xff]
        %v1990 = vld [vmem:[%s345 + $0x1d98] sm:$0xff]
        %v1991 = vld [vmem:[%s345 + $0x1da0] sm:$0xff]
        %v1992 = vld [vmem:[%s345 + $0x1da8] sm:$0xff]
        %v1993 = vld [vmem:[%s345 + $0x1db0] sm:$0xff]
        %v1994 = vld [vmem:[%s345 + $0x1db8] sm:$0xff]
        %v1995 = vld [vmem:[%s345 + $0x1dc0] sm:$0xff]
        %v1996 = vld [vmem:[%s345 + $0x1dc8] sm:$0xff]
        %v1997 = vld [vmem:[%s345 + $0x1dd0] sm:$0xff]
        %v1998 = vld [vmem:[%s345 + $0x1dd8] sm:$0xff]
        %v1999 = vld [vmem:[%s345 + $0x1de0] sm:$0xff]
        %v2000 = vld [vmem:[%s345 + $0x1de8] sm:$0xff]
        %v2001 = vld [vmem:[%s345 + $0x1df0] sm:$0xff]
        %v2002 = vld [vmem:[%s345 + $0x1df8] sm:$0xff]
        %v2003 = vld [vmem:[%s345 + $0x1e00] sm:$0xff]
        %v2004 = vld [vmem:[%s345 + $0x1e08] sm:$0xff]
        %v2005 = vld [vmem:[%s345 + $0x1e10] sm:$0xff]
        %v2006 = vld [vmem:[%s345 + $0x1e18] sm:$0xff]
        %v2007 = vld [vmem:[%s345 + $0x1e20] sm:$0xff]
        %v2008 = vld [vmem:[%s345 + $0x1e28] sm:$0xff]
        %v2009 = vld [vmem:[%s345 + $0x1e30] sm:$0xff]
        %v2010 = vld [vmem:[%s345 + $0x1e38] sm:$0xff]
        %v2011 = vld [vmem:[%s345 + $0x1e40] sm:$0xff]
        %v2012 = vld [vmem:[%s345 + $0x1e48] sm:$0xff]
        %v2013 = vld [vmem:[%s345 + $0x1e50] sm:$0xff]
        %v2014 = vld [vmem:[%s345 + $0x1e58] sm:$0xff]
        %v2015 = vld [vmem:[%s345 + $0x1e60] sm:$0xff]
        %v2016 = vld [vmem:[%s345 + $0x1e68] sm:$0xff]
        %v2017 = vld [vmem:[%s345 + $0x1e70] sm:$0xff]
        %v2018 = vld [vmem:[%s345 + $0x1e78] sm:$0xff]
        %v2019 = vld [vmem:[%s345 + $0x1e80] sm:$0xff]
        %v2020 = vld [vmem:[%s345 + $0x1e88] sm:$0xff]
        %v2021 = vld [vmem:[%s345 + $0x1e90] sm:$0xff]
        %v2022 = vld [vmem:[%s345 + $0x1e98] sm:$0xff]
        %v2023 = vld [vmem:[%s345 + $0x1ea0] sm:$0xff]
        %v2024 = vld [vmem:[%s345 + $0x1ea8] sm:$0xff]
        %v2025 = vld [vmem:[%s345 + $0x1eb0] sm:$0xff]
        %v2026 = vld [vmem:[%s345 + $0x1eb8] sm:$0xff]
        %v2027 = vld [vmem:[%s345 + $0x1ec0] sm:$0xff]
        %v2028 = vld [vmem:[%s345 + $0x1ec8] sm:$0xff]
        %v2029 = vld [vmem:[%s345 + $0x1ed0] sm:$0xff]
        %v2030 = vld [vmem:[%s345 + $0x1ed8] sm:$0xff]
        %v2031 = vld [vmem:[%s345 + $0x1ee0] sm:$0xff]
        %v2032 = vld [vmem:[%s345 + $0x1ee8] sm:$0xff]
        %v2033 = vld [vmem:[%s345 + $0x1ef0] sm:$0xff]
        %v2034 = vld [vmem:[%s345 + $0x1ef8] sm:$0xff]
        %v2035 = vld [vmem:[%s345 + $0x1f00] sm:$0xff]
        %v2036 = vld [vmem:[%s345 + $0x1f08] sm:$0xff]
        %v2037 = vld [vmem:[%s345 + $0x1f10] sm:$0xff]
        %v2038 = vld [vmem:[%s345 + $0x1f18] sm:$0xff]
        %v2039 = vld [vmem:[%s345 + $0x1f20] sm:$0xff]
        %v2040 = vld [vmem:[%s345 + $0x1f28] sm:$0xff]
        %v2041 = vld [vmem:[%s345 + $0x1f30] sm:$0xff]
        %v2042 = vld [vmem:[%s345 + $0x1f38] sm:$0xff]
        %v2043 = vld [vmem:[%s345 + $0x1f40] sm:$0xff]
        %v2044 = vld [vmem:[%s345 + $0x1f48] sm:$0xff]
        %v2045 = vld [vmem:[%s345 + $0x1f50] sm:$0xff]
        %v2046 = vld [vmem:[%s345 + $0x1f58] sm:$0xff]
        %v2047 = vld [vmem:[%s345 + $0x1f60] sm:$0xff]
        %v2048 = vld [vmem:[%s345 + $0x1f68] sm:$0xff]
        %v2049 = vld [vmem:[%s345 + $0x1f70] sm:$0xff]
        %v2050 = vld [vmem:[%s345 + $0x1f78] sm:$0xff]
        %v2051 = vld [vmem:[%s345 + $0x1f80] sm:$0xff]
        %v2052 = vld [vmem:[%s345 + $0x1f88] sm:$0xff]
        %v2053 = vld [vmem:[%s345 + $0x1f90] sm:$0xff]
        %v2054 = vld [vmem:[%s345 + $0x1f98] sm:$0xff]
        %v2055 = vld [vmem:[%s345 + $0x1fa0] sm:$0xff]
        %v2056 = vld [vmem:[%s345 + $0x1fa8] sm:$0xff]
        %v2057 = vld [vmem:[%s345 + $0x1fb0] sm:$0xff]
        %v2058 = vld [vmem:[%s345 + $0x1fb8] sm:$0xff]
        %v2059 = vld [vmem:[%s345 + $0x1fc0] sm:$0xff]
        %v2060 = vld [vmem:[%s345 + $0x1fc8] sm:$0xff]
        %v2061 = vld [vmem:[%s345 + $0x1fd0] sm:$0xff]
        %v2062 = vld [vmem:[%s345 + $0x1fd8] sm:$0xff]
        %v2063 = vld [vmem:[%s345 + $0x1fe0] sm:$0xff]
        %v2064 = vld [vmem:[%s345 + $0x1fe8] sm:$0xff]
        %v2065 = vld [vmem:[%s345 + $0x1ff0] sm:$0xff]
        %v2066 = vld [vmem:[%s345 + $0x1ff8] sm:$0xff]
        %v2067 = vld [vmem:[%s345 + $0x2000] sm:$0xff]
        %v2068 = vld [vmem:[%s345 + $0x2008] sm:$0xff]
        %v2069 = vld [vmem:[%s345 + $0x2010] sm:$0xff]
        %v2070 = vld [vmem:[%s345 + $0x2018] sm:$0xff]
        %v2071 = vld [vmem:[%s345 + $0x2020] sm:$0xff]
        %v2072 = vld [vmem:[%s345 + $0x2028] sm:$0xff]
        %v2073 = vld [vmem:[%s345 + $0x2030] sm:$0xff]
        %v2074 = vld [vmem:[%s345 + $0x2038] sm:$0xff]
        %v2075 = vld [vmem:[%s345 + $0x2040] sm:$0xff]
        %v2076 = vld [vmem:[%s345 + $0x2048] sm:$0xff]
        %v2077 = vld [vmem:[%s345 + $0x2050] sm:$0xff]
        %v2078 = vld [vmem:[%s345 + $0x2058] sm:$0xff]
        %v2079 = vld [vmem:[%s345 + $0x2060] sm:$0xff]
        %v2080 = vld [vmem:[%s345 + $0x2068] sm:$0xff]
        %v2081 = vld [vmem:[%s345 + $0x2070] sm:$0xff]
        %v2082 = vld [vmem:[%s345 + $0x2078] sm:$0xff]
        %v2083 = vld [vmem:[%s345 + $0x2080] sm:$0xff]
        %v2084 = vld [vmem:[%s345 + $0x2088] sm:$0xff]
        %v2085 = vld [vmem:[%s345 + $0x2090] sm:$0xff]
        %v2086 = vld [vmem:[%s345 + $0x2098] sm:$0xff]
        %v2087 = vld [vmem:[%s345 + $0x20a0] sm:$0xff]
        %v2088 = vld [vmem:[%s345 + $0x20a8] sm:$0xff]
        %v2089 = vld [vmem:[%s345 + $0x20b0] sm:$0xff]
        %v2090 = vld [vmem:[%s345 + $0x20b8] sm:$0xff]
        %v2091 = vld [vmem:[%s345 + $0x20c0] sm:$0xff]
        %v2092 = vld [vmem:[%s345 + $0x20c8] sm:$0xff]
        %v2093 = vld [vmem:[%s345 + $0x20d0] sm:$0xff]
        %v2094 = vld [vmem:[%s345 + $0x20d8] sm:$0xff]
        %v2095 = vld [vmem:[%s345 + $0x20e0] sm:$0xff]
        %v2096 = vld [vmem:[%s345 + $0x20e8] sm:$0xff]
        %v2097 = vld [vmem:[%s345 + $0x20f0] sm:$0xff]
        %v2098 = vld [vmem:[%s345 + $0x20f8] sm:$0xff]
        %v2099 = vld [vmem:[%s345 + $0x2100] sm:$0xff]
        %v2100 = vld [vmem:[%s345 + $0x2108] sm:$0xff]
        %v2101 = vld [vmem:[%s345 + $0x2110] sm:$0xff]
        %v2102 = vld [vmem:[%s345 + $0x2118] sm:$0xff]
        %v2103 = vld [vmem:[%s345 + $0x2120] sm:$0xff]
        %v2104 = vld [vmem:[%s345 + $0x2128] sm:$0xff]
        %v2105 = vld [vmem:[%s345 + $0x2130] sm:$0xff]
        %v2106 = vld [vmem:[%s345 + $0x2138] sm:$0xff]
        %v2107 = vld [vmem:[%s345 + $0x2140] sm:$0xff]
        %v2108 = vld [vmem:[%s345 + $0x2148] sm:$0xff]
        %v2109 = vld [vmem:[%s345 + $0x2150] sm:$0xff]
        %v2110 = vld [vmem:[%s345 + $0x2158] sm:$0xff]
        %v2111 = vld [vmem:[%s345 + $0x2160] sm:$0xff]
        %v2112 = vld [vmem:[%s345 + $0x2168] sm:$0xff]
        %v2113 = vld [vmem:[%s345 + $0x2170] sm:$0xff]
        %v2114 = vld [vmem:[%s345 + $0x2178] sm:$0xff]
        %v2115 = vld [vmem:[%s345 + $0x2180] sm:$0xff]
        %v2116 = vld [vmem:[%s345 + $0x2188] sm:$0xff]
        %v2117 = vld [vmem:[%s345 + $0x2190] sm:$0xff]
        %v2118 = vld [vmem:[%s345 + $0x2198] sm:$0xff]
        %v2119 = vld [vmem:[%s345 + $0x21a0] sm:$0xff]
        %v2120 = vld [vmem:[%s345 + $0x21a8] sm:$0xff]
        %v2121 = vld [vmem:[%s345 + $0x21b0] sm:$0xff]
        %v2122 = vld [vmem:[%s345 + $0x21b8] sm:$0xff]
        %v2123 = vld [vmem:[%s345 + $0x21c0] sm:$0xff]
        %v2124 = vld [vmem:[%s345 + $0x21c8] sm:$0xff]
        %v2125 = vld [vmem:[%s345 + $0x21d0] sm:$0xff]
        %v2126 = vld [vmem:[%s345 + $0x21d8] sm:$0xff]
        %v2127 = vld [vmem:[%s345 + $0x21e0] sm:$0xff]
        %v2128 = vld [vmem:[%s345 + $0x21e8] sm:$0xff]
        %v2129 = vld [vmem:[%s345 + $0x21f0] sm:$0xff]
        %v2130 = vld [vmem:[%s345 + $0x21f8] sm:$0xff]
        %v2131 = vld [vmem:[%s345 + $0x2200] sm:$0xff]
        %v2132 = vld [vmem:[%s345 + $0x2208] sm:$0xff]
        %v2133 = vld [vmem:[%s345 + $0x2210] sm:$0xff]
        %v2134 = vld [vmem:[%s345 + $0x2218] sm:$0xff]
        %v2135 = vld [vmem:[%s345 + $0x2220] sm:$0xff]
        %v2136 = vld [vmem:[%s345 + $0x2228] sm:$0xff]
        %v2137 = vld [vmem:[%s345 + $0x2230] sm:$0xff]
        %v2138 = vld [vmem:[%s345 + $0x2238] sm:$0xff]
        %v2139 = vld [vmem:[%s345 + $0x2240] sm:$0xff]
        %v2140 = vld [vmem:[%s345 + $0x2248] sm:$0xff]
        %v2141 = vld [vmem:[%s345 + $0x2250] sm:$0xff]
        %v2142 = vld [vmem:[%s345 + $0x2258] sm:$0xff]
        %v2143 = vld [vmem:[%s345 + $0x2260] sm:$0xff]
        %v2144 = vld [vmem:[%s345 + $0x2268] sm:$0xff]
        %v2145 = vld [vmem:[%s345 + $0x2270] sm:$0xff]
        %v2146 = vld [vmem:[%s345 + $0x2278] sm:$0xff]
        %v2147 = vld [vmem:[%s345 + $0x2280] sm:$0xff]
        %v2148 = vld [vmem:[%s345 + $0x2288] sm:$0xff]
        %v2149 = vld [vmem:[%s345 + $0x2290] sm:$0xff]
        %v2150 = vld [vmem:[%s345 + $0x2298] sm:$0xff]
        %v2151 = vld [vmem:[%s345 + $0x22a0] sm:$0xff]
        %v2152 = vld [vmem:[%s345 + $0x22a8] sm:$0xff]
        %v2153 = vld [vmem:[%s345 + $0x22b0] sm:$0xff]
        %v2154 = vld [vmem:[%s345 + $0x22b8] sm:$0xff]
        %v2155 = vld [vmem:[%s345 + $0x22c0] sm:$0xff]
        %v2156 = vld [vmem:[%s345 + $0x22c8] sm:$0xff]
        %v2157 = vld [vmem:[%s345 + $0x22d0] sm:$0xff]
        %v2158 = vld [vmem:[%s345 + $0x22d8] sm:$0xff]
        %v2159 = vld [vmem:[%s345 + $0x22e0] sm:$0xff]
        %v2160 = vld [vmem:[%s345 + $0x22e8] sm:$0xff]
        %v2161 = vld [vmem:[%s345 + $0x22f0] sm:$0xff]
        %v2162 = vld [vmem:[%s345 + $0x22f8] sm:$0xff]
        %v2163 = vld [vmem:[%s345 + $0x2300] sm:$0xff]
        %v2164 = vld [vmem:[%s345 + $0x2308] sm:$0xff]
        %v2165 = vld [vmem:[%s345 + $0x2310] sm:$0xff]
        %v2166 = vld [vmem:[%s345 + $0x2318] sm:$0xff]
        %v2167 = vld [vmem:[%s345 + $0x2320] sm:$0xff]
        %v2168 = vld [vmem:[%s345 + $0x2328] sm:$0xff]
        %v2169 = vld [vmem:[%s345 + $0x2330] sm:$0xff]
        %v2170 = vld [vmem:[%s345 + $0x2338] sm:$0xff]
        %v2171 = vld [vmem:[%s345 + $0x2340] sm:$0xff]
        %v2172 = vld [vmem:[%s345 + $0x2348] sm:$0xff]
        %v2173 = vld [vmem:[%s345 + $0x2350] sm:$0xff]
        %v2174 = vld [vmem:[%s345 + $0x2358] sm:$0xff]
        %v2175 = vld [vmem:[%s345 + $0x2360] sm:$0xff]
        %v2176 = vld [vmem:[%s345 + $0x2368] sm:$0xff]
        %v2177 = vld [vmem:[%s345 + $0x2370] sm:$0xff]
        %v2178 = vld [vmem:[%s345 + $0x2378] sm:$0xff]
        %v2179 = vld [vmem:[%s345 + $0x2380] sm:$0xff]
        %v2180 = vld [vmem:[%s345 + $0x2388] sm:$0xff]
        %v2181 = vld [vmem:[%s345 + $0x2390] sm:$0xff]
        %v2182 = vld [vmem:[%s345 + $0x2398] sm:$0xff]
        %v2183 = vld [vmem:[%s345 + $0x23a0] sm:$0xff]
        %v2184 = vld [vmem:[%s345 + $0x23a8] sm:$0xff]
        %v2185 = vld [vmem:[%s345 + $0x23b0] sm:$0xff]
        %v2186 = vld [vmem:[%s345 + $0x23b8] sm:$0xff]
        %v2187 = vld [vmem:[%s345 + $0x23c0] sm:$0xff]
        %v2188 = vld [vmem:[%s345 + $0x23c8] sm:$0xff]
        %v2189 = vld [vmem:[%s345 + $0x23d0] sm:$0xff]
        %v2190 = vld [vmem:[%s345 + $0x23d8] sm:$0xff]
        %v2191 = vld [vmem:[%s345 + $0x23e0] sm:$0xff]
        %v2192 = vld [vmem:[%s345 + $0x23e8] sm:$0xff]
        %v2193 = vld [vmem:[%s345 + $0x23f0] sm:$0xff]
        %v2194 = vld [vmem:[%s345 + $0x23f8] sm:$0xff]
        %v2195 = vld [vmem:[%s345 + $0x2400] sm:$0xff]
        %v2196 = vld [vmem:[%s345 + $0x2408] sm:$0xff]
        %v2197 = vld [vmem:[%s345 + $0x2410] sm:$0xff]
        %v2198 = vld [vmem:[%s345 + $0x2418] sm:$0xff]
        %v2199 = vld [vmem:[%s345 + $0x2420] sm:$0xff]
        %v2200 = vld [vmem:[%s345 + $0x2428] sm:$0xff]
        %v2201 = vld [vmem:[%s345 + $0x2430] sm:$0xff]
        %v2202 = vld [vmem:[%s345 + $0x2438] sm:$0xff]
        %v2203 = vld [vmem:[%s345 + $0x2440] sm:$0xff]
        %v2204 = vld [vmem:[%s345 + $0x2448] sm:$0xff]
        %v2205 = vld [vmem:[%s345 + $0x2450] sm:$0xff]
        %v2206 = vld [vmem:[%s345 + $0x2458] sm:$0xff]
        %v2207 = vld [vmem:[%s345 + $0x2460] sm:$0xff]
        %v2208 = vld [vmem:[%s345 + $0x2468] sm:$0xff]
        %v2209 = vld [vmem:[%s345 + $0x2470] sm:$0xff]
        %v2210 = vld [vmem:[%s345 + $0x2478] sm:$0xff]
        %v2211 = vld [vmem:[%s345 + $0x2480] sm:$0xff]
        %v2212 = vld [vmem:[%s345 + $0x2488] sm:$0xff]
        %v2213 = vld [vmem:[%s345 + $0x2490] sm:$0xff]
        %v2214 = vld [vmem:[%s345 + $0x2498] sm:$0xff]
        %v2215 = vld [vmem:[%s345 + $0x24a0] sm:$0xff]
        %v2216 = vld [vmem:[%s345 + $0x24a8] sm:$0xff]
        %v2217 = vld [vmem:[%s345 + $0x24b0] sm:$0xff]
        %v2218 = vld [vmem:[%s345 + $0x24b8] sm:$0xff]
        %v2219 = vld [vmem:[%s345 + $0x24c0] sm:$0xff]
        %v2220 = vld [vmem:[%s345 + $0x24c8] sm:$0xff]
        %v2221 = vld [vmem:[%s345 + $0x24d0] sm:$0xff]
        %v2222 = vld [vmem:[%s345 + $0x24d8] sm:$0xff]
        %v2223 = vld [vmem:[%s345 + $0x24e0] sm:$0xff]
        %v2224 = vld [vmem:[%s345 + $0x24e8] sm:$0xff]
        %v2225 = vld [vmem:[%s345 + $0x24f0] sm:$0xff]
        %v2226 = vld [vmem:[%s345 + $0x24f8] sm:$0xff]
        %v2227 = vld [vmem:[%s345 + $0x2500] sm:$0xff]
        %v2228 = vld [vmem:[%s345 + $0x2508] sm:$0xff]
        %v2229 = vld [vmem:[%s345 + $0x2510] sm:$0xff]
        %v2230 = vld [vmem:[%s345 + $0x2518] sm:$0xff]
        %v2231 = vld [vmem:[%s345 + $0x2520] sm:$0xff]
        %v2232 = vld [vmem:[%s345 + $0x2528] sm:$0xff]
        %v2233 = vld [vmem:[%s345 + $0x2530] sm:$0xff]
        %v2234 = vld [vmem:[%s345 + $0x2538] sm:$0xff]
        %v2235 = vld [vmem:[%s345 + $0x2540] sm:$0xff]
        %v2236 = vld [vmem:[%s345 + $0x2548] sm:$0xff]
        %v2237 = vld [vmem:[%s345 + $0x2550] sm:$0xff]
        %v2238 = vld [vmem:[%s345 + $0x2558] sm:$0xff]
        %v2239 = vld [vmem:[%s345 + $0x2560] sm:$0xff]
        %v2240 = vld [vmem:[%s345 + $0x2568] sm:$0xff]
        %v2241 = vld [vmem:[%s345 + $0x2570] sm:$0xff]
        %v2242 = vld [vmem:[%s345 + $0x2578] sm:$0xff]
        %v2243 = vld [vmem:[%s345 + $0x2580] sm:$0xff]
        %v2244 = vld [vmem:[%s345 + $0x2588] sm:$0xff]
        %v2245 = vld [vmem:[%s345 + $0x2590] sm:$0xff]
        %v2246 = vld [vmem:[%s345 + $0x2598] sm:$0xff]
        %v2247 = vld [vmem:[%s345 + $0x25a0] sm:$0xff]
        %v2248 = vld [vmem:[%s345 + $0x25a8] sm:$0xff]
        %v2249 = vld [vmem:[%s345 + $0x25b0] sm:$0xff]
        %v2250 = vld [vmem:[%s345 + $0x25b8] sm:$0xff]
        %v2251 = vld [vmem:[%s345 + $0x25c0] sm:$0xff]
        %v2252 = vld [vmem:[%s345 + $0x25c8] sm:$0xff]
        %v2253 = vld [vmem:[%s345 + $0x25d0] sm:$0xff]
        %v2254 = vld [vmem:[%s345 + $0x25d8] sm:$0xff]
        %v2255 = vld [vmem:[%s345 + $0x25e0] sm:$0xff]
        %v2256 = vld [vmem:[%s345 + $0x25e8] sm:$0xff]
        %v2257 = vld [vmem:[%s345 + $0x25f0] sm:$0xff]
        %v2258 = vld [vmem:[%s345 + $0x25f8] sm:$0xff]
        %v2259 = vld [vmem:[%s345 + $0x2600] sm:$0xff]
        %v2260 = vld [vmem:[%s345 + $0x2608] sm:$0xff]
        %v2261 = vld [vmem:[%s345 + $0x2610] sm:$0xff]
        %v2262 = vld [vmem:[%s345 + $0x2618] sm:$0xff]
        %v2263 = vld [vmem:[%s345 + $0x2620] sm:$0xff]
        %v2264 = vld [vmem:[%s345 + $0x2628] sm:$0xff]
        %v2265 = vld [vmem:[%s345 + $0x2630] sm:$0xff]
        %v2266 = vld [vmem:[%s345 + $0x2638] sm:$0xff]
        %v2267 = vld [vmem:[%s345 + $0x2640] sm:$0xff]
        %v2268 = vld [vmem:[%s345 + $0x2648] sm:$0xff]
        %v2269 = vld [vmem:[%s345 + $0x2650] sm:$0xff]
        %v2270 = vld [vmem:[%s345 + $0x2658] sm:$0xff]
        %v2271 = vld [vmem:[%s345 + $0x2660] sm:$0xff]
        %v2272 = vld [vmem:[%s345 + $0x2668] sm:$0xff]
        %v2273 = vld [vmem:[%s345 + $0x2670] sm:$0xff]
        %v2274 = vld [vmem:[%s345 + $0x2678] sm:$0xff]
        %v2275 = vld [vmem:[%s345 + $0x2680] sm:$0xff]
        %v2276 = vld [vmem:[%s345 + $0x2688] sm:$0xff]
        %v2277 = vld [vmem:[%s345 + $0x2690] sm:$0xff]
        %v2278 = vld [vmem:[%s345 + $0x2698] sm:$0xff]
        %v2279 = vld [vmem:[%s345 + $0x26a0] sm:$0xff]
        %v2280 = vld [vmem:[%s345 + $0x26a8] sm:$0xff]
        %v2281 = vld [vmem:[%s345 + $0x26b0] sm:$0xff]
        %v2282 = vld [vmem:[%s345 + $0x26b8] sm:$0xff]
        %v2283 = vld [vmem:[%s345 + $0x26c0] sm:$0xff]
        %v2284 = vld [vmem:[%s345 + $0x26c8] sm:$0xff]
        %v2285 = vld [vmem:[%s345 + $0x26d0] sm:$0xff]
        %v2286 = vld [vmem:[%s345 + $0x26d8] sm:$0xff]
        %v2287 = vld [vmem:[%s345 + $0x26e0] sm:$0xff]
        %v2288 = vld [vmem:[%s345 + $0x26e8] sm:$0xff]
        %v2289 = vld [vmem:[%s345 + $0x26f0] sm:$0xff]
        %v2290 = vld [vmem:[%s345 + $0x26f8] sm:$0xff]
        %v2291 = vld [vmem:[%s345 + $0x2700] sm:$0xff]
        %v2292 = vld [vmem:[%s345 + $0x2708] sm:$0xff]
        %v2293 = vld [vmem:[%s345 + $0x2710] sm:$0xff]
        %v2294 = vld [vmem:[%s345 + $0x2718] sm:$0xff]
        %v2295 = vld [vmem:[%s345 + $0x2720] sm:$0xff]
        %v2296 = vld [vmem:[%s345 + $0x2728] sm:$0xff]
        %v2297 = vld [vmem:[%s345 + $0x2730] sm:$0xff]
        %v2298 = vld [vmem:[%s345 + $0x2738] sm:$0xff]
        %v2299 = vld [vmem:[%s345 + $0x2740] sm:$0xff]
        %v2300 = vld [vmem:[%s345 + $0x2748] sm:$0xff]
        %v2301 = vld [vmem:[%s345 + $0x2750] sm:$0xff]
        %v2302 = vld [vmem:[%s345 + $0x2758] sm:$0xff]
        %v2303 = vld [vmem:[%s345 + $0x2760] sm:$0xff]
        %v2304 = vld [vmem:[%s345 + $0x2768] sm:$0xff]
        %v2305 = vld [vmem:[%s345 + $0x2770] sm:$0xff]
        %v2306 = vld [vmem:[%s345 + $0x2778] sm:$0xff]
        %v2307 = vld [vmem:[%s345 + $0x2780] sm:$0xff]
        %v2308 = vld [vmem:[%s345 + $0x2788] sm:$0xff]
        %v2309 = vld [vmem:[%s345 + $0x2790] sm:$0xff]
        %v2310 = vld [vmem:[%s345 + $0x2798] sm:$0xff]
        %v2311 = vld [vmem:[%s345 + $0x27a0] sm:$0xff]
        %v2312 = vld [vmem:[%s345 + $0x27a8] sm:$0xff]
        %v2313 = vld [vmem:[%s345 + $0x27b0] sm:$0xff]
        %v2314 = vld [vmem:[%s345 + $0x27b8] sm:$0xff]
        %v2315 = vld [vmem:[%s345 + $0x27c0] sm:$0xff]
        %v2316 = vld [vmem:[%s345 + $0x27c8] sm:$0xff]
        %v2317 = vld [vmem:[%s345 + $0x27d0] sm:$0xff]
        %v2318 = vld [vmem:[%s345 + $0x27d8] sm:$0xff]
        %v2319 = vld [vmem:[%s345 + $0x27e0] sm:$0xff]
        %v2320 = vld [vmem:[%s345 + $0x27e8] sm:$0xff]
        %v2321 = vld [vmem:[%s345 + $0x27f0] sm:$0xff]
        %v2322 = vld [vmem:[%s345 + $0x27f8] sm:$0xff]
        %v2323 = vld [vmem:[%s345 + $0x2800] sm:$0xff]
        %v2324 = vld [vmem:[%s345 + $0x2808] sm:$0xff]
        %v2325 = vld [vmem:[%s345 + $0x2810] sm:$0xff]
        %v2326 = vld [vmem:[%s345 + $0x2818] sm:$0xff]
        %v2327 = vld [vmem:[%s345 + $0x2820] sm:$0xff]
        %v2328 = vld [vmem:[%s345 + $0x2828] sm:$0xff]
        %v2329 = vld [vmem:[%s345 + $0x2830] sm:$0xff]
        %v2330 = vld [vmem:[%s345 + $0x2838] sm:$0xff]
        %v2331 = vld [vmem:[%s345 + $0x2840] sm:$0xff]
        %v2332 = vld [vmem:[%s345 + $0x2848] sm:$0xff]
        %v2333 = vld [vmem:[%s345 + $0x2850] sm:$0xff]
        %v2334 = vld [vmem:[%s345 + $0x2858] sm:$0xff]
        %v2335 = vld [vmem:[%s345 + $0x2860] sm:$0xff]
        %v2336 = vld [vmem:[%s345 + $0x2868] sm:$0xff]
        %v2337 = vld [vmem:[%s345 + $0x2870] sm:$0xff]
        %v2338 = vld [vmem:[%s345 + $0x2878] sm:$0xff]
        %v2339 = vld [vmem:[%s345 + $0x2880] sm:$0xff]
        %v2340 = vld [vmem:[%s345 + $0x2888] sm:$0xff]
        %v2341 = vld [vmem:[%s345 + $0x2890] sm:$0xff]
        %v2342 = vld [vmem:[%s345 + $0x2898] sm:$0xff]
        %v2343 = vld [vmem:[%s345 + $0x28a0] sm:$0xff]
        %v2344 = vld [vmem:[%s345 + $0x28a8] sm:$0xff]
        %v2345 = vld [vmem:[%s345 + $0x28b0] sm:$0xff]
        %v2346 = vld [vmem:[%s345 + $0x28b8] sm:$0xff]
        %v2347 = vld [vmem:[%s345 + $0x28c0] sm:$0xff]
        %v2348 = vld [vmem:[%s345 + $0x28c8] sm:$0xff]
        %v2349 = vld [vmem:[%s345 + $0x28d0] sm:$0xff]
        %v2350 = vld [vmem:[%s345 + $0x28d8] sm:$0xff]
        %v2351 = vld [vmem:[%s345 + $0x28e0] sm:$0xff]
        %v2352 = vld [vmem:[%s345 + $0x28e8] sm:$0xff]
        %v2353 = vld [vmem:[%s345 + $0x28f0] sm:$0xff]
        %v2354 = vld [vmem:[%s345 + $0x28f8] sm:$0xff]
        %v2355 = vld [vmem:[%s345 + $0x2900] sm:$0xff]
        %v2356 = vld [vmem:[%s345 + $0x2908] sm:$0xff]
        %v2357 = vld [vmem:[%s345 + $0x2910] sm:$0xff]
        %v2358 = vld [vmem:[%s345 + $0x2918] sm:$0xff]
        %v2359 = vld [vmem:[%s345 + $0x2920] sm:$0xff]
        %v2360 = vld [vmem:[%s345 + $0x2928] sm:$0xff]
        %v2361 = vld [vmem:[%s345 + $0x2930] sm:$0xff]
        %v2362 = vld [vmem:[%s345 + $0x2938] sm:$0xff]
        %v2363 = vld [vmem:[%s345 + $0x2940] sm:$0xff]
        %v2364 = vld [vmem:[%s345 + $0x2948] sm:$0xff]
        %v2365 = vld [vmem:[%s345 + $0x2950] sm:$0xff]
        %v2366 = vld [vmem:[%s345 + $0x2958] sm:$0xff]
        %v2367 = vld [vmem:[%s345 + $0x2960] sm:$0xff]
        %v2368 = vld [vmem:[%s345 + $0x2968] sm:$0xff]
        %v2369 = vld [vmem:[%s345 + $0x2970] sm:$0xff]
        %v2370 = vld [vmem:[%s345 + $0x2978] sm:$0xff]
        %v2371 = vld [vmem:[%s345 + $0x2980] sm:$0xff]
        %v2372 = vld [vmem:[%s345 + $0x2988] sm:$0xff]
        %v2373 = vld [vmem:[%s345 + $0x2990] sm:$0xff]
        %v2374 = vld [vmem:[%s345 + $0x2998] sm:$0xff]
        %v2375 = vld [vmem:[%s345 + $0x29a0] sm:$0xff]
        %v2376 = vld [vmem:[%s345 + $0x29a8] sm:$0xff]
        %v2377 = vld [vmem:[%s345 + $0x29b0] sm:$0xff]
        %v2378 = vld [vmem:[%s345 + $0x29b8] sm:$0xff]
        %v2379 = vld [vmem:[%s345 + $0x29c0] sm:$0xff]
        %v2380 = vld [vmem:[%s345 + $0x29c8] sm:$0xff]
        %v2381 = vld [vmem:[%s345 + $0x29d0] sm:$0xff]
        %v2382 = vld [vmem:[%s345 + $0x29d8] sm:$0xff]
        %v2383 = vld [vmem:[%s345 + $0x29e0] sm:$0xff]
        %v2384 = vld [vmem:[%s345 + $0x29e8] sm:$0xff]
        %v2385 = vld [vmem:[%s345 + $0x29f0] sm:$0xff]
        %v2386 = vld [vmem:[%s345 + $0x29f8] sm:$0xff]
        %v2387 = vld [vmem:[%s345 + $0x2a00] sm:$0xff]
        %v2388 = vld [vmem:[%s345 + $0x2a08] sm:$0xff]
        %v2389 = vld [vmem:[%s345 + $0x2a10] sm:$0xff]
        %v2390 = vld [vmem:[%s345 + $0x2a18] sm:$0xff]
        %v2391 = vld [vmem:[%s345 + $0x2a20] sm:$0xff]
        %v2392 = vld [vmem:[%s345 + $0x2a28] sm:$0xff]
        %v2393 = vld [vmem:[%s345 + $0x2a30] sm:$0xff]
        %v2394 = vld [vmem:[%s345 + $0x2a38] sm:$0xff]
        %v2395 = vld [vmem:[%s345 + $0x2a40] sm:$0xff]
        %v2396 = vld [vmem:[%s345 + $0x2a48] sm:$0xff]
        %v2397 = vld [vmem:[%s345 + $0x2a50] sm:$0xff]
        %v2398 = vld [vmem:[%s345 + $0x2a58] sm:$0xff]
        %v2399 = vld [vmem:[%s345 + $0x2a60] sm:$0xff]
        %v2400 = vld [vmem:[%s345 + $0x2a68] sm:$0xff]
        %v2401 = vld [vmem:[%s345 + $0x2a70] sm:$0xff]
        %v2402 = vld [vmem:[%s345 + $0x2a78] sm:$0xff]
        %v2403 = vld [vmem:[%s345 + $0x2a80] sm:$0xff]
        %v2404 = vld [vmem:[%s345 + $0x2a88] sm:$0xff]
        %v2405 = vld [vmem:[%s345 + $0x2a90] sm:$0xff]
        %v2406 = vld [vmem:[%s345 + $0x2a98] sm:$0xff]
        %v2407 = vld [vmem:[%s345 + $0x2aa0] sm:$0xff]
        %v2408 = vld [vmem:[%s345 + $0x2aa8] sm:$0xff]
        %v2409 = vld [vmem:[%s345 + $0x2ab0] sm:$0xff]
        %v2410 = vld [vmem:[%s345 + $0x2ab8] sm:$0xff]
        %v2411 = vld [vmem:[%s345 + $0x2ac0] sm:$0xff]
        %v2412 = vld [vmem:[%s345 + $0x2ac8] sm:$0xff]
        %v2413 = vld [vmem:[%s345 + $0x2ad0] sm:$0xff]
        %v2414 = vld [vmem:[%s345 + $0x2ad8] sm:$0xff]
        %v2415 = vld [vmem:[%s345 + $0x2ae0] sm:$0xff]
        %v2416 = vld [vmem:[%s345 + $0x2ae8] sm:$0xff]
        %v2417 = vld [vmem:[%s345 + $0x2af0] sm:$0xff]
        %v2418 = vld [vmem:[%s345 + $0x2af8] sm:$0xff]
        %v2419 = vld [vmem:[%s345 + $0x2b00] sm:$0xff]
        %v2420 = vld [vmem:[%s345 + $0x2b08] sm:$0xff]
        %v2421 = vld [vmem:[%s345 + $0x2b10] sm:$0xff]
        %v2422 = vld [vmem:[%s345 + $0x2b18] sm:$0xff]
        %v2423 = vld [vmem:[%s345 + $0x2b20] sm:$0xff]
        %v2424 = vld [vmem:[%s345 + $0x2b28] sm:$0xff]
        %v2425 = vld [vmem:[%s345 + $0x2b30] sm:$0xff]
        %v2426 = vld [vmem:[%s345 + $0x2b38] sm:$0xff]
        %v2427 = vld [vmem:[%s345 + $0x2b40] sm:$0xff]
        %v2428 = vld [vmem:[%s345 + $0x2b48] sm:$0xff]
        %v2429 = vld [vmem:[%s345 + $0x2b50] sm:$0xff]
        %v2430 = vld [vmem:[%s345 + $0x2b58] sm:$0xff]
        %v2431 = vld [vmem:[%s345 + $0x2b60] sm:$0xff]
        %v2432 = vld [vmem:[%s345 + $0x2b68] sm:$0xff]
        %v2433 = vld [vmem:[%s345 + $0x2b70] sm:$0xff]
        %v2434 = vld [vmem:[%s345 + $0x2b78] sm:$0xff]
        %v2435 = vld [vmem:[%s345 + $0x2b80] sm:$0xff]
        %v2436 = vld [vmem:[%s345 + $0x2b88] sm:$0xff]
        %v2437 = vld [vmem:[%s345 + $0x2b90] sm:$0xff]
        %v2438 = vld [vmem:[%s345 + $0x2b98] sm:$0xff]
        %v2439 = vld [vmem:[%s345 + $0x2ba0] sm:$0xff]
        %v2440 = vld [vmem:[%s345 + $0x2ba8] sm:$0xff]
        %v2441 = vld [vmem:[%s345 + $0x2bb0] sm:$0xff]
        %v2442 = vld [vmem:[%s345 + $0x2bb8] sm:$0xff]
        %v2443 = vld [vmem:[%s345 + $0x2bc0] sm:$0xff]
        %v2444 = vld [vmem:[%s345 + $0x2bc8] sm:$0xff]
        %v2445 = vld [vmem:[%s345 + $0x2bd0] sm:$0xff]
        %v2446 = vld [vmem:[%s345 + $0x2bd8] sm:$0xff]
        %v2447 = vld [vmem:[%s345 + $0x2be0] sm:$0xff]
        %v2448 = vld [vmem:[%s345 + $0x2be8] sm:$0xff]
        %v2449 = vld [vmem:[%s345 + $0x2bf0] sm:$0xff]
        %v2450 = vld [vmem:[%s345 + $0x2bf8] sm:$0xff]
        %v2451 = vld [vmem:[%s345 + $0x2c00] sm:$0xff]
        %v2452 = vld [vmem:[%s345 + $0x2c08] sm:$0xff]
        %v2453 = vld [vmem:[%s345 + $0x2c10] sm:$0xff]
        %v2454 = vld [vmem:[%s345 + $0x2c18] sm:$0xff]
        %v2455 = vld [vmem:[%s345 + $0x2c20] sm:$0xff]
        %v2456 = vld [vmem:[%s345 + $0x2c28] sm:$0xff]
        %v2457 = vld [vmem:[%s345 + $0x2c30] sm:$0xff]
        %v2458 = vld [vmem:[%s345 + $0x2c38] sm:$0xff]
        %v2459 = vld [vmem:[%s345 + $0x2c40] sm:$0xff]
        %v2460 = vld [vmem:[%s345 + $0x2c48] sm:$0xff]
        %v2461 = vld [vmem:[%s345 + $0x2c50] sm:$0xff]
        %v2462 = vld [vmem:[%s345 + $0x2c58] sm:$0xff]
        %v2463 = vld [vmem:[%s345 + $0x2c60] sm:$0xff]
        %v2464 = vld [vmem:[%s345 + $0x2c68] sm:$0xff]
        %v2465 = vld [vmem:[%s345 + $0x2c70] sm:$0xff]
        %v2466 = vld [vmem:[%s345 + $0x2c78] sm:$0xff]
        %v2467 = vld [vmem:[%s345 + $0x2c80] sm:$0xff]
        %v2468 = vld [vmem:[%s345 + $0x2c88] sm:$0xff]
        %v2469 = vld [vmem:[%s345 + $0x2c90] sm:$0xff]
        %v2470 = vld [vmem:[%s345 + $0x2c98] sm:$0xff]
        %v2471 = vld [vmem:[%s345 + $0x2ca0] sm:$0xff]
        %v2472 = vld [vmem:[%s345 + $0x2ca8] sm:$0xff]
        %v2473 = vld [vmem:[%s345 + $0x2cb0] sm:$0xff]
        %v2474 = vld [vmem:[%s345 + $0x2cb8] sm:$0xff]
        %v2475 = vld [vmem:[%s345 + $0x2cc0] sm:$0xff]
        %v2476 = vld [vmem:[%s345 + $0x2cc8] sm:$0xff]
        %v2477 = vld [vmem:[%s345 + $0x2cd0] sm:$0xff]
        %v2478 = vld [vmem:[%s345 + $0x2cd8] sm:$0xff]
        %v2479 = vld [vmem:[%s345 + $0x2ce0] sm:$0xff]
        %v2480 = vld [vmem:[%s345 + $0x2ce8] sm:$0xff]
        %v2481 = vld [vmem:[%s345 + $0x2cf0] sm:$0xff]
        %v2482 = vld [vmem:[%s345 + $0x2cf8] sm:$0xff]
        %v2483 = vld [vmem:[%s345 + $0x2d00] sm:$0xff]
        %v2484 = vld [vmem:[%s345 + $0x2d08] sm:$0xff]
        %v2485 = vld [vmem:[%s345 + $0x2d10] sm:$0xff]
        %v2486 = vld [vmem:[%s345 + $0x2d18] sm:$0xff]
        %v2487 = vld [vmem:[%s345 + $0x2d20] sm:$0xff]
        %v2488 = vld [vmem:[%s345 + $0x2d28] sm:$0xff]
        %v2489 = vld [vmem:[%s345 + $0x2d30] sm:$0xff]
        %v2490 = vld [vmem:[%s345 + $0x2d38] sm:$0xff]
        %v2491 = vld [vmem:[%s345 + $0x2d40] sm:$0xff]
        %v2492 = vld [vmem:[%s345 + $0x2d48] sm:$0xff]
        %v2493 = vld [vmem:[%s345 + $0x2d50] sm:$0xff]
        %v2494 = vld [vmem:[%s345 + $0x2d58] sm:$0xff]
        %v2495 = vld [vmem:[%s345 + $0x2d60] sm:$0xff]
        %v2496 = vld [vmem:[%s345 + $0x2d68] sm:$0xff]
        %v2497 = vld [vmem:[%s345 + $0x2d70] sm:$0xff]
        %v2498 = vld [vmem:[%s345 + $0x2d78] sm:$0xff]
        %v2499 = vld [vmem:[%s345 + $0x2d80] sm:$0xff]
        %v2500 = vld [vmem:[%s345 + $0x2d88] sm:$0xff]
        %v2501 = vld [vmem:[%s345 + $0x2d90] sm:$0xff]
        %v2502 = vld [vmem:[%s345 + $0x2d98] sm:$0xff]
        %v2503 = vld [vmem:[%s345 + $0x2da0] sm:$0xff]
        %v2504 = vld [vmem:[%s345 + $0x2da8] sm:$0xff]
        %v2505 = vld [vmem:[%s345 + $0x2db0] sm:$0xff]
        %v2506 = vld [vmem:[%s345 + $0x2db8] sm:$0xff]
        %v2507 = vld [vmem:[%s345 + $0x2dc0] sm:$0xff]
        %v2508 = vld [vmem:[%s345 + $0x2dc8] sm:$0xff]
        %v2509 = vld [vmem:[%s345 + $0x2dd0] sm:$0xff]
        %v2510 = vld [vmem:[%s345 + $0x2dd8] sm:$0xff]
        %v2511 = vld [vmem:[%s345 + $0x2de0] sm:$0xff]
        %v2512 = vld [vmem:[%s345 + $0x2de8] sm:$0xff]
        %v2513 = vld [vmem:[%s345 + $0x2df0] sm:$0xff]
        %v2514 = vld [vmem:[%s345 + $0x2df8] sm:$0xff]
        %v2515 = vld [vmem:[%s345 + $0x2e00] sm:$0xff]
        %v2516 = vld [vmem:[%s345 + $0x2e08] sm:$0xff]
        %v2517 = vld [vmem:[%s345 + $0x2e10] sm:$0xff]
        %v2518 = vld [vmem:[%s345 + $0x2e18] sm:$0xff]
        %v2519 = vld [vmem:[%s345 + $0x2e20] sm:$0xff]
        %v2520 = vld [vmem:[%s345 + $0x2e28] sm:$0xff]
        %v2521 = vld [vmem:[%s345 + $0x2e30] sm:$0xff]
        %v2522 = vld [vmem:[%s345 + $0x2e38] sm:$0xff]
        %v2523 = vld [vmem:[%s345 + $0x2e40] sm:$0xff]
        %v2524 = vld [vmem:[%s345 + $0x2e48] sm:$0xff]
        %v2525 = vld [vmem:[%s345 + $0x2e50] sm:$0xff]
        %v2526 = vld [vmem:[%s345 + $0x2e58] sm:$0xff]
        %v2527 = vld [vmem:[%s345 + $0x2e60] sm:$0xff]
        %v2528 = vld [vmem:[%s345 + $0x2e68] sm:$0xff]
        %v2529 = vld [vmem:[%s345 + $0x2e70] sm:$0xff]
        %v2530 = vld [vmem:[%s345 + $0x2e78] sm:$0xff]
        %v2531 = vld [vmem:[%s345 + $0x2e80] sm:$0xff]
        %v2532 = vld [vmem:[%s345 + $0x2e88] sm:$0xff]
        %v2533 = vld [vmem:[%s345 + $0x2e90] sm:$0xff]
        %v2534 = vld [vmem:[%s345 + $0x2e98] sm:$0xff]
        %v2535 = vld [vmem:[%s345 + $0x2ea0] sm:$0xff]
        %v2536 = vld [vmem:[%s345 + $0x2ea8] sm:$0xff]
        %v2537 = vld [vmem:[%s345 + $0x2eb0] sm:$0xff]
        %v2538 = vld [vmem:[%s345 + $0x2eb8] sm:$0xff]
        %v2539 = vld [vmem:[%s345 + $0x2ec0] sm:$0xff]
        %v2540 = vld [vmem:[%s345 + $0x2ec8] sm:$0xff]
        %v2541 = vld [vmem:[%s345 + $0x2ed0] sm:$0xff]
        %v2542 = vld [vmem:[%s345 + $0x2ed8] sm:$0xff]
        %v2543 = vld [vmem:[%s345 + $0x2ee0] sm:$0xff]
        %v2544 = vld [vmem:[%s345 + $0x2ee8] sm:$0xff]
        %v2545 = vld [vmem:[%s345 + $0x2ef0] sm:$0xff]
        %v2546 = vld [vmem:[%s345 + $0x2ef8] sm:$0xff]
        %v2547 = vld [vmem:[%s345 + $0x2f00] sm:$0xff]
        %v2548 = vld [vmem:[%s345 + $0x2f08] sm:$0xff]
        %v2549 = vld [vmem:[%s345 + $0x2f10] sm:$0xff]
        %v2550 = vld [vmem:[%s345 + $0x2f18] sm:$0xff]
        %v2551 = vld [vmem:[%s345 + $0x2f20] sm:$0xff]
        %v2552 = vld [vmem:[%s345 + $0x2f28] sm:$0xff]
        %v2553 = vld [vmem:[%s345 + $0x2f30] sm:$0xff]
        %v2554 = vld [vmem:[%s345 + $0x2f38] sm:$0xff]
        %v2555 = vld [vmem:[%s345 + $0x2f40] sm:$0xff]
        %v2556 = vld [vmem:[%s345 + $0x2f48] sm:$0xff]
        %v2557 = vld [vmem:[%s345 + $0x2f50] sm:$0xff]
        %v2558 = vld [vmem:[%s345 + $0x2f58] sm:$0xff]
        %v2559 = vld [vmem:[%s345 + $0x2f60] sm:$0xff]
        %v2560 = vld [vmem:[%s345 + $0x2f68] sm:$0xff]
        %v2561 = vld [vmem:[%s345 + $0x2f70] sm:$0xff]
        %v2562 = vld [vmem:[%s345 + $0x2f78] sm:$0xff]
        %v2563 = vld [vmem:[%s345 + $0x2f80] sm:$0xff]
        %v2564 = vld [vmem:[%s345 + $0x2f88] sm:$0xff]
        %v2565 = vld [vmem:[%s345 + $0x2f90] sm:$0xff]
        %v2566 = vld [vmem:[%s345 + $0x2f98] sm:$0xff]
        %v2567 = vld [vmem:[%s345 + $0x2fa0] sm:$0xff]
        %v2568 = vld [vmem:[%s345 + $0x2fa8] sm:$0xff]
        %v2569 = vld [vmem:[%s345 + $0x2fb0] sm:$0xff]
        %v2570 = vld [vmem:[%s345 + $0x2fb8] sm:$0xff]
        %v2571 = vld [vmem:[%s345 + $0x2fc0] sm:$0xff]
        %v2572 = vld [vmem:[%s345 + $0x2fc8] sm:$0xff]
        %v2573 = vld [vmem:[%s345 + $0x2fd0] sm:$0xff]
        %v2574 = vld [vmem:[%s345 + $0x2fd8] sm:$0xff]
        %v2575 = vld [vmem:[%s345 + $0x2fe0] sm:$0xff]
        %v2576 = vld [vmem:[%s345 + $0x2fe8] sm:$0xff]
        %v2577 = vld [vmem:[%s345 + $0x2ff0] sm:$0xff]
        %v2578 = vld [vmem:[%s345 + $0x2ff8] sm:$0xff]
        %v4115 = vunpack.c.l.b16 %v1043
        %v4116 = vunpack.c.h.b16 %v1043
        %v4117 = vunpack.c.l.b16 %v1044
        %v4118 = vunpack.c.h.b16 %v1044
        %v4119 = vunpack.c.l.b16 %v1045
        %v4120 = vunpack.c.h.b16 %v1045
        %v4121 = vunpack.c.l.b16 %v1046
        %v4122 = vunpack.c.h.b16 %v1046
        %v4123 = vunpack.c.l.b16 %v1047
        %v4124 = vunpack.c.h.b16 %v1047
        %v4125 = vunpack.c.l.b16 %v1048
        %v4126 = vunpack.c.h.b16 %v1048
        %v4127 = vunpack.c.l.b16 %v1049
        %v4128 = vunpack.c.h.b16 %v1049
        %v4129 = vunpack.c.l.b16 %v1050
        %v4130 = vunpack.c.h.b16 %v1050
        %v4131 = vunpack.c.l.b16 %v1051
        %v4132 = vunpack.c.h.b16 %v1051
        %v4133 = vunpack.c.l.b16 %v1052
        %v4134 = vunpack.c.h.b16 %v1052
        %v4135 = vunpack.c.l.b16 %v1053
        %v4136 = vunpack.c.h.b16 %v1053
        %v4137 = vunpack.c.l.b16 %v1054
        %v4138 = vunpack.c.h.b16 %v1054
        %v4139 = vunpack.c.l.b16 %v1055
        %v4140 = vunpack.c.h.b16 %v1055
        %v4141 = vunpack.c.l.b16 %v1056
        %v4142 = vunpack.c.h.b16 %v1056
        %v4143 = vunpack.c.l.b16 %v1057
        %v4144 = vunpack.c.h.b16 %v1057
        %v4145 = vunpack.c.l.b16 %v1058
        %v4146 = vunpack.c.h.b16 %v1058
        %v4147 = vunpack.c.l.b16 %v1059
        %v4148 = vunpack.c.h.b16 %v1059
        %v4149 = vunpack.c.l.b16 %v1060
        %v4150 = vunpack.c.h.b16 %v1060
        %v4151 = vunpack.c.l.b16 %v1061
        %v4152 = vunpack.c.h.b16 %v1061
        %v4153 = vunpack.c.l.b16 %v1062
        %v4154 = vunpack.c.h.b16 %v1062
        %v4155 = vunpack.c.l.b16 %v1063
        %v4156 = vunpack.c.h.b16 %v1063
        %v4157 = vunpack.c.l.b16 %v1064
        %v4158 = vunpack.c.h.b16 %v1064
        %v4159 = vunpack.c.l.b16 %v1065
        %v4160 = vunpack.c.h.b16 %v1065
        %v4161 = vunpack.c.l.b16 %v1066
        %v4162 = vunpack.c.h.b16 %v1066
        %v4163 = vunpack.c.l.b16 %v1067
        %v4164 = vunpack.c.h.b16 %v1067
        %v4165 = vunpack.c.l.b16 %v1068
        %v4166 = vunpack.c.h.b16 %v1068
        %v4167 = vunpack.c.l.b16 %v1069
        %v4168 = vunpack.c.h.b16 %v1069
        %v4169 = vunpack.c.l.b16 %v1070
        %v4170 = vunpack.c.h.b16 %v1070
        %v4171 = vunpack.c.l.b16 %v1071
        %v4172 = vunpack.c.h.b16 %v1071
        %v4173 = vunpack.c.l.b16 %v1072
        %v4174 = vunpack.c.h.b16 %v1072
        %v4175 = vunpack.c.l.b16 %v1073
        %v4176 = vunpack.c.h.b16 %v1073
        %v4177 = vunpack.c.l.b16 %v1074
        %v4178 = vunpack.c.h.b16 %v1074
        %v4179 = vunpack.c.l.b16 %v1075
        %v4180 = vunpack.c.h.b16 %v1075
        %v4181 = vunpack.c.l.b16 %v1076
        %v4182 = vunpack.c.h.b16 %v1076
        %v4183 = vunpack.c.l.b16 %v1077
        %v4184 = vunpack.c.h.b16 %v1077
        %v4185 = vunpack.c.l.b16 %v1078
        %v4186 = vunpack.c.h.b16 %v1078
        %v4187 = vunpack.c.l.b16 %v1079
        %v4188 = vunpack.c.h.b16 %v1079
        %v4189 = vunpack.c.l.b16 %v1080
        %v4190 = vunpack.c.h.b16 %v1080
        %v4191 = vunpack.c.l.b16 %v1081
        %v4192 = vunpack.c.h.b16 %v1081
        %v4193 = vunpack.c.l.b16 %v1082
        %v4194 = vunpack.c.h.b16 %v1082
        %v4195 = vunpack.c.l.b16 %v1083
        %v4196 = vunpack.c.h.b16 %v1083
        %v4197 = vunpack.c.l.b16 %v1084
        %v4198 = vunpack.c.h.b16 %v1084
        %v4199 = vunpack.c.l.b16 %v1085
        %v4200 = vunpack.c.h.b16 %v1085
        %v4201 = vunpack.c.l.b16 %v1086
        %v4202 = vunpack.c.h.b16 %v1086
        %v4203 = vunpack.c.l.b16 %v1087
        %v4204 = vunpack.c.h.b16 %v1087
        %v4205 = vunpack.c.l.b16 %v1088
        %v4206 = vunpack.c.h.b16 %v1088
        %v4207 = vunpack.c.l.b16 %v1089
        %v4208 = vunpack.c.h.b16 %v1089
        %v4209 = vunpack.c.l.b16 %v1090
        %v4210 = vunpack.c.h.b16 %v1090
        %v4211 = vunpack.c.l.b16 %v1091
        %v4212 = vunpack.c.h.b16 %v1091
        %v4213 = vunpack.c.l.b16 %v1092
        %v4214 = vunpack.c.h.b16 %v1092
        %v4215 = vunpack.c.l.b16 %v1093
        %v4216 = vunpack.c.h.b16 %v1093
        %v4217 = vunpack.c.l.b16 %v1094
        %v4218 = vunpack.c.h.b16 %v1094
        %v4219 = vunpack.c.l.b16 %v1095
        %v4220 = vunpack.c.h.b16 %v1095
        %v4221 = vunpack.c.l.b16 %v1096
        %v4222 = vunpack.c.h.b16 %v1096
        %v4223 = vunpack.c.l.b16 %v1097
        %v4224 = vunpack.c.h.b16 %v1097
        %v4225 = vunpack.c.l.b16 %v1098
        %v4226 = vunpack.c.h.b16 %v1098
        %v4227 = vunpack.c.l.b16 %v1099
        %v4228 = vunpack.c.h.b16 %v1099
        %v4229 = vunpack.c.l.b16 %v1100
        %v4230 = vunpack.c.h.b16 %v1100
        %v4231 = vunpack.c.l.b16 %v1101
        %v4232 = vunpack.c.h.b16 %v1101
        %v4233 = vunpack.c.l.b16 %v1102
        %v4234 = vunpack.c.h.b16 %v1102
        %v4235 = vunpack.c.l.b16 %v1103
        %v4236 = vunpack.c.h.b16 %v1103
        %v4237 = vunpack.c.l.b16 %v1104
        %v4238 = vunpack.c.h.b16 %v1104
        %v4239 = vunpack.c.l.b16 %v1105
        %v4240 = vunpack.c.h.b16 %v1105
        %v4241 = vunpack.c.l.b16 %v1106
        %v4242 = vunpack.c.h.b16 %v1106
        %v4243 = vunpack.c.l.b16 %v1107
        %v4244 = vunpack.c.h.b16 %v1107
        %v4245 = vunpack.c.l.b16 %v1108
        %v4246 = vunpack.c.h.b16 %v1108
        %v4247 = vunpack.c.l.b16 %v1109
        %v4248 = vunpack.c.h.b16 %v1109
        %v4249 = vunpack.c.l.b16 %v1110
        %v4250 = vunpack.c.h.b16 %v1110
        %v4251 = vunpack.c.l.b16 %v1111
        %v4252 = vunpack.c.h.b16 %v1111
        %v4253 = vunpack.c.l.b16 %v1112
        %v4254 = vunpack.c.h.b16 %v1112
        %v4255 = vunpack.c.l.b16 %v1113
        %v4256 = vunpack.c.h.b16 %v1113
        %v4257 = vunpack.c.l.b16 %v1114
        %v4258 = vunpack.c.h.b16 %v1114
        %v4259 = vunpack.c.l.b16 %v1115
        %v4260 = vunpack.c.h.b16 %v1115
        %v4261 = vunpack.c.l.b16 %v1116
        %v4262 = vunpack.c.h.b16 %v1116
        %v4263 = vunpack.c.l.b16 %v1117
        %v4264 = vunpack.c.h.b16 %v1117
        %v4265 = vunpack.c.l.b16 %v1118
        %v4266 = vunpack.c.h.b16 %v1118
        %v4267 = vunpack.c.l.b16 %v1119
        %v4268 = vunpack.c.h.b16 %v1119
        %v4269 = vunpack.c.l.b16 %v1120
        %v4270 = vunpack.c.h.b16 %v1120
        %v4271 = vunpack.c.l.b16 %v1121
        %v4272 = vunpack.c.h.b16 %v1121
        %v4273 = vunpack.c.l.b16 %v1122
        %v4274 = vunpack.c.h.b16 %v1122
        %v4275 = vunpack.c.l.b16 %v1123
        %v4276 = vunpack.c.h.b16 %v1123
        %v4277 = vunpack.c.l.b16 %v1124
        %v4278 = vunpack.c.h.b16 %v1124
        %v4279 = vunpack.c.l.b16 %v1125
        %v4280 = vunpack.c.h.b16 %v1125
        %v4281 = vunpack.c.l.b16 %v1126
        %v4282 = vunpack.c.h.b16 %v1126
        %v4283 = vunpack.c.l.b16 %v1127
        %v4284 = vunpack.c.h.b16 %v1127
        %v4285 = vunpack.c.l.b16 %v1128
        %v4286 = vunpack.c.h.b16 %v1128
        %v4287 = vunpack.c.l.b16 %v1129
        %v4288 = vunpack.c.h.b16 %v1129
        %v4289 = vunpack.c.l.b16 %v1130
        %v4290 = vunpack.c.h.b16 %v1130
        %v4291 = vunpack.c.l.b16 %v1131
        %v4292 = vunpack.c.h.b16 %v1131
        %v4293 = vunpack.c.l.b16 %v1132
        %v4294 = vunpack.c.h.b16 %v1132
        %v4295 = vunpack.c.l.b16 %v1133
        %v4296 = vunpack.c.h.b16 %v1133
        %v4297 = vunpack.c.l.b16 %v1134
        %v4298 = vunpack.c.h.b16 %v1134
        %v4299 = vunpack.c.l.b16 %v1135
        %v4300 = vunpack.c.h.b16 %v1135
        %v4301 = vunpack.c.l.b16 %v1136
        %v4302 = vunpack.c.h.b16 %v1136
        %v4303 = vunpack.c.l.b16 %v1137
        %v4304 = vunpack.c.h.b16 %v1137
        %v4305 = vunpack.c.l.b16 %v1138
        %v4306 = vunpack.c.h.b16 %v1138
        %v4307 = vunpack.c.l.b16 %v1139
        %v4308 = vunpack.c.h.b16 %v1139
        %v4309 = vunpack.c.l.b16 %v1140
        %v4310 = vunpack.c.h.b16 %v1140
        %v4311 = vunpack.c.l.b16 %v1141
        %v4312 = vunpack.c.h.b16 %v1141
        %v4313 = vunpack.c.l.b16 %v1142
        %v4314 = vunpack.c.h.b16 %v1142
        %v4315 = vunpack.c.l.b16 %v1143
        %v4316 = vunpack.c.h.b16 %v1143
        %v4317 = vunpack.c.l.b16 %v1144
        %v4318 = vunpack.c.h.b16 %v1144
        %v4319 = vunpack.c.l.b16 %v1145
        %v4320 = vunpack.c.h.b16 %v1145
        %v4321 = vunpack.c.l.b16 %v1146
        %v4322 = vunpack.c.h.b16 %v1146
        %v4323 = vunpack.c.l.b16 %v1147
        %v4324 = vunpack.c.h.b16 %v1147
        %v4325 = vunpack.c.l.b16 %v1148
        %v4326 = vunpack.c.h.b16 %v1148
        %v4327 = vunpack.c.l.b16 %v1149
        %v4328 = vunpack.c.h.b16 %v1149
        %v4329 = vunpack.c.l.b16 %v1150
        %v4330 = vunpack.c.h.b16 %v1150
        %v4331 = vunpack.c.l.b16 %v1151
        %v4332 = vunpack.c.h.b16 %v1151
        %v4333 = vunpack.c.l.b16 %v1152
        %v4334 = vunpack.c.h.b16 %v1152
        %v4335 = vunpack.c.l.b16 %v1153
        %v4336 = vunpack.c.h.b16 %v1153
        %v4337 = vunpack.c.l.b16 %v1154
        %v4338 = vunpack.c.h.b16 %v1154
        %v4339 = vunpack.c.l.b16 %v1155
        %v4340 = vunpack.c.h.b16 %v1155
        %v4341 = vunpack.c.l.b16 %v1156
        %v4342 = vunpack.c.h.b16 %v1156
        %v4343 = vunpack.c.l.b16 %v1157
        %v4344 = vunpack.c.h.b16 %v1157
        %v4345 = vunpack.c.l.b16 %v1158
        %v4346 = vunpack.c.h.b16 %v1158
        %v4347 = vunpack.c.l.b16 %v1159
        %v4348 = vunpack.c.h.b16 %v1159
        %v4349 = vunpack.c.l.b16 %v1160
        %v4350 = vunpack.c.h.b16 %v1160
        %v4351 = vunpack.c.l.b16 %v1161
        %v4352 = vunpack.c.h.b16 %v1161
        %v4353 = vunpack.c.l.b16 %v1162
        %v4354 = vunpack.c.h.b16 %v1162
        %v4355 = vunpack.c.l.b16 %v1163
        %v4356 = vunpack.c.h.b16 %v1163
        %v4357 = vunpack.c.l.b16 %v1164
        %v4358 = vunpack.c.h.b16 %v1164
        %v4359 = vunpack.c.l.b16 %v1165
        %v4360 = vunpack.c.h.b16 %v1165
        %v4361 = vunpack.c.l.b16 %v1166
        %v4362 = vunpack.c.h.b16 %v1166
        %v4363 = vunpack.c.l.b16 %v1167
        %v4364 = vunpack.c.h.b16 %v1167
        %v4365 = vunpack.c.l.b16 %v1168
        %v4366 = vunpack.c.h.b16 %v1168
        %v4367 = vunpack.c.l.b16 %v1169
        %v4368 = vunpack.c.h.b16 %v1169
        %v4369 = vunpack.c.l.b16 %v1170
        %v4370 = vunpack.c.h.b16 %v1170
        %v4371 = vunpack.c.l.b16 %v1171
        %v4372 = vunpack.c.h.b16 %v1171
        %v4373 = vunpack.c.l.b16 %v1172
        %v4374 = vunpack.c.h.b16 %v1172
        %v4375 = vunpack.c.l.b16 %v1173
        %v4376 = vunpack.c.h.b16 %v1173
        %v4377 = vunpack.c.l.b16 %v1174
        %v4378 = vunpack.c.h.b16 %v1174
        %v4379 = vunpack.c.l.b16 %v1175
        %v4380 = vunpack.c.h.b16 %v1175
        %v4381 = vunpack.c.l.b16 %v1176
        %v4382 = vunpack.c.h.b16 %v1176
        %v4383 = vunpack.c.l.b16 %v1177
        %v4384 = vunpack.c.h.b16 %v1177
        %v4385 = vunpack.c.l.b16 %v1178
        %v4386 = vunpack.c.h.b16 %v1178
        %v4387 = vunpack.c.l.b16 %v1179
        %v4388 = vunpack.c.h.b16 %v1179
        %v4389 = vunpack.c.l.b16 %v1180
        %v4390 = vunpack.c.h.b16 %v1180
        %v4391 = vunpack.c.l.b16 %v1181
        %v4392 = vunpack.c.h.b16 %v1181
        %v4393 = vunpack.c.l.b16 %v1182
        %v4394 = vunpack.c.h.b16 %v1182
        %v4395 = vunpack.c.l.b16 %v1183
        %v4396 = vunpack.c.h.b16 %v1183
        %v4397 = vunpack.c.l.b16 %v1184
        %v4398 = vunpack.c.h.b16 %v1184
        %v4399 = vunpack.c.l.b16 %v1185
        %v4400 = vunpack.c.h.b16 %v1185
        %v4401 = vunpack.c.l.b16 %v1186
        %v4402 = vunpack.c.h.b16 %v1186
        %v4403 = vunpack.c.l.b16 %v1187
        %v4404 = vunpack.c.h.b16 %v1187
        %v4405 = vunpack.c.l.b16 %v1188
        %v4406 = vunpack.c.h.b16 %v1188
        %v4407 = vunpack.c.l.b16 %v1189
        %v4408 = vunpack.c.h.b16 %v1189
        %v4409 = vunpack.c.l.b16 %v1190
        %v4410 = vunpack.c.h.b16 %v1190
        %v4411 = vunpack.c.l.b16 %v1191
        %v4412 = vunpack.c.h.b16 %v1191
        %v4413 = vunpack.c.l.b16 %v1192
        %v4414 = vunpack.c.h.b16 %v1192
        %v4415 = vunpack.c.l.b16 %v1193
        %v4416 = vunpack.c.h.b16 %v1193
        %v4417 = vunpack.c.l.b16 %v1194
        %v4418 = vunpack.c.h.b16 %v1194
        %v4419 = vunpack.c.l.b16 %v1195
        %v4420 = vunpack.c.h.b16 %v1195
        %v4421 = vunpack.c.l.b16 %v1196
        %v4422 = vunpack.c.h.b16 %v1196
        %v4423 = vunpack.c.l.b16 %v1197
        %v4424 = vunpack.c.h.b16 %v1197
        %v4425 = vunpack.c.l.b16 %v1198
        %v4426 = vunpack.c.h.b16 %v1198
        %v4427 = vunpack.c.l.b16 %v1199
        %v4428 = vunpack.c.h.b16 %v1199
        %v4429 = vunpack.c.l.b16 %v1200
        %v4430 = vunpack.c.h.b16 %v1200
        %v4431 = vunpack.c.l.b16 %v1201
        %v4432 = vunpack.c.h.b16 %v1201
        %v4433 = vunpack.c.l.b16 %v1202
        %v4434 = vunpack.c.h.b16 %v1202
        %v4435 = vunpack.c.l.b16 %v1203
        %v4436 = vunpack.c.h.b16 %v1203
        %v4437 = vunpack.c.l.b16 %v1204
        %v4438 = vunpack.c.h.b16 %v1204
        %v4439 = vunpack.c.l.b16 %v1205
        %v4440 = vunpack.c.h.b16 %v1205
        %v4441 = vunpack.c.l.b16 %v1206
        %v4442 = vunpack.c.h.b16 %v1206
        %v4443 = vunpack.c.l.b16 %v1207
        %v4444 = vunpack.c.h.b16 %v1207
        %v4445 = vunpack.c.l.b16 %v1208
        %v4446 = vunpack.c.h.b16 %v1208
        %v4447 = vunpack.c.l.b16 %v1209
        %v4448 = vunpack.c.h.b16 %v1209
        %v4449 = vunpack.c.l.b16 %v1210
        %v4450 = vunpack.c.h.b16 %v1210
        %v4451 = vunpack.c.l.b16 %v1211
        %v4452 = vunpack.c.h.b16 %v1211
        %v4453 = vunpack.c.l.b16 %v1212
        %v4454 = vunpack.c.h.b16 %v1212
        %v4455 = vunpack.c.l.b16 %v1213
        %v4456 = vunpack.c.h.b16 %v1213
        %v4457 = vunpack.c.l.b16 %v1214
        %v4458 = vunpack.c.h.b16 %v1214
        %v4459 = vunpack.c.l.b16 %v1215
        %v4460 = vunpack.c.h.b16 %v1215
        %v4461 = vunpack.c.l.b16 %v1216
        %v4462 = vunpack.c.h.b16 %v1216
        %v4463 = vunpack.c.l.b16 %v1217
        %v4464 = vunpack.c.h.b16 %v1217
        %v4465 = vunpack.c.l.b16 %v1218
        %v4466 = vunpack.c.h.b16 %v1218
        %v4467 = vunpack.c.l.b16 %v1219
        %v4468 = vunpack.c.h.b16 %v1219
        %v4469 = vunpack.c.l.b16 %v1220
        %v4470 = vunpack.c.h.b16 %v1220
        %v4471 = vunpack.c.l.b16 %v1221
        %v4472 = vunpack.c.h.b16 %v1221
        %v4473 = vunpack.c.l.b16 %v1222
        %v4474 = vunpack.c.h.b16 %v1222
        %v4475 = vunpack.c.l.b16 %v1223
        %v4476 = vunpack.c.h.b16 %v1223
        %v4477 = vunpack.c.l.b16 %v1224
        %v4478 = vunpack.c.h.b16 %v1224
        %v4479 = vunpack.c.l.b16 %v1225
        %v4480 = vunpack.c.h.b16 %v1225
        %v4481 = vunpack.c.l.b16 %v1226
        %v4482 = vunpack.c.h.b16 %v1226
        %v4483 = vunpack.c.l.b16 %v1227
        %v4484 = vunpack.c.h.b16 %v1227
        %v4485 = vunpack.c.l.b16 %v1228
        %v4486 = vunpack.c.h.b16 %v1228
        %v4487 = vunpack.c.l.b16 %v1229
        %v4488 = vunpack.c.h.b16 %v1229
        %v4489 = vunpack.c.l.b16 %v1230
        %v4490 = vunpack.c.h.b16 %v1230
        %v4491 = vunpack.c.l.b16 %v1231
        %v4492 = vunpack.c.h.b16 %v1231
        %v4493 = vunpack.c.l.b16 %v1232
        %v4494 = vunpack.c.h.b16 %v1232
        %v4495 = vunpack.c.l.b16 %v1233
        %v4496 = vunpack.c.h.b16 %v1233
        %v4497 = vunpack.c.l.b16 %v1234
        %v4498 = vunpack.c.h.b16 %v1234
        %v4499 = vunpack.c.l.b16 %v1235
        %v4500 = vunpack.c.h.b16 %v1235
        %v4501 = vunpack.c.l.b16 %v1236
        %v4502 = vunpack.c.h.b16 %v1236
        %v4503 = vunpack.c.l.b16 %v1237
        %v4504 = vunpack.c.h.b16 %v1237
        %v4505 = vunpack.c.l.b16 %v1238
        %v4506 = vunpack.c.h.b16 %v1238
        %v4507 = vunpack.c.l.b16 %v1239
        %v4508 = vunpack.c.h.b16 %v1239
        %v4509 = vunpack.c.l.b16 %v1240
        %v4510 = vunpack.c.h.b16 %v1240
        %v4511 = vunpack.c.l.b16 %v1241
        %v4512 = vunpack.c.h.b16 %v1241
        %v4513 = vunpack.c.l.b16 %v1242
        %v4514 = vunpack.c.h.b16 %v1242
        %v4515 = vunpack.c.l.b16 %v1243
        %v4516 = vunpack.c.h.b16 %v1243
        %v4517 = vunpack.c.l.b16 %v1244
        %v4518 = vunpack.c.h.b16 %v1244
        %v4519 = vunpack.c.l.b16 %v1245
        %v4520 = vunpack.c.h.b16 %v1245
        %v4521 = vunpack.c.l.b16 %v1246
        %v4522 = vunpack.c.h.b16 %v1246
        %v4523 = vunpack.c.l.b16 %v1247
        %v4524 = vunpack.c.h.b16 %v1247
        %v4525 = vunpack.c.l.b16 %v1248
        %v4526 = vunpack.c.h.b16 %v1248
        %v4527 = vunpack.c.l.b16 %v1249
        %v4528 = vunpack.c.h.b16 %v1249
        %v4529 = vunpack.c.l.b16 %v1250
        %v4530 = vunpack.c.h.b16 %v1250
        %v4531 = vunpack.c.l.b16 %v1251
        %v4532 = vunpack.c.h.b16 %v1251
        %v4533 = vunpack.c.l.b16 %v1252
        %v4534 = vunpack.c.h.b16 %v1252
        %v4535 = vunpack.c.l.b16 %v1253
        %v4536 = vunpack.c.h.b16 %v1253
        %v4537 = vunpack.c.l.b16 %v1254
        %v4538 = vunpack.c.h.b16 %v1254
        %v4539 = vunpack.c.l.b16 %v1255
        %v4540 = vunpack.c.h.b16 %v1255
        %v4541 = vunpack.c.l.b16 %v1256
        %v4542 = vunpack.c.h.b16 %v1256
        %v4543 = vunpack.c.l.b16 %v1257
        %v4544 = vunpack.c.h.b16 %v1257
        %v4545 = vunpack.c.l.b16 %v1258
        %v4546 = vunpack.c.h.b16 %v1258
        %v4547 = vunpack.c.l.b16 %v1259
        %v4548 = vunpack.c.h.b16 %v1259
        %v4549 = vunpack.c.l.b16 %v1260
        %v4550 = vunpack.c.h.b16 %v1260
        %v4551 = vunpack.c.l.b16 %v1261
        %v4552 = vunpack.c.h.b16 %v1261
        %v4553 = vunpack.c.l.b16 %v1262
        %v4554 = vunpack.c.h.b16 %v1262
        %v4555 = vunpack.c.l.b16 %v1263
        %v4556 = vunpack.c.h.b16 %v1263
        %v4557 = vunpack.c.l.b16 %v1264
        %v4558 = vunpack.c.h.b16 %v1264
        %v4559 = vunpack.c.l.b16 %v1265
        %v4560 = vunpack.c.h.b16 %v1265
        %v4561 = vunpack.c.l.b16 %v1266
        %v4562 = vunpack.c.h.b16 %v1266
        %v4563 = vunpack.c.l.b16 %v1267
        %v4564 = vunpack.c.h.b16 %v1267
        %v4565 = vunpack.c.l.b16 %v1268
        %v4566 = vunpack.c.h.b16 %v1268
        %v4567 = vunpack.c.l.b16 %v1269
        %v4568 = vunpack.c.h.b16 %v1269
        %v4569 = vunpack.c.l.b16 %v1270
        %v4570 = vunpack.c.h.b16 %v1270
        %v4571 = vunpack.c.l.b16 %v1271
        %v4572 = vunpack.c.h.b16 %v1271
        %v4573 = vunpack.c.l.b16 %v1272
        %v4574 = vunpack.c.h.b16 %v1272
        %v4575 = vunpack.c.l.b16 %v1273
        %v4576 = vunpack.c.h.b16 %v1273
        %v4577 = vunpack.c.l.b16 %v1274
        %v4578 = vunpack.c.h.b16 %v1274
        %v4579 = vunpack.c.l.b16 %v1275
        %v4580 = vunpack.c.h.b16 %v1275
        %v4581 = vunpack.c.l.b16 %v1276
        %v4582 = vunpack.c.h.b16 %v1276
        %v4583 = vunpack.c.l.b16 %v1277
        %v4584 = vunpack.c.h.b16 %v1277
        %v4585 = vunpack.c.l.b16 %v1278
        %v4586 = vunpack.c.h.b16 %v1278
        %v4587 = vunpack.c.l.b16 %v1279
        %v4588 = vunpack.c.h.b16 %v1279
        %v4589 = vunpack.c.l.b16 %v1280
        %v4590 = vunpack.c.h.b16 %v1280
        %v4591 = vunpack.c.l.b16 %v1281
        %v4592 = vunpack.c.h.b16 %v1281
        %v4593 = vunpack.c.l.b16 %v1282
        %v4594 = vunpack.c.h.b16 %v1282
        %v4595 = vunpack.c.l.b16 %v1283
        %v4596 = vunpack.c.h.b16 %v1283
        %v4597 = vunpack.c.l.b16 %v1284
        %v4598 = vunpack.c.h.b16 %v1284
        %v4599 = vunpack.c.l.b16 %v1285
        %v4600 = vunpack.c.h.b16 %v1285
        %v4601 = vunpack.c.l.b16 %v1286
        %v4602 = vunpack.c.h.b16 %v1286
        %v4603 = vunpack.c.l.b16 %v1287
        %v4604 = vunpack.c.h.b16 %v1287
        %v4605 = vunpack.c.l.b16 %v1288
        %v4606 = vunpack.c.h.b16 %v1288
        %v4607 = vunpack.c.l.b16 %v1289
        %v4608 = vunpack.c.h.b16 %v1289
        %v4609 = vunpack.c.l.b16 %v1290
        %v4610 = vunpack.c.h.b16 %v1290
        %v4611 = vunpack.c.l.b16 %v1291
        %v4612 = vunpack.c.h.b16 %v1291
        %v4613 = vunpack.c.l.b16 %v1292
        %v4614 = vunpack.c.h.b16 %v1292
        %v4615 = vunpack.c.l.b16 %v1293
        %v4616 = vunpack.c.h.b16 %v1293
        %v4617 = vunpack.c.l.b16 %v1294
        %v4618 = vunpack.c.h.b16 %v1294
        %v4619 = vunpack.c.l.b16 %v1295
        %v4620 = vunpack.c.h.b16 %v1295
        %v4621 = vunpack.c.l.b16 %v1296
        %v4622 = vunpack.c.h.b16 %v1296
        %v4623 = vunpack.c.l.b16 %v1297
        %v4624 = vunpack.c.h.b16 %v1297
        %v4625 = vunpack.c.l.b16 %v1298
        %v4626 = vunpack.c.h.b16 %v1298
        %v4627 = vunpack.c.l.b16 %v1299
        %v4628 = vunpack.c.h.b16 %v1299
        %v4629 = vunpack.c.l.b16 %v1300
        %v4630 = vunpack.c.h.b16 %v1300
        %v4631 = vunpack.c.l.b16 %v1301
        %v4632 = vunpack.c.h.b16 %v1301
        %v4633 = vunpack.c.l.b16 %v1302
        %v4634 = vunpack.c.h.b16 %v1302
        %v4635 = vunpack.c.l.b16 %v1303
        %v4636 = vunpack.c.h.b16 %v1303
        %v4637 = vunpack.c.l.b16 %v1304
        %v4638 = vunpack.c.h.b16 %v1304
        %v4639 = vunpack.c.l.b16 %v1305
        %v4640 = vunpack.c.h.b16 %v1305
        %v4641 = vunpack.c.l.b16 %v1306
        %v4642 = vunpack.c.h.b16 %v1306
        %v4643 = vunpack.c.l.b16 %v1307
        %v4644 = vunpack.c.h.b16 %v1307
        %v4645 = vunpack.c.l.b16 %v1308
        %v4646 = vunpack.c.h.b16 %v1308
        %v4647 = vunpack.c.l.b16 %v1309
        %v4648 = vunpack.c.h.b16 %v1309
        %v4649 = vunpack.c.l.b16 %v1310
        %v4650 = vunpack.c.h.b16 %v1310
        %v4651 = vunpack.c.l.b16 %v1311
        %v4652 = vunpack.c.h.b16 %v1311
        %v4653 = vunpack.c.l.b16 %v1312
        %v4654 = vunpack.c.h.b16 %v1312
        %v4655 = vunpack.c.l.b16 %v1313
        %v4656 = vunpack.c.h.b16 %v1313
        %v4657 = vunpack.c.l.b16 %v1314
        %v4658 = vunpack.c.h.b16 %v1314
        %v4659 = vunpack.c.l.b16 %v1315
        %v4660 = vunpack.c.h.b16 %v1315
        %v4661 = vunpack.c.l.b16 %v1316
        %v4662 = vunpack.c.h.b16 %v1316
        %v4663 = vunpack.c.l.b16 %v1317
        %v4664 = vunpack.c.h.b16 %v1317
        %v4665 = vunpack.c.l.b16 %v1318
        %v4666 = vunpack.c.h.b16 %v1318
        %v4667 = vunpack.c.l.b16 %v1319
        %v4668 = vunpack.c.h.b16 %v1319
        %v4669 = vunpack.c.l.b16 %v1320
        %v4670 = vunpack.c.h.b16 %v1320
        %v4671 = vunpack.c.l.b16 %v1321
        %v4672 = vunpack.c.h.b16 %v1321
        %v4673 = vunpack.c.l.b16 %v1322
        %v4674 = vunpack.c.h.b16 %v1322
        %v4675 = vunpack.c.l.b16 %v1323
        %v4676 = vunpack.c.h.b16 %v1323
        %v4677 = vunpack.c.l.b16 %v1324
        %v4678 = vunpack.c.h.b16 %v1324
        %v4679 = vunpack.c.l.b16 %v1325
        %v4680 = vunpack.c.h.b16 %v1325
        %v4681 = vunpack.c.l.b16 %v1326
        %v4682 = vunpack.c.h.b16 %v1326
        %v4683 = vunpack.c.l.b16 %v1327
        %v4684 = vunpack.c.h.b16 %v1327
        %v4685 = vunpack.c.l.b16 %v1328
        %v4686 = vunpack.c.h.b16 %v1328
        %v4687 = vunpack.c.l.b16 %v1329
        %v4688 = vunpack.c.h.b16 %v1329
        %v4689 = vunpack.c.l.b16 %v1330
        %v4690 = vunpack.c.h.b16 %v1330
        %v4691 = vunpack.c.l.b16 %v1331
        %v4692 = vunpack.c.h.b16 %v1331
        %v4693 = vunpack.c.l.b16 %v1332
        %v4694 = vunpack.c.h.b16 %v1332
        %v4695 = vunpack.c.l.b16 %v1333
        %v4696 = vunpack.c.h.b16 %v1333
        %v4697 = vunpack.c.l.b16 %v1334
        %v4698 = vunpack.c.h.b16 %v1334
        %v4699 = vunpack.c.l.b16 %v1335
        %v4700 = vunpack.c.h.b16 %v1335
        %v4701 = vunpack.c.l.b16 %v1336
        %v4702 = vunpack.c.h.b16 %v1336
        %v4703 = vunpack.c.l.b16 %v1337
        %v4704 = vunpack.c.h.b16 %v1337
        %v4705 = vunpack.c.l.b16 %v1338
        %v4706 = vunpack.c.h.b16 %v1338
        %v4707 = vunpack.c.l.b16 %v1339
        %v4708 = vunpack.c.h.b16 %v1339
        %v4709 = vunpack.c.l.b16 %v1340
        %v4710 = vunpack.c.h.b16 %v1340
        %v4711 = vunpack.c.l.b16 %v1341
        %v4712 = vunpack.c.h.b16 %v1341
        %v4713 = vunpack.c.l.b16 %v1342
        %v4714 = vunpack.c.h.b16 %v1342
        %v4715 = vunpack.c.l.b16 %v1343
        %v4716 = vunpack.c.h.b16 %v1343
        %v4717 = vunpack.c.l.b16 %v1344
        %v4718 = vunpack.c.h.b16 %v1344
        %v4719 = vunpack.c.l.b16 %v1345
        %v4720 = vunpack.c.h.b16 %v1345
        %v4721 = vunpack.c.l.b16 %v1346
        %v4722 = vunpack.c.h.b16 %v1346
        %v4723 = vunpack.c.l.b16 %v1347
        %v4724 = vunpack.c.h.b16 %v1347
        %v4725 = vunpack.c.l.b16 %v1348
        %v4726 = vunpack.c.h.b16 %v1348
        %v4727 = vunpack.c.l.b16 %v1349
        %v4728 = vunpack.c.h.b16 %v1349
        %v4729 = vunpack.c.l.b16 %v1350
        %v4730 = vunpack.c.h.b16 %v1350
        %v4731 = vunpack.c.l.b16 %v1351
        %v4732 = vunpack.c.h.b16 %v1351
        %v4733 = vunpack.c.l.b16 %v1352
        %v4734 = vunpack.c.h.b16 %v1352
        %v4735 = vunpack.c.l.b16 %v1353
        %v4736 = vunpack.c.h.b16 %v1353
        %v4737 = vunpack.c.l.b16 %v1354
        %v4738 = vunpack.c.h.b16 %v1354
        %v4739 = vunpack.c.l.b16 %v1355
        %v4740 = vunpack.c.h.b16 %v1355
        %v4741 = vunpack.c.l.b16 %v1356
        %v4742 = vunpack.c.h.b16 %v1356
        %v4743 = vunpack.c.l.b16 %v1357
        %v4744 = vunpack.c.h.b16 %v1357
        %v4745 = vunpack.c.l.b16 %v1358
        %v4746 = vunpack.c.h.b16 %v1358
        %v4747 = vunpack.c.l.b16 %v1359
        %v4748 = vunpack.c.h.b16 %v1359
        %v4749 = vunpack.c.l.b16 %v1360
        %v4750 = vunpack.c.h.b16 %v1360
        %v4751 = vunpack.c.l.b16 %v1361
        %v4752 = vunpack.c.h.b16 %v1361
        %v4753 = vunpack.c.l.b16 %v1362
        %v4754 = vunpack.c.h.b16 %v1362
        %v4755 = vunpack.c.l.b16 %v1363
        %v4756 = vunpack.c.h.b16 %v1363
        %v4757 = vunpack.c.l.b16 %v1364
        %v4758 = vunpack.c.h.b16 %v1364
        %v4759 = vunpack.c.l.b16 %v1365
        %v4760 = vunpack.c.h.b16 %v1365
        %v4761 = vunpack.c.l.b16 %v1366
        %v4762 = vunpack.c.h.b16 %v1366
        %v4763 = vunpack.c.l.b16 %v1367
        %v4764 = vunpack.c.h.b16 %v1367
        %v4765 = vunpack.c.l.b16 %v1368
        %v4766 = vunpack.c.h.b16 %v1368
        %v4767 = vunpack.c.l.b16 %v1369
        %v4768 = vunpack.c.h.b16 %v1369
        %v4769 = vunpack.c.l.b16 %v1370
        %v4770 = vunpack.c.h.b16 %v1370
        %v4771 = vunpack.c.l.b16 %v1371
        %v4772 = vunpack.c.h.b16 %v1371
        %v4773 = vunpack.c.l.b16 %v1372
        %v4774 = vunpack.c.h.b16 %v1372
        %v4775 = vunpack.c.l.b16 %v1373
        %v4776 = vunpack.c.h.b16 %v1373
        %v4777 = vunpack.c.l.b16 %v1374
        %v4778 = vunpack.c.h.b16 %v1374
        %v4779 = vunpack.c.l.b16 %v1375
        %v4780 = vunpack.c.h.b16 %v1375
        %v4781 = vunpack.c.l.b16 %v1376
        %v4782 = vunpack.c.h.b16 %v1376
        %v4783 = vunpack.c.l.b16 %v1377
        %v4784 = vunpack.c.h.b16 %v1377
        %v4785 = vunpack.c.l.b16 %v1378
        %v4786 = vunpack.c.h.b16 %v1378
        %v4787 = vunpack.c.l.b16 %v1379
        %v4788 = vunpack.c.h.b16 %v1379
        %v4789 = vunpack.c.l.b16 %v1380
        %v4790 = vunpack.c.h.b16 %v1380
        %v4791 = vunpack.c.l.b16 %v1381
        %v4792 = vunpack.c.h.b16 %v1381
        %v4793 = vunpack.c.l.b16 %v1382
        %v4794 = vunpack.c.h.b16 %v1382
        %v4795 = vunpack.c.l.b16 %v1383
        %v4796 = vunpack.c.h.b16 %v1383
        %v4797 = vunpack.c.l.b16 %v1384
        %v4798 = vunpack.c.h.b16 %v1384
        %v4799 = vunpack.c.l.b16 %v1385
        %v4800 = vunpack.c.h.b16 %v1385
        %v4801 = vunpack.c.l.b16 %v1386
        %v4802 = vunpack.c.h.b16 %v1386
        %v4803 = vunpack.c.l.b16 %v1387
        %v4804 = vunpack.c.h.b16 %v1387
        %v4805 = vunpack.c.l.b16 %v1388
        %v4806 = vunpack.c.h.b16 %v1388
        %v4807 = vunpack.c.l.b16 %v1389
        %v4808 = vunpack.c.h.b16 %v1389
        %v4809 = vunpack.c.l.b16 %v1390
        %v4810 = vunpack.c.h.b16 %v1390
        %v4811 = vunpack.c.l.b16 %v1391
        %v4812 = vunpack.c.h.b16 %v1391
        %v4813 = vunpack.c.l.b16 %v1392
        %v4814 = vunpack.c.h.b16 %v1392
        %v4815 = vunpack.c.l.b16 %v1393
        %v4816 = vunpack.c.h.b16 %v1393
        %v4817 = vunpack.c.l.b16 %v1394
        %v4818 = vunpack.c.h.b16 %v1394
        %v4819 = vunpack.c.l.b16 %v1395
        %v4820 = vunpack.c.h.b16 %v1395
        %v4821 = vunpack.c.l.b16 %v1396
        %v4822 = vunpack.c.h.b16 %v1396
        %v4823 = vunpack.c.l.b16 %v1397
        %v4824 = vunpack.c.h.b16 %v1397
        %v4825 = vunpack.c.l.b16 %v1398
        %v4826 = vunpack.c.h.b16 %v1398
        %v4827 = vunpack.c.l.b16 %v1399
        %v4828 = vunpack.c.h.b16 %v1399
        %v4829 = vunpack.c.l.b16 %v1400
        %v4830 = vunpack.c.h.b16 %v1400
        %v4831 = vunpack.c.l.b16 %v1401
        %v4832 = vunpack.c.h.b16 %v1401
        %v4833 = vunpack.c.l.b16 %v1402
        %v4834 = vunpack.c.h.b16 %v1402
        %v4835 = vunpack.c.l.b16 %v1403
        %v4836 = vunpack.c.h.b16 %v1403
        %v4837 = vunpack.c.l.b16 %v1404
        %v4838 = vunpack.c.h.b16 %v1404
        %v4839 = vunpack.c.l.b16 %v1405
        %v4840 = vunpack.c.h.b16 %v1405
        %v4841 = vunpack.c.l.b16 %v1406
        %v4842 = vunpack.c.h.b16 %v1406
        %v4843 = vunpack.c.l.b16 %v1407
        %v4844 = vunpack.c.h.b16 %v1407
        %v4845 = vunpack.c.l.b16 %v1408
        %v4846 = vunpack.c.h.b16 %v1408
        %v4847 = vunpack.c.l.b16 %v1409
        %v4848 = vunpack.c.h.b16 %v1409
        %v4849 = vunpack.c.l.b16 %v1410
        %v4850 = vunpack.c.h.b16 %v1410
        %v4851 = vunpack.c.l.b16 %v1411
        %v4852 = vunpack.c.h.b16 %v1411
        %v4853 = vunpack.c.l.b16 %v1412
        %v4854 = vunpack.c.h.b16 %v1412
        %v4855 = vunpack.c.l.b16 %v1413
        %v4856 = vunpack.c.h.b16 %v1413
        %v4857 = vunpack.c.l.b16 %v1414
        %v4858 = vunpack.c.h.b16 %v1414
        %v4859 = vunpack.c.l.b16 %v1415
        %v4860 = vunpack.c.h.b16 %v1415
        %v4861 = vunpack.c.l.b16 %v1416
        %v4862 = vunpack.c.h.b16 %v1416
        %v4863 = vunpack.c.l.b16 %v1417
        %v4864 = vunpack.c.h.b16 %v1417
        %v4865 = vunpack.c.l.b16 %v1418
        %v4866 = vunpack.c.h.b16 %v1418
        %v4867 = vunpack.c.l.b16 %v1419
        %v4868 = vunpack.c.h.b16 %v1419
        %v4869 = vunpack.c.l.b16 %v1420
        %v4870 = vunpack.c.h.b16 %v1420
        %v4871 = vunpack.c.l.b16 %v1421
        %v4872 = vunpack.c.h.b16 %v1421
        %v4873 = vunpack.c.l.b16 %v1422
        %v4874 = vunpack.c.h.b16 %v1422
        %v4875 = vunpack.c.l.b16 %v1423
        %v4876 = vunpack.c.h.b16 %v1423
        %v4877 = vunpack.c.l.b16 %v1424
        %v4878 = vunpack.c.h.b16 %v1424
        %v4879 = vunpack.c.l.b16 %v1425
        %v4880 = vunpack.c.h.b16 %v1425
        %v4881 = vunpack.c.l.b16 %v1426
        %v4882 = vunpack.c.h.b16 %v1426
        %v4883 = vunpack.c.l.b16 %v1427
        %v4884 = vunpack.c.h.b16 %v1427
        %v4885 = vunpack.c.l.b16 %v1428
        %v4886 = vunpack.c.h.b16 %v1428
        %v4887 = vunpack.c.l.b16 %v1429
        %v4888 = vunpack.c.h.b16 %v1429
        %v4889 = vunpack.c.l.b16 %v1430
        %v4890 = vunpack.c.h.b16 %v1430
        %v4891 = vunpack.c.l.b16 %v1431
        %v4892 = vunpack.c.h.b16 %v1431
        %v4893 = vunpack.c.l.b16 %v1432
        %v4894 = vunpack.c.h.b16 %v1432
        %v4895 = vunpack.c.l.b16 %v1433
        %v4896 = vunpack.c.h.b16 %v1433
        %v4897 = vunpack.c.l.b16 %v1434
        %v4898 = vunpack.c.h.b16 %v1434
        %v4899 = vunpack.c.l.b16 %v1435
        %v4900 = vunpack.c.h.b16 %v1435
        %v4901 = vunpack.c.l.b16 %v1436
        %v4902 = vunpack.c.h.b16 %v1436
        %v4903 = vunpack.c.l.b16 %v1437
        %v4904 = vunpack.c.h.b16 %v1437
        %v4905 = vunpack.c.l.b16 %v1438
        %v4906 = vunpack.c.h.b16 %v1438
        %v4907 = vunpack.c.l.b16 %v1439
        %v4908 = vunpack.c.h.b16 %v1439
        %v4909 = vunpack.c.l.b16 %v1440
        %v4910 = vunpack.c.h.b16 %v1440
        %v4911 = vunpack.c.l.b16 %v1441
        %v4912 = vunpack.c.h.b16 %v1441
        %v4913 = vunpack.c.l.b16 %v1442
        %v4914 = vunpack.c.h.b16 %v1442
        %v4915 = vunpack.c.l.b16 %v1443
        %v4916 = vunpack.c.h.b16 %v1443
        %v4917 = vunpack.c.l.b16 %v1444
        %v4918 = vunpack.c.h.b16 %v1444
        %v4919 = vunpack.c.l.b16 %v1445
        %v4920 = vunpack.c.h.b16 %v1445
        %v4921 = vunpack.c.l.b16 %v1446
        %v4922 = vunpack.c.h.b16 %v1446
        %v4923 = vunpack.c.l.b16 %v1447
        %v4924 = vunpack.c.h.b16 %v1447
        %v4925 = vunpack.c.l.b16 %v1448
        %v4926 = vunpack.c.h.b16 %v1448
        %v4927 = vunpack.c.l.b16 %v1449
        %v4928 = vunpack.c.h.b16 %v1449
        %v4929 = vunpack.c.l.b16 %v1450
        %v4930 = vunpack.c.h.b16 %v1450
        %v4931 = vunpack.c.l.b16 %v1451
        %v4932 = vunpack.c.h.b16 %v1451
        %v4933 = vunpack.c.l.b16 %v1452
        %v4934 = vunpack.c.h.b16 %v1452
        %v4935 = vunpack.c.l.b16 %v1453
        %v4936 = vunpack.c.h.b16 %v1453
        %v4937 = vunpack.c.l.b16 %v1454
        %v4938 = vunpack.c.h.b16 %v1454
        %v4939 = vunpack.c.l.b16 %v1455
        %v4940 = vunpack.c.h.b16 %v1455
        %v4941 = vunpack.c.l.b16 %v1456
        %v4942 = vunpack.c.h.b16 %v1456
        %v4943 = vunpack.c.l.b16 %v1457
        %v4944 = vunpack.c.h.b16 %v1457
        %v4945 = vunpack.c.l.b16 %v1458
        %v4946 = vunpack.c.h.b16 %v1458
        %v4947 = vunpack.c.l.b16 %v1459
        %v4948 = vunpack.c.h.b16 %v1459
        %v4949 = vunpack.c.l.b16 %v1460
        %v4950 = vunpack.c.h.b16 %v1460
        %v4951 = vunpack.c.l.b16 %v1461
        %v4952 = vunpack.c.h.b16 %v1461
        %v4953 = vunpack.c.l.b16 %v1462
        %v4954 = vunpack.c.h.b16 %v1462
        %v4955 = vunpack.c.l.b16 %v1463
        %v4956 = vunpack.c.h.b16 %v1463
        %v4957 = vunpack.c.l.b16 %v1464
        %v4958 = vunpack.c.h.b16 %v1464
        %v4959 = vunpack.c.l.b16 %v1465
        %v4960 = vunpack.c.h.b16 %v1465
        %v4961 = vunpack.c.l.b16 %v1466
        %v4962 = vunpack.c.h.b16 %v1466
        %v4963 = vunpack.c.l.b16 %v1467
        %v4964 = vunpack.c.h.b16 %v1467
        %v4965 = vunpack.c.l.b16 %v1468
        %v4966 = vunpack.c.h.b16 %v1468
        %v4967 = vunpack.c.l.b16 %v1469
        %v4968 = vunpack.c.h.b16 %v1469
        %v4969 = vunpack.c.l.b16 %v1470
        %v4970 = vunpack.c.h.b16 %v1470
        %v4971 = vunpack.c.l.b16 %v1471
        %v4972 = vunpack.c.h.b16 %v1471
        %v4973 = vunpack.c.l.b16 %v1472
        %v4974 = vunpack.c.h.b16 %v1472
        %v4975 = vunpack.c.l.b16 %v1473
        %v4976 = vunpack.c.h.b16 %v1473
        %v4977 = vunpack.c.l.b16 %v1474
        %v4978 = vunpack.c.h.b16 %v1474
        %v4979 = vunpack.c.l.b16 %v1475
        %v4980 = vunpack.c.h.b16 %v1475
        %v4981 = vunpack.c.l.b16 %v1476
        %v4982 = vunpack.c.h.b16 %v1476
        %v4983 = vunpack.c.l.b16 %v1477
        %v4984 = vunpack.c.h.b16 %v1477
        %v4985 = vunpack.c.l.b16 %v1478
        %v4986 = vunpack.c.h.b16 %v1478
        %v4987 = vunpack.c.l.b16 %v1479
        %v4988 = vunpack.c.h.b16 %v1479
        %v4989 = vunpack.c.l.b16 %v1480
        %v4990 = vunpack.c.h.b16 %v1480
        %v4991 = vunpack.c.l.b16 %v1481
        %v4992 = vunpack.c.h.b16 %v1481
        %v4993 = vunpack.c.l.b16 %v1482
        %v4994 = vunpack.c.h.b16 %v1482
        %v4995 = vunpack.c.l.b16 %v1483
        %v4996 = vunpack.c.h.b16 %v1483
        %v4997 = vunpack.c.l.b16 %v1484
        %v4998 = vunpack.c.h.b16 %v1484
        %v4999 = vunpack.c.l.b16 %v1485
        %v5000 = vunpack.c.h.b16 %v1485
        %v5001 = vunpack.c.l.b16 %v1486
        %v5002 = vunpack.c.h.b16 %v1486
        %v5003 = vunpack.c.l.b16 %v1487
        %v5004 = vunpack.c.h.b16 %v1487
        %v5005 = vunpack.c.l.b16 %v1488
        %v5006 = vunpack.c.h.b16 %v1488
        %v5007 = vunpack.c.l.b16 %v1489
        %v5008 = vunpack.c.h.b16 %v1489
        %v5009 = vunpack.c.l.b16 %v1490
        %v5010 = vunpack.c.h.b16 %v1490
        %v5011 = vunpack.c.l.b16 %v1491
        %v5012 = vunpack.c.h.b16 %v1491
        %v5013 = vunpack.c.l.b16 %v1492
        %v5014 = vunpack.c.h.b16 %v1492
        %v5015 = vunpack.c.l.b16 %v1493
        %v5016 = vunpack.c.h.b16 %v1493
        %v5017 = vunpack.c.l.b16 %v1494
        %v5018 = vunpack.c.h.b16 %v1494
        %v5019 = vunpack.c.l.b16 %v1495
        %v5020 = vunpack.c.h.b16 %v1495
        %v5021 = vunpack.c.l.b16 %v1496
        %v5022 = vunpack.c.h.b16 %v1496
        %v5023 = vunpack.c.l.b16 %v1497
        %v5024 = vunpack.c.h.b16 %v1497
        %v5025 = vunpack.c.l.b16 %v1498
        %v5026 = vunpack.c.h.b16 %v1498
        %v5027 = vunpack.c.l.b16 %v1499
        %v5028 = vunpack.c.h.b16 %v1499
        %v5029 = vunpack.c.l.b16 %v1500
        %v5030 = vunpack.c.h.b16 %v1500
        %v5031 = vunpack.c.l.b16 %v1501
        %v5032 = vunpack.c.h.b16 %v1501
        %v5033 = vunpack.c.l.b16 %v1502
        %v5034 = vunpack.c.h.b16 %v1502
        %v5035 = vunpack.c.l.b16 %v1503
        %v5036 = vunpack.c.h.b16 %v1503
        %v5037 = vunpack.c.l.b16 %v1504
        %v5038 = vunpack.c.h.b16 %v1504
        %v5039 = vunpack.c.l.b16 %v1505
        %v5040 = vunpack.c.h.b16 %v1505
        %v5041 = vunpack.c.l.b16 %v1506
        %v5042 = vunpack.c.h.b16 %v1506
        %v5043 = vunpack.c.l.b16 %v1507
        %v5044 = vunpack.c.h.b16 %v1507
        %v5045 = vunpack.c.l.b16 %v1508
        %v5046 = vunpack.c.h.b16 %v1508
        %v5047 = vunpack.c.l.b16 %v1509
        %v5048 = vunpack.c.h.b16 %v1509
        %v5049 = vunpack.c.l.b16 %v1510
        %v5050 = vunpack.c.h.b16 %v1510
        %v5051 = vunpack.c.l.b16 %v1511
        %v5052 = vunpack.c.h.b16 %v1511
        %v5053 = vunpack.c.l.b16 %v1512
        %v5054 = vunpack.c.h.b16 %v1512
        %v5055 = vunpack.c.l.b16 %v1513
        %v5056 = vunpack.c.h.b16 %v1513
        %v5057 = vunpack.c.l.b16 %v1514
        %v5058 = vunpack.c.h.b16 %v1514
        %v5059 = vunpack.c.l.b16 %v1515
        %v5060 = vunpack.c.h.b16 %v1515
        %v5061 = vunpack.c.l.b16 %v1516
        %v5062 = vunpack.c.h.b16 %v1516
        %v5063 = vunpack.c.l.b16 %v1517
        %v5064 = vunpack.c.h.b16 %v1517
        %v5065 = vunpack.c.l.b16 %v1518
        %v5066 = vunpack.c.h.b16 %v1518
        %v5067 = vunpack.c.l.b16 %v1519
        %v5068 = vunpack.c.h.b16 %v1519
        %v5069 = vunpack.c.l.b16 %v1520
        %v5070 = vunpack.c.h.b16 %v1520
        %v5071 = vunpack.c.l.b16 %v1521
        %v5072 = vunpack.c.h.b16 %v1521
        %v5073 = vunpack.c.l.b16 %v1522
        %v5074 = vunpack.c.h.b16 %v1522
        %v5075 = vunpack.c.l.b16 %v1523
        %v5076 = vunpack.c.h.b16 %v1523
        %v5077 = vunpack.c.l.b16 %v1524
        %v5078 = vunpack.c.h.b16 %v1524
        %v5079 = vunpack.c.l.b16 %v1525
        %v5080 = vunpack.c.h.b16 %v1525
        %v5081 = vunpack.c.l.b16 %v1526
        %v5082 = vunpack.c.h.b16 %v1526
        %v5083 = vunpack.c.l.b16 %v1527
        %v5084 = vunpack.c.h.b16 %v1527
        %v5085 = vunpack.c.l.b16 %v1528
        %v5086 = vunpack.c.h.b16 %v1528
        %v5087 = vunpack.c.l.b16 %v1529
        %v5088 = vunpack.c.h.b16 %v1529
        %v5089 = vunpack.c.l.b16 %v1530
        %v5090 = vunpack.c.h.b16 %v1530
        %v5091 = vunpack.c.l.b16 %v1531
        %v5092 = vunpack.c.h.b16 %v1531
        %v5093 = vunpack.c.l.b16 %v1532
        %v5094 = vunpack.c.h.b16 %v1532
        %v5095 = vunpack.c.l.b16 %v1533
        %v5096 = vunpack.c.h.b16 %v1533
        %v5097 = vunpack.c.l.b16 %v1534
        %v5098 = vunpack.c.h.b16 %v1534
        %v5099 = vunpack.c.l.b16 %v1535
        %v5100 = vunpack.c.h.b16 %v1535
        %v5101 = vunpack.c.l.b16 %v1536
        %v5102 = vunpack.c.h.b16 %v1536
        %v5103 = vunpack.c.l.b16 %v1537
        %v5104 = vunpack.c.h.b16 %v1537
        %v5105 = vunpack.c.l.b16 %v1538
        %v5106 = vunpack.c.h.b16 %v1538
        %v5107 = vunpack.c.l.b16 %v1539
        %v5108 = vunpack.c.h.b16 %v1539
        %v5109 = vunpack.c.l.b16 %v1540
        %v5110 = vunpack.c.h.b16 %v1540
        %v5111 = vunpack.c.l.b16 %v1541
        %v5112 = vunpack.c.h.b16 %v1541
        %v5113 = vunpack.c.l.b16 %v1542
        %v5114 = vunpack.c.h.b16 %v1542
        %v5115 = vunpack.c.l.b16 %v1543
        %v5116 = vunpack.c.h.b16 %v1543
        %v5117 = vunpack.c.l.b16 %v1544
        %v5118 = vunpack.c.h.b16 %v1544
        %v5119 = vunpack.c.l.b16 %v1545
        %v5120 = vunpack.c.h.b16 %v1545
        %v5121 = vunpack.c.l.b16 %v1546
        %v5122 = vunpack.c.h.b16 %v1546
        %v5123 = vunpack.c.l.b16 %v1547
        %v5124 = vunpack.c.h.b16 %v1547
        %v5125 = vunpack.c.l.b16 %v1548
        %v5126 = vunpack.c.h.b16 %v1548
        %v5127 = vunpack.c.l.b16 %v1549
        %v5128 = vunpack.c.h.b16 %v1549
        %v5129 = vunpack.c.l.b16 %v1550
        %v5130 = vunpack.c.h.b16 %v1550
        %v5131 = vunpack.c.l.b16 %v1551
        %v5132 = vunpack.c.h.b16 %v1551
        %v5133 = vunpack.c.l.b16 %v1552
        %v5134 = vunpack.c.h.b16 %v1552
        %v5135 = vunpack.c.l.b16 %v1553
        %v5136 = vunpack.c.h.b16 %v1553
        %v5137 = vunpack.c.l.b16 %v1554
        %v5138 = vunpack.c.h.b16 %v1554
        %v5139 = vunpack.c.l.b16 %v1555
        %v5140 = vunpack.c.h.b16 %v1555
        %v5141 = vunpack.c.l.b16 %v1556
        %v5142 = vunpack.c.h.b16 %v1556
        %v5143 = vunpack.c.l.b16 %v1557
        %v5144 = vunpack.c.h.b16 %v1557
        %v5145 = vunpack.c.l.b16 %v1558
        %v5146 = vunpack.c.h.b16 %v1558
        %v5147 = vunpack.c.l.b16 %v1559
        %v5148 = vunpack.c.h.b16 %v1559
        %v5149 = vunpack.c.l.b16 %v1560
        %v5150 = vunpack.c.h.b16 %v1560
        %v5151 = vunpack.c.l.b16 %v1561
        %v5152 = vunpack.c.h.b16 %v1561
        %v5153 = vunpack.c.l.b16 %v1562
        %v5154 = vunpack.c.h.b16 %v1562
        %v5155 = vunpack.c.l.b16 %v1563
        %v5156 = vunpack.c.h.b16 %v1563
        %v5157 = vunpack.c.l.b16 %v1564
        %v5158 = vunpack.c.h.b16 %v1564
        %v5159 = vunpack.c.l.b16 %v1565
        %v5160 = vunpack.c.h.b16 %v1565
        %v5161 = vunpack.c.l.b16 %v1566
        %v5162 = vunpack.c.h.b16 %v1566
        %v5163 = vunpack.c.l.b16 %v1567
        %v5164 = vunpack.c.h.b16 %v1567
        %v5165 = vunpack.c.l.b16 %v1568
        %v5166 = vunpack.c.h.b16 %v1568
        %v5167 = vunpack.c.l.b16 %v1569
        %v5168 = vunpack.c.h.b16 %v1569
        %v5169 = vunpack.c.l.b16 %v1570
        %v5170 = vunpack.c.h.b16 %v1570
        %v5171 = vunpack.c.l.b16 %v1571
        %v5172 = vunpack.c.h.b16 %v1571
        %v5173 = vunpack.c.l.b16 %v1572
        %v5174 = vunpack.c.h.b16 %v1572
        %v5175 = vunpack.c.l.b16 %v1573
        %v5176 = vunpack.c.h.b16 %v1573
        %v5177 = vunpack.c.l.b16 %v1574
        %v5178 = vunpack.c.h.b16 %v1574
        %v5179 = vunpack.c.l.b16 %v1575
        %v5180 = vunpack.c.h.b16 %v1575
        %v5181 = vunpack.c.l.b16 %v1576
        %v5182 = vunpack.c.h.b16 %v1576
        %v5183 = vunpack.c.l.b16 %v1577
        %v5184 = vunpack.c.h.b16 %v1577
        %v5185 = vunpack.c.l.b16 %v1578
        %v5186 = vunpack.c.h.b16 %v1578
        %v5187 = vunpack.c.l.b16 %v1579
        %v5188 = vunpack.c.h.b16 %v1579
        %v5189 = vunpack.c.l.b16 %v1580
        %v5190 = vunpack.c.h.b16 %v1580
        %v5191 = vunpack.c.l.b16 %v1581
        %v5192 = vunpack.c.h.b16 %v1581
        %v5193 = vunpack.c.l.b16 %v1582
        %v5194 = vunpack.c.h.b16 %v1582
        %v5195 = vunpack.c.l.b16 %v1583
        %v5196 = vunpack.c.h.b16 %v1583
        %v5197 = vunpack.c.l.b16 %v1584
        %v5198 = vunpack.c.h.b16 %v1584
        %v5199 = vunpack.c.l.b16 %v1585
        %v5200 = vunpack.c.h.b16 %v1585
        %v5201 = vunpack.c.l.b16 %v1586
        %v5202 = vunpack.c.h.b16 %v1586
        %v5203 = vunpack.c.l.b16 %v1587
        %v5204 = vunpack.c.h.b16 %v1587
        %v5205 = vunpack.c.l.b16 %v1588
        %v5206 = vunpack.c.h.b16 %v1588
        %v5207 = vunpack.c.l.b16 %v1589
        %v5208 = vunpack.c.h.b16 %v1589
        %v5209 = vunpack.c.l.b16 %v1590
        %v5210 = vunpack.c.h.b16 %v1590
        %v5211 = vunpack.c.l.b16 %v1591
        %v5212 = vunpack.c.h.b16 %v1591
        %v5213 = vunpack.c.l.b16 %v1592
        %v5214 = vunpack.c.h.b16 %v1592
        %v5215 = vunpack.c.l.b16 %v1593
        %v5216 = vunpack.c.h.b16 %v1593
        %v5217 = vunpack.c.l.b16 %v1594
        %v5218 = vunpack.c.h.b16 %v1594
        %v5219 = vunpack.c.l.b16 %v1595
        %v5220 = vunpack.c.h.b16 %v1595
        %v5221 = vunpack.c.l.b16 %v1596
        %v5222 = vunpack.c.h.b16 %v1596
        %v5223 = vunpack.c.l.b16 %v1597
        %v5224 = vunpack.c.h.b16 %v1597
        %v5225 = vunpack.c.l.b16 %v1598
        %v5226 = vunpack.c.h.b16 %v1598
        %v5227 = vunpack.c.l.b16 %v1599
        %v5228 = vunpack.c.h.b16 %v1599
        %v5229 = vunpack.c.l.b16 %v1600
        %v5230 = vunpack.c.h.b16 %v1600
        %v5231 = vunpack.c.l.b16 %v1601
        %v5232 = vunpack.c.h.b16 %v1601
        %v5233 = vunpack.c.l.b16 %v1602
        %v5234 = vunpack.c.h.b16 %v1602
        %v5235 = vunpack.c.l.b16 %v1603
        %v5236 = vunpack.c.h.b16 %v1603
        %v5237 = vunpack.c.l.b16 %v1604
        %v5238 = vunpack.c.h.b16 %v1604
        %v5239 = vunpack.c.l.b16 %v1605
        %v5240 = vunpack.c.h.b16 %v1605
        %v5241 = vunpack.c.l.b16 %v1606
        %v5242 = vunpack.c.h.b16 %v1606
        %v5243 = vunpack.c.l.b16 %v1607
        %v5244 = vunpack.c.h.b16 %v1607
        %v5245 = vunpack.c.l.b16 %v1608
        %v5246 = vunpack.c.h.b16 %v1608
        %v5247 = vunpack.c.l.b16 %v1609
        %v5248 = vunpack.c.h.b16 %v1609
        %v5249 = vunpack.c.l.b16 %v1610
        %v5250 = vunpack.c.h.b16 %v1610
        %v5251 = vunpack.c.l.b16 %v1611
        %v5252 = vunpack.c.h.b16 %v1611
        %v5253 = vunpack.c.l.b16 %v1612
        %v5254 = vunpack.c.h.b16 %v1612
        %v5255 = vunpack.c.l.b16 %v1613
        %v5256 = vunpack.c.h.b16 %v1613
        %v5257 = vunpack.c.l.b16 %v1614
        %v5258 = vunpack.c.h.b16 %v1614
        %v5259 = vunpack.c.l.b16 %v1615
        %v5260 = vunpack.c.h.b16 %v1615
        %v5261 = vunpack.c.l.b16 %v1616
        %v5262 = vunpack.c.h.b16 %v1616
        %v5263 = vunpack.c.l.b16 %v1617
        %v5264 = vunpack.c.h.b16 %v1617
        %v5265 = vunpack.c.l.b16 %v1618
        %v5266 = vunpack.c.h.b16 %v1618
        %v5267 = vunpack.c.l.b16 %v1619
        %v5268 = vunpack.c.h.b16 %v1619
        %v5269 = vunpack.c.l.b16 %v1620
        %v5270 = vunpack.c.h.b16 %v1620
        %v5271 = vunpack.c.l.b16 %v1621
        %v5272 = vunpack.c.h.b16 %v1621
        %v5273 = vunpack.c.l.b16 %v1622
        %v5274 = vunpack.c.h.b16 %v1622
        %v5275 = vunpack.c.l.b16 %v1623
        %v5276 = vunpack.c.h.b16 %v1623
        %v5277 = vunpack.c.l.b16 %v1624
        %v5278 = vunpack.c.h.b16 %v1624
        %v5279 = vunpack.c.l.b16 %v1625
        %v5280 = vunpack.c.h.b16 %v1625
        %v5281 = vunpack.c.l.b16 %v1626
        %v5282 = vunpack.c.h.b16 %v1626
        %v5283 = vunpack.c.l.b16 %v1627
        %v5284 = vunpack.c.h.b16 %v1627
        %v5285 = vunpack.c.l.b16 %v1628
        %v5286 = vunpack.c.h.b16 %v1628
        %v5287 = vunpack.c.l.b16 %v1629
        %v5288 = vunpack.c.h.b16 %v1629
        %v5289 = vunpack.c.l.b16 %v1630
        %v5290 = vunpack.c.h.b16 %v1630
        %v5291 = vunpack.c.l.b16 %v1631
        %v5292 = vunpack.c.h.b16 %v1631
        %v5293 = vunpack.c.l.b16 %v1632
        %v5294 = vunpack.c.h.b16 %v1632
        %v5295 = vunpack.c.l.b16 %v1633
        %v5296 = vunpack.c.h.b16 %v1633
        %v5297 = vunpack.c.l.b16 %v1634
        %v5298 = vunpack.c.h.b16 %v1634
        %v5299 = vunpack.c.l.b16 %v1635
        %v5300 = vunpack.c.h.b16 %v1635
        %v5301 = vunpack.c.l.b16 %v1636
        %v5302 = vunpack.c.h.b16 %v1636
        %v5303 = vunpack.c.l.b16 %v1637
        %v5304 = vunpack.c.h.b16 %v1637
        %v5305 = vunpack.c.l.b16 %v1638
        %v5306 = vunpack.c.h.b16 %v1638
        %v5307 = vunpack.c.l.b16 %v1639
        %v5308 = vunpack.c.h.b16 %v1639
        %v5309 = vunpack.c.l.b16 %v1640
        %v5310 = vunpack.c.h.b16 %v1640
        %v5311 = vunpack.c.l.b16 %v1641
        %v5312 = vunpack.c.h.b16 %v1641
        %v5313 = vunpack.c.l.b16 %v1642
        %v5314 = vunpack.c.h.b16 %v1642
        %v5315 = vunpack.c.l.b16 %v1643
        %v5316 = vunpack.c.h.b16 %v1643
        %v5317 = vunpack.c.l.b16 %v1644
        %v5318 = vunpack.c.h.b16 %v1644
        %v5319 = vunpack.c.l.b16 %v1645
        %v5320 = vunpack.c.h.b16 %v1645
        %v5321 = vunpack.c.l.b16 %v1646
        %v5322 = vunpack.c.h.b16 %v1646
        %v5323 = vunpack.c.l.b16 %v1647
        %v5324 = vunpack.c.h.b16 %v1647
        %v5325 = vunpack.c.l.b16 %v1648
        %v5326 = vunpack.c.h.b16 %v1648
        %v5327 = vunpack.c.l.b16 %v1649
        %v5328 = vunpack.c.h.b16 %v1649
        %v5329 = vunpack.c.l.b16 %v1650
        %v5330 = vunpack.c.h.b16 %v1650
        %v5331 = vunpack.c.l.b16 %v1651
        %v5332 = vunpack.c.h.b16 %v1651
        %v5333 = vunpack.c.l.b16 %v1652
        %v5334 = vunpack.c.h.b16 %v1652
        %v5335 = vunpack.c.l.b16 %v1653
        %v5336 = vunpack.c.h.b16 %v1653
        %v5337 = vunpack.c.l.b16 %v1654
        %v5338 = vunpack.c.h.b16 %v1654
        %v5339 = vunpack.c.l.b16 %v1655
        %v5340 = vunpack.c.h.b16 %v1655
        %v5341 = vunpack.c.l.b16 %v1656
        %v5342 = vunpack.c.h.b16 %v1656
        %v5343 = vunpack.c.l.b16 %v1657
        %v5344 = vunpack.c.h.b16 %v1657
        %v5345 = vunpack.c.l.b16 %v1658
        %v5346 = vunpack.c.h.b16 %v1658
        %v5347 = vunpack.c.l.b16 %v1659
        %v5348 = vunpack.c.h.b16 %v1659
        %v5349 = vunpack.c.l.b16 %v1660
        %v5350 = vunpack.c.h.b16 %v1660
        %v5351 = vunpack.c.l.b16 %v1661
        %v5352 = vunpack.c.h.b16 %v1661
        %v5353 = vunpack.c.l.b16 %v1662
        %v5354 = vunpack.c.h.b16 %v1662
        %v5355 = vunpack.c.l.b16 %v1663
        %v5356 = vunpack.c.h.b16 %v1663
        %v5357 = vunpack.c.l.b16 %v1664
        %v5358 = vunpack.c.h.b16 %v1664
        %v5359 = vunpack.c.l.b16 %v1665
        %v5360 = vunpack.c.h.b16 %v1665
        %v5361 = vunpack.c.l.b16 %v1666
        %v5362 = vunpack.c.h.b16 %v1666
        %v5363 = vunpack.c.l.b16 %v1667
        %v5364 = vunpack.c.h.b16 %v1667
        %v5365 = vunpack.c.l.b16 %v1668
        %v5366 = vunpack.c.h.b16 %v1668
        %v5367 = vunpack.c.l.b16 %v1669
        %v5368 = vunpack.c.h.b16 %v1669
        %v5369 = vunpack.c.l.b16 %v1670
        %v5370 = vunpack.c.h.b16 %v1670
        %v5371 = vunpack.c.l.b16 %v1671
        %v5372 = vunpack.c.h.b16 %v1671
        %v5373 = vunpack.c.l.b16 %v1672
        %v5374 = vunpack.c.h.b16 %v1672
        %v5375 = vunpack.c.l.b16 %v1673
        %v5376 = vunpack.c.h.b16 %v1673
        %v5377 = vunpack.c.l.b16 %v1674
        %v5378 = vunpack.c.h.b16 %v1674
        %v5379 = vunpack.c.l.b16 %v1675
        %v5380 = vunpack.c.h.b16 %v1675
        %v5381 = vunpack.c.l.b16 %v1676
        %v5382 = vunpack.c.h.b16 %v1676
        %v5383 = vunpack.c.l.b16 %v1677
        %v5384 = vunpack.c.h.b16 %v1677
        %v5385 = vunpack.c.l.b16 %v1678
        %v5386 = vunpack.c.h.b16 %v1678
        %v5387 = vunpack.c.l.b16 %v1679
        %v5388 = vunpack.c.h.b16 %v1679
        %v5389 = vunpack.c.l.b16 %v1680
        %v5390 = vunpack.c.h.b16 %v1680
        %v5391 = vunpack.c.l.b16 %v1681
        %v5392 = vunpack.c.h.b16 %v1681
        %v5393 = vunpack.c.l.b16 %v1682
        %v5394 = vunpack.c.h.b16 %v1682
        %v5395 = vunpack.c.l.b16 %v1683
        %v5396 = vunpack.c.h.b16 %v1683
        %v5397 = vunpack.c.l.b16 %v1684
        %v5398 = vunpack.c.h.b16 %v1684
        %v5399 = vunpack.c.l.b16 %v1685
        %v5400 = vunpack.c.h.b16 %v1685
        %v5401 = vunpack.c.l.b16 %v1686
        %v5402 = vunpack.c.h.b16 %v1686
        %v5403 = vunpack.c.l.b16 %v1687
        %v5404 = vunpack.c.h.b16 %v1687
        %v5405 = vunpack.c.l.b16 %v1688
        %v5406 = vunpack.c.h.b16 %v1688
        %v5407 = vunpack.c.l.b16 %v1689
        %v5408 = vunpack.c.h.b16 %v1689
        %v5409 = vunpack.c.l.b16 %v1690
        %v5410 = vunpack.c.h.b16 %v1690
        %v5411 = vunpack.c.l.b16 %v1691
        %v5412 = vunpack.c.h.b16 %v1691
        %v5413 = vunpack.c.l.b16 %v1692
        %v5414 = vunpack.c.h.b16 %v1692
        %v5415 = vunpack.c.l.b16 %v1693
        %v5416 = vunpack.c.h.b16 %v1693
        %v5417 = vunpack.c.l.b16 %v1694
        %v5418 = vunpack.c.h.b16 %v1694
        %v5419 = vunpack.c.l.b16 %v1695
        %v5420 = vunpack.c.h.b16 %v1695
        %v5421 = vunpack.c.l.b16 %v1696
        %v5422 = vunpack.c.h.b16 %v1696
        %v5423 = vunpack.c.l.b16 %v1697
        %v5424 = vunpack.c.h.b16 %v1697
        %v5425 = vunpack.c.l.b16 %v1698
        %v5426 = vunpack.c.h.b16 %v1698
        %v5427 = vunpack.c.l.b16 %v1699
        %v5428 = vunpack.c.h.b16 %v1699
        %v5429 = vunpack.c.l.b16 %v1700
        %v5430 = vunpack.c.h.b16 %v1700
        %v5431 = vunpack.c.l.b16 %v1701
        %v5432 = vunpack.c.h.b16 %v1701
        %v5433 = vunpack.c.l.b16 %v1702
        %v5434 = vunpack.c.h.b16 %v1702
        %v5435 = vunpack.c.l.b16 %v1703
        %v5436 = vunpack.c.h.b16 %v1703
        %v5437 = vunpack.c.l.b16 %v1704
        %v5438 = vunpack.c.h.b16 %v1704
        %v5439 = vunpack.c.l.b16 %v1705
        %v5440 = vunpack.c.h.b16 %v1705
        %v5441 = vunpack.c.l.b16 %v1706
        %v5442 = vunpack.c.h.b16 %v1706
        %v5443 = vunpack.c.l.b16 %v1707
        %v5444 = vunpack.c.h.b16 %v1707
        %v5445 = vunpack.c.l.b16 %v1708
        %v5446 = vunpack.c.h.b16 %v1708
        %v5447 = vunpack.c.l.b16 %v1709
        %v5448 = vunpack.c.h.b16 %v1709
        %v5449 = vunpack.c.l.b16 %v1710
        %v5450 = vunpack.c.h.b16 %v1710
        %v5451 = vunpack.c.l.b16 %v1711
        %v5452 = vunpack.c.h.b16 %v1711
        %v5453 = vunpack.c.l.b16 %v1712
        %v5454 = vunpack.c.h.b16 %v1712
        %v5455 = vunpack.c.l.b16 %v1713
        %v5456 = vunpack.c.h.b16 %v1713
        %v5457 = vunpack.c.l.b16 %v1714
        %v5458 = vunpack.c.h.b16 %v1714
        %v5459 = vunpack.c.l.b16 %v1715
        %v5460 = vunpack.c.h.b16 %v1715
        %v5461 = vunpack.c.l.b16 %v1716
        %v5462 = vunpack.c.h.b16 %v1716
        %v5463 = vunpack.c.l.b16 %v1717
        %v5464 = vunpack.c.h.b16 %v1717
        %v5465 = vunpack.c.l.b16 %v1718
        %v5466 = vunpack.c.h.b16 %v1718
        %v5467 = vunpack.c.l.b16 %v1719
        %v5468 = vunpack.c.h.b16 %v1719
        %v5469 = vunpack.c.l.b16 %v1720
        %v5470 = vunpack.c.h.b16 %v1720
        %v5471 = vunpack.c.l.b16 %v1721
        %v5472 = vunpack.c.h.b16 %v1721
        %v5473 = vunpack.c.l.b16 %v1722
        %v5474 = vunpack.c.h.b16 %v1722
        %v5475 = vunpack.c.l.b16 %v1723
        %v5476 = vunpack.c.h.b16 %v1723
        %v5477 = vunpack.c.l.b16 %v1724
        %v5478 = vunpack.c.h.b16 %v1724
        %v5479 = vunpack.c.l.b16 %v1725
        %v5480 = vunpack.c.h.b16 %v1725
        %v5481 = vunpack.c.l.b16 %v1726
        %v5482 = vunpack.c.h.b16 %v1726
        %v5483 = vunpack.c.l.b16 %v1727
        %v5484 = vunpack.c.h.b16 %v1727
        %v5485 = vunpack.c.l.b16 %v1728
        %v5486 = vunpack.c.h.b16 %v1728
        %v5487 = vunpack.c.l.b16 %v1729
        %v5488 = vunpack.c.h.b16 %v1729
        %v5489 = vunpack.c.l.b16 %v1730
        %v5490 = vunpack.c.h.b16 %v1730
        %v5491 = vunpack.c.l.b16 %v1731
        %v5492 = vunpack.c.h.b16 %v1731
        %v5493 = vunpack.c.l.b16 %v1732
        %v5494 = vunpack.c.h.b16 %v1732
        %v5495 = vunpack.c.l.b16 %v1733
        %v5496 = vunpack.c.h.b16 %v1733
        %v5497 = vunpack.c.l.b16 %v1734
        %v5498 = vunpack.c.h.b16 %v1734
        %v5499 = vunpack.c.l.b16 %v1735
        %v5500 = vunpack.c.h.b16 %v1735
        %v5501 = vunpack.c.l.b16 %v1736
        %v5502 = vunpack.c.h.b16 %v1736
        %v5503 = vunpack.c.l.b16 %v1737
        %v5504 = vunpack.c.h.b16 %v1737
        %v5505 = vunpack.c.l.b16 %v1738
        %v5506 = vunpack.c.h.b16 %v1738
        %v5507 = vunpack.c.l.b16 %v1739
        %v5508 = vunpack.c.h.b16 %v1739
        %v5509 = vunpack.c.l.b16 %v1740
        %v5510 = vunpack.c.h.b16 %v1740
        %v5511 = vunpack.c.l.b16 %v1741
        %v5512 = vunpack.c.h.b16 %v1741
        %v5513 = vunpack.c.l.b16 %v1742
        %v5514 = vunpack.c.h.b16 %v1742
        %v5515 = vunpack.c.l.b16 %v1743
        %v5516 = vunpack.c.h.b16 %v1743
        %v5517 = vunpack.c.l.b16 %v1744
        %v5518 = vunpack.c.h.b16 %v1744
        %v5519 = vunpack.c.l.b16 %v1745
        %v5520 = vunpack.c.h.b16 %v1745
        %v5521 = vunpack.c.l.b16 %v1746
        %v5522 = vunpack.c.h.b16 %v1746
        %v5523 = vunpack.c.l.b16 %v1747
        %v5524 = vunpack.c.h.b16 %v1747
        %v5525 = vunpack.c.l.b16 %v1748
        %v5526 = vunpack.c.h.b16 %v1748
        %v5527 = vunpack.c.l.b16 %v1749
        %v5528 = vunpack.c.h.b16 %v1749
        %v5529 = vunpack.c.l.b16 %v1750
        %v5530 = vunpack.c.h.b16 %v1750
        %v5531 = vunpack.c.l.b16 %v1751
        %v5532 = vunpack.c.h.b16 %v1751
        %v5533 = vunpack.c.l.b16 %v1752
        %v5534 = vunpack.c.h.b16 %v1752
        %v5535 = vunpack.c.l.b16 %v1753
        %v5536 = vunpack.c.h.b16 %v1753
        %v5537 = vunpack.c.l.b16 %v1754
        %v5538 = vunpack.c.h.b16 %v1754
        %v5539 = vunpack.c.l.b16 %v1755
        %v5540 = vunpack.c.h.b16 %v1755
        %v5541 = vunpack.c.l.b16 %v1756
        %v5542 = vunpack.c.h.b16 %v1756
        %v5543 = vunpack.c.l.b16 %v1757
        %v5544 = vunpack.c.h.b16 %v1757
        %v5545 = vunpack.c.l.b16 %v1758
        %v5546 = vunpack.c.h.b16 %v1758
        %v5547 = vunpack.c.l.b16 %v1759
        %v5548 = vunpack.c.h.b16 %v1759
        %v5549 = vunpack.c.l.b16 %v1760
        %v5550 = vunpack.c.h.b16 %v1760
        %v5551 = vunpack.c.l.b16 %v1761
        %v5552 = vunpack.c.h.b16 %v1761
        %v5553 = vunpack.c.l.b16 %v1762
        %v5554 = vunpack.c.h.b16 %v1762
        %v5555 = vunpack.c.l.b16 %v1763
        %v5556 = vunpack.c.h.b16 %v1763
        %v5557 = vunpack.c.l.b16 %v1764
        %v5558 = vunpack.c.h.b16 %v1764
        %v5559 = vunpack.c.l.b16 %v1765
        %v5560 = vunpack.c.h.b16 %v1765
        %v5561 = vunpack.c.l.b16 %v1766
        %v5562 = vunpack.c.h.b16 %v1766
        %v5563 = vunpack.c.l.b16 %v1767
        %v5564 = vunpack.c.h.b16 %v1767
        %v5565 = vunpack.c.l.b16 %v1768
        %v5566 = vunpack.c.h.b16 %v1768
        %v5567 = vunpack.c.l.b16 %v1769
        %v5568 = vunpack.c.h.b16 %v1769
        %v5569 = vunpack.c.l.b16 %v1770
        %v5570 = vunpack.c.h.b16 %v1770
        %v5571 = vunpack.c.l.b16 %v1771
        %v5572 = vunpack.c.h.b16 %v1771
        %v5573 = vunpack.c.l.b16 %v1772
        %v5574 = vunpack.c.h.b16 %v1772
        %v5575 = vunpack.c.l.b16 %v1773
        %v5576 = vunpack.c.h.b16 %v1773
        %v5577 = vunpack.c.l.b16 %v1774
        %v5578 = vunpack.c.h.b16 %v1774
        %v5579 = vunpack.c.l.b16 %v1775
        %v5580 = vunpack.c.h.b16 %v1775
        %v5581 = vunpack.c.l.b16 %v1776
        %v5582 = vunpack.c.h.b16 %v1776
        %v5583 = vunpack.c.l.b16 %v1777
        %v5584 = vunpack.c.h.b16 %v1777
        %v5585 = vunpack.c.l.b16 %v1778
        %v5586 = vunpack.c.h.b16 %v1778
        %v5587 = vunpack.c.l.b16 %v1779
        %v5588 = vunpack.c.h.b16 %v1779
        %v5589 = vunpack.c.l.b16 %v1780
        %v5590 = vunpack.c.h.b16 %v1780
        %v5591 = vunpack.c.l.b16 %v1781
        %v5592 = vunpack.c.h.b16 %v1781
        %v5593 = vunpack.c.l.b16 %v1782
        %v5594 = vunpack.c.h.b16 %v1782
        %v5595 = vunpack.c.l.b16 %v1783
        %v5596 = vunpack.c.h.b16 %v1783
        %v5597 = vunpack.c.l.b16 %v1784
        %v5598 = vunpack.c.h.b16 %v1784
        %v5599 = vunpack.c.l.b16 %v1785
        %v5600 = vunpack.c.h.b16 %v1785
        %v5601 = vunpack.c.l.b16 %v1786
        %v5602 = vunpack.c.h.b16 %v1786
        %v5603 = vunpack.c.l.b16 %v1787
        %v5604 = vunpack.c.h.b16 %v1787
        %v5605 = vunpack.c.l.b16 %v1788
        %v5606 = vunpack.c.h.b16 %v1788
        %v5607 = vunpack.c.l.b16 %v1789
        %v5608 = vunpack.c.h.b16 %v1789
        %v5609 = vunpack.c.l.b16 %v1790
        %v5610 = vunpack.c.h.b16 %v1790
        %v5611 = vunpack.c.l.b16 %v1791
        %v5612 = vunpack.c.h.b16 %v1791
        %v5613 = vunpack.c.l.b16 %v1792
        %v5614 = vunpack.c.h.b16 %v1792
        %v5615 = vunpack.c.l.b16 %v1793
        %v5616 = vunpack.c.h.b16 %v1793
        %v5617 = vunpack.c.l.b16 %v1794
        %v5618 = vunpack.c.h.b16 %v1794
        %v5619 = vunpack.c.l.b16 %v1795
        %v5620 = vunpack.c.h.b16 %v1795
        %v5621 = vunpack.c.l.b16 %v1796
        %v5622 = vunpack.c.h.b16 %v1796
        %v5623 = vunpack.c.l.b16 %v1797
        %v5624 = vunpack.c.h.b16 %v1797
        %v5625 = vunpack.c.l.b16 %v1798
        %v5626 = vunpack.c.h.b16 %v1798
        %v5627 = vunpack.c.l.b16 %v1799
        %v5628 = vunpack.c.h.b16 %v1799
        %v5629 = vunpack.c.l.b16 %v1800
        %v5630 = vunpack.c.h.b16 %v1800
        %v5631 = vunpack.c.l.b16 %v1801
        %v5632 = vunpack.c.h.b16 %v1801
        %v5633 = vunpack.c.l.b16 %v1802
        %v5634 = vunpack.c.h.b16 %v1802
        %v5635 = vunpack.c.l.b16 %v1803
        %v5636 = vunpack.c.h.b16 %v1803
        %v5637 = vunpack.c.l.b16 %v1804
        %v5638 = vunpack.c.h.b16 %v1804
        %v5639 = vunpack.c.l.b16 %v1805
        %v5640 = vunpack.c.h.b16 %v1805
        %v5641 = vunpack.c.l.b16 %v1806
        %v5642 = vunpack.c.h.b16 %v1806
        %v5643 = vunpack.c.l.b16 %v1807
        %v5644 = vunpack.c.h.b16 %v1807
        %v5645 = vunpack.c.l.b16 %v1808
        %v5646 = vunpack.c.h.b16 %v1808
        %v5647 = vunpack.c.l.b16 %v1809
        %v5648 = vunpack.c.h.b16 %v1809
        %v5649 = vunpack.c.l.b16 %v1810
        %v5650 = vunpack.c.h.b16 %v1810
        %v5651 = vunpack.c.l.b16 %v1811
        %v5652 = vunpack.c.h.b16 %v1811
        %v5653 = vunpack.c.l.b16 %v1812
        %v5654 = vunpack.c.h.b16 %v1812
        %v5655 = vunpack.c.l.b16 %v1813
        %v5656 = vunpack.c.h.b16 %v1813
        %v5657 = vunpack.c.l.b16 %v1814
        %v5658 = vunpack.c.h.b16 %v1814
        %v5659 = vunpack.c.l.b16 %v1815
        %v5660 = vunpack.c.h.b16 %v1815
        %v5661 = vunpack.c.l.b16 %v1816
        %v5662 = vunpack.c.h.b16 %v1816
        %v5663 = vunpack.c.l.b16 %v1817
        %v5664 = vunpack.c.h.b16 %v1817
        %v5665 = vunpack.c.l.b16 %v1818
        %v5666 = vunpack.c.h.b16 %v1818
        %v5667 = vunpack.c.l.b16 %v1819
        %v5668 = vunpack.c.h.b16 %v1819
        %v5669 = vunpack.c.l.b16 %v1820
        %v5670 = vunpack.c.h.b16 %v1820
        %v5671 = vunpack.c.l.b16 %v1821
        %v5672 = vunpack.c.h.b16 %v1821
        %v5673 = vunpack.c.l.b16 %v1822
        %v5674 = vunpack.c.h.b16 %v1822
        %v5675 = vunpack.c.l.b16 %v1823
        %v5676 = vunpack.c.h.b16 %v1823
        %v5677 = vunpack.c.l.b16 %v1824
        %v5678 = vunpack.c.h.b16 %v1824
        %v5679 = vunpack.c.l.b16 %v1825
        %v5680 = vunpack.c.h.b16 %v1825
        %v5681 = vunpack.c.l.b16 %v1826
        %v5682 = vunpack.c.h.b16 %v1826
        %v5683 = vunpack.c.l.b16 %v1827
        %v5684 = vunpack.c.h.b16 %v1827
        %v5685 = vunpack.c.l.b16 %v1828
        %v5686 = vunpack.c.h.b16 %v1828
        %v5687 = vunpack.c.l.b16 %v1829
        %v5688 = vunpack.c.h.b16 %v1829
        %v5689 = vunpack.c.l.b16 %v1830
        %v5690 = vunpack.c.h.b16 %v1830
        %v5691 = vunpack.c.l.b16 %v1831
        %v5692 = vunpack.c.h.b16 %v1831
        %v5693 = vunpack.c.l.b16 %v1832
        %v5694 = vunpack.c.h.b16 %v1832
        %v5695 = vunpack.c.l.b16 %v1833
        %v5696 = vunpack.c.h.b16 %v1833
        %v5697 = vunpack.c.l.b16 %v1834
        %v5698 = vunpack.c.h.b16 %v1834
        %v5699 = vunpack.c.l.b16 %v1835
        %v5700 = vunpack.c.h.b16 %v1835
        %v5701 = vunpack.c.l.b16 %v1836
        %v5702 = vunpack.c.h.b16 %v1836
        %v5703 = vunpack.c.l.b16 %v1837
        %v5704 = vunpack.c.h.b16 %v1837
        %v5705 = vunpack.c.l.b16 %v1838
        %v5706 = vunpack.c.h.b16 %v1838
        %v5707 = vunpack.c.l.b16 %v1839
        %v5708 = vunpack.c.h.b16 %v1839
        %v5709 = vunpack.c.l.b16 %v1840
        %v5710 = vunpack.c.h.b16 %v1840
        %v5711 = vunpack.c.l.b16 %v1841
        %v5712 = vunpack.c.h.b16 %v1841
        %v5713 = vunpack.c.l.b16 %v1842
        %v5714 = vunpack.c.h.b16 %v1842
        %v5715 = vunpack.c.l.b16 %v1843
        %v5716 = vunpack.c.h.b16 %v1843
        %v5717 = vunpack.c.l.b16 %v1844
        %v5718 = vunpack.c.h.b16 %v1844
        %v5719 = vunpack.c.l.b16 %v1845
        %v5720 = vunpack.c.h.b16 %v1845
        %v5721 = vunpack.c.l.b16 %v1846
        %v5722 = vunpack.c.h.b16 %v1846
        %v5723 = vunpack.c.l.b16 %v1847
        %v5724 = vunpack.c.h.b16 %v1847
        %v5725 = vunpack.c.l.b16 %v1848
        %v5726 = vunpack.c.h.b16 %v1848
        %v5727 = vunpack.c.l.b16 %v1849
        %v5728 = vunpack.c.h.b16 %v1849
        %v5729 = vunpack.c.l.b16 %v1850
        %v5730 = vunpack.c.h.b16 %v1850
        %v5731 = vunpack.c.l.b16 %v1851
        %v5732 = vunpack.c.h.b16 %v1851
        %v5733 = vunpack.c.l.b16 %v1852
        %v5734 = vunpack.c.h.b16 %v1852
        %v5735 = vunpack.c.l.b16 %v1853
        %v5736 = vunpack.c.h.b16 %v1853
        %v5737 = vunpack.c.l.b16 %v1854
        %v5738 = vunpack.c.h.b16 %v1854
        %v5739 = vunpack.c.l.b16 %v1855
        %v5740 = vunpack.c.h.b16 %v1855
        %v5741 = vunpack.c.l.b16 %v1856
        %v5742 = vunpack.c.h.b16 %v1856
        %v5743 = vunpack.c.l.b16 %v1857
        %v5744 = vunpack.c.h.b16 %v1857
        %v5745 = vunpack.c.l.b16 %v1858
        %v5746 = vunpack.c.h.b16 %v1858
        %v5747 = vunpack.c.l.b16 %v1859
        %v5748 = vunpack.c.h.b16 %v1859
        %v5749 = vunpack.c.l.b16 %v1860
        %v5750 = vunpack.c.h.b16 %v1860
        %v5751 = vunpack.c.l.b16 %v1861
        %v5752 = vunpack.c.h.b16 %v1861
        %v5753 = vunpack.c.l.b16 %v1862
        %v5754 = vunpack.c.h.b16 %v1862
        %v5755 = vunpack.c.l.b16 %v1863
        %v5756 = vunpack.c.h.b16 %v1863
        %v5757 = vunpack.c.l.b16 %v1864
        %v5758 = vunpack.c.h.b16 %v1864
        %v5759 = vunpack.c.l.b16 %v1865
        %v5760 = vunpack.c.h.b16 %v1865
        %v5761 = vunpack.c.l.b16 %v1866
        %v5762 = vunpack.c.h.b16 %v1866
        %v5763 = vunpack.c.l.b16 %v1867
        %v5764 = vunpack.c.h.b16 %v1867
        %v5765 = vunpack.c.l.b16 %v1868
        %v5766 = vunpack.c.h.b16 %v1868
        %v5767 = vunpack.c.l.b16 %v1869
        %v5768 = vunpack.c.h.b16 %v1869
        %v5769 = vunpack.c.l.b16 %v1870
        %v5770 = vunpack.c.h.b16 %v1870
        %v5771 = vunpack.c.l.b16 %v1871
        %v5772 = vunpack.c.h.b16 %v1871
        %v5773 = vunpack.c.l.b16 %v1872
        %v5774 = vunpack.c.h.b16 %v1872
        %v5775 = vunpack.c.l.b16 %v1873
        %v5776 = vunpack.c.h.b16 %v1873
        %v5777 = vunpack.c.l.b16 %v1874
        %v5778 = vunpack.c.h.b16 %v1874
        %v5779 = vunpack.c.l.b16 %v1875
        %v5780 = vunpack.c.h.b16 %v1875
        %v5781 = vunpack.c.l.b16 %v1876
        %v5782 = vunpack.c.h.b16 %v1876
        %v5783 = vunpack.c.l.b16 %v1877
        %v5784 = vunpack.c.h.b16 %v1877
        %v5785 = vunpack.c.l.b16 %v1878
        %v5786 = vunpack.c.h.b16 %v1878
        %v5787 = vunpack.c.l.b16 %v1879
        %v5788 = vunpack.c.h.b16 %v1879
        %v5789 = vunpack.c.l.b16 %v1880
        %v5790 = vunpack.c.h.b16 %v1880
        %v5791 = vunpack.c.l.b16 %v1881
        %v5792 = vunpack.c.h.b16 %v1881
        %v5793 = vunpack.c.l.b16 %v1882
        %v5794 = vunpack.c.h.b16 %v1882
        %v5795 = vunpack.c.l.b16 %v1883
        %v5796 = vunpack.c.h.b16 %v1883
        %v5797 = vunpack.c.l.b16 %v1884
        %v5798 = vunpack.c.h.b16 %v1884
        %v5799 = vunpack.c.l.b16 %v1885
        %v5800 = vunpack.c.h.b16 %v1885
        %v5801 = vunpack.c.l.b16 %v1886
        %v5802 = vunpack.c.h.b16 %v1886
        %v5803 = vunpack.c.l.b16 %v1887
        %v5804 = vunpack.c.h.b16 %v1887
        %v5805 = vunpack.c.l.b16 %v1888
        %v5806 = vunpack.c.h.b16 %v1888
        %v5807 = vunpack.c.l.b16 %v1889
        %v5808 = vunpack.c.h.b16 %v1889
        %v5809 = vunpack.c.l.b16 %v1890
        %v5810 = vunpack.c.h.b16 %v1890
        %v5811 = vunpack.c.l.b16 %v1891
        %v5812 = vunpack.c.h.b16 %v1891
        %v5813 = vunpack.c.l.b16 %v1892
        %v5814 = vunpack.c.h.b16 %v1892
        %v5815 = vunpack.c.l.b16 %v1893
        %v5816 = vunpack.c.h.b16 %v1893
        %v5817 = vunpack.c.l.b16 %v1894
        %v5818 = vunpack.c.h.b16 %v1894
        %v5819 = vunpack.c.l.b16 %v1895
        %v5820 = vunpack.c.h.b16 %v1895
        %v5821 = vunpack.c.l.b16 %v1896
        %v5822 = vunpack.c.h.b16 %v1896
        %v5823 = vunpack.c.l.b16 %v1897
        %v5824 = vunpack.c.h.b16 %v1897
        %v5825 = vunpack.c.l.b16 %v1898
        %v5826 = vunpack.c.h.b16 %v1898
        %v5827 = vunpack.c.l.b16 %v1899
        %v5828 = vunpack.c.h.b16 %v1899
        %v5829 = vunpack.c.l.b16 %v1900
        %v5830 = vunpack.c.h.b16 %v1900
        %v5831 = vunpack.c.l.b16 %v1901
        %v5832 = vunpack.c.h.b16 %v1901
        %v5833 = vunpack.c.l.b16 %v1902
        %v5834 = vunpack.c.h.b16 %v1902
        %v5835 = vunpack.c.l.b16 %v1903
        %v5836 = vunpack.c.h.b16 %v1903
        %v5837 = vunpack.c.l.b16 %v1904
        %v5838 = vunpack.c.h.b16 %v1904
        %v5839 = vunpack.c.l.b16 %v1905
        %v5840 = vunpack.c.h.b16 %v1905
        %v5841 = vunpack.c.l.b16 %v1906
        %v5842 = vunpack.c.h.b16 %v1906
        %v5843 = vunpack.c.l.b16 %v1907
        %v5844 = vunpack.c.h.b16 %v1907
        %v5845 = vunpack.c.l.b16 %v1908
        %v5846 = vunpack.c.h.b16 %v1908
        %v5847 = vunpack.c.l.b16 %v1909
        %v5848 = vunpack.c.h.b16 %v1909
        %v5849 = vunpack.c.l.b16 %v1910
        %v5850 = vunpack.c.h.b16 %v1910
        %v5851 = vunpack.c.l.b16 %v1911
        %v5852 = vunpack.c.h.b16 %v1911
        %v5853 = vunpack.c.l.b16 %v1912
        %v5854 = vunpack.c.h.b16 %v1912
        %v5855 = vunpack.c.l.b16 %v1913
        %v5856 = vunpack.c.h.b16 %v1913
        %v5857 = vunpack.c.l.b16 %v1914
        %v5858 = vunpack.c.h.b16 %v1914
        %v5859 = vunpack.c.l.b16 %v1915
        %v5860 = vunpack.c.h.b16 %v1915
        %v5861 = vunpack.c.l.b16 %v1916
        %v5862 = vunpack.c.h.b16 %v1916
        %v5863 = vunpack.c.l.b16 %v1917
        %v5864 = vunpack.c.h.b16 %v1917
        %v5865 = vunpack.c.l.b16 %v1918
        %v5866 = vunpack.c.h.b16 %v1918
        %v5867 = vunpack.c.l.b16 %v1919
        %v5868 = vunpack.c.h.b16 %v1919
        %v5869 = vunpack.c.l.b16 %v1920
        %v5870 = vunpack.c.h.b16 %v1920
        %v5871 = vunpack.c.l.b16 %v1921
        %v5872 = vunpack.c.h.b16 %v1921
        %v5873 = vunpack.c.l.b16 %v1922
        %v5874 = vunpack.c.h.b16 %v1922
        %v5875 = vunpack.c.l.b16 %v1923
        %v5876 = vunpack.c.h.b16 %v1923
        %v5877 = vunpack.c.l.b16 %v1924
        %v5878 = vunpack.c.h.b16 %v1924
        %v5879 = vunpack.c.l.b16 %v1925
        %v5880 = vunpack.c.h.b16 %v1925
        %v5881 = vunpack.c.l.b16 %v1926
        %v5882 = vunpack.c.h.b16 %v1926
        %v5883 = vunpack.c.l.b16 %v1927
        %v5884 = vunpack.c.h.b16 %v1927
        %v5885 = vunpack.c.l.b16 %v1928
        %v5886 = vunpack.c.h.b16 %v1928
        %v5887 = vunpack.c.l.b16 %v1929
        %v5888 = vunpack.c.h.b16 %v1929
        %v5889 = vunpack.c.l.b16 %v1930
        %v5890 = vunpack.c.h.b16 %v1930
        %v5891 = vunpack.c.l.b16 %v1931
        %v5892 = vunpack.c.h.b16 %v1931
        %v5893 = vunpack.c.l.b16 %v1932
        %v5894 = vunpack.c.h.b16 %v1932
        %v5895 = vunpack.c.l.b16 %v1933
        %v5896 = vunpack.c.h.b16 %v1933
        %v5897 = vunpack.c.l.b16 %v1934
        %v5898 = vunpack.c.h.b16 %v1934
        %v5899 = vunpack.c.l.b16 %v1935
        %v5900 = vunpack.c.h.b16 %v1935
        %v5901 = vunpack.c.l.b16 %v1936
        %v5902 = vunpack.c.h.b16 %v1936
        %v5903 = vunpack.c.l.b16 %v1937
        %v5904 = vunpack.c.h.b16 %v1937
        %v5905 = vunpack.c.l.b16 %v1938
        %v5906 = vunpack.c.h.b16 %v1938
        %v5907 = vunpack.c.l.b16 %v1939
        %v5908 = vunpack.c.h.b16 %v1939
        %v5909 = vunpack.c.l.b16 %v1940
        %v5910 = vunpack.c.h.b16 %v1940
        %v5911 = vunpack.c.l.b16 %v1941
        %v5912 = vunpack.c.h.b16 %v1941
        %v5913 = vunpack.c.l.b16 %v1942
        %v5914 = vunpack.c.h.b16 %v1942
        %v5915 = vunpack.c.l.b16 %v1943
        %v5916 = vunpack.c.h.b16 %v1943
        %v5917 = vunpack.c.l.b16 %v1944
        %v5918 = vunpack.c.h.b16 %v1944
        %v5919 = vunpack.c.l.b16 %v1945
        %v5920 = vunpack.c.h.b16 %v1945
        %v5921 = vunpack.c.l.b16 %v1946
        %v5922 = vunpack.c.h.b16 %v1946
        %v5923 = vunpack.c.l.b16 %v1947
        %v5924 = vunpack.c.h.b16 %v1947
        %v5925 = vunpack.c.l.b16 %v1948
        %v5926 = vunpack.c.h.b16 %v1948
        %v5927 = vunpack.c.l.b16 %v1949
        %v5928 = vunpack.c.h.b16 %v1949
        %v5929 = vunpack.c.l.b16 %v1950
        %v5930 = vunpack.c.h.b16 %v1950
        %v5931 = vunpack.c.l.b16 %v1951
        %v5932 = vunpack.c.h.b16 %v1951
        %v5933 = vunpack.c.l.b16 %v1952
        %v5934 = vunpack.c.h.b16 %v1952
        %v5935 = vunpack.c.l.b16 %v1953
        %v5936 = vunpack.c.h.b16 %v1953
        %v5937 = vunpack.c.l.b16 %v1954
        %v5938 = vunpack.c.h.b16 %v1954
        %v5939 = vunpack.c.l.b16 %v1955
        %v5940 = vunpack.c.h.b16 %v1955
        %v5941 = vunpack.c.l.b16 %v1956
        %v5942 = vunpack.c.h.b16 %v1956
        %v5943 = vunpack.c.l.b16 %v1957
        %v5944 = vunpack.c.h.b16 %v1957
        %v5945 = vunpack.c.l.b16 %v1958
        %v5946 = vunpack.c.h.b16 %v1958
        %v5947 = vunpack.c.l.b16 %v1959
        %v5948 = vunpack.c.h.b16 %v1959
        %v5949 = vunpack.c.l.b16 %v1960
        %v5950 = vunpack.c.h.b16 %v1960
        %v5951 = vunpack.c.l.b16 %v1961
        %v5952 = vunpack.c.h.b16 %v1961
        %v5953 = vunpack.c.l.b16 %v1962
        %v5954 = vunpack.c.h.b16 %v1962
        %v5955 = vunpack.c.l.b16 %v1963
        %v5956 = vunpack.c.h.b16 %v1963
        %v5957 = vunpack.c.l.b16 %v1964
        %v5958 = vunpack.c.h.b16 %v1964
        %v5959 = vunpack.c.l.b16 %v1965
        %v5960 = vunpack.c.h.b16 %v1965
        %v5961 = vunpack.c.l.b16 %v1966
        %v5962 = vunpack.c.h.b16 %v1966
        %v5963 = vunpack.c.l.b16 %v1967
        %v5964 = vunpack.c.h.b16 %v1967
        %v5965 = vunpack.c.l.b16 %v1968
        %v5966 = vunpack.c.h.b16 %v1968
        %v5967 = vunpack.c.l.b16 %v1969
        %v5968 = vunpack.c.h.b16 %v1969
        %v5969 = vunpack.c.l.b16 %v1970
        %v5970 = vunpack.c.h.b16 %v1970
        %v5971 = vunpack.c.l.b16 %v1971
        %v5972 = vunpack.c.h.b16 %v1971
        %v5973 = vunpack.c.l.b16 %v1972
        %v5974 = vunpack.c.h.b16 %v1972
        %v5975 = vunpack.c.l.b16 %v1973
        %v5976 = vunpack.c.h.b16 %v1973
        %v5977 = vunpack.c.l.b16 %v1974
        %v5978 = vunpack.c.h.b16 %v1974
        %v5979 = vunpack.c.l.b16 %v1975
        %v5980 = vunpack.c.h.b16 %v1975
        %v5981 = vunpack.c.l.b16 %v1976
        %v5982 = vunpack.c.h.b16 %v1976
        %v5983 = vunpack.c.l.b16 %v1977
        %v5984 = vunpack.c.h.b16 %v1977
        %v5985 = vunpack.c.l.b16 %v1978
        %v5986 = vunpack.c.h.b16 %v1978
        %v5987 = vunpack.c.l.b16 %v1979
        %v5988 = vunpack.c.h.b16 %v1979
        %v5989 = vunpack.c.l.b16 %v1980
        %v5990 = vunpack.c.h.b16 %v1980
        %v5991 = vunpack.c.l.b16 %v1981
        %v5992 = vunpack.c.h.b16 %v1981
        %v5993 = vunpack.c.l.b16 %v1982
        %v5994 = vunpack.c.h.b16 %v1982
        %v5995 = vunpack.c.l.b16 %v1983
        %v5996 = vunpack.c.h.b16 %v1983
        %v5997 = vunpack.c.l.b16 %v1984
        %v5998 = vunpack.c.h.b16 %v1984
        %v5999 = vunpack.c.l.b16 %v1985
        %v6000 = vunpack.c.h.b16 %v1985
        %v6001 = vunpack.c.l.b16 %v1986
        %v6002 = vunpack.c.h.b16 %v1986
        %v6003 = vunpack.c.l.b16 %v1987
        %v6004 = vunpack.c.h.b16 %v1987
        %v6005 = vunpack.c.l.b16 %v1988
        %v6006 = vunpack.c.h.b16 %v1988
        %v6007 = vunpack.c.l.b16 %v1989
        %v6008 = vunpack.c.h.b16 %v1989
        %v6009 = vunpack.c.l.b16 %v1990
        %v6010 = vunpack.c.h.b16 %v1990
        %v6011 = vunpack.c.l.b16 %v1991
        %v6012 = vunpack.c.h.b16 %v1991
        %v6013 = vunpack.c.l.b16 %v1992
        %v6014 = vunpack.c.h.b16 %v1992
        %v6015 = vunpack.c.l.b16 %v1993
        %v6016 = vunpack.c.h.b16 %v1993
        %v6017 = vunpack.c.l.b16 %v1994
        %v6018 = vunpack.c.h.b16 %v1994
        %v6019 = vunpack.c.l.b16 %v1995
        %v6020 = vunpack.c.h.b16 %v1995
        %v6021 = vunpack.c.l.b16 %v1996
        %v6022 = vunpack.c.h.b16 %v1996
        %v6023 = vunpack.c.l.b16 %v1997
        %v6024 = vunpack.c.h.b16 %v1997
        %v6025 = vunpack.c.l.b16 %v1998
        %v6026 = vunpack.c.h.b16 %v1998
        %v6027 = vunpack.c.l.b16 %v1999
        %v6028 = vunpack.c.h.b16 %v1999
        %v6029 = vunpack.c.l.b16 %v2000
        %v6030 = vunpack.c.h.b16 %v2000
        %v6031 = vunpack.c.l.b16 %v2001
        %v6032 = vunpack.c.h.b16 %v2001
        %v6033 = vunpack.c.l.b16 %v2002
        %v6034 = vunpack.c.h.b16 %v2002
        %v6035 = vunpack.c.l.b16 %v2003
        %v6036 = vunpack.c.h.b16 %v2003
        %v6037 = vunpack.c.l.b16 %v2004
        %v6038 = vunpack.c.h.b16 %v2004
        %v6039 = vunpack.c.l.b16 %v2005
        %v6040 = vunpack.c.h.b16 %v2005
        %v6041 = vunpack.c.l.b16 %v2006
        %v6042 = vunpack.c.h.b16 %v2006
        %v6043 = vunpack.c.l.b16 %v2007
        %v6044 = vunpack.c.h.b16 %v2007
        %v6045 = vunpack.c.l.b16 %v2008
        %v6046 = vunpack.c.h.b16 %v2008
        %v6047 = vunpack.c.l.b16 %v2009
        %v6048 = vunpack.c.h.b16 %v2009
        %v6049 = vunpack.c.l.b16 %v2010
        %v6050 = vunpack.c.h.b16 %v2010
        %v6051 = vunpack.c.l.b16 %v2011
        %v6052 = vunpack.c.h.b16 %v2011
        %v6053 = vunpack.c.l.b16 %v2012
        %v6054 = vunpack.c.h.b16 %v2012
        %v6055 = vunpack.c.l.b16 %v2013
        %v6056 = vunpack.c.h.b16 %v2013
        %v6057 = vunpack.c.l.b16 %v2014
        %v6058 = vunpack.c.h.b16 %v2014
        %v6059 = vunpack.c.l.b16 %v2015
        %v6060 = vunpack.c.h.b16 %v2015
        %v6061 = vunpack.c.l.b16 %v2016
        %v6062 = vunpack.c.h.b16 %v2016
        %v6063 = vunpack.c.l.b16 %v2017
        %v6064 = vunpack.c.h.b16 %v2017
        %v6065 = vunpack.c.l.b16 %v2018
        %v6066 = vunpack.c.h.b16 %v2018
        %v6067 = vunpack.c.l.b16 %v2019
        %v6068 = vunpack.c.h.b16 %v2019
        %v6069 = vunpack.c.l.b16 %v2020
        %v6070 = vunpack.c.h.b16 %v2020
        %v6071 = vunpack.c.l.b16 %v2021
        %v6072 = vunpack.c.h.b16 %v2021
        %v6073 = vunpack.c.l.b16 %v2022
        %v6074 = vunpack.c.h.b16 %v2022
        %v6075 = vunpack.c.l.b16 %v2023
        %v6076 = vunpack.c.h.b16 %v2023
        %v6077 = vunpack.c.l.b16 %v2024
        %v6078 = vunpack.c.h.b16 %v2024
        %v6079 = vunpack.c.l.b16 %v2025
        %v6080 = vunpack.c.h.b16 %v2025
        %v6081 = vunpack.c.l.b16 %v2026
        %v6082 = vunpack.c.h.b16 %v2026
        %v6083 = vunpack.c.l.b16 %v2027
        %v6084 = vunpack.c.h.b16 %v2027
        %v6085 = vunpack.c.l.b16 %v2028
        %v6086 = vunpack.c.h.b16 %v2028
        %v6087 = vunpack.c.l.b16 %v2029
        %v6088 = vunpack.c.h.b16 %v2029
        %v6089 = vunpack.c.l.b16 %v2030
        %v6090 = vunpack.c.h.b16 %v2030
        %v6091 = vunpack.c.l.b16 %v2031
        %v6092 = vunpack.c.h.b16 %v2031
        %v6093 = vunpack.c.l.b16 %v2032
        %v6094 = vunpack.c.h.b16 %v2032
        %v6095 = vunpack.c.l.b16 %v2033
        %v6096 = vunpack.c.h.b16 %v2033
        %v6097 = vunpack.c.l.b16 %v2034
        %v6098 = vunpack.c.h.b16 %v2034
        %v6099 = vunpack.c.l.b16 %v2035
        %v6100 = vunpack.c.h.b16 %v2035
        %v6101 = vunpack.c.l.b16 %v2036
        %v6102 = vunpack.c.h.b16 %v2036
        %v6103 = vunpack.c.l.b16 %v2037
        %v6104 = vunpack.c.h.b16 %v2037
        %v6105 = vunpack.c.l.b16 %v2038
        %v6106 = vunpack.c.h.b16 %v2038
        %v6107 = vunpack.c.l.b16 %v2039
        %v6108 = vunpack.c.h.b16 %v2039
        %v6109 = vunpack.c.l.b16 %v2040
        %v6110 = vunpack.c.h.b16 %v2040
        %v6111 = vunpack.c.l.b16 %v2041
        %v6112 = vunpack.c.h.b16 %v2041
        %v6113 = vunpack.c.l.b16 %v2042
        %v6114 = vunpack.c.h.b16 %v2042
        %v6115 = vunpack.c.l.b16 %v2043
        %v6116 = vunpack.c.h.b16 %v2043
        %v6117 = vunpack.c.l.b16 %v2044
        %v6118 = vunpack.c.h.b16 %v2044
        %v6119 = vunpack.c.l.b16 %v2045
        %v6120 = vunpack.c.h.b16 %v2045
        %v6121 = vunpack.c.l.b16 %v2046
        %v6122 = vunpack.c.h.b16 %v2046
        %v6123 = vunpack.c.l.b16 %v2047
        %v6124 = vunpack.c.h.b16 %v2047
        %v6125 = vunpack.c.l.b16 %v2048
        %v6126 = vunpack.c.h.b16 %v2048
        %v6127 = vunpack.c.l.b16 %v2049
        %v6128 = vunpack.c.h.b16 %v2049
        %v6129 = vunpack.c.l.b16 %v2050
        %v6130 = vunpack.c.h.b16 %v2050
        %v6131 = vunpack.c.l.b16 %v2051
        %v6132 = vunpack.c.h.b16 %v2051
        %v6133 = vunpack.c.l.b16 %v2052
        %v6134 = vunpack.c.h.b16 %v2052
        %v6135 = vunpack.c.l.b16 %v2053
        %v6136 = vunpack.c.h.b16 %v2053
        %v6137 = vunpack.c.l.b16 %v2054
        %v6138 = vunpack.c.h.b16 %v2054
        %v6139 = vunpack.c.l.b16 %v2055
        %v6140 = vunpack.c.h.b16 %v2055
        %v6141 = vunpack.c.l.b16 %v2056
        %v6142 = vunpack.c.h.b16 %v2056
        %v6143 = vunpack.c.l.b16 %v2057
        %v6144 = vunpack.c.h.b16 %v2057
        %v6145 = vunpack.c.l.b16 %v2058
        %v6146 = vunpack.c.h.b16 %v2058
        %v6147 = vunpack.c.l.b16 %v2059
        %v6148 = vunpack.c.h.b16 %v2059
        %v6149 = vunpack.c.l.b16 %v2060
        %v6150 = vunpack.c.h.b16 %v2060
        %v6151 = vunpack.c.l.b16 %v2061
        %v6152 = vunpack.c.h.b16 %v2061
        %v6153 = vunpack.c.l.b16 %v2062
        %v6154 = vunpack.c.h.b16 %v2062
        %v6155 = vunpack.c.l.b16 %v2063
        %v6156 = vunpack.c.h.b16 %v2063
        %v6157 = vunpack.c.l.b16 %v2064
        %v6158 = vunpack.c.h.b16 %v2064
        %v6159 = vunpack.c.l.b16 %v2065
        %v6160 = vunpack.c.h.b16 %v2065
        %v6161 = vunpack.c.l.b16 %v2066
        %v6162 = vunpack.c.h.b16 %v2066
        %v6163 = vunpack.c.l.b16 %v2067
        %v6164 = vunpack.c.h.b16 %v2067
        %v6165 = vunpack.c.l.b16 %v2068
        %v6166 = vunpack.c.h.b16 %v2068
        %v6167 = vunpack.c.l.b16 %v2069
        %v6168 = vunpack.c.h.b16 %v2069
        %v6169 = vunpack.c.l.b16 %v2070
        %v6170 = vunpack.c.h.b16 %v2070
        %v6171 = vunpack.c.l.b16 %v2071
        %v6172 = vunpack.c.h.b16 %v2071
        %v6173 = vunpack.c.l.b16 %v2072
        %v6174 = vunpack.c.h.b16 %v2072
        %v6175 = vunpack.c.l.b16 %v2073
        %v6176 = vunpack.c.h.b16 %v2073
        %v6177 = vunpack.c.l.b16 %v2074
        %v6178 = vunpack.c.h.b16 %v2074
        %v6179 = vunpack.c.l.b16 %v2075
        %v6180 = vunpack.c.h.b16 %v2075
        %v6181 = vunpack.c.l.b16 %v2076
        %v6182 = vunpack.c.h.b16 %v2076
        %v6183 = vunpack.c.l.b16 %v2077
        %v6184 = vunpack.c.h.b16 %v2077
        %v6185 = vunpack.c.l.b16 %v2078
        %v6186 = vunpack.c.h.b16 %v2078
        %v6187 = vunpack.c.l.b16 %v2079
        %v6188 = vunpack.c.h.b16 %v2079
        %v6189 = vunpack.c.l.b16 %v2080
        %v6190 = vunpack.c.h.b16 %v2080
        %v6191 = vunpack.c.l.b16 %v2081
        %v6192 = vunpack.c.h.b16 %v2081
        %v6193 = vunpack.c.l.b16 %v2082
        %v6194 = vunpack.c.h.b16 %v2082
        %v6195 = vunpack.c.l.b16 %v2083
        %v6196 = vunpack.c.h.b16 %v2083
        %v6197 = vunpack.c.l.b16 %v2084
        %v6198 = vunpack.c.h.b16 %v2084
        %v6199 = vunpack.c.l.b16 %v2085
        %v6200 = vunpack.c.h.b16 %v2085
        %v6201 = vunpack.c.l.b16 %v2086
        %v6202 = vunpack.c.h.b16 %v2086
        %v6203 = vunpack.c.l.b16 %v2087
        %v6204 = vunpack.c.h.b16 %v2087
        %v6205 = vunpack.c.l.b16 %v2088
        %v6206 = vunpack.c.h.b16 %v2088
        %v6207 = vunpack.c.l.b16 %v2089
        %v6208 = vunpack.c.h.b16 %v2089
        %v6209 = vunpack.c.l.b16 %v2090
        %v6210 = vunpack.c.h.b16 %v2090
        %v6211 = vunpack.c.l.b16 %v2091
        %v6212 = vunpack.c.h.b16 %v2091
        %v6213 = vunpack.c.l.b16 %v2092
        %v6214 = vunpack.c.h.b16 %v2092
        %v6215 = vunpack.c.l.b16 %v2093
        %v6216 = vunpack.c.h.b16 %v2093
        %v6217 = vunpack.c.l.b16 %v2094
        %v6218 = vunpack.c.h.b16 %v2094
        %v6219 = vunpack.c.l.b16 %v2095
        %v6220 = vunpack.c.h.b16 %v2095
        %v6221 = vunpack.c.l.b16 %v2096
        %v6222 = vunpack.c.h.b16 %v2096
        %v6223 = vunpack.c.l.b16 %v2097
        %v6224 = vunpack.c.h.b16 %v2097
        %v6225 = vunpack.c.l.b16 %v2098
        %v6226 = vunpack.c.h.b16 %v2098
        %v6227 = vunpack.c.l.b16 %v2099
        %v6228 = vunpack.c.h.b16 %v2099
        %v6229 = vunpack.c.l.b16 %v2100
        %v6230 = vunpack.c.h.b16 %v2100
        %v6231 = vunpack.c.l.b16 %v2101
        %v6232 = vunpack.c.h.b16 %v2101
        %v6233 = vunpack.c.l.b16 %v2102
        %v6234 = vunpack.c.h.b16 %v2102
        %v6235 = vunpack.c.l.b16 %v2103
        %v6236 = vunpack.c.h.b16 %v2103
        %v6237 = vunpack.c.l.b16 %v2104
        %v6238 = vunpack.c.h.b16 %v2104
        %v6239 = vunpack.c.l.b16 %v2105
        %v6240 = vunpack.c.h.b16 %v2105
        %v6241 = vunpack.c.l.b16 %v2106
        %v6242 = vunpack.c.h.b16 %v2106
        %v6243 = vunpack.c.l.b16 %v2107
        %v6244 = vunpack.c.h.b16 %v2107
        %v6245 = vunpack.c.l.b16 %v2108
        %v6246 = vunpack.c.h.b16 %v2108
        %v6247 = vunpack.c.l.b16 %v2109
        %v6248 = vunpack.c.h.b16 %v2109
        %v6249 = vunpack.c.l.b16 %v2110
        %v6250 = vunpack.c.h.b16 %v2110
        %v6251 = vunpack.c.l.b16 %v2111
        %v6252 = vunpack.c.h.b16 %v2111
        %v6253 = vunpack.c.l.b16 %v2112
        %v6254 = vunpack.c.h.b16 %v2112
        %v6255 = vunpack.c.l.b16 %v2113
        %v6256 = vunpack.c.h.b16 %v2113
        %v6257 = vunpack.c.l.b16 %v2114
        %v6258 = vunpack.c.h.b16 %v2114
        %v6259 = vunpack.c.l.b16 %v2115
        %v6260 = vunpack.c.h.b16 %v2115
        %v6261 = vunpack.c.l.b16 %v2116
        %v6262 = vunpack.c.h.b16 %v2116
        %v6263 = vunpack.c.l.b16 %v2117
        %v6264 = vunpack.c.h.b16 %v2117
        %v6265 = vunpack.c.l.b16 %v2118
        %v6266 = vunpack.c.h.b16 %v2118
        %v6267 = vunpack.c.l.b16 %v2119
        %v6268 = vunpack.c.h.b16 %v2119
        %v6269 = vunpack.c.l.b16 %v2120
        %v6270 = vunpack.c.h.b16 %v2120
        %v6271 = vunpack.c.l.b16 %v2121
        %v6272 = vunpack.c.h.b16 %v2121
        %v6273 = vunpack.c.l.b16 %v2122
        %v6274 = vunpack.c.h.b16 %v2122
        %v6275 = vunpack.c.l.b16 %v2123
        %v6276 = vunpack.c.h.b16 %v2123
        %v6277 = vunpack.c.l.b16 %v2124
        %v6278 = vunpack.c.h.b16 %v2124
        %v6279 = vunpack.c.l.b16 %v2125
        %v6280 = vunpack.c.h.b16 %v2125
        %v6281 = vunpack.c.l.b16 %v2126
        %v6282 = vunpack.c.h.b16 %v2126
        %v6283 = vunpack.c.l.b16 %v2127
        %v6284 = vunpack.c.h.b16 %v2127
        %v6285 = vunpack.c.l.b16 %v2128
        %v6286 = vunpack.c.h.b16 %v2128
        %v6287 = vunpack.c.l.b16 %v2129
        %v6288 = vunpack.c.h.b16 %v2129
        %v6289 = vunpack.c.l.b16 %v2130
        %v6290 = vunpack.c.h.b16 %v2130
        %v6291 = vunpack.c.l.b16 %v2131
        %v6292 = vunpack.c.h.b16 %v2131
        %v6293 = vunpack.c.l.b16 %v2132
        %v6294 = vunpack.c.h.b16 %v2132
        %v6295 = vunpack.c.l.b16 %v2133
        %v6296 = vunpack.c.h.b16 %v2133
        %v6297 = vunpack.c.l.b16 %v2134
        %v6298 = vunpack.c.h.b16 %v2134
        %v6299 = vunpack.c.l.b16 %v2135
        %v6300 = vunpack.c.h.b16 %v2135
        %v6301 = vunpack.c.l.b16 %v2136
        %v6302 = vunpack.c.h.b16 %v2136
        %v6303 = vunpack.c.l.b16 %v2137
        %v6304 = vunpack.c.h.b16 %v2137
        %v6305 = vunpack.c.l.b16 %v2138
        %v6306 = vunpack.c.h.b16 %v2138
        %v6307 = vunpack.c.l.b16 %v2139
        %v6308 = vunpack.c.h.b16 %v2139
        %v6309 = vunpack.c.l.b16 %v2140
        %v6310 = vunpack.c.h.b16 %v2140
        %v6311 = vunpack.c.l.b16 %v2141
        %v6312 = vunpack.c.h.b16 %v2141
        %v6313 = vunpack.c.l.b16 %v2142
        %v6314 = vunpack.c.h.b16 %v2142
        %v6315 = vunpack.c.l.b16 %v2143
        %v6316 = vunpack.c.h.b16 %v2143
        %v6317 = vunpack.c.l.b16 %v2144
        %v6318 = vunpack.c.h.b16 %v2144
        %v6319 = vunpack.c.l.b16 %v2145
        %v6320 = vunpack.c.h.b16 %v2145
        %v6321 = vunpack.c.l.b16 %v2146
        %v6322 = vunpack.c.h.b16 %v2146
        %v6323 = vunpack.c.l.b16 %v2147
        %v6324 = vunpack.c.h.b16 %v2147
        %v6325 = vunpack.c.l.b16 %v2148
        %v6326 = vunpack.c.h.b16 %v2148
        %v6327 = vunpack.c.l.b16 %v2149
        %v6328 = vunpack.c.h.b16 %v2149
        %v6329 = vunpack.c.l.b16 %v2150
        %v6330 = vunpack.c.h.b16 %v2150
        %v6331 = vunpack.c.l.b16 %v2151
        %v6332 = vunpack.c.h.b16 %v2151
        %v6333 = vunpack.c.l.b16 %v2152
        %v6334 = vunpack.c.h.b16 %v2152
        %v6335 = vunpack.c.l.b16 %v2153
        %v6336 = vunpack.c.h.b16 %v2153
        %v6337 = vunpack.c.l.b16 %v2154
        %v6338 = vunpack.c.h.b16 %v2154
        %v6339 = vunpack.c.l.b16 %v2155
        %v6340 = vunpack.c.h.b16 %v2155
        %v6341 = vunpack.c.l.b16 %v2156
        %v6342 = vunpack.c.h.b16 %v2156
        %v6343 = vunpack.c.l.b16 %v2157
        %v6344 = vunpack.c.h.b16 %v2157
        %v6345 = vunpack.c.l.b16 %v2158
        %v6346 = vunpack.c.h.b16 %v2158
        %v6347 = vunpack.c.l.b16 %v2159
        %v6348 = vunpack.c.h.b16 %v2159
        %v6349 = vunpack.c.l.b16 %v2160
        %v6350 = vunpack.c.h.b16 %v2160
        %v6351 = vunpack.c.l.b16 %v2161
        %v6352 = vunpack.c.h.b16 %v2161
        %v6353 = vunpack.c.l.b16 %v2162
        %v6354 = vunpack.c.h.b16 %v2162
        %v6355 = vunpack.c.l.b16 %v2163
        %v6356 = vunpack.c.h.b16 %v2163
        %v6357 = vunpack.c.l.b16 %v2164
        %v6358 = vunpack.c.h.b16 %v2164
        %v6359 = vunpack.c.l.b16 %v2165
        %v6360 = vunpack.c.h.b16 %v2165
        %v6361 = vunpack.c.l.b16 %v2166
        %v6362 = vunpack.c.h.b16 %v2166
        %v6363 = vunpack.c.l.b16 %v2167
        %v6364 = vunpack.c.h.b16 %v2167
        %v6365 = vunpack.c.l.b16 %v2168
        %v6366 = vunpack.c.h.b16 %v2168
        %v6367 = vunpack.c.l.b16 %v2169
        %v6368 = vunpack.c.h.b16 %v2169
        %v6369 = vunpack.c.l.b16 %v2170
        %v6370 = vunpack.c.h.b16 %v2170
        %v6371 = vunpack.c.l.b16 %v2171
        %v6372 = vunpack.c.h.b16 %v2171
        %v6373 = vunpack.c.l.b16 %v2172
        %v6374 = vunpack.c.h.b16 %v2172
        %v6375 = vunpack.c.l.b16 %v2173
        %v6376 = vunpack.c.h.b16 %v2173
        %v6377 = vunpack.c.l.b16 %v2174
        %v6378 = vunpack.c.h.b16 %v2174
        %v6379 = vunpack.c.l.b16 %v2175
        %v6380 = vunpack.c.h.b16 %v2175
        %v6381 = vunpack.c.l.b16 %v2176
        %v6382 = vunpack.c.h.b16 %v2176
        %v6383 = vunpack.c.l.b16 %v2177
        %v6384 = vunpack.c.h.b16 %v2177
        %v6385 = vunpack.c.l.b16 %v2178
        %v6386 = vunpack.c.h.b16 %v2178
        %v6387 = vunpack.c.l.b16 %v2179
        %v6388 = vunpack.c.h.b16 %v2179
        %v6389 = vunpack.c.l.b16 %v2180
        %v6390 = vunpack.c.h.b16 %v2180
        %v6391 = vunpack.c.l.b16 %v2181
        %v6392 = vunpack.c.h.b16 %v2181
        %v6393 = vunpack.c.l.b16 %v2182
        %v6394 = vunpack.c.h.b16 %v2182
        %v6395 = vunpack.c.l.b16 %v2183
        %v6396 = vunpack.c.h.b16 %v2183
        %v6397 = vunpack.c.l.b16 %v2184
        %v6398 = vunpack.c.h.b16 %v2184
        %v6399 = vunpack.c.l.b16 %v2185
        %v6400 = vunpack.c.h.b16 %v2185
        %v6401 = vunpack.c.l.b16 %v2186
        %v6402 = vunpack.c.h.b16 %v2186
        %v6403 = vunpack.c.l.b16 %v2187
        %v6404 = vunpack.c.h.b16 %v2187
        %v6405 = vunpack.c.l.b16 %v2188
        %v6406 = vunpack.c.h.b16 %v2188
        %v6407 = vunpack.c.l.b16 %v2189
        %v6408 = vunpack.c.h.b16 %v2189
        %v6409 = vunpack.c.l.b16 %v2190
        %v6410 = vunpack.c.h.b16 %v2190
        %v6411 = vunpack.c.l.b16 %v2191
        %v6412 = vunpack.c.h.b16 %v2191
        %v6413 = vunpack.c.l.b16 %v2192
        %v6414 = vunpack.c.h.b16 %v2192
        %v6415 = vunpack.c.l.b16 %v2193
        %v6416 = vunpack.c.h.b16 %v2193
        %v6417 = vunpack.c.l.b16 %v2194
        %v6418 = vunpack.c.h.b16 %v2194
        %v6419 = vunpack.c.l.b16 %v2195
        %v6420 = vunpack.c.h.b16 %v2195
        %v6421 = vunpack.c.l.b16 %v2196
        %v6422 = vunpack.c.h.b16 %v2196
        %v6423 = vunpack.c.l.b16 %v2197
        %v6424 = vunpack.c.h.b16 %v2197
        %v6425 = vunpack.c.l.b16 %v2198
        %v6426 = vunpack.c.h.b16 %v2198
        %v6427 = vunpack.c.l.b16 %v2199
        %v6428 = vunpack.c.h.b16 %v2199
        %v6429 = vunpack.c.l.b16 %v2200
        %v6430 = vunpack.c.h.b16 %v2200
        %v6431 = vunpack.c.l.b16 %v2201
        %v6432 = vunpack.c.h.b16 %v2201
        %v6433 = vunpack.c.l.b16 %v2202
        %v6434 = vunpack.c.h.b16 %v2202
        %v6435 = vunpack.c.l.b16 %v2203
        %v6436 = vunpack.c.h.b16 %v2203
        %v6437 = vunpack.c.l.b16 %v2204
        %v6438 = vunpack.c.h.b16 %v2204
        %v6439 = vunpack.c.l.b16 %v2205
        %v6440 = vunpack.c.h.b16 %v2205
        %v6441 = vunpack.c.l.b16 %v2206
        %v6442 = vunpack.c.h.b16 %v2206
        %v6443 = vunpack.c.l.b16 %v2207
        %v6444 = vunpack.c.h.b16 %v2207
        %v6445 = vunpack.c.l.b16 %v2208
        %v6446 = vunpack.c.h.b16 %v2208
        %v6447 = vunpack.c.l.b16 %v2209
        %v6448 = vunpack.c.h.b16 %v2209
        %v6449 = vunpack.c.l.b16 %v2210
        %v6450 = vunpack.c.h.b16 %v2210
        %v6451 = vunpack.c.l.b16 %v2211
        %v6452 = vunpack.c.h.b16 %v2211
        %v6453 = vunpack.c.l.b16 %v2212
        %v6454 = vunpack.c.h.b16 %v2212
        %v6455 = vunpack.c.l.b16 %v2213
        %v6456 = vunpack.c.h.b16 %v2213
        %v6457 = vunpack.c.l.b16 %v2214
        %v6458 = vunpack.c.h.b16 %v2214
        %v6459 = vunpack.c.l.b16 %v2215
        %v6460 = vunpack.c.h.b16 %v2215
        %v6461 = vunpack.c.l.b16 %v2216
        %v6462 = vunpack.c.h.b16 %v2216
        %v6463 = vunpack.c.l.b16 %v2217
        %v6464 = vunpack.c.h.b16 %v2217
        %v6465 = vunpack.c.l.b16 %v2218
        %v6466 = vunpack.c.h.b16 %v2218
        %v6467 = vunpack.c.l.b16 %v2219
        %v6468 = vunpack.c.h.b16 %v2219
        %v6469 = vunpack.c.l.b16 %v2220
        %v6470 = vunpack.c.h.b16 %v2220
        %v6471 = vunpack.c.l.b16 %v2221
        %v6472 = vunpack.c.h.b16 %v2221
        %v6473 = vunpack.c.l.b16 %v2222
        %v6474 = vunpack.c.h.b16 %v2222
        %v6475 = vunpack.c.l.b16 %v2223
        %v6476 = vunpack.c.h.b16 %v2223
        %v6477 = vunpack.c.l.b16 %v2224
        %v6478 = vunpack.c.h.b16 %v2224
        %v6479 = vunpack.c.l.b16 %v2225
        %v6480 = vunpack.c.h.b16 %v2225
        %v6481 = vunpack.c.l.b16 %v2226
        %v6482 = vunpack.c.h.b16 %v2226
        %v6483 = vunpack.c.l.b16 %v2227
        %v6484 = vunpack.c.h.b16 %v2227
        %v6485 = vunpack.c.l.b16 %v2228
        %v6486 = vunpack.c.h.b16 %v2228
        %v6487 = vunpack.c.l.b16 %v2229
        %v6488 = vunpack.c.h.b16 %v2229
        %v6489 = vunpack.c.l.b16 %v2230
        %v6490 = vunpack.c.h.b16 %v2230
        %v6491 = vunpack.c.l.b16 %v2231
        %v6492 = vunpack.c.h.b16 %v2231
        %v6493 = vunpack.c.l.b16 %v2232
        %v6494 = vunpack.c.h.b16 %v2232
        %v6495 = vunpack.c.l.b16 %v2233
        %v6496 = vunpack.c.h.b16 %v2233
        %v6497 = vunpack.c.l.b16 %v2234
        %v6498 = vunpack.c.h.b16 %v2234
        %v6499 = vunpack.c.l.b16 %v2235
        %v6500 = vunpack.c.h.b16 %v2235
        %v6501 = vunpack.c.l.b16 %v2236
        %v6502 = vunpack.c.h.b16 %v2236
        %v6503 = vunpack.c.l.b16 %v2237
        %v6504 = vunpack.c.h.b16 %v2237
        %v6505 = vunpack.c.l.b16 %v2238
        %v6506 = vunpack.c.h.b16 %v2238
        %v6507 = vunpack.c.l.b16 %v2239
        %v6508 = vunpack.c.h.b16 %v2239
        %v6509 = vunpack.c.l.b16 %v2240
        %v6510 = vunpack.c.h.b16 %v2240
        %v6511 = vunpack.c.l.b16 %v2241
        %v6512 = vunpack.c.h.b16 %v2241
        %v6513 = vunpack.c.l.b16 %v2242
        %v6514 = vunpack.c.h.b16 %v2242
        %v6515 = vunpack.c.l.b16 %v2243
        %v6516 = vunpack.c.h.b16 %v2243
        %v6517 = vunpack.c.l.b16 %v2244
        %v6518 = vunpack.c.h.b16 %v2244
        %v6519 = vunpack.c.l.b16 %v2245
        %v6520 = vunpack.c.h.b16 %v2245
        %v6521 = vunpack.c.l.b16 %v2246
        %v6522 = vunpack.c.h.b16 %v2246
        %v6523 = vunpack.c.l.b16 %v2247
        %v6524 = vunpack.c.h.b16 %v2247
        %v6525 = vunpack.c.l.b16 %v2248
        %v6526 = vunpack.c.h.b16 %v2248
        %v6527 = vunpack.c.l.b16 %v2249
        %v6528 = vunpack.c.h.b16 %v2249
        %v6529 = vunpack.c.l.b16 %v2250
        %v6530 = vunpack.c.h.b16 %v2250
        %v6531 = vunpack.c.l.b16 %v2251
        %v6532 = vunpack.c.h.b16 %v2251
        %v6533 = vunpack.c.l.b16 %v2252
        %v6534 = vunpack.c.h.b16 %v2252
        %v6535 = vunpack.c.l.b16 %v2253
        %v6536 = vunpack.c.h.b16 %v2253
        %v6537 = vunpack.c.l.b16 %v2254
        %v6538 = vunpack.c.h.b16 %v2254
        %v6539 = vunpack.c.l.b16 %v2255
        %v6540 = vunpack.c.h.b16 %v2255
        %v6541 = vunpack.c.l.b16 %v2256
        %v6542 = vunpack.c.h.b16 %v2256
        %v6543 = vunpack.c.l.b16 %v2257
        %v6544 = vunpack.c.h.b16 %v2257
        %v6545 = vunpack.c.l.b16 %v2258
        %v6546 = vunpack.c.h.b16 %v2258
        %v6547 = vunpack.c.l.b16 %v2259
        %v6548 = vunpack.c.h.b16 %v2259
        %v6549 = vunpack.c.l.b16 %v2260
        %v6550 = vunpack.c.h.b16 %v2260
        %v6551 = vunpack.c.l.b16 %v2261
        %v6552 = vunpack.c.h.b16 %v2261
        %v6553 = vunpack.c.l.b16 %v2262
        %v6554 = vunpack.c.h.b16 %v2262
        %v6555 = vunpack.c.l.b16 %v2263
        %v6556 = vunpack.c.h.b16 %v2263
        %v6557 = vunpack.c.l.b16 %v2264
        %v6558 = vunpack.c.h.b16 %v2264
        %v6559 = vunpack.c.l.b16 %v2265
        %v6560 = vunpack.c.h.b16 %v2265
        %v6561 = vunpack.c.l.b16 %v2266
        %v6562 = vunpack.c.h.b16 %v2266
        %v6563 = vunpack.c.l.b16 %v2267
        %v6564 = vunpack.c.h.b16 %v2267
        %v6565 = vunpack.c.l.b16 %v2268
        %v6566 = vunpack.c.h.b16 %v2268
        %v6567 = vunpack.c.l.b16 %v2269
        %v6568 = vunpack.c.h.b16 %v2269
        %v6569 = vunpack.c.l.b16 %v2270
        %v6570 = vunpack.c.h.b16 %v2270
        %v6571 = vunpack.c.l.b16 %v2271
        %v6572 = vunpack.c.h.b16 %v2271
        %v6573 = vunpack.c.l.b16 %v2272
        %v6574 = vunpack.c.h.b16 %v2272
        %v6575 = vunpack.c.l.b16 %v2273
        %v6576 = vunpack.c.h.b16 %v2273
        %v6577 = vunpack.c.l.b16 %v2274
        %v6578 = vunpack.c.h.b16 %v2274
        %v6579 = vunpack.c.l.b16 %v2275
        %v6580 = vunpack.c.h.b16 %v2275
        %v6581 = vunpack.c.l.b16 %v2276
        %v6582 = vunpack.c.h.b16 %v2276
        %v6583 = vunpack.c.l.b16 %v2277
        %v6584 = vunpack.c.h.b16 %v2277
        %v6585 = vunpack.c.l.b16 %v2278
        %v6586 = vunpack.c.h.b16 %v2278
        %v6587 = vunpack.c.l.b16 %v2279
        %v6588 = vunpack.c.h.b16 %v2279
        %v6589 = vunpack.c.l.b16 %v2280
        %v6590 = vunpack.c.h.b16 %v2280
        %v6591 = vunpack.c.l.b16 %v2281
        %v6592 = vunpack.c.h.b16 %v2281
        %v6593 = vunpack.c.l.b16 %v2282
        %v6594 = vunpack.c.h.b16 %v2282
        %v6595 = vunpack.c.l.b16 %v2283
        %v6596 = vunpack.c.h.b16 %v2283
        %v6597 = vunpack.c.l.b16 %v2284
        %v6598 = vunpack.c.h.b16 %v2284
        %v6599 = vunpack.c.l.b16 %v2285
        %v6600 = vunpack.c.h.b16 %v2285
        %v6601 = vunpack.c.l.b16 %v2286
        %v6602 = vunpack.c.h.b16 %v2286
        %v6603 = vunpack.c.l.b16 %v2287
        %v6604 = vunpack.c.h.b16 %v2287
        %v6605 = vunpack.c.l.b16 %v2288
        %v6606 = vunpack.c.h.b16 %v2288
        %v6607 = vunpack.c.l.b16 %v2289
        %v6608 = vunpack.c.h.b16 %v2289
        %v6609 = vunpack.c.l.b16 %v2290
        %v6610 = vunpack.c.h.b16 %v2290
        %v6611 = vunpack.c.l.b16 %v2291
        %v6612 = vunpack.c.h.b16 %v2291
        %v6613 = vunpack.c.l.b16 %v2292
        %v6614 = vunpack.c.h.b16 %v2292
        %v6615 = vunpack.c.l.b16 %v2293
        %v6616 = vunpack.c.h.b16 %v2293
        %v6617 = vunpack.c.l.b16 %v2294
        %v6618 = vunpack.c.h.b16 %v2294
        %v6619 = vunpack.c.l.b16 %v2295
        %v6620 = vunpack.c.h.b16 %v2295
        %v6621 = vunpack.c.l.b16 %v2296
        %v6622 = vunpack.c.h.b16 %v2296
        %v6623 = vunpack.c.l.b16 %v2297
        %v6624 = vunpack.c.h.b16 %v2297
        %v6625 = vunpack.c.l.b16 %v2298
        %v6626 = vunpack.c.h.b16 %v2298
        %v6627 = vunpack.c.l.b16 %v2299
        %v6628 = vunpack.c.h.b16 %v2299
        %v6629 = vunpack.c.l.b16 %v2300
        %v6630 = vunpack.c.h.b16 %v2300
        %v6631 = vunpack.c.l.b16 %v2301
        %v6632 = vunpack.c.h.b16 %v2301
        %v6633 = vunpack.c.l.b16 %v2302
        %v6634 = vunpack.c.h.b16 %v2302
        %v6635 = vunpack.c.l.b16 %v2303
        %v6636 = vunpack.c.h.b16 %v2303
        %v6637 = vunpack.c.l.b16 %v2304
        %v6638 = vunpack.c.h.b16 %v2304
        %v6639 = vunpack.c.l.b16 %v2305
        %v6640 = vunpack.c.h.b16 %v2305
        %v6641 = vunpack.c.l.b16 %v2306
        %v6642 = vunpack.c.h.b16 %v2306
        %v6643 = vunpack.c.l.b16 %v2307
        %v6644 = vunpack.c.h.b16 %v2307
        %v6645 = vunpack.c.l.b16 %v2308
        %v6646 = vunpack.c.h.b16 %v2308
        %v6647 = vunpack.c.l.b16 %v2309
        %v6648 = vunpack.c.h.b16 %v2309
        %v6649 = vunpack.c.l.b16 %v2310
        %v6650 = vunpack.c.h.b16 %v2310
        %v6651 = vunpack.c.l.b16 %v2311
        %v6652 = vunpack.c.h.b16 %v2311
        %v6653 = vunpack.c.l.b16 %v2312
        %v6654 = vunpack.c.h.b16 %v2312
        %v6655 = vunpack.c.l.b16 %v2313
        %v6656 = vunpack.c.h.b16 %v2313
        %v6657 = vunpack.c.l.b16 %v2314
        %v6658 = vunpack.c.h.b16 %v2314
        %v6659 = vunpack.c.l.b16 %v2315
        %v6660 = vunpack.c.h.b16 %v2315
        %v6661 = vunpack.c.l.b16 %v2316
        %v6662 = vunpack.c.h.b16 %v2316
        %v6663 = vunpack.c.l.b16 %v2317
        %v6664 = vunpack.c.h.b16 %v2317
        %v6665 = vunpack.c.l.b16 %v2318
        %v6666 = vunpack.c.h.b16 %v2318
        %v6667 = vunpack.c.l.b16 %v2319
        %v6668 = vunpack.c.h.b16 %v2319
        %v6669 = vunpack.c.l.b16 %v2320
        %v6670 = vunpack.c.h.b16 %v2320
        %v6671 = vunpack.c.l.b16 %v2321
        %v6672 = vunpack.c.h.b16 %v2321
        %v6673 = vunpack.c.l.b16 %v2322
        %v6674 = vunpack.c.h.b16 %v2322
        %v6675 = vunpack.c.l.b16 %v2323
        %v6676 = vunpack.c.h.b16 %v2323
        %v6677 = vunpack.c.l.b16 %v2324
        %v6678 = vunpack.c.h.b16 %v2324
        %v6679 = vunpack.c.l.b16 %v2325
        %v6680 = vunpack.c.h.b16 %v2325
        %v6681 = vunpack.c.l.b16 %v2326
        %v6682 = vunpack.c.h.b16 %v2326
        %v6683 = vunpack.c.l.b16 %v2327
        %v6684 = vunpack.c.h.b16 %v2327
        %v6685 = vunpack.c.l.b16 %v2328
        %v6686 = vunpack.c.h.b16 %v2328
        %v6687 = vunpack.c.l.b16 %v2329
        %v6688 = vunpack.c.h.b16 %v2329
        %v6689 = vunpack.c.l.b16 %v2330
        %v6690 = vunpack.c.h.b16 %v2330
        %v6691 = vunpack.c.l.b16 %v2331
        %v6692 = vunpack.c.h.b16 %v2331
        %v6693 = vunpack.c.l.b16 %v2332
        %v6694 = vunpack.c.h.b16 %v2332
        %v6695 = vunpack.c.l.b16 %v2333
        %v6696 = vunpack.c.h.b16 %v2333
        %v6697 = vunpack.c.l.b16 %v2334
        %v6698 = vunpack.c.h.b16 %v2334
        %v6699 = vunpack.c.l.b16 %v2335
        %v6700 = vunpack.c.h.b16 %v2335
        %v6701 = vunpack.c.l.b16 %v2336
        %v6702 = vunpack.c.h.b16 %v2336
        %v6703 = vunpack.c.l.b16 %v2337
        %v6704 = vunpack.c.h.b16 %v2337
        %v6705 = vunpack.c.l.b16 %v2338
        %v6706 = vunpack.c.h.b16 %v2338
        %v6707 = vunpack.c.l.b16 %v2339
        %v6708 = vunpack.c.h.b16 %v2339
        %v6709 = vunpack.c.l.b16 %v2340
        %v6710 = vunpack.c.h.b16 %v2340
        %v6711 = vunpack.c.l.b16 %v2341
        %v6712 = vunpack.c.h.b16 %v2341
        %v6713 = vunpack.c.l.b16 %v2342
        %v6714 = vunpack.c.h.b16 %v2342
        %v6715 = vunpack.c.l.b16 %v2343
        %v6716 = vunpack.c.h.b16 %v2343
        %v6717 = vunpack.c.l.b16 %v2344
        %v6718 = vunpack.c.h.b16 %v2344
        %v6719 = vunpack.c.l.b16 %v2345
        %v6720 = vunpack.c.h.b16 %v2345
        %v6721 = vunpack.c.l.b16 %v2346
        %v6722 = vunpack.c.h.b16 %v2346
        %v6723 = vunpack.c.l.b16 %v2347
        %v6724 = vunpack.c.h.b16 %v2347
        %v6725 = vunpack.c.l.b16 %v2348
        %v6726 = vunpack.c.h.b16 %v2348
        %v6727 = vunpack.c.l.b16 %v2349
        %v6728 = vunpack.c.h.b16 %v2349
        %v6729 = vunpack.c.l.b16 %v2350
        %v6730 = vunpack.c.h.b16 %v2350
        %v6731 = vunpack.c.l.b16 %v2351
        %v6732 = vunpack.c.h.b16 %v2351
        %v6733 = vunpack.c.l.b16 %v2352
        %v6734 = vunpack.c.h.b16 %v2352
        %v6735 = vunpack.c.l.b16 %v2353
        %v6736 = vunpack.c.h.b16 %v2353
        %v6737 = vunpack.c.l.b16 %v2354
        %v6738 = vunpack.c.h.b16 %v2354
        %v6739 = vunpack.c.l.b16 %v2355
        %v6740 = vunpack.c.h.b16 %v2355
        %v6741 = vunpack.c.l.b16 %v2356
        %v6742 = vunpack.c.h.b16 %v2356
        %v6743 = vunpack.c.l.b16 %v2357
        %v6744 = vunpack.c.h.b16 %v2357
        %v6745 = vunpack.c.l.b16 %v2358
        %v6746 = vunpack.c.h.b16 %v2358
        %v6747 = vunpack.c.l.b16 %v2359
        %v6748 = vunpack.c.h.b16 %v2359
        %v6749 = vunpack.c.l.b16 %v2360
        %v6750 = vunpack.c.h.b16 %v2360
        %v6751 = vunpack.c.l.b16 %v2361
        %v6752 = vunpack.c.h.b16 %v2361
        %v6753 = vunpack.c.l.b16 %v2362
        %v6754 = vunpack.c.h.b16 %v2362
        %v6755 = vunpack.c.l.b16 %v2363
        %v6756 = vunpack.c.h.b16 %v2363
        %v6757 = vunpack.c.l.b16 %v2364
        %v6758 = vunpack.c.h.b16 %v2364
        %v6759 = vunpack.c.l.b16 %v2365
        %v6760 = vunpack.c.h.b16 %v2365
        %v6761 = vunpack.c.l.b16 %v2366
        %v6762 = vunpack.c.h.b16 %v2366
        %v6763 = vunpack.c.l.b16 %v2367
        %v6764 = vunpack.c.h.b16 %v2367
        %v6765 = vunpack.c.l.b16 %v2368
        %v6766 = vunpack.c.h.b16 %v2368
        %v6767 = vunpack.c.l.b16 %v2369
        %v6768 = vunpack.c.h.b16 %v2369
        %v6769 = vunpack.c.l.b16 %v2370
        %v6770 = vunpack.c.h.b16 %v2370
        %v6771 = vunpack.c.l.b16 %v2371
        %v6772 = vunpack.c.h.b16 %v2371
        %v6773 = vunpack.c.l.b16 %v2372
        %v6774 = vunpack.c.h.b16 %v2372
        %v6775 = vunpack.c.l.b16 %v2373
        %v6776 = vunpack.c.h.b16 %v2373
        %v6777 = vunpack.c.l.b16 %v2374
        %v6778 = vunpack.c.h.b16 %v2374
        %v6779 = vunpack.c.l.b16 %v2375
        %v6780 = vunpack.c.h.b16 %v2375
        %v6781 = vunpack.c.l.b16 %v2376
        %v6782 = vunpack.c.h.b16 %v2376
        %v6783 = vunpack.c.l.b16 %v2377
        %v6784 = vunpack.c.h.b16 %v2377
        %v6785 = vunpack.c.l.b16 %v2378
        %v6786 = vunpack.c.h.b16 %v2378
        %v6787 = vunpack.c.l.b16 %v2379
        %v6788 = vunpack.c.h.b16 %v2379
        %v6789 = vunpack.c.l.b16 %v2380
        %v6790 = vunpack.c.h.b16 %v2380
        %v6791 = vunpack.c.l.b16 %v2381
        %v6792 = vunpack.c.h.b16 %v2381
        %v6793 = vunpack.c.l.b16 %v2382
        %v6794 = vunpack.c.h.b16 %v2382
        %v6795 = vunpack.c.l.b16 %v2383
        %v6796 = vunpack.c.h.b16 %v2383
        %v6797 = vunpack.c.l.b16 %v2384
        %v6798 = vunpack.c.h.b16 %v2384
        %v6799 = vunpack.c.l.b16 %v2385
        %v6800 = vunpack.c.h.b16 %v2385
        %v6801 = vunpack.c.l.b16 %v2386
        %v6802 = vunpack.c.h.b16 %v2386
        %v6803 = vunpack.c.l.b16 %v2387
        %v6804 = vunpack.c.h.b16 %v2387
        %v6805 = vunpack.c.l.b16 %v2388
        %v6806 = vunpack.c.h.b16 %v2388
        %v6807 = vunpack.c.l.b16 %v2389
        %v6808 = vunpack.c.h.b16 %v2389
        %v6809 = vunpack.c.l.b16 %v2390
        %v6810 = vunpack.c.h.b16 %v2390
        %v6811 = vunpack.c.l.b16 %v2391
        %v6812 = vunpack.c.h.b16 %v2391
        %v6813 = vunpack.c.l.b16 %v2392
        %v6814 = vunpack.c.h.b16 %v2392
        %v6815 = vunpack.c.l.b16 %v2393
        %v6816 = vunpack.c.h.b16 %v2393
        %v6817 = vunpack.c.l.b16 %v2394
        %v6818 = vunpack.c.h.b16 %v2394
        %v6819 = vunpack.c.l.b16 %v2395
        %v6820 = vunpack.c.h.b16 %v2395
        %v6821 = vunpack.c.l.b16 %v2396
        %v6822 = vunpack.c.h.b16 %v2396
        %v6823 = vunpack.c.l.b16 %v2397
        %v6824 = vunpack.c.h.b16 %v2397
        %v6825 = vunpack.c.l.b16 %v2398
        %v6826 = vunpack.c.h.b16 %v2398
        %v6827 = vunpack.c.l.b16 %v2399
        %v6828 = vunpack.c.h.b16 %v2399
        %v6829 = vunpack.c.l.b16 %v2400
        %v6830 = vunpack.c.h.b16 %v2400
        %v6831 = vunpack.c.l.b16 %v2401
        %v6832 = vunpack.c.h.b16 %v2401
        %v6833 = vunpack.c.l.b16 %v2402
        %v6834 = vunpack.c.h.b16 %v2402
        %v6835 = vunpack.c.l.b16 %v2403
        %v6836 = vunpack.c.h.b16 %v2403
        %v6837 = vunpack.c.l.b16 %v2404
        %v6838 = vunpack.c.h.b16 %v2404
        %v6839 = vunpack.c.l.b16 %v2405
        %v6840 = vunpack.c.h.b16 %v2405
        %v6841 = vunpack.c.l.b16 %v2406
        %v6842 = vunpack.c.h.b16 %v2406
        %v6843 = vunpack.c.l.b16 %v2407
        %v6844 = vunpack.c.h.b16 %v2407
        %v6845 = vunpack.c.l.b16 %v2408
        %v6846 = vunpack.c.h.b16 %v2408
        %v6847 = vunpack.c.l.b16 %v2409
        %v6848 = vunpack.c.h.b16 %v2409
        %v6849 = vunpack.c.l.b16 %v2410
        %v6850 = vunpack.c.h.b16 %v2410
        %v6851 = vunpack.c.l.b16 %v2411
        %v6852 = vunpack.c.h.b16 %v2411
        %v6853 = vunpack.c.l.b16 %v2412
        %v6854 = vunpack.c.h.b16 %v2412
        %v6855 = vunpack.c.l.b16 %v2413
        %v6856 = vunpack.c.h.b16 %v2413
        %v6857 = vunpack.c.l.b16 %v2414
        %v6858 = vunpack.c.h.b16 %v2414
        %v6859 = vunpack.c.l.b16 %v2415
        %v6860 = vunpack.c.h.b16 %v2415
        %v6861 = vunpack.c.l.b16 %v2416
        %v6862 = vunpack.c.h.b16 %v2416
        %v6863 = vunpack.c.l.b16 %v2417
        %v6864 = vunpack.c.h.b16 %v2417
        %v6865 = vunpack.c.l.b16 %v2418
        %v6866 = vunpack.c.h.b16 %v2418
        %v6867 = vunpack.c.l.b16 %v2419
        %v6868 = vunpack.c.h.b16 %v2419
        %v6869 = vunpack.c.l.b16 %v2420
        %v6870 = vunpack.c.h.b16 %v2420
        %v6871 = vunpack.c.l.b16 %v2421
        %v6872 = vunpack.c.h.b16 %v2421
        %v6873 = vunpack.c.l.b16 %v2422
        %v6874 = vunpack.c.h.b16 %v2422
        %v6875 = vunpack.c.l.b16 %v2423
        %v6876 = vunpack.c.h.b16 %v2423
        %v6877 = vunpack.c.l.b16 %v2424
        %v6878 = vunpack.c.h.b16 %v2424
        %v6879 = vunpack.c.l.b16 %v2425
        %v6880 = vunpack.c.h.b16 %v2425
        %v6881 = vunpack.c.l.b16 %v2426
        %v6882 = vunpack.c.h.b16 %v2426
        %v6883 = vunpack.c.l.b16 %v2427
        %v6884 = vunpack.c.h.b16 %v2427
        %v6885 = vunpack.c.l.b16 %v2428
        %v6886 = vunpack.c.h.b16 %v2428
        %v6887 = vunpack.c.l.b16 %v2429
        %v6888 = vunpack.c.h.b16 %v2429
        %v6889 = vunpack.c.l.b16 %v2430
        %v6890 = vunpack.c.h.b16 %v2430
        %v6891 = vunpack.c.l.b16 %v2431
        %v6892 = vunpack.c.h.b16 %v2431
        %v6893 = vunpack.c.l.b16 %v2432
        %v6894 = vunpack.c.h.b16 %v2432
        %v6895 = vunpack.c.l.b16 %v2433
        %v6896 = vunpack.c.h.b16 %v2433
        %v6897 = vunpack.c.l.b16 %v2434
        %v6898 = vunpack.c.h.b16 %v2434
        %v6899 = vunpack.c.l.b16 %v2435
        %v6900 = vunpack.c.h.b16 %v2435
        %v6901 = vunpack.c.l.b16 %v2436
        %v6902 = vunpack.c.h.b16 %v2436
        %v6903 = vunpack.c.l.b16 %v2437
        %v6904 = vunpack.c.h.b16 %v2437
        %v6905 = vunpack.c.l.b16 %v2438
        %v6906 = vunpack.c.h.b16 %v2438
        %v6907 = vunpack.c.l.b16 %v2439
        %v6908 = vunpack.c.h.b16 %v2439
        %v6909 = vunpack.c.l.b16 %v2440
        %v6910 = vunpack.c.h.b16 %v2440
        %v6911 = vunpack.c.l.b16 %v2441
        %v6912 = vunpack.c.h.b16 %v2441
        %v6913 = vunpack.c.l.b16 %v2442
        %v6914 = vunpack.c.h.b16 %v2442
        %v6915 = vunpack.c.l.b16 %v2443
        %v6916 = vunpack.c.h.b16 %v2443
        %v6917 = vunpack.c.l.b16 %v2444
        %v6918 = vunpack.c.h.b16 %v2444
        %v6919 = vunpack.c.l.b16 %v2445
        %v6920 = vunpack.c.h.b16 %v2445
        %v6921 = vunpack.c.l.b16 %v2446
        %v6922 = vunpack.c.h.b16 %v2446
        %v6923 = vunpack.c.l.b16 %v2447
        %v6924 = vunpack.c.h.b16 %v2447
        %v6925 = vunpack.c.l.b16 %v2448
        %v6926 = vunpack.c.h.b16 %v2448
        %v6927 = vunpack.c.l.b16 %v2449
        %v6928 = vunpack.c.h.b16 %v2449
        %v6929 = vunpack.c.l.b16 %v2450
        %v6930 = vunpack.c.h.b16 %v2450
        %v6931 = vunpack.c.l.b16 %v2451
        %v6932 = vunpack.c.h.b16 %v2451
        %v6933 = vunpack.c.l.b16 %v2452
        %v6934 = vunpack.c.h.b16 %v2452
        %v6935 = vunpack.c.l.b16 %v2453
        %v6936 = vunpack.c.h.b16 %v2453
        %v6937 = vunpack.c.l.b16 %v2454
        %v6938 = vunpack.c.h.b16 %v2454
        %v6939 = vunpack.c.l.b16 %v2455
        %v6940 = vunpack.c.h.b16 %v2455
        %v6941 = vunpack.c.l.b16 %v2456
        %v6942 = vunpack.c.h.b16 %v2456
        %v6943 = vunpack.c.l.b16 %v2457
        %v6944 = vunpack.c.h.b16 %v2457
        %v6945 = vunpack.c.l.b16 %v2458
        %v6946 = vunpack.c.h.b16 %v2458
        %v6947 = vunpack.c.l.b16 %v2459
        %v6948 = vunpack.c.h.b16 %v2459
        %v6949 = vunpack.c.l.b16 %v2460
        %v6950 = vunpack.c.h.b16 %v2460
        %v6951 = vunpack.c.l.b16 %v2461
        %v6952 = vunpack.c.h.b16 %v2461
        %v6953 = vunpack.c.l.b16 %v2462
        %v6954 = vunpack.c.h.b16 %v2462
        %v6955 = vunpack.c.l.b16 %v2463
        %v6956 = vunpack.c.h.b16 %v2463
        %v6957 = vunpack.c.l.b16 %v2464
        %v6958 = vunpack.c.h.b16 %v2464
        %v6959 = vunpack.c.l.b16 %v2465
        %v6960 = vunpack.c.h.b16 %v2465
        %v6961 = vunpack.c.l.b16 %v2466
        %v6962 = vunpack.c.h.b16 %v2466
        %v6963 = vunpack.c.l.b16 %v2467
        %v6964 = vunpack.c.h.b16 %v2467
        %v6965 = vunpack.c.l.b16 %v2468
        %v6966 = vunpack.c.h.b16 %v2468
        %v6967 = vunpack.c.l.b16 %v2469
        %v6968 = vunpack.c.h.b16 %v2469
        %v6969 = vunpack.c.l.b16 %v2470
        %v6970 = vunpack.c.h.b16 %v2470
        %v6971 = vunpack.c.l.b16 %v2471
        %v6972 = vunpack.c.h.b16 %v2471
        %v6973 = vunpack.c.l.b16 %v2472
        %v6974 = vunpack.c.h.b16 %v2472
        %v6975 = vunpack.c.l.b16 %v2473
        %v6976 = vunpack.c.h.b16 %v2473
        %v6977 = vunpack.c.l.b16 %v2474
        %v6978 = vunpack.c.h.b16 %v2474
        %v6979 = vunpack.c.l.b16 %v2475
        %v6980 = vunpack.c.h.b16 %v2475
        %v6981 = vunpack.c.l.b16 %v2476
        %v6982 = vunpack.c.h.b16 %v2476
        %v6983 = vunpack.c.l.b16 %v2477
        %v6984 = vunpack.c.h.b16 %v2477
        %v6985 = vunpack.c.l.b16 %v2478
        %v6986 = vunpack.c.h.b16 %v2478
        %v6987 = vunpack.c.l.b16 %v2479
        %v6988 = vunpack.c.h.b16 %v2479
        %v6989 = vunpack.c.l.b16 %v2480
        %v6990 = vunpack.c.h.b16 %v2480
        %v6991 = vunpack.c.l.b16 %v2481
        %v6992 = vunpack.c.h.b16 %v2481
        %v6993 = vunpack.c.l.b16 %v2482
        %v6994 = vunpack.c.h.b16 %v2482
        %v6995 = vunpack.c.l.b16 %v2483
        %v6996 = vunpack.c.h.b16 %v2483
        %v6997 = vunpack.c.l.b16 %v2484
        %v6998 = vunpack.c.h.b16 %v2484
        %v6999 = vunpack.c.l.b16 %v2485
        %v7000 = vunpack.c.h.b16 %v2485
        %v7001 = vunpack.c.l.b16 %v2486
        %v7002 = vunpack.c.h.b16 %v2486
        %v7003 = vunpack.c.l.b16 %v2487
        %v7004 = vunpack.c.h.b16 %v2487
        %v7005 = vunpack.c.l.b16 %v2488
        %v7006 = vunpack.c.h.b16 %v2488
        %v7007 = vunpack.c.l.b16 %v2489
        %v7008 = vunpack.c.h.b16 %v2489
        %v7009 = vunpack.c.l.b16 %v2490
        %v7010 = vunpack.c.h.b16 %v2490
        %v7011 = vunpack.c.l.b16 %v2491
        %v7012 = vunpack.c.h.b16 %v2491
        %v7013 = vunpack.c.l.b16 %v2492
        %v7014 = vunpack.c.h.b16 %v2492
        %v7015 = vunpack.c.l.b16 %v2493
        %v7016 = vunpack.c.h.b16 %v2493
        %v7017 = vunpack.c.l.b16 %v2494
        %v7018 = vunpack.c.h.b16 %v2494
        %v7019 = vunpack.c.l.b16 %v2495
        %v7020 = vunpack.c.h.b16 %v2495
        %v7021 = vunpack.c.l.b16 %v2496
        %v7022 = vunpack.c.h.b16 %v2496
        %v7023 = vunpack.c.l.b16 %v2497
        %v7024 = vunpack.c.h.b16 %v2497
        %v7025 = vunpack.c.l.b16 %v2498
        %v7026 = vunpack.c.h.b16 %v2498
        %v7027 = vunpack.c.l.b16 %v2499
        %v7028 = vunpack.c.h.b16 %v2499
        %v7029 = vunpack.c.l.b16 %v2500
        %v7030 = vunpack.c.h.b16 %v2500
        %v7031 = vunpack.c.l.b16 %v2501
        %v7032 = vunpack.c.h.b16 %v2501
        %v7033 = vunpack.c.l.b16 %v2502
        %v7034 = vunpack.c.h.b16 %v2502
        %v7035 = vunpack.c.l.b16 %v2503
        %v7036 = vunpack.c.h.b16 %v2503
        %v7037 = vunpack.c.l.b16 %v2504
        %v7038 = vunpack.c.h.b16 %v2504
        %v7039 = vunpack.c.l.b16 %v2505
        %v7040 = vunpack.c.h.b16 %v2505
        %v7041 = vunpack.c.l.b16 %v2506
        %v7042 = vunpack.c.h.b16 %v2506
        %v7043 = vunpack.c.l.b16 %v2507
        %v7044 = vunpack.c.h.b16 %v2507
        %v7045 = vunpack.c.l.b16 %v2508
        %v7046 = vunpack.c.h.b16 %v2508
        %v7047 = vunpack.c.l.b16 %v2509
        %v7048 = vunpack.c.h.b16 %v2509
        %v7049 = vunpack.c.l.b16 %v2510
        %v7050 = vunpack.c.h.b16 %v2510
        %v7051 = vunpack.c.l.b16 %v2511
        %v7052 = vunpack.c.h.b16 %v2511
        %v7053 = vunpack.c.l.b16 %v2512
        %v7054 = vunpack.c.h.b16 %v2512
        %v7055 = vunpack.c.l.b16 %v2513
        %v7056 = vunpack.c.h.b16 %v2513
        %v7057 = vunpack.c.l.b16 %v2514
        %v7058 = vunpack.c.h.b16 %v2514
        %v7059 = vunpack.c.l.b16 %v2515
        %v7060 = vunpack.c.h.b16 %v2515
        %v7061 = vunpack.c.l.b16 %v2516
        %v7062 = vunpack.c.h.b16 %v2516
        %v7063 = vunpack.c.l.b16 %v2517
        %v7064 = vunpack.c.h.b16 %v2517
        %v7065 = vunpack.c.l.b16 %v2518
        %v7066 = vunpack.c.h.b16 %v2518
        %v7067 = vunpack.c.l.b16 %v2519
        %v7068 = vunpack.c.h.b16 %v2519
        %v7069 = vunpack.c.l.b16 %v2520
        %v7070 = vunpack.c.h.b16 %v2520
        %v7071 = vunpack.c.l.b16 %v2521
        %v7072 = vunpack.c.h.b16 %v2521
        %v7073 = vunpack.c.l.b16 %v2522
        %v7074 = vunpack.c.h.b16 %v2522
        %v7075 = vunpack.c.l.b16 %v2523
        %v7076 = vunpack.c.h.b16 %v2523
        %v7077 = vunpack.c.l.b16 %v2524
        %v7078 = vunpack.c.h.b16 %v2524
        %v7079 = vunpack.c.l.b16 %v2525
        %v7080 = vunpack.c.h.b16 %v2525
        %v7081 = vunpack.c.l.b16 %v2526
        %v7082 = vunpack.c.h.b16 %v2526
        %v7083 = vunpack.c.l.b16 %v2527
        %v7084 = vunpack.c.h.b16 %v2527
        %v7085 = vunpack.c.l.b16 %v2528
        %v7086 = vunpack.c.h.b16 %v2528
        %v7087 = vunpack.c.l.b16 %v2529
        %v7088 = vunpack.c.h.b16 %v2529
        %v7089 = vunpack.c.l.b16 %v2530
        %v7090 = vunpack.c.h.b16 %v2530
        %v7091 = vunpack.c.l.b16 %v2531
        %v7092 = vunpack.c.h.b16 %v2531
        %v7093 = vunpack.c.l.b16 %v2532
        %v7094 = vunpack.c.h.b16 %v2532
        %v7095 = vunpack.c.l.b16 %v2533
        %v7096 = vunpack.c.h.b16 %v2533
        %v7097 = vunpack.c.l.b16 %v2534
        %v7098 = vunpack.c.h.b16 %v2534
        %v7099 = vunpack.c.l.b16 %v2535
        %v7100 = vunpack.c.h.b16 %v2535
        %v7101 = vunpack.c.l.b16 %v2536
        %v7102 = vunpack.c.h.b16 %v2536
        %v7103 = vunpack.c.l.b16 %v2537
        %v7104 = vunpack.c.h.b16 %v2537
        %v7105 = vunpack.c.l.b16 %v2538
        %v7106 = vunpack.c.h.b16 %v2538
        %v7107 = vunpack.c.l.b16 %v2539
        %v7108 = vunpack.c.h.b16 %v2539
        %v7109 = vunpack.c.l.b16 %v2540
        %v7110 = vunpack.c.h.b16 %v2540
        %v7111 = vunpack.c.l.b16 %v2541
        %v7112 = vunpack.c.h.b16 %v2541
        %v7113 = vunpack.c.l.b16 %v2542
        %v7114 = vunpack.c.h.b16 %v2542
        %v7115 = vunpack.c.l.b16 %v2543
        %v7116 = vunpack.c.h.b16 %v2543
        %v7117 = vunpack.c.l.b16 %v2544
        %v7118 = vunpack.c.h.b16 %v2544
        %v7119 = vunpack.c.l.b16 %v2545
        %v7120 = vunpack.c.h.b16 %v2545
        %v7121 = vunpack.c.l.b16 %v2546
        %v7122 = vunpack.c.h.b16 %v2546
        %v7123 = vunpack.c.l.b16 %v2547
        %v7124 = vunpack.c.h.b16 %v2547
        %v7125 = vunpack.c.l.b16 %v2548
        %v7126 = vunpack.c.h.b16 %v2548
        %v7127 = vunpack.c.l.b16 %v2549
        %v7128 = vunpack.c.h.b16 %v2549
        %v7129 = vunpack.c.l.b16 %v2550
        %v7130 = vunpack.c.h.b16 %v2550
        %v7131 = vunpack.c.l.b16 %v2551
        %v7132 = vunpack.c.h.b16 %v2551
        %v7133 = vunpack.c.l.b16 %v2552
        %v7134 = vunpack.c.h.b16 %v2552
        %v7135 = vunpack.c.l.b16 %v2553
        %v7136 = vunpack.c.h.b16 %v2553
        %v7137 = vunpack.c.l.b16 %v2554
        %v7138 = vunpack.c.h.b16 %v2554
        %v7139 = vunpack.c.l.b16 %v2555
        %v7140 = vunpack.c.h.b16 %v2555
        %v7141 = vunpack.c.l.b16 %v2556
        %v7142 = vunpack.c.h.b16 %v2556
        %v7143 = vunpack.c.l.b16 %v2557
        %v7144 = vunpack.c.h.b16 %v2557
        %v7145 = vunpack.c.l.b16 %v2558
        %v7146 = vunpack.c.h.b16 %v2558
        %v7147 = vunpack.c.l.b16 %v2559
        %v7148 = vunpack.c.h.b16 %v2559
        %v7149 = vunpack.c.l.b16 %v2560
        %v7150 = vunpack.c.h.b16 %v2560
        %v7151 = vunpack.c.l.b16 %v2561
        %v7152 = vunpack.c.h.b16 %v2561
        %v7153 = vunpack.c.l.b16 %v2562
        %v7154 = vunpack.c.h.b16 %v2562
        %v7155 = vunpack.c.l.b16 %v2563
        %v7156 = vunpack.c.h.b16 %v2563
        %v7157 = vunpack.c.l.b16 %v2564
        %v7158 = vunpack.c.h.b16 %v2564
        %v7159 = vunpack.c.l.b16 %v2565
        %v7160 = vunpack.c.h.b16 %v2565
        %v7161 = vunpack.c.l.b16 %v2566
        %v7162 = vunpack.c.h.b16 %v2566
        %v7163 = vunpack.c.l.b16 %v2567
        %v7164 = vunpack.c.h.b16 %v2567
        %v7165 = vunpack.c.l.b16 %v2568
        %v7166 = vunpack.c.h.b16 %v2568
        %v7167 = vunpack.c.l.b16 %v2569
        %v7168 = vunpack.c.h.b16 %v2569
        %v7169 = vunpack.c.l.b16 %v2570
        %v7170 = vunpack.c.h.b16 %v2570
        %v7171 = vunpack.c.l.b16 %v2571
        %v7172 = vunpack.c.h.b16 %v2571
        %v7173 = vunpack.c.l.b16 %v2572
        %v7174 = vunpack.c.h.b16 %v2572
        %v7175 = vunpack.c.l.b16 %v2573
        %v7176 = vunpack.c.h.b16 %v2573
        %v7177 = vunpack.c.l.b16 %v2574
        %v7178 = vunpack.c.h.b16 %v2574
        %v7179 = vunpack.c.l.b16 %v2575
        %v7180 = vunpack.c.h.b16 %v2575
        %v7181 = vunpack.c.l.b16 %v2576
        %v7182 = vunpack.c.h.b16 %v2576
        %v7183 = vunpack.c.l.b16 %v2577
        %v7184 = vunpack.c.h.b16 %v2577
        %v7185 = vunpack.c.l.b16 %v2578
        %v7186 = vunpack.c.h.b16 %v2578
        %v7187 = vpack.c.b16 %v4117, %v4115
        %v7188 = vpack.c.b16 %v4118, %v4116
        %v7189 = vpack.c.b16 %v4121, %v4119
        %v7190 = vpack.c.b16 %v4122, %v4120
        %v7191 = vpack.c.b16 %v4125, %v4123
        %v7192 = vpack.c.b16 %v4126, %v4124
        %v7193 = vpack.c.b16 %v4129, %v4127
        %v7194 = vpack.c.b16 %v4130, %v4128
        %v7195 = vpack.c.b16 %v4133, %v4131
        %v7196 = vpack.c.b16 %v4134, %v4132
        %v7197 = vpack.c.b16 %v4137, %v4135
        %v7198 = vpack.c.b16 %v4138, %v4136
        %v7199 = vpack.c.b16 %v4141, %v4139
        %v7200 = vpack.c.b16 %v4142, %v4140
        %v7201 = vpack.c.b16 %v4145, %v4143
        %v7202 = vpack.c.b16 %v4146, %v4144
        %v7203 = vpack.c.b16 %v4149, %v4147
        %v7204 = vpack.c.b16 %v4150, %v4148
        %v7205 = vpack.c.b16 %v4153, %v4151
        %v7206 = vpack.c.b16 %v4154, %v4152
        %v7207 = vpack.c.b16 %v4157, %v4155
        %v7208 = vpack.c.b16 %v4158, %v4156
        %v7209 = vpack.c.b16 %v4161, %v4159
        %v7210 = vpack.c.b16 %v4162, %v4160
        %v7211 = vpack.c.b16 %v4165, %v4163
        %v7212 = vpack.c.b16 %v4166, %v4164
        %v7213 = vpack.c.b16 %v4169, %v4167
        %v7214 = vpack.c.b16 %v4170, %v4168
        %v7215 = vpack.c.b16 %v4173, %v4171
        %v7216 = vpack.c.b16 %v4174, %v4172
        %v7217 = vpack.c.b16 %v4177, %v4175
        %v7218 = vpack.c.b16 %v4178, %v4176
        %v7219 = vpack.c.b16 %v4181, %v4179
        %v7220 = vpack.c.b16 %v4182, %v4180
        %v7221 = vpack.c.b16 %v4185, %v4183
        %v7222 = vpack.c.b16 %v4186, %v4184
        %v7223 = vpack.c.b16 %v4189, %v4187
        %v7224 = vpack.c.b16 %v4190, %v4188
        %v7225 = vpack.c.b16 %v4193, %v4191
        %v7226 = vpack.c.b16 %v4194, %v4192
        %v7227 = vpack.c.b16 %v4197, %v4195
        %v7228 = vpack.c.b16 %v4198, %v4196
        %v7229 = vpack.c.b16 %v4201, %v4199
        %v7230 = vpack.c.b16 %v4202, %v4200
        %v7231 = vpack.c.b16 %v4205, %v4203
        %v7232 = vpack.c.b16 %v4206, %v4204
        %v7233 = vpack.c.b16 %v4209, %v4207
        %v7234 = vpack.c.b16 %v4210, %v4208
        %v7235 = vpack.c.b16 %v4213, %v4211
        %v7236 = vpack.c.b16 %v4214, %v4212
        %v7237 = vpack.c.b16 %v4217, %v4215
        %v7238 = vpack.c.b16 %v4218, %v4216
        %v7239 = vpack.c.b16 %v4221, %v4219
        %v7240 = vpack.c.b16 %v4222, %v4220
        %v7241 = vpack.c.b16 %v4225, %v4223
        %v7242 = vpack.c.b16 %v4226, %v4224
        %v7243 = vpack.c.b16 %v4229, %v4227
        %v7244 = vpack.c.b16 %v4230, %v4228
        %v7245 = vpack.c.b16 %v4233, %v4231
        %v7246 = vpack.c.b16 %v4234, %v4232
        %v7247 = vpack.c.b16 %v4237, %v4235
        %v7248 = vpack.c.b16 %v4238, %v4236
        %v7249 = vpack.c.b16 %v4241, %v4239
        %v7250 = vpack.c.b16 %v4242, %v4240
        %v7251 = vpack.c.b16 %v4245, %v4243
        %v7252 = vpack.c.b16 %v4246, %v4244
        %v7253 = vpack.c.b16 %v4249, %v4247
        %v7254 = vpack.c.b16 %v4250, %v4248
        %v7255 = vpack.c.b16 %v4253, %v4251
        %v7256 = vpack.c.b16 %v4254, %v4252
        %v7257 = vpack.c.b16 %v4257, %v4255
        %v7258 = vpack.c.b16 %v4258, %v4256
        %v7259 = vpack.c.b16 %v4261, %v4259
        %v7260 = vpack.c.b16 %v4262, %v4260
        %v7261 = vpack.c.b16 %v4265, %v4263
        %v7262 = vpack.c.b16 %v4266, %v4264
        %v7263 = vpack.c.b16 %v4269, %v4267
        %v7264 = vpack.c.b16 %v4270, %v4268
        %v7265 = vpack.c.b16 %v4273, %v4271
        %v7266 = vpack.c.b16 %v4274, %v4272
        %v7267 = vpack.c.b16 %v4277, %v4275
        %v7268 = vpack.c.b16 %v4278, %v4276
        %v7269 = vpack.c.b16 %v4281, %v4279
        %v7270 = vpack.c.b16 %v4282, %v4280
        %v7271 = vpack.c.b16 %v4285, %v4283
        %v7272 = vpack.c.b16 %v4286, %v4284
        %v7273 = vpack.c.b16 %v4289, %v4287
        %v7274 = vpack.c.b16 %v4290, %v4288
        %v7275 = vpack.c.b16 %v4293, %v4291
        %v7276 = vpack.c.b16 %v4294, %v4292
        %v7277 = vpack.c.b16 %v4297, %v4295
        %v7278 = vpack.c.b16 %v4298, %v4296
        %v7279 = vpack.c.b16 %v4301, %v4299
        %v7280 = vpack.c.b16 %v4302, %v4300
        %v7281 = vpack.c.b16 %v4305, %v4303
        %v7282 = vpack.c.b16 %v4306, %v4304
        %v7283 = vpack.c.b16 %v4309, %v4307
        %v7284 = vpack.c.b16 %v4310, %v4308
        %v7285 = vpack.c.b16 %v4313, %v4311
        %v7286 = vpack.c.b16 %v4314, %v4312
        %v7287 = vpack.c.b16 %v4317, %v4315
        %v7288 = vpack.c.b16 %v4318, %v4316
        %v7289 = vpack.c.b16 %v4321, %v4319
        %v7290 = vpack.c.b16 %v4322, %v4320
        %v7291 = vpack.c.b16 %v4325, %v4323
        %v7292 = vpack.c.b16 %v4326, %v4324
        %v7293 = vpack.c.b16 %v4329, %v4327
        %v7294 = vpack.c.b16 %v4330, %v4328
        %v7295 = vpack.c.b16 %v4333, %v4331
        %v7296 = vpack.c.b16 %v4334, %v4332
        %v7297 = vpack.c.b16 %v4337, %v4335
        %v7298 = vpack.c.b16 %v4338, %v4336
        %v7299 = vpack.c.b16 %v4341, %v4339
        %v7300 = vpack.c.b16 %v4342, %v4340
        %v7301 = vpack.c.b16 %v4345, %v4343
        %v7302 = vpack.c.b16 %v4346, %v4344
        %v7303 = vpack.c.b16 %v4349, %v4347
        %v7304 = vpack.c.b16 %v4350, %v4348
        %v7305 = vpack.c.b16 %v4353, %v4351
        %v7306 = vpack.c.b16 %v4354, %v4352
        %v7307 = vpack.c.b16 %v4357, %v4355
        %v7308 = vpack.c.b16 %v4358, %v4356
        %v7309 = vpack.c.b16 %v4361, %v4359
        %v7310 = vpack.c.b16 %v4362, %v4360
        %v7311 = vpack.c.b16 %v4365, %v4363
        %v7312 = vpack.c.b16 %v4366, %v4364
        %v7313 = vpack.c.b16 %v4369, %v4367
        %v7314 = vpack.c.b16 %v4370, %v4368
        %v7315 = vpack.c.b16 %v4373, %v4371
        %v7316 = vpack.c.b16 %v4374, %v4372
        %v7317 = vpack.c.b16 %v4377, %v4375
        %v7318 = vpack.c.b16 %v4378, %v4376
        %v7319 = vpack.c.b16 %v4381, %v4379
        %v7320 = vpack.c.b16 %v4382, %v4380
        %v7321 = vpack.c.b16 %v4385, %v4383
        %v7322 = vpack.c.b16 %v4386, %v4384
        %v7323 = vpack.c.b16 %v4389, %v4387
        %v7324 = vpack.c.b16 %v4390, %v4388
        %v7325 = vpack.c.b16 %v4393, %v4391
        %v7326 = vpack.c.b16 %v4394, %v4392
        %v7327 = vpack.c.b16 %v4397, %v4395
        %v7328 = vpack.c.b16 %v4398, %v4396
        %v7329 = vpack.c.b16 %v4401, %v4399
        %v7330 = vpack.c.b16 %v4402, %v4400
        %v7331 = vpack.c.b16 %v4405, %v4403
        %v7332 = vpack.c.b16 %v4406, %v4404
        %v7333 = vpack.c.b16 %v4409, %v4407
        %v7334 = vpack.c.b16 %v4410, %v4408
        %v7335 = vpack.c.b16 %v4413, %v4411
        %v7336 = vpack.c.b16 %v4414, %v4412
        %v7337 = vpack.c.b16 %v4417, %v4415
        %v7338 = vpack.c.b16 %v4418, %v4416
        %v7339 = vpack.c.b16 %v4421, %v4419
        %v7340 = vpack.c.b16 %v4422, %v4420
        %v7341 = vpack.c.b16 %v4425, %v4423
        %v7342 = vpack.c.b16 %v4426, %v4424
        %v7343 = vpack.c.b16 %v4429, %v4427
        %v7344 = vpack.c.b16 %v4430, %v4428
        %v7345 = vpack.c.b16 %v4433, %v4431
        %v7346 = vpack.c.b16 %v4434, %v4432
        %v7347 = vpack.c.b16 %v4437, %v4435
        %v7348 = vpack.c.b16 %v4438, %v4436
        %v7349 = vpack.c.b16 %v4441, %v4439
        %v7350 = vpack.c.b16 %v4442, %v4440
        %v7351 = vpack.c.b16 %v4445, %v4443
        %v7352 = vpack.c.b16 %v4446, %v4444
        %v7353 = vpack.c.b16 %v4449, %v4447
        %v7354 = vpack.c.b16 %v4450, %v4448
        %v7355 = vpack.c.b16 %v4453, %v4451
        %v7356 = vpack.c.b16 %v4454, %v4452
        %v7357 = vpack.c.b16 %v4457, %v4455
        %v7358 = vpack.c.b16 %v4458, %v4456
        %v7359 = vpack.c.b16 %v4461, %v4459
        %v7360 = vpack.c.b16 %v4462, %v4460
        %v7361 = vpack.c.b16 %v4465, %v4463
        %v7362 = vpack.c.b16 %v4466, %v4464
        %v7363 = vpack.c.b16 %v4469, %v4467
        %v7364 = vpack.c.b16 %v4470, %v4468
        %v7365 = vpack.c.b16 %v4473, %v4471
        %v7366 = vpack.c.b16 %v4474, %v4472
        %v7367 = vpack.c.b16 %v4477, %v4475
        %v7368 = vpack.c.b16 %v4478, %v4476
        %v7369 = vpack.c.b16 %v4481, %v4479
        %v7370 = vpack.c.b16 %v4482, %v4480
        %v7371 = vpack.c.b16 %v4485, %v4483
        %v7372 = vpack.c.b16 %v4486, %v4484
        %v7373 = vpack.c.b16 %v4489, %v4487
        %v7374 = vpack.c.b16 %v4490, %v4488
        %v7375 = vpack.c.b16 %v4493, %v4491
        %v7376 = vpack.c.b16 %v4494, %v4492
        %v7377 = vpack.c.b16 %v4497, %v4495
        %v7378 = vpack.c.b16 %v4498, %v4496
        %v7379 = vpack.c.b16 %v4501, %v4499
        %v7380 = vpack.c.b16 %v4502, %v4500
        %v7381 = vpack.c.b16 %v4505, %v4503
        %v7382 = vpack.c.b16 %v4506, %v4504
        %v7383 = vpack.c.b16 %v4509, %v4507
        %v7384 = vpack.c.b16 %v4510, %v4508
        %v7385 = vpack.c.b16 %v4513, %v4511
        %v7386 = vpack.c.b16 %v4514, %v4512
        %v7387 = vpack.c.b16 %v4517, %v4515
        %v7388 = vpack.c.b16 %v4518, %v4516
        %v7389 = vpack.c.b16 %v4521, %v4519
        %v7390 = vpack.c.b16 %v4522, %v4520
        %v7391 = vpack.c.b16 %v4525, %v4523
        %v7392 = vpack.c.b16 %v4526, %v4524
        %v7393 = vpack.c.b16 %v4529, %v4527
        %v7394 = vpack.c.b16 %v4530, %v4528
        %v7395 = vpack.c.b16 %v4533, %v4531
        %v7396 = vpack.c.b16 %v4534, %v4532
        %v7397 = vpack.c.b16 %v4537, %v4535
        %v7398 = vpack.c.b16 %v4538, %v4536
        %v7399 = vpack.c.b16 %v4541, %v4539
        %v7400 = vpack.c.b16 %v4542, %v4540
        %v7401 = vpack.c.b16 %v4545, %v4543
        %v7402 = vpack.c.b16 %v4546, %v4544
        %v7403 = vpack.c.b16 %v4549, %v4547
        %v7404 = vpack.c.b16 %v4550, %v4548
        %v7405 = vpack.c.b16 %v4553, %v4551
        %v7406 = vpack.c.b16 %v4554, %v4552
        %v7407 = vpack.c.b16 %v4557, %v4555
        %v7408 = vpack.c.b16 %v4558, %v4556
        %v7409 = vpack.c.b16 %v4561, %v4559
        %v7410 = vpack.c.b16 %v4562, %v4560
        %v7411 = vpack.c.b16 %v4565, %v4563
        %v7412 = vpack.c.b16 %v4566, %v4564
        %v7413 = vpack.c.b16 %v4569, %v4567
        %v7414 = vpack.c.b16 %v4570, %v4568
        %v7415 = vpack.c.b16 %v4573, %v4571
        %v7416 = vpack.c.b16 %v4574, %v4572
        %v7417 = vpack.c.b16 %v4577, %v4575
        %v7418 = vpack.c.b16 %v4578, %v4576
        %v7419 = vpack.c.b16 %v4581, %v4579
        %v7420 = vpack.c.b16 %v4582, %v4580
        %v7421 = vpack.c.b16 %v4585, %v4583
        %v7422 = vpack.c.b16 %v4586, %v4584
        %v7423 = vpack.c.b16 %v4589, %v4587
        %v7424 = vpack.c.b16 %v4590, %v4588
        %v7425 = vpack.c.b16 %v4593, %v4591
        %v7426 = vpack.c.b16 %v4594, %v4592
        %v7427 = vpack.c.b16 %v4597, %v4595
        %v7428 = vpack.c.b16 %v4598, %v4596
        %v7429 = vpack.c.b16 %v4601, %v4599
        %v7430 = vpack.c.b16 %v4602, %v4600
        %v7431 = vpack.c.b16 %v4605, %v4603
        %v7432 = vpack.c.b16 %v4606, %v4604
        %v7433 = vpack.c.b16 %v4609, %v4607
        %v7434 = vpack.c.b16 %v4610, %v4608
        %v7435 = vpack.c.b16 %v4613, %v4611
        %v7436 = vpack.c.b16 %v4614, %v4612
        %v7437 = vpack.c.b16 %v4617, %v4615
        %v7438 = vpack.c.b16 %v4618, %v4616
        %v7439 = vpack.c.b16 %v4621, %v4619
        %v7440 = vpack.c.b16 %v4622, %v4620
        %v7441 = vpack.c.b16 %v4625, %v4623
        %v7442 = vpack.c.b16 %v4626, %v4624
        %v7443 = vpack.c.b16 %v4629, %v4627
        %v7444 = vpack.c.b16 %v4630, %v4628
        %v7445 = vpack.c.b16 %v4633, %v4631
        %v7446 = vpack.c.b16 %v4634, %v4632
        %v7447 = vpack.c.b16 %v4637, %v4635
        %v7448 = vpack.c.b16 %v4638, %v4636
        %v7449 = vpack.c.b16 %v4641, %v4639
        %v7450 = vpack.c.b16 %v4642, %v4640
        %v7451 = vpack.c.b16 %v4645, %v4643
        %v7452 = vpack.c.b16 %v4646, %v4644
        %v7453 = vpack.c.b16 %v4649, %v4647
        %v7454 = vpack.c.b16 %v4650, %v4648
        %v7455 = vpack.c.b16 %v4653, %v4651
        %v7456 = vpack.c.b16 %v4654, %v4652
        %v7457 = vpack.c.b16 %v4657, %v4655
        %v7458 = vpack.c.b16 %v4658, %v4656
        %v7459 = vpack.c.b16 %v4661, %v4659
        %v7460 = vpack.c.b16 %v4662, %v4660
        %v7461 = vpack.c.b16 %v4665, %v4663
        %v7462 = vpack.c.b16 %v4666, %v4664
        %v7463 = vpack.c.b16 %v4669, %v4667
        %v7464 = vpack.c.b16 %v4670, %v4668
        %v7465 = vpack.c.b16 %v4673, %v4671
        %v7466 = vpack.c.b16 %v4674, %v4672
        %v7467 = vpack.c.b16 %v4677, %v4675
        %v7468 = vpack.c.b16 %v4678, %v4676
        %v7469 = vpack.c.b16 %v4681, %v4679
        %v7470 = vpack.c.b16 %v4682, %v4680
        %v7471 = vpack.c.b16 %v4685, %v4683
        %v7472 = vpack.c.b16 %v4686, %v4684
        %v7473 = vpack.c.b16 %v4689, %v4687
        %v7474 = vpack.c.b16 %v4690, %v4688
        %v7475 = vpack.c.b16 %v4693, %v4691
        %v7476 = vpack.c.b16 %v4694, %v4692
        %v7477 = vpack.c.b16 %v4697, %v4695
        %v7478 = vpack.c.b16 %v4698, %v4696
        %v7479 = vpack.c.b16 %v4701, %v4699
        %v7480 = vpack.c.b16 %v4702, %v4700
        %v7481 = vpack.c.b16 %v4705, %v4703
        %v7482 = vpack.c.b16 %v4706, %v4704
        %v7483 = vpack.c.b16 %v4709, %v4707
        %v7484 = vpack.c.b16 %v4710, %v4708
        %v7485 = vpack.c.b16 %v4713, %v4711
        %v7486 = vpack.c.b16 %v4714, %v4712
        %v7487 = vpack.c.b16 %v4717, %v4715
        %v7488 = vpack.c.b16 %v4718, %v4716
        %v7489 = vpack.c.b16 %v4721, %v4719
        %v7490 = vpack.c.b16 %v4722, %v4720
        %v7491 = vpack.c.b16 %v4725, %v4723
        %v7492 = vpack.c.b16 %v4726, %v4724
        %v7493 = vpack.c.b16 %v4729, %v4727
        %v7494 = vpack.c.b16 %v4730, %v4728
        %v7495 = vpack.c.b16 %v4733, %v4731
        %v7496 = vpack.c.b16 %v4734, %v4732
        %v7497 = vpack.c.b16 %v4737, %v4735
        %v7498 = vpack.c.b16 %v4738, %v4736
        %v7499 = vpack.c.b16 %v4741, %v4739
        %v7500 = vpack.c.b16 %v4742, %v4740
        %v7501 = vpack.c.b16 %v4745, %v4743
        %v7502 = vpack.c.b16 %v4746, %v4744
        %v7503 = vpack.c.b16 %v4749, %v4747
        %v7504 = vpack.c.b16 %v4750, %v4748
        %v7505 = vpack.c.b16 %v4753, %v4751
        %v7506 = vpack.c.b16 %v4754, %v4752
        %v7507 = vpack.c.b16 %v4757, %v4755
        %v7508 = vpack.c.b16 %v4758, %v4756
        %v7509 = vpack.c.b16 %v4761, %v4759
        %v7510 = vpack.c.b16 %v4762, %v4760
        %v7511 = vpack.c.b16 %v4765, %v4763
        %v7512 = vpack.c.b16 %v4766, %v4764
        %v7513 = vpack.c.b16 %v4769, %v4767
        %v7514 = vpack.c.b16 %v4770, %v4768
        %v7515 = vpack.c.b16 %v4773, %v4771
        %v7516 = vpack.c.b16 %v4774, %v4772
        %v7517 = vpack.c.b16 %v4777, %v4775
        %v7518 = vpack.c.b16 %v4778, %v4776
        %v7519 = vpack.c.b16 %v4781, %v4779
        %v7520 = vpack.c.b16 %v4782, %v4780
        %v7521 = vpack.c.b16 %v4785, %v4783
        %v7522 = vpack.c.b16 %v4786, %v4784
        %v7523 = vpack.c.b16 %v4789, %v4787
        %v7524 = vpack.c.b16 %v4790, %v4788
        %v7525 = vpack.c.b16 %v4793, %v4791
        %v7526 = vpack.c.b16 %v4794, %v4792
        %v7527 = vpack.c.b16 %v4797, %v4795
        %v7528 = vpack.c.b16 %v4798, %v4796
        %v7529 = vpack.c.b16 %v4801, %v4799
        %v7530 = vpack.c.b16 %v4802, %v4800
        %v7531 = vpack.c.b16 %v4805, %v4803
        %v7532 = vpack.c.b16 %v4806, %v4804
        %v7533 = vpack.c.b16 %v4809, %v4807
        %v7534 = vpack.c.b16 %v4810, %v4808
        %v7535 = vpack.c.b16 %v4813, %v4811
        %v7536 = vpack.c.b16 %v4814, %v4812
        %v7537 = vpack.c.b16 %v4817, %v4815
        %v7538 = vpack.c.b16 %v4818, %v4816
        %v7539 = vpack.c.b16 %v4821, %v4819
        %v7540 = vpack.c.b16 %v4822, %v4820
        %v7541 = vpack.c.b16 %v4825, %v4823
        %v7542 = vpack.c.b16 %v4826, %v4824
        %v7543 = vpack.c.b16 %v4829, %v4827
        %v7544 = vpack.c.b16 %v4830, %v4828
        %v7545 = vpack.c.b16 %v4833, %v4831
        %v7546 = vpack.c.b16 %v4834, %v4832
        %v7547 = vpack.c.b16 %v4837, %v4835
        %v7548 = vpack.c.b16 %v4838, %v4836
        %v7549 = vpack.c.b16 %v4841, %v4839
        %v7550 = vpack.c.b16 %v4842, %v4840
        %v7551 = vpack.c.b16 %v4845, %v4843
        %v7552 = vpack.c.b16 %v4846, %v4844
        %v7553 = vpack.c.b16 %v4849, %v4847
        %v7554 = vpack.c.b16 %v4850, %v4848
        %v7555 = vpack.c.b16 %v4853, %v4851
        %v7556 = vpack.c.b16 %v4854, %v4852
        %v7557 = vpack.c.b16 %v4857, %v4855
        %v7558 = vpack.c.b16 %v4858, %v4856
        %v7559 = vpack.c.b16 %v4861, %v4859
        %v7560 = vpack.c.b16 %v4862, %v4860
        %v7561 = vpack.c.b16 %v4865, %v4863
        %v7562 = vpack.c.b16 %v4866, %v4864
        %v7563 = vpack.c.b16 %v4869, %v4867
        %v7564 = vpack.c.b16 %v4870, %v4868
        %v7565 = vpack.c.b16 %v4873, %v4871
        %v7566 = vpack.c.b16 %v4874, %v4872
        %v7567 = vpack.c.b16 %v4877, %v4875
        %v7568 = vpack.c.b16 %v4878, %v4876
        %v7569 = vpack.c.b16 %v4881, %v4879
        %v7570 = vpack.c.b16 %v4882, %v4880
        %v7571 = vpack.c.b16 %v4885, %v4883
        %v7572 = vpack.c.b16 %v4886, %v4884
        %v7573 = vpack.c.b16 %v4889, %v4887
        %v7574 = vpack.c.b16 %v4890, %v4888
        %v7575 = vpack.c.b16 %v4893, %v4891
        %v7576 = vpack.c.b16 %v4894, %v4892
        %v7577 = vpack.c.b16 %v4897, %v4895
        %v7578 = vpack.c.b16 %v4898, %v4896
        %v7579 = vpack.c.b16 %v4901, %v4899
        %v7580 = vpack.c.b16 %v4902, %v4900
        %v7581 = vpack.c.b16 %v4905, %v4903
        %v7582 = vpack.c.b16 %v4906, %v4904
        %v7583 = vpack.c.b16 %v4909, %v4907
        %v7584 = vpack.c.b16 %v4910, %v4908
        %v7585 = vpack.c.b16 %v4913, %v4911
        %v7586 = vpack.c.b16 %v4914, %v4912
        %v7587 = vpack.c.b16 %v4917, %v4915
        %v7588 = vpack.c.b16 %v4918, %v4916
        %v7589 = vpack.c.b16 %v4921, %v4919
        %v7590 = vpack.c.b16 %v4922, %v4920
        %v7591 = vpack.c.b16 %v4925, %v4923
        %v7592 = vpack.c.b16 %v4926, %v4924
        %v7593 = vpack.c.b16 %v4929, %v4927
        %v7594 = vpack.c.b16 %v4930, %v4928
        %v7595 = vpack.c.b16 %v4933, %v4931
        %v7596 = vpack.c.b16 %v4934, %v4932
        %v7597 = vpack.c.b16 %v4937, %v4935
        %v7598 = vpack.c.b16 %v4938, %v4936
        %v7599 = vpack.c.b16 %v4941, %v4939
        %v7600 = vpack.c.b16 %v4942, %v4940
        %v7601 = vpack.c.b16 %v4945, %v4943
        %v7602 = vpack.c.b16 %v4946, %v4944
        %v7603 = vpack.c.b16 %v4949, %v4947
        %v7604 = vpack.c.b16 %v4950, %v4948
        %v7605 = vpack.c.b16 %v4953, %v4951
        %v7606 = vpack.c.b16 %v4954, %v4952
        %v7607 = vpack.c.b16 %v4957, %v4955
        %v7608 = vpack.c.b16 %v4958, %v4956
        %v7609 = vpack.c.b16 %v4961, %v4959
        %v7610 = vpack.c.b16 %v4962, %v4960
        %v7611 = vpack.c.b16 %v4965, %v4963
        %v7612 = vpack.c.b16 %v4966, %v4964
        %v7613 = vpack.c.b16 %v4969, %v4967
        %v7614 = vpack.c.b16 %v4970, %v4968
        %v7615 = vpack.c.b16 %v4973, %v4971
        %v7616 = vpack.c.b16 %v4974, %v4972
        %v7617 = vpack.c.b16 %v4977, %v4975
        %v7618 = vpack.c.b16 %v4978, %v4976
        %v7619 = vpack.c.b16 %v4981, %v4979
        %v7620 = vpack.c.b16 %v4982, %v4980
        %v7621 = vpack.c.b16 %v4985, %v4983
        %v7622 = vpack.c.b16 %v4986, %v4984
        %v7623 = vpack.c.b16 %v4989, %v4987
        %v7624 = vpack.c.b16 %v4990, %v4988
        %v7625 = vpack.c.b16 %v4993, %v4991
        %v7626 = vpack.c.b16 %v4994, %v4992
        %v7627 = vpack.c.b16 %v4997, %v4995
        %v7628 = vpack.c.b16 %v4998, %v4996
        %v7629 = vpack.c.b16 %v5001, %v4999
        %v7630 = vpack.c.b16 %v5002, %v5000
        %v7631 = vpack.c.b16 %v5005, %v5003
        %v7632 = vpack.c.b16 %v5006, %v5004
        %v7633 = vpack.c.b16 %v5009, %v5007
        %v7634 = vpack.c.b16 %v5010, %v5008
        %v7635 = vpack.c.b16 %v5013, %v5011
        %v7636 = vpack.c.b16 %v5014, %v5012
        %v7637 = vpack.c.b16 %v5017, %v5015
        %v7638 = vpack.c.b16 %v5018, %v5016
        %v7639 = vpack.c.b16 %v5021, %v5019
        %v7640 = vpack.c.b16 %v5022, %v5020
        %v7641 = vpack.c.b16 %v5025, %v5023
        %v7642 = vpack.c.b16 %v5026, %v5024
        %v7643 = vpack.c.b16 %v5029, %v5027
        %v7644 = vpack.c.b16 %v5030, %v5028
        %v7645 = vpack.c.b16 %v5033, %v5031
        %v7646 = vpack.c.b16 %v5034, %v5032
        %v7647 = vpack.c.b16 %v5037, %v5035
        %v7648 = vpack.c.b16 %v5038, %v5036
        %v7649 = vpack.c.b16 %v5041, %v5039
        %v7650 = vpack.c.b16 %v5042, %v5040
        %v7651 = vpack.c.b16 %v5045, %v5043
        %v7652 = vpack.c.b16 %v5046, %v5044
        %v7653 = vpack.c.b16 %v5049, %v5047
        %v7654 = vpack.c.b16 %v5050, %v5048
        %v7655 = vpack.c.b16 %v5053, %v5051
        %v7656 = vpack.c.b16 %v5054, %v5052
        %v7657 = vpack.c.b16 %v5057, %v5055
        %v7658 = vpack.c.b16 %v5058, %v5056
        %v7659 = vpack.c.b16 %v5061, %v5059
        %v7660 = vpack.c.b16 %v5062, %v5060
        %v7661 = vpack.c.b16 %v5065, %v5063
        %v7662 = vpack.c.b16 %v5066, %v5064
        %v7663 = vpack.c.b16 %v5069, %v5067
        %v7664 = vpack.c.b16 %v5070, %v5068
        %v7665 = vpack.c.b16 %v5073, %v5071
        %v7666 = vpack.c.b16 %v5074, %v5072
        %v7667 = vpack.c.b16 %v5077, %v5075
        %v7668 = vpack.c.b16 %v5078, %v5076
        %v7669 = vpack.c.b16 %v5081, %v5079
        %v7670 = vpack.c.b16 %v5082, %v5080
        %v7671 = vpack.c.b16 %v5085, %v5083
        %v7672 = vpack.c.b16 %v5086, %v5084
        %v7673 = vpack.c.b16 %v5089, %v5087
        %v7674 = vpack.c.b16 %v5090, %v5088
        %v7675 = vpack.c.b16 %v5093, %v5091
        %v7676 = vpack.c.b16 %v5094, %v5092
        %v7677 = vpack.c.b16 %v5097, %v5095
        %v7678 = vpack.c.b16 %v5098, %v5096
        %v7679 = vpack.c.b16 %v5101, %v5099
        %v7680 = vpack.c.b16 %v5102, %v5100
        %v7681 = vpack.c.b16 %v5105, %v5103
        %v7682 = vpack.c.b16 %v5106, %v5104
        %v7683 = vpack.c.b16 %v5109, %v5107
        %v7684 = vpack.c.b16 %v5110, %v5108
        %v7685 = vpack.c.b16 %v5113, %v5111
        %v7686 = vpack.c.b16 %v5114, %v5112
        %v7687 = vpack.c.b16 %v5117, %v5115
        %v7688 = vpack.c.b16 %v5118, %v5116
        %v7689 = vpack.c.b16 %v5121, %v5119
        %v7690 = vpack.c.b16 %v5122, %v5120
        %v7691 = vpack.c.b16 %v5125, %v5123
        %v7692 = vpack.c.b16 %v5126, %v5124
        %v7693 = vpack.c.b16 %v5129, %v5127
        %v7694 = vpack.c.b16 %v5130, %v5128
        %v7695 = vpack.c.b16 %v5133, %v5131
        %v7696 = vpack.c.b16 %v5134, %v5132
        %v7697 = vpack.c.b16 %v5137, %v5135
        %v7698 = vpack.c.b16 %v5138, %v5136
        %v7699 = vpack.c.b16 %v5141, %v5139
        %v7700 = vpack.c.b16 %v5142, %v5140
        %v7701 = vpack.c.b16 %v5145, %v5143
        %v7702 = vpack.c.b16 %v5146, %v5144
        %v7703 = vpack.c.b16 %v5149, %v5147
        %v7704 = vpack.c.b16 %v5150, %v5148
        %v7705 = vpack.c.b16 %v5153, %v5151
        %v7706 = vpack.c.b16 %v5154, %v5152
        %v7707 = vpack.c.b16 %v5157, %v5155
        %v7708 = vpack.c.b16 %v5158, %v5156
        %v7709 = vpack.c.b16 %v5161, %v5159
        %v7710 = vpack.c.b16 %v5162, %v5160
        %v7711 = vpack.c.b16 %v5165, %v5163
        %v7712 = vpack.c.b16 %v5166, %v5164
        %v7713 = vpack.c.b16 %v5169, %v5167
        %v7714 = vpack.c.b16 %v5170, %v5168
        %v7715 = vpack.c.b16 %v5173, %v5171
        %v7716 = vpack.c.b16 %v5174, %v5172
        %v7717 = vpack.c.b16 %v5177, %v5175
        %v7718 = vpack.c.b16 %v5178, %v5176
        %v7719 = vpack.c.b16 %v5181, %v5179
        %v7720 = vpack.c.b16 %v5182, %v5180
        %v7721 = vpack.c.b16 %v5185, %v5183
        %v7722 = vpack.c.b16 %v5186, %v5184
        %v7723 = vpack.c.b16 %v5189, %v5187
        %v7724 = vpack.c.b16 %v5190, %v5188
        %v7725 = vpack.c.b16 %v5193, %v5191
        %v7726 = vpack.c.b16 %v5194, %v5192
        %v7727 = vpack.c.b16 %v5197, %v5195
        %v7728 = vpack.c.b16 %v5198, %v5196
        %v7729 = vpack.c.b16 %v5201, %v5199
        %v7730 = vpack.c.b16 %v5202, %v5200
        %v7731 = vpack.c.b16 %v5205, %v5203
        %v7732 = vpack.c.b16 %v5206, %v5204
        %v7733 = vpack.c.b16 %v5209, %v5207
        %v7734 = vpack.c.b16 %v5210, %v5208
        %v7735 = vpack.c.b16 %v5213, %v5211
        %v7736 = vpack.c.b16 %v5214, %v5212
        %v7737 = vpack.c.b16 %v5217, %v5215
        %v7738 = vpack.c.b16 %v5218, %v5216
        %v7739 = vpack.c.b16 %v5221, %v5219
        %v7740 = vpack.c.b16 %v5222, %v5220
        %v7741 = vpack.c.b16 %v5225, %v5223
        %v7742 = vpack.c.b16 %v5226, %v5224
        %v7743 = vpack.c.b16 %v5229, %v5227
        %v7744 = vpack.c.b16 %v5230, %v5228
        %v7745 = vpack.c.b16 %v5233, %v5231
        %v7746 = vpack.c.b16 %v5234, %v5232
        %v7747 = vpack.c.b16 %v5237, %v5235
        %v7748 = vpack.c.b16 %v5238, %v5236
        %v7749 = vpack.c.b16 %v5241, %v5239
        %v7750 = vpack.c.b16 %v5242, %v5240
        %v7751 = vpack.c.b16 %v5245, %v5243
        %v7752 = vpack.c.b16 %v5246, %v5244
        %v7753 = vpack.c.b16 %v5249, %v5247
        %v7754 = vpack.c.b16 %v5250, %v5248
        %v7755 = vpack.c.b16 %v5253, %v5251
        %v7756 = vpack.c.b16 %v5254, %v5252
        %v7757 = vpack.c.b16 %v5257, %v5255
        %v7758 = vpack.c.b16 %v5258, %v5256
        %v7759 = vpack.c.b16 %v5261, %v5259
        %v7760 = vpack.c.b16 %v5262, %v5260
        %v7761 = vpack.c.b16 %v5265, %v5263
        %v7762 = vpack.c.b16 %v5266, %v5264
        %v7763 = vpack.c.b16 %v5269, %v5267
        %v7764 = vpack.c.b16 %v5270, %v5268
        %v7765 = vpack.c.b16 %v5273, %v5271
        %v7766 = vpack.c.b16 %v5274, %v5272
        %v7767 = vpack.c.b16 %v5277, %v5275
        %v7768 = vpack.c.b16 %v5278, %v5276
        %v7769 = vpack.c.b16 %v5281, %v5279
        %v7770 = vpack.c.b16 %v5282, %v5280
        %v7771 = vpack.c.b16 %v5285, %v5283
        %v7772 = vpack.c.b16 %v5286, %v5284
        %v7773 = vpack.c.b16 %v5289, %v5287
        %v7774 = vpack.c.b16 %v5290, %v5288
        %v7775 = vpack.c.b16 %v5293, %v5291
        %v7776 = vpack.c.b16 %v5294, %v5292
        %v7777 = vpack.c.b16 %v5297, %v5295
        %v7778 = vpack.c.b16 %v5298, %v5296
        %v7779 = vpack.c.b16 %v5301, %v5299
        %v7780 = vpack.c.b16 %v5302, %v5300
        %v7781 = vpack.c.b16 %v5305, %v5303
        %v7782 = vpack.c.b16 %v5306, %v5304
        %v7783 = vpack.c.b16 %v5309, %v5307
        %v7784 = vpack.c.b16 %v5310, %v5308
        %v7785 = vpack.c.b16 %v5313, %v5311
        %v7786 = vpack.c.b16 %v5314, %v5312
        %v7787 = vpack.c.b16 %v5317, %v5315
        %v7788 = vpack.c.b16 %v5318, %v5316
        %v7789 = vpack.c.b16 %v5321, %v5319
        %v7790 = vpack.c.b16 %v5322, %v5320
        %v7791 = vpack.c.b16 %v5325, %v5323
        %v7792 = vpack.c.b16 %v5326, %v5324
        %v7793 = vpack.c.b16 %v5329, %v5327
        %v7794 = vpack.c.b16 %v5330, %v5328
        %v7795 = vpack.c.b16 %v5333, %v5331
        %v7796 = vpack.c.b16 %v5334, %v5332
        %v7797 = vpack.c.b16 %v5337, %v5335
        %v7798 = vpack.c.b16 %v5338, %v5336
        %v7799 = vpack.c.b16 %v5341, %v5339
        %v7800 = vpack.c.b16 %v5342, %v5340
        %v7801 = vpack.c.b16 %v5345, %v5343
        %v7802 = vpack.c.b16 %v5346, %v5344
        %v7803 = vpack.c.b16 %v5349, %v5347
        %v7804 = vpack.c.b16 %v5350, %v5348
        %v7805 = vpack.c.b16 %v5353, %v5351
        %v7806 = vpack.c.b16 %v5354, %v5352
        %v7807 = vpack.c.b16 %v5357, %v5355
        %v7808 = vpack.c.b16 %v5358, %v5356
        %v7809 = vpack.c.b16 %v5361, %v5359
        %v7810 = vpack.c.b16 %v5362, %v5360
        %v7811 = vpack.c.b16 %v5365, %v5363
        %v7812 = vpack.c.b16 %v5366, %v5364
        %v7813 = vpack.c.b16 %v5369, %v5367
        %v7814 = vpack.c.b16 %v5370, %v5368
        %v7815 = vpack.c.b16 %v5373, %v5371
        %v7816 = vpack.c.b16 %v5374, %v5372
        %v7817 = vpack.c.b16 %v5377, %v5375
        %v7818 = vpack.c.b16 %v5378, %v5376
        %v7819 = vpack.c.b16 %v5381, %v5379
        %v7820 = vpack.c.b16 %v5382, %v5380
        %v7821 = vpack.c.b16 %v5385, %v5383
        %v7822 = vpack.c.b16 %v5386, %v5384
        %v7823 = vpack.c.b16 %v5389, %v5387
        %v7824 = vpack.c.b16 %v5390, %v5388
        %v7825 = vpack.c.b16 %v5393, %v5391
        %v7826 = vpack.c.b16 %v5394, %v5392
        %v7827 = vpack.c.b16 %v5397, %v5395
        %v7828 = vpack.c.b16 %v5398, %v5396
        %v7829 = vpack.c.b16 %v5401, %v5399
        %v7830 = vpack.c.b16 %v5402, %v5400
        %v7831 = vpack.c.b16 %v5405, %v5403
        %v7832 = vpack.c.b16 %v5406, %v5404
        %v7833 = vpack.c.b16 %v5409, %v5407
        %v7834 = vpack.c.b16 %v5410, %v5408
        %v7835 = vpack.c.b16 %v5413, %v5411
        %v7836 = vpack.c.b16 %v5414, %v5412
        %v7837 = vpack.c.b16 %v5417, %v5415
        %v7838 = vpack.c.b16 %v5418, %v5416
        %v7839 = vpack.c.b16 %v5421, %v5419
        %v7840 = vpack.c.b16 %v5422, %v5420
        %v7841 = vpack.c.b16 %v5425, %v5423
        %v7842 = vpack.c.b16 %v5426, %v5424
        %v7843 = vpack.c.b16 %v5429, %v5427
        %v7844 = vpack.c.b16 %v5430, %v5428
        %v7845 = vpack.c.b16 %v5433, %v5431
        %v7846 = vpack.c.b16 %v5434, %v5432
        %v7847 = vpack.c.b16 %v5437, %v5435
        %v7848 = vpack.c.b16 %v5438, %v5436
        %v7849 = vpack.c.b16 %v5441, %v5439
        %v7850 = vpack.c.b16 %v5442, %v5440
        %v7851 = vpack.c.b16 %v5445, %v5443
        %v7852 = vpack.c.b16 %v5446, %v5444
        %v7853 = vpack.c.b16 %v5449, %v5447
        %v7854 = vpack.c.b16 %v5450, %v5448
        %v7855 = vpack.c.b16 %v5453, %v5451
        %v7856 = vpack.c.b16 %v5454, %v5452
        %v7857 = vpack.c.b16 %v5457, %v5455
        %v7858 = vpack.c.b16 %v5458, %v5456
        %v7859 = vpack.c.b16 %v5461, %v5459
        %v7860 = vpack.c.b16 %v5462, %v5460
        %v7861 = vpack.c.b16 %v5465, %v5463
        %v7862 = vpack.c.b16 %v5466, %v5464
        %v7863 = vpack.c.b16 %v5469, %v5467
        %v7864 = vpack.c.b16 %v5470, %v5468
        %v7865 = vpack.c.b16 %v5473, %v5471
        %v7866 = vpack.c.b16 %v5474, %v5472
        %v7867 = vpack.c.b16 %v5477, %v5475
        %v7868 = vpack.c.b16 %v5478, %v5476
        %v7869 = vpack.c.b16 %v5481, %v5479
        %v7870 = vpack.c.b16 %v5482, %v5480
        %v7871 = vpack.c.b16 %v5485, %v5483
        %v7872 = vpack.c.b16 %v5486, %v5484
        %v7873 = vpack.c.b16 %v5489, %v5487
        %v7874 = vpack.c.b16 %v5490, %v5488
        %v7875 = vpack.c.b16 %v5493, %v5491
        %v7876 = vpack.c.b16 %v5494, %v5492
        %v7877 = vpack.c.b16 %v5497, %v5495
        %v7878 = vpack.c.b16 %v5498, %v5496
        %v7879 = vpack.c.b16 %v5501, %v5499
        %v7880 = vpack.c.b16 %v5502, %v5500
        %v7881 = vpack.c.b16 %v5505, %v5503
        %v7882 = vpack.c.b16 %v5506, %v5504
        %v7883 = vpack.c.b16 %v5509, %v5507
        %v7884 = vpack.c.b16 %v5510, %v5508
        %v7885 = vpack.c.b16 %v5513, %v5511
        %v7886 = vpack.c.b16 %v5514, %v5512
        %v7887 = vpack.c.b16 %v5517, %v5515
        %v7888 = vpack.c.b16 %v5518, %v5516
        %v7889 = vpack.c.b16 %v5521, %v5519
        %v7890 = vpack.c.b16 %v5522, %v5520
        %v7891 = vpack.c.b16 %v5525, %v5523
        %v7892 = vpack.c.b16 %v5526, %v5524
        %v7893 = vpack.c.b16 %v5529, %v5527
        %v7894 = vpack.c.b16 %v5530, %v5528
        %v7895 = vpack.c.b16 %v5533, %v5531
        %v7896 = vpack.c.b16 %v5534, %v5532
        %v7897 = vpack.c.b16 %v5537, %v5535
        %v7898 = vpack.c.b16 %v5538, %v5536
        %v7899 = vpack.c.b16 %v5541, %v5539
        %v7900 = vpack.c.b16 %v5542, %v5540
        %v7901 = vpack.c.b16 %v5545, %v5543
        %v7902 = vpack.c.b16 %v5546, %v5544
        %v7903 = vpack.c.b16 %v5549, %v5547
        %v7904 = vpack.c.b16 %v5550, %v5548
        %v7905 = vpack.c.b16 %v5553, %v5551
        %v7906 = vpack.c.b16 %v5554, %v5552
        %v7907 = vpack.c.b16 %v5557, %v5555
        %v7908 = vpack.c.b16 %v5558, %v5556
        %v7909 = vpack.c.b16 %v5561, %v5559
        %v7910 = vpack.c.b16 %v5562, %v5560
        %v7911 = vpack.c.b16 %v5565, %v5563
        %v7912 = vpack.c.b16 %v5566, %v5564
        %v7913 = vpack.c.b16 %v5569, %v5567
        %v7914 = vpack.c.b16 %v5570, %v5568
        %v7915 = vpack.c.b16 %v5573, %v5571
        %v7916 = vpack.c.b16 %v5574, %v5572
        %v7917 = vpack.c.b16 %v5577, %v5575
        %v7918 = vpack.c.b16 %v5578, %v5576
        %v7919 = vpack.c.b16 %v5581, %v5579
        %v7920 = vpack.c.b16 %v5582, %v5580
        %v7921 = vpack.c.b16 %v5585, %v5583
        %v7922 = vpack.c.b16 %v5586, %v5584
        %v7923 = vpack.c.b16 %v5589, %v5587
        %v7924 = vpack.c.b16 %v5590, %v5588
        %v7925 = vpack.c.b16 %v5593, %v5591
        %v7926 = vpack.c.b16 %v5594, %v5592
        %v7927 = vpack.c.b16 %v5597, %v5595
        %v7928 = vpack.c.b16 %v5598, %v5596
        %v7929 = vpack.c.b16 %v5601, %v5599
        %v7930 = vpack.c.b16 %v5602, %v5600
        %v7931 = vpack.c.b16 %v5605, %v5603
        %v7932 = vpack.c.b16 %v5606, %v5604
        %v7933 = vpack.c.b16 %v5609, %v5607
        %v7934 = vpack.c.b16 %v5610, %v5608
        %v7935 = vpack.c.b16 %v5613, %v5611
        %v7936 = vpack.c.b16 %v5614, %v5612
        %v7937 = vpack.c.b16 %v5617, %v5615
        %v7938 = vpack.c.b16 %v5618, %v5616
        %v7939 = vpack.c.b16 %v5621, %v5619
        %v7940 = vpack.c.b16 %v5622, %v5620
        %v7941 = vpack.c.b16 %v5625, %v5623
        %v7942 = vpack.c.b16 %v5626, %v5624
        %v7943 = vpack.c.b16 %v5629, %v5627
        %v7944 = vpack.c.b16 %v5630, %v5628
        %v7945 = vpack.c.b16 %v5633, %v5631
        %v7946 = vpack.c.b16 %v5634, %v5632
        %v7947 = vpack.c.b16 %v5637, %v5635
        %v7948 = vpack.c.b16 %v5638, %v5636
        %v7949 = vpack.c.b16 %v5641, %v5639
        %v7950 = vpack.c.b16 %v5642, %v5640
        %v7951 = vpack.c.b16 %v5645, %v5643
        %v7952 = vpack.c.b16 %v5646, %v5644
        %v7953 = vpack.c.b16 %v5649, %v5647
        %v7954 = vpack.c.b16 %v5650, %v5648
        %v7955 = vpack.c.b16 %v5653, %v5651
        %v7956 = vpack.c.b16 %v5654, %v5652
        %v7957 = vpack.c.b16 %v5657, %v5655
        %v7958 = vpack.c.b16 %v5658, %v5656
        %v7959 = vpack.c.b16 %v5661, %v5659
        %v7960 = vpack.c.b16 %v5662, %v5660
        %v7961 = vpack.c.b16 %v5665, %v5663
        %v7962 = vpack.c.b16 %v5666, %v5664
        %v7963 = vpack.c.b16 %v5669, %v5667
        %v7964 = vpack.c.b16 %v5670, %v5668
        %v7965 = vpack.c.b16 %v5673, %v5671
        %v7966 = vpack.c.b16 %v5674, %v5672
        %v7967 = vpack.c.b16 %v5677, %v5675
        %v7968 = vpack.c.b16 %v5678, %v5676
        %v7969 = vpack.c.b16 %v5681, %v5679
        %v7970 = vpack.c.b16 %v5682, %v5680
        %v7971 = vpack.c.b16 %v5685, %v5683
        %v7972 = vpack.c.b16 %v5686, %v5684
        %v7973 = vpack.c.b16 %v5689, %v5687
        %v7974 = vpack.c.b16 %v5690, %v5688
        %v7975 = vpack.c.b16 %v5693, %v5691
        %v7976 = vpack.c.b16 %v5694, %v5692
        %v7977 = vpack.c.b16 %v5697, %v5695
        %v7978 = vpack.c.b16 %v5698, %v5696
        %v7979 = vpack.c.b16 %v5701, %v5699
        %v7980 = vpack.c.b16 %v5702, %v5700
        %v7981 = vpack.c.b16 %v5705, %v5703
        %v7982 = vpack.c.b16 %v5706, %v5704
        %v7983 = vpack.c.b16 %v5709, %v5707
        %v7984 = vpack.c.b16 %v5710, %v5708
        %v7985 = vpack.c.b16 %v5713, %v5711
        %v7986 = vpack.c.b16 %v5714, %v5712
        %v7987 = vpack.c.b16 %v5717, %v5715
        %v7988 = vpack.c.b16 %v5718, %v5716
        %v7989 = vpack.c.b16 %v5721, %v5719
        %v7990 = vpack.c.b16 %v5722, %v5720
        %v7991 = vpack.c.b16 %v5725, %v5723
        %v7992 = vpack.c.b16 %v5726, %v5724
        %v7993 = vpack.c.b16 %v5729, %v5727
        %v7994 = vpack.c.b16 %v5730, %v5728
        %v7995 = vpack.c.b16 %v5733, %v5731
        %v7996 = vpack.c.b16 %v5734, %v5732
        %v7997 = vpack.c.b16 %v5737, %v5735
        %v7998 = vpack.c.b16 %v5738, %v5736
        %v7999 = vpack.c.b16 %v5741, %v5739
        %v8000 = vpack.c.b16 %v5742, %v5740
        %v8001 = vpack.c.b16 %v5745, %v5743
        %v8002 = vpack.c.b16 %v5746, %v5744
        %v8003 = vpack.c.b16 %v5749, %v5747
        %v8004 = vpack.c.b16 %v5750, %v5748
        %v8005 = vpack.c.b16 %v5753, %v5751
        %v8006 = vpack.c.b16 %v5754, %v5752
        %v8007 = vpack.c.b16 %v5757, %v5755
        %v8008 = vpack.c.b16 %v5758, %v5756
        %v8009 = vpack.c.b16 %v5761, %v5759
        %v8010 = vpack.c.b16 %v5762, %v5760
        %v8011 = vpack.c.b16 %v5765, %v5763
        %v8012 = vpack.c.b16 %v5766, %v5764
        %v8013 = vpack.c.b16 %v5769, %v5767
        %v8014 = vpack.c.b16 %v5770, %v5768
        %v8015 = vpack.c.b16 %v5773, %v5771
        %v8016 = vpack.c.b16 %v5774, %v5772
        %v8017 = vpack.c.b16 %v5777, %v5775
        %v8018 = vpack.c.b16 %v5778, %v5776
        %v8019 = vpack.c.b16 %v5781, %v5779
        %v8020 = vpack.c.b16 %v5782, %v5780
        %v8021 = vpack.c.b16 %v5785, %v5783
        %v8022 = vpack.c.b16 %v5786, %v5784
        %v8023 = vpack.c.b16 %v5789, %v5787
        %v8024 = vpack.c.b16 %v5790, %v5788
        %v8025 = vpack.c.b16 %v5793, %v5791
        %v8026 = vpack.c.b16 %v5794, %v5792
        %v8027 = vpack.c.b16 %v5797, %v5795
        %v8028 = vpack.c.b16 %v5798, %v5796
        %v8029 = vpack.c.b16 %v5801, %v5799
        %v8030 = vpack.c.b16 %v5802, %v5800
        %v8031 = vpack.c.b16 %v5805, %v5803
        %v8032 = vpack.c.b16 %v5806, %v5804
        %v8033 = vpack.c.b16 %v5809, %v5807
        %v8034 = vpack.c.b16 %v5810, %v5808
        %v8035 = vpack.c.b16 %v5813, %v5811
        %v8036 = vpack.c.b16 %v5814, %v5812
        %v8037 = vpack.c.b16 %v5817, %v5815
        %v8038 = vpack.c.b16 %v5818, %v5816
        %v8039 = vpack.c.b16 %v5821, %v5819
        %v8040 = vpack.c.b16 %v5822, %v5820
        %v8041 = vpack.c.b16 %v5825, %v5823
        %v8042 = vpack.c.b16 %v5826, %v5824
        %v8043 = vpack.c.b16 %v5829, %v5827
        %v8044 = vpack.c.b16 %v5830, %v5828
        %v8045 = vpack.c.b16 %v5833, %v5831
        %v8046 = vpack.c.b16 %v5834, %v5832
        %v8047 = vpack.c.b16 %v5837, %v5835
        %v8048 = vpack.c.b16 %v5838, %v5836
        %v8049 = vpack.c.b16 %v5841, %v5839
        %v8050 = vpack.c.b16 %v5842, %v5840
        %v8051 = vpack.c.b16 %v5845, %v5843
        %v8052 = vpack.c.b16 %v5846, %v5844
        %v8053 = vpack.c.b16 %v5849, %v5847
        %v8054 = vpack.c.b16 %v5850, %v5848
        %v8055 = vpack.c.b16 %v5853, %v5851
        %v8056 = vpack.c.b16 %v5854, %v5852
        %v8057 = vpack.c.b16 %v5857, %v5855
        %v8058 = vpack.c.b16 %v5858, %v5856
        %v8059 = vpack.c.b16 %v5861, %v5859
        %v8060 = vpack.c.b16 %v5862, %v5860
        %v8061 = vpack.c.b16 %v5865, %v5863
        %v8062 = vpack.c.b16 %v5866, %v5864
        %v8063 = vpack.c.b16 %v5869, %v5867
        %v8064 = vpack.c.b16 %v5870, %v5868
        %v8065 = vpack.c.b16 %v5873, %v5871
        %v8066 = vpack.c.b16 %v5874, %v5872
        %v8067 = vpack.c.b16 %v5877, %v5875
        %v8068 = vpack.c.b16 %v5878, %v5876
        %v8069 = vpack.c.b16 %v5881, %v5879
        %v8070 = vpack.c.b16 %v5882, %v5880
        %v8071 = vpack.c.b16 %v5885, %v5883
        %v8072 = vpack.c.b16 %v5886, %v5884
        %v8073 = vpack.c.b16 %v5889, %v5887
        %v8074 = vpack.c.b16 %v5890, %v5888
        %v8075 = vpack.c.b16 %v5893, %v5891
        %v8076 = vpack.c.b16 %v5894, %v5892
        %v8077 = vpack.c.b16 %v5897, %v5895
        %v8078 = vpack.c.b16 %v5898, %v5896
        %v8079 = vpack.c.b16 %v5901, %v5899
        %v8080 = vpack.c.b16 %v5902, %v5900
        %v8081 = vpack.c.b16 %v5905, %v5903
        %v8082 = vpack.c.b16 %v5906, %v5904
        %v8083 = vpack.c.b16 %v5909, %v5907
        %v8084 = vpack.c.b16 %v5910, %v5908
        %v8085 = vpack.c.b16 %v5913, %v5911
        %v8086 = vpack.c.b16 %v5914, %v5912
        %v8087 = vpack.c.b16 %v5917, %v5915
        %v8088 = vpack.c.b16 %v5918, %v5916
        %v8089 = vpack.c.b16 %v5921, %v5919
        %v8090 = vpack.c.b16 %v5922, %v5920
        %v8091 = vpack.c.b16 %v5925, %v5923
        %v8092 = vpack.c.b16 %v5926, %v5924
        %v8093 = vpack.c.b16 %v5929, %v5927
        %v8094 = vpack.c.b16 %v5930, %v5928
        %v8095 = vpack.c.b16 %v5933, %v5931
        %v8096 = vpack.c.b16 %v5934, %v5932
        %v8097 = vpack.c.b16 %v5937, %v5935
        %v8098 = vpack.c.b16 %v5938, %v5936
        %v8099 = vpack.c.b16 %v5941, %v5939
        %v8100 = vpack.c.b16 %v5942, %v5940
        %v8101 = vpack.c.b16 %v5945, %v5943
        %v8102 = vpack.c.b16 %v5946, %v5944
        %v8103 = vpack.c.b16 %v5949, %v5947
        %v8104 = vpack.c.b16 %v5950, %v5948
        %v8105 = vpack.c.b16 %v5953, %v5951
        %v8106 = vpack.c.b16 %v5954, %v5952
        %v8107 = vpack.c.b16 %v5957, %v5955
        %v8108 = vpack.c.b16 %v5958, %v5956
        %v8109 = vpack.c.b16 %v5961, %v5959
        %v8110 = vpack.c.b16 %v5962, %v5960
        %v8111 = vpack.c.b16 %v5965, %v5963
        %v8112 = vpack.c.b16 %v5966, %v5964
        %v8113 = vpack.c.b16 %v5969, %v5967
        %v8114 = vpack.c.b16 %v5970, %v5968
        %v8115 = vpack.c.b16 %v5973, %v5971
        %v8116 = vpack.c.b16 %v5974, %v5972
        %v8117 = vpack.c.b16 %v5977, %v5975
        %v8118 = vpack.c.b16 %v5978, %v5976
        %v8119 = vpack.c.b16 %v5981, %v5979
        %v8120 = vpack.c.b16 %v5982, %v5980
        %v8121 = vpack.c.b16 %v5985, %v5983
        %v8122 = vpack.c.b16 %v5986, %v5984
        %v8123 = vpack.c.b16 %v5989, %v5987
        %v8124 = vpack.c.b16 %v5990, %v5988
        %v8125 = vpack.c.b16 %v5993, %v5991
        %v8126 = vpack.c.b16 %v5994, %v5992
        %v8127 = vpack.c.b16 %v5997, %v5995
        %v8128 = vpack.c.b16 %v5998, %v5996
        %v8129 = vpack.c.b16 %v6001, %v5999
        %v8130 = vpack.c.b16 %v6002, %v6000
        %v8131 = vpack.c.b16 %v6005, %v6003
        %v8132 = vpack.c.b16 %v6006, %v6004
        %v8133 = vpack.c.b16 %v6009, %v6007
        %v8134 = vpack.c.b16 %v6010, %v6008
        %v8135 = vpack.c.b16 %v6013, %v6011
        %v8136 = vpack.c.b16 %v6014, %v6012
        %v8137 = vpack.c.b16 %v6017, %v6015
        %v8138 = vpack.c.b16 %v6018, %v6016
        %v8139 = vpack.c.b16 %v6021, %v6019
        %v8140 = vpack.c.b16 %v6022, %v6020
        %v8141 = vpack.c.b16 %v6025, %v6023
        %v8142 = vpack.c.b16 %v6026, %v6024
        %v8143 = vpack.c.b16 %v6029, %v6027
        %v8144 = vpack.c.b16 %v6030, %v6028
        %v8145 = vpack.c.b16 %v6033, %v6031
        %v8146 = vpack.c.b16 %v6034, %v6032
        %v8147 = vpack.c.b16 %v6037, %v6035
        %v8148 = vpack.c.b16 %v6038, %v6036
        %v8149 = vpack.c.b16 %v6041, %v6039
        %v8150 = vpack.c.b16 %v6042, %v6040
        %v8151 = vpack.c.b16 %v6045, %v6043
        %v8152 = vpack.c.b16 %v6046, %v6044
        %v8153 = vpack.c.b16 %v6049, %v6047
        %v8154 = vpack.c.b16 %v6050, %v6048
        %v8155 = vpack.c.b16 %v6053, %v6051
        %v8156 = vpack.c.b16 %v6054, %v6052
        %v8157 = vpack.c.b16 %v6057, %v6055
        %v8158 = vpack.c.b16 %v6058, %v6056
        %v8159 = vpack.c.b16 %v6061, %v6059
        %v8160 = vpack.c.b16 %v6062, %v6060
        %v8161 = vpack.c.b16 %v6065, %v6063
        %v8162 = vpack.c.b16 %v6066, %v6064
        %v8163 = vpack.c.b16 %v6069, %v6067
        %v8164 = vpack.c.b16 %v6070, %v6068
        %v8165 = vpack.c.b16 %v6073, %v6071
        %v8166 = vpack.c.b16 %v6074, %v6072
        %v8167 = vpack.c.b16 %v6077, %v6075
        %v8168 = vpack.c.b16 %v6078, %v6076
        %v8169 = vpack.c.b16 %v6081, %v6079
        %v8170 = vpack.c.b16 %v6082, %v6080
        %v8171 = vpack.c.b16 %v6085, %v6083
        %v8172 = vpack.c.b16 %v6086, %v6084
        %v8173 = vpack.c.b16 %v6089, %v6087
        %v8174 = vpack.c.b16 %v6090, %v6088
        %v8175 = vpack.c.b16 %v6093, %v6091
        %v8176 = vpack.c.b16 %v6094, %v6092
        %v8177 = vpack.c.b16 %v6097, %v6095
        %v8178 = vpack.c.b16 %v6098, %v6096
        %v8179 = vpack.c.b16 %v6101, %v6099
        %v8180 = vpack.c.b16 %v6102, %v6100
        %v8181 = vpack.c.b16 %v6105, %v6103
        %v8182 = vpack.c.b16 %v6106, %v6104
        %v8183 = vpack.c.b16 %v6109, %v6107
        %v8184 = vpack.c.b16 %v6110, %v6108
        %v8185 = vpack.c.b16 %v6113, %v6111
        %v8186 = vpack.c.b16 %v6114, %v6112
        %v8187 = vpack.c.b16 %v6117, %v6115
        %v8188 = vpack.c.b16 %v6118, %v6116
        %v8189 = vpack.c.b16 %v6121, %v6119
        %v8190 = vpack.c.b16 %v6122, %v6120
        %v8191 = vpack.c.b16 %v6125, %v6123
        %v8192 = vpack.c.b16 %v6126, %v6124
        %v8193 = vpack.c.b16 %v6129, %v6127
        %v8194 = vpack.c.b16 %v6130, %v6128
        %v8195 = vpack.c.b16 %v6133, %v6131
        %v8196 = vpack.c.b16 %v6134, %v6132
        %v8197 = vpack.c.b16 %v6137, %v6135
        %v8198 = vpack.c.b16 %v6138, %v6136
        %v8199 = vpack.c.b16 %v6141, %v6139
        %v8200 = vpack.c.b16 %v6142, %v6140
        %v8201 = vpack.c.b16 %v6145, %v6143
        %v8202 = vpack.c.b16 %v6146, %v6144
        %v8203 = vpack.c.b16 %v6149, %v6147
        %v8204 = vpack.c.b16 %v6150, %v6148
        %v8205 = vpack.c.b16 %v6153, %v6151
        %v8206 = vpack.c.b16 %v6154, %v6152
        %v8207 = vpack.c.b16 %v6157, %v6155
        %v8208 = vpack.c.b16 %v6158, %v6156
        %v8209 = vpack.c.b16 %v6161, %v6159
        %v8210 = vpack.c.b16 %v6162, %v6160
        %v8211 = vpack.c.b16 %v6165, %v6163
        %v8212 = vpack.c.b16 %v6166, %v6164
        %v8213 = vpack.c.b16 %v6169, %v6167
        %v8214 = vpack.c.b16 %v6170, %v6168
        %v8215 = vpack.c.b16 %v6173, %v6171
        %v8216 = vpack.c.b16 %v6174, %v6172
        %v8217 = vpack.c.b16 %v6177, %v6175
        %v8218 = vpack.c.b16 %v6178, %v6176
        %v8219 = vpack.c.b16 %v6181, %v6179
        %v8220 = vpack.c.b16 %v6182, %v6180
        %v8221 = vpack.c.b16 %v6185, %v6183
        %v8222 = vpack.c.b16 %v6186, %v6184
        %v8223 = vpack.c.b16 %v6189, %v6187
        %v8224 = vpack.c.b16 %v6190, %v6188
        %v8225 = vpack.c.b16 %v6193, %v6191
        %v8226 = vpack.c.b16 %v6194, %v6192
        %v8227 = vpack.c.b16 %v6197, %v6195
        %v8228 = vpack.c.b16 %v6198, %v6196
        %v8229 = vpack.c.b16 %v6201, %v6199
        %v8230 = vpack.c.b16 %v6202, %v6200
        %v8231 = vpack.c.b16 %v6205, %v6203
        %v8232 = vpack.c.b16 %v6206, %v6204
        %v8233 = vpack.c.b16 %v6209, %v6207
        %v8234 = vpack.c.b16 %v6210, %v6208
        %v8235 = vpack.c.b16 %v6213, %v6211
        %v8236 = vpack.c.b16 %v6214, %v6212
        %v8237 = vpack.c.b16 %v6217, %v6215
        %v8238 = vpack.c.b16 %v6218, %v6216
        %v8239 = vpack.c.b16 %v6221, %v6219
        %v8240 = vpack.c.b16 %v6222, %v6220
        %v8241 = vpack.c.b16 %v6225, %v6223
        %v8242 = vpack.c.b16 %v6226, %v6224
        %v8243 = vpack.c.b16 %v6229, %v6227
        %v8244 = vpack.c.b16 %v6230, %v6228
        %v8245 = vpack.c.b16 %v6233, %v6231
        %v8246 = vpack.c.b16 %v6234, %v6232
        %v8247 = vpack.c.b16 %v6237, %v6235
        %v8248 = vpack.c.b16 %v6238, %v6236
        %v8249 = vpack.c.b16 %v6241, %v6239
        %v8250 = vpack.c.b16 %v6242, %v6240
        %v8251 = vpack.c.b16 %v6245, %v6243
        %v8252 = vpack.c.b16 %v6246, %v6244
        %v8253 = vpack.c.b16 %v6249, %v6247
        %v8254 = vpack.c.b16 %v6250, %v6248
        %v8255 = vpack.c.b16 %v6253, %v6251
        %v8256 = vpack.c.b16 %v6254, %v6252
        %v8257 = vpack.c.b16 %v6257, %v6255
        %v8258 = vpack.c.b16 %v6258, %v6256
        %v8259 = vpack.c.b16 %v6261, %v6259
        %v8260 = vpack.c.b16 %v6262, %v6260
        %v8261 = vpack.c.b16 %v6265, %v6263
        %v8262 = vpack.c.b16 %v6266, %v6264
        %v8263 = vpack.c.b16 %v6269, %v6267
        %v8264 = vpack.c.b16 %v6270, %v6268
        %v8265 = vpack.c.b16 %v6273, %v6271
        %v8266 = vpack.c.b16 %v6274, %v6272
        %v8267 = vpack.c.b16 %v6277, %v6275
        %v8268 = vpack.c.b16 %v6278, %v6276
        %v8269 = vpack.c.b16 %v6281, %v6279
        %v8270 = vpack.c.b16 %v6282, %v6280
        %v8271 = vpack.c.b16 %v6285, %v6283
        %v8272 = vpack.c.b16 %v6286, %v6284
        %v8273 = vpack.c.b16 %v6289, %v6287
        %v8274 = vpack.c.b16 %v6290, %v6288
        %v8275 = vpack.c.b16 %v6293, %v6291
        %v8276 = vpack.c.b16 %v6294, %v6292
        %v8277 = vpack.c.b16 %v6297, %v6295
        %v8278 = vpack.c.b16 %v6298, %v6296
        %v8279 = vpack.c.b16 %v6301, %v6299
        %v8280 = vpack.c.b16 %v6302, %v6300
        %v8281 = vpack.c.b16 %v6305, %v6303
        %v8282 = vpack.c.b16 %v6306, %v6304
        %v8283 = vpack.c.b16 %v6309, %v6307
        %v8284 = vpack.c.b16 %v6310, %v6308
        %v8285 = vpack.c.b16 %v6313, %v6311
        %v8286 = vpack.c.b16 %v6314, %v6312
        %v8287 = vpack.c.b16 %v6317, %v6315
        %v8288 = vpack.c.b16 %v6318, %v6316
        %v8289 = vpack.c.b16 %v6321, %v6319
        %v8290 = vpack.c.b16 %v6322, %v6320
        %v8291 = vpack.c.b16 %v6325, %v6323
        %v8292 = vpack.c.b16 %v6326, %v6324
        %v8293 = vpack.c.b16 %v6329, %v6327
        %v8294 = vpack.c.b16 %v6330, %v6328
        %v8295 = vpack.c.b16 %v6333, %v6331
        %v8296 = vpack.c.b16 %v6334, %v6332
        %v8297 = vpack.c.b16 %v6337, %v6335
        %v8298 = vpack.c.b16 %v6338, %v6336
        %v8299 = vpack.c.b16 %v6341, %v6339
        %v8300 = vpack.c.b16 %v6342, %v6340
        %v8301 = vpack.c.b16 %v6345, %v6343
        %v8302 = vpack.c.b16 %v6346, %v6344
        %v8303 = vpack.c.b16 %v6349, %v6347
        %v8304 = vpack.c.b16 %v6350, %v6348
        %v8305 = vpack.c.b16 %v6353, %v6351
        %v8306 = vpack.c.b16 %v6354, %v6352
        %v8307 = vpack.c.b16 %v6357, %v6355
        %v8308 = vpack.c.b16 %v6358, %v6356
        %v8309 = vpack.c.b16 %v6361, %v6359
        %v8310 = vpack.c.b16 %v6362, %v6360
        %v8311 = vpack.c.b16 %v6365, %v6363
        %v8312 = vpack.c.b16 %v6366, %v6364
        %v8313 = vpack.c.b16 %v6369, %v6367
        %v8314 = vpack.c.b16 %v6370, %v6368
        %v8315 = vpack.c.b16 %v6373, %v6371
        %v8316 = vpack.c.b16 %v6374, %v6372
        %v8317 = vpack.c.b16 %v6377, %v6375
        %v8318 = vpack.c.b16 %v6378, %v6376
        %v8319 = vpack.c.b16 %v6381, %v6379
        %v8320 = vpack.c.b16 %v6382, %v6380
        %v8321 = vpack.c.b16 %v6385, %v6383
        %v8322 = vpack.c.b16 %v6386, %v6384
        %v8323 = vpack.c.b16 %v6389, %v6387
        %v8324 = vpack.c.b16 %v6390, %v6388
        %v8325 = vpack.c.b16 %v6393, %v6391
        %v8326 = vpack.c.b16 %v6394, %v6392
        %v8327 = vpack.c.b16 %v6397, %v6395
        %v8328 = vpack.c.b16 %v6398, %v6396
        %v8329 = vpack.c.b16 %v6401, %v6399
        %v8330 = vpack.c.b16 %v6402, %v6400
        %v8331 = vpack.c.b16 %v6405, %v6403
        %v8332 = vpack.c.b16 %v6406, %v6404
        %v8333 = vpack.c.b16 %v6409, %v6407
        %v8334 = vpack.c.b16 %v6410, %v6408
        %v8335 = vpack.c.b16 %v6413, %v6411
        %v8336 = vpack.c.b16 %v6414, %v6412
        %v8337 = vpack.c.b16 %v6417, %v6415
        %v8338 = vpack.c.b16 %v6418, %v6416
        %v8339 = vpack.c.b16 %v6421, %v6419
        %v8340 = vpack.c.b16 %v6422, %v6420
        %v8341 = vpack.c.b16 %v6425, %v6423
        %v8342 = vpack.c.b16 %v6426, %v6424
        %v8343 = vpack.c.b16 %v6429, %v6427
        %v8344 = vpack.c.b16 %v6430, %v6428
        %v8345 = vpack.c.b16 %v6433, %v6431
        %v8346 = vpack.c.b16 %v6434, %v6432
        %v8347 = vpack.c.b16 %v6437, %v6435
        %v8348 = vpack.c.b16 %v6438, %v6436
        %v8349 = vpack.c.b16 %v6441, %v6439
        %v8350 = vpack.c.b16 %v6442, %v6440
        %v8351 = vpack.c.b16 %v6445, %v6443
        %v8352 = vpack.c.b16 %v6446, %v6444
        %v8353 = vpack.c.b16 %v6449, %v6447
        %v8354 = vpack.c.b16 %v6450, %v6448
        %v8355 = vpack.c.b16 %v6453, %v6451
        %v8356 = vpack.c.b16 %v6454, %v6452
        %v8357 = vpack.c.b16 %v6457, %v6455
        %v8358 = vpack.c.b16 %v6458, %v6456
        %v8359 = vpack.c.b16 %v6461, %v6459
        %v8360 = vpack.c.b16 %v6462, %v6460
        %v8361 = vpack.c.b16 %v6465, %v6463
        %v8362 = vpack.c.b16 %v6466, %v6464
        %v8363 = vpack.c.b16 %v6469, %v6467
        %v8364 = vpack.c.b16 %v6470, %v6468
        %v8365 = vpack.c.b16 %v6473, %v6471
        %v8366 = vpack.c.b16 %v6474, %v6472
        %v8367 = vpack.c.b16 %v6477, %v6475
        %v8368 = vpack.c.b16 %v6478, %v6476
        %v8369 = vpack.c.b16 %v6481, %v6479
        %v8370 = vpack.c.b16 %v6482, %v6480
        %v8371 = vpack.c.b16 %v6485, %v6483
        %v8372 = vpack.c.b16 %v6486, %v6484
        %v8373 = vpack.c.b16 %v6489, %v6487
        %v8374 = vpack.c.b16 %v6490, %v6488
        %v8375 = vpack.c.b16 %v6493, %v6491
        %v8376 = vpack.c.b16 %v6494, %v6492
        %v8377 = vpack.c.b16 %v6497, %v6495
        %v8378 = vpack.c.b16 %v6498, %v6496
        %v8379 = vpack.c.b16 %v6501, %v6499
        %v8380 = vpack.c.b16 %v6502, %v6500
        %v8381 = vpack.c.b16 %v6505, %v6503
        %v8382 = vpack.c.b16 %v6506, %v6504
        %v8383 = vpack.c.b16 %v6509, %v6507
        %v8384 = vpack.c.b16 %v6510, %v6508
        %v8385 = vpack.c.b16 %v6513, %v6511
        %v8386 = vpack.c.b16 %v6514, %v6512
        %v8387 = vpack.c.b16 %v6517, %v6515
        %v8388 = vpack.c.b16 %v6518, %v6516
        %v8389 = vpack.c.b16 %v6521, %v6519
        %v8390 = vpack.c.b16 %v6522, %v6520
        %v8391 = vpack.c.b16 %v6525, %v6523
        %v8392 = vpack.c.b16 %v6526, %v6524
        %v8393 = vpack.c.b16 %v6529, %v6527
        %v8394 = vpack.c.b16 %v6530, %v6528
        %v8395 = vpack.c.b16 %v6533, %v6531
        %v8396 = vpack.c.b16 %v6534, %v6532
        %v8397 = vpack.c.b16 %v6537, %v6535
        %v8398 = vpack.c.b16 %v6538, %v6536
        %v8399 = vpack.c.b16 %v6541, %v6539
        %v8400 = vpack.c.b16 %v6542, %v6540
        %v8401 = vpack.c.b16 %v6545, %v6543
        %v8402 = vpack.c.b16 %v6546, %v6544
        %v8403 = vpack.c.b16 %v6549, %v6547
        %v8404 = vpack.c.b16 %v6550, %v6548
        %v8405 = vpack.c.b16 %v6553, %v6551
        %v8406 = vpack.c.b16 %v6554, %v6552
        %v8407 = vpack.c.b16 %v6557, %v6555
        %v8408 = vpack.c.b16 %v6558, %v6556
        %v8409 = vpack.c.b16 %v6561, %v6559
        %v8410 = vpack.c.b16 %v6562, %v6560
        %v8411 = vpack.c.b16 %v6565, %v6563
        %v8412 = vpack.c.b16 %v6566, %v6564
        %v8413 = vpack.c.b16 %v6569, %v6567
        %v8414 = vpack.c.b16 %v6570, %v6568
        %v8415 = vpack.c.b16 %v6573, %v6571
        %v8416 = vpack.c.b16 %v6574, %v6572
        %v8417 = vpack.c.b16 %v6577, %v6575
        %v8418 = vpack.c.b16 %v6578, %v6576
        %v8419 = vpack.c.b16 %v6581, %v6579
        %v8420 = vpack.c.b16 %v6582, %v6580
        %v8421 = vpack.c.b16 %v6585, %v6583
        %v8422 = vpack.c.b16 %v6586, %v6584
        %v8423 = vpack.c.b16 %v6589, %v6587
        %v8424 = vpack.c.b16 %v6590, %v6588
        %v8425 = vpack.c.b16 %v6593, %v6591
        %v8426 = vpack.c.b16 %v6594, %v6592
        %v8427 = vpack.c.b16 %v6597, %v6595
        %v8428 = vpack.c.b16 %v6598, %v6596
        %v8429 = vpack.c.b16 %v6601, %v6599
        %v8430 = vpack.c.b16 %v6602, %v6600
        %v8431 = vpack.c.b16 %v6605, %v6603
        %v8432 = vpack.c.b16 %v6606, %v6604
        %v8433 = vpack.c.b16 %v6609, %v6607
        %v8434 = vpack.c.b16 %v6610, %v6608
        %v8435 = vpack.c.b16 %v6613, %v6611
        %v8436 = vpack.c.b16 %v6614, %v6612
        %v8437 = vpack.c.b16 %v6617, %v6615
        %v8438 = vpack.c.b16 %v6618, %v6616
        %v8439 = vpack.c.b16 %v6621, %v6619
        %v8440 = vpack.c.b16 %v6622, %v6620
        %v8441 = vpack.c.b16 %v6625, %v6623
        %v8442 = vpack.c.b16 %v6626, %v6624
        %v8443 = vpack.c.b16 %v6629, %v6627
        %v8444 = vpack.c.b16 %v6630, %v6628
        %v8445 = vpack.c.b16 %v6633, %v6631
        %v8446 = vpack.c.b16 %v6634, %v6632
        %v8447 = vpack.c.b16 %v6637, %v6635
        %v8448 = vpack.c.b16 %v6638, %v6636
        %v8449 = vpack.c.b16 %v6641, %v6639
        %v8450 = vpack.c.b16 %v6642, %v6640
        %v8451 = vpack.c.b16 %v6645, %v6643
        %v8452 = vpack.c.b16 %v6646, %v6644
        %v8453 = vpack.c.b16 %v6649, %v6647
        %v8454 = vpack.c.b16 %v6650, %v6648
        %v8455 = vpack.c.b16 %v6653, %v6651
        %v8456 = vpack.c.b16 %v6654, %v6652
        %v8457 = vpack.c.b16 %v6657, %v6655
        %v8458 = vpack.c.b16 %v6658, %v6656
        %v8459 = vpack.c.b16 %v6661, %v6659
        %v8460 = vpack.c.b16 %v6662, %v6660
        %v8461 = vpack.c.b16 %v6665, %v6663
        %v8462 = vpack.c.b16 %v6666, %v6664
        %v8463 = vpack.c.b16 %v6669, %v6667
        %v8464 = vpack.c.b16 %v6670, %v6668
        %v8465 = vpack.c.b16 %v6673, %v6671
        %v8466 = vpack.c.b16 %v6674, %v6672
        %v8467 = vpack.c.b16 %v6677, %v6675
        %v8468 = vpack.c.b16 %v6678, %v6676
        %v8469 = vpack.c.b16 %v6681, %v6679
        %v8470 = vpack.c.b16 %v6682, %v6680
        %v8471 = vpack.c.b16 %v6685, %v6683
        %v8472 = vpack.c.b16 %v6686, %v6684
        %v8473 = vpack.c.b16 %v6689, %v6687
        %v8474 = vpack.c.b16 %v6690, %v6688
        %v8475 = vpack.c.b16 %v6693, %v6691
        %v8476 = vpack.c.b16 %v6694, %v6692
        %v8477 = vpack.c.b16 %v6697, %v6695
        %v8478 = vpack.c.b16 %v6698, %v6696
        %v8479 = vpack.c.b16 %v6701, %v6699
        %v8480 = vpack.c.b16 %v6702, %v6700
        %v8481 = vpack.c.b16 %v6705, %v6703
        %v8482 = vpack.c.b16 %v6706, %v6704
        %v8483 = vpack.c.b16 %v6709, %v6707
        %v8484 = vpack.c.b16 %v6710, %v6708
        %v8485 = vpack.c.b16 %v6713, %v6711
        %v8486 = vpack.c.b16 %v6714, %v6712
        %v8487 = vpack.c.b16 %v6717, %v6715
        %v8488 = vpack.c.b16 %v6718, %v6716
        %v8489 = vpack.c.b16 %v6721, %v6719
        %v8490 = vpack.c.b16 %v6722, %v6720
        %v8491 = vpack.c.b16 %v6725, %v6723
        %v8492 = vpack.c.b16 %v6726, %v6724
        %v8493 = vpack.c.b16 %v6729, %v6727
        %v8494 = vpack.c.b16 %v6730, %v6728
        %v8495 = vpack.c.b16 %v6733, %v6731
        %v8496 = vpack.c.b16 %v6734, %v6732
        %v8497 = vpack.c.b16 %v6737, %v6735
        %v8498 = vpack.c.b16 %v6738, %v6736
        %v8499 = vpack.c.b16 %v6741, %v6739
        %v8500 = vpack.c.b16 %v6742, %v6740
        %v8501 = vpack.c.b16 %v6745, %v6743
        %v8502 = vpack.c.b16 %v6746, %v6744
        %v8503 = vpack.c.b16 %v6749, %v6747
        %v8504 = vpack.c.b16 %v6750, %v6748
        %v8505 = vpack.c.b16 %v6753, %v6751
        %v8506 = vpack.c.b16 %v6754, %v6752
        %v8507 = vpack.c.b16 %v6757, %v6755
        %v8508 = vpack.c.b16 %v6758, %v6756
        %v8509 = vpack.c.b16 %v6761, %v6759
        %v8510 = vpack.c.b16 %v6762, %v6760
        %v8511 = vpack.c.b16 %v6765, %v6763
        %v8512 = vpack.c.b16 %v6766, %v6764
        %v8513 = vpack.c.b16 %v6769, %v6767
        %v8514 = vpack.c.b16 %v6770, %v6768
        %v8515 = vpack.c.b16 %v6773, %v6771
        %v8516 = vpack.c.b16 %v6774, %v6772
        %v8517 = vpack.c.b16 %v6777, %v6775
        %v8518 = vpack.c.b16 %v6778, %v6776
        %v8519 = vpack.c.b16 %v6781, %v6779
        %v8520 = vpack.c.b16 %v6782, %v6780
        %v8521 = vpack.c.b16 %v6785, %v6783
        %v8522 = vpack.c.b16 %v6786, %v6784
        %v8523 = vpack.c.b16 %v6789, %v6787
        %v8524 = vpack.c.b16 %v6790, %v6788
        %v8525 = vpack.c.b16 %v6793, %v6791
        %v8526 = vpack.c.b16 %v6794, %v6792
        %v8527 = vpack.c.b16 %v6797, %v6795
        %v8528 = vpack.c.b16 %v6798, %v6796
        %v8529 = vpack.c.b16 %v6801, %v6799
        %v8530 = vpack.c.b16 %v6802, %v6800
        %v8531 = vpack.c.b16 %v6805, %v6803
        %v8532 = vpack.c.b16 %v6806, %v6804
        %v8533 = vpack.c.b16 %v6809, %v6807
        %v8534 = vpack.c.b16 %v6810, %v6808
        %v8535 = vpack.c.b16 %v6813, %v6811
        %v8536 = vpack.c.b16 %v6814, %v6812
        %v8537 = vpack.c.b16 %v6817, %v6815
        %v8538 = vpack.c.b16 %v6818, %v6816
        %v8539 = vpack.c.b16 %v6821, %v6819
        %v8540 = vpack.c.b16 %v6822, %v6820
        %v8541 = vpack.c.b16 %v6825, %v6823
        %v8542 = vpack.c.b16 %v6826, %v6824
        %v8543 = vpack.c.b16 %v6829, %v6827
        %v8544 = vpack.c.b16 %v6830, %v6828
        %v8545 = vpack.c.b16 %v6833, %v6831
        %v8546 = vpack.c.b16 %v6834, %v6832
        %v8547 = vpack.c.b16 %v6837, %v6835
        %v8548 = vpack.c.b16 %v6838, %v6836
        %v8549 = vpack.c.b16 %v6841, %v6839
        %v8550 = vpack.c.b16 %v6842, %v6840
        %v8551 = vpack.c.b16 %v6845, %v6843
        %v8552 = vpack.c.b16 %v6846, %v6844
        %v8553 = vpack.c.b16 %v6849, %v6847
        %v8554 = vpack.c.b16 %v6850, %v6848
        %v8555 = vpack.c.b16 %v6853, %v6851
        %v8556 = vpack.c.b16 %v6854, %v6852
        %v8557 = vpack.c.b16 %v6857, %v6855
        %v8558 = vpack.c.b16 %v6858, %v6856
        %v8559 = vpack.c.b16 %v6861, %v6859
        %v8560 = vpack.c.b16 %v6862, %v6860
        %v8561 = vpack.c.b16 %v6865, %v6863
        %v8562 = vpack.c.b16 %v6866, %v6864
        %v8563 = vpack.c.b16 %v6869, %v6867
        %v8564 = vpack.c.b16 %v6870, %v6868
        %v8565 = vpack.c.b16 %v6873, %v6871
        %v8566 = vpack.c.b16 %v6874, %v6872
        %v8567 = vpack.c.b16 %v6877, %v6875
        %v8568 = vpack.c.b16 %v6878, %v6876
        %v8569 = vpack.c.b16 %v6881, %v6879
        %v8570 = vpack.c.b16 %v6882, %v6880
        %v8571 = vpack.c.b16 %v6885, %v6883
        %v8572 = vpack.c.b16 %v6886, %v6884
        %v8573 = vpack.c.b16 %v6889, %v6887
        %v8574 = vpack.c.b16 %v6890, %v6888
        %v8575 = vpack.c.b16 %v6893, %v6891
        %v8576 = vpack.c.b16 %v6894, %v6892
        %v8577 = vpack.c.b16 %v6897, %v6895
        %v8578 = vpack.c.b16 %v6898, %v6896
        %v8579 = vpack.c.b16 %v6901, %v6899
        %v8580 = vpack.c.b16 %v6902, %v6900
        %v8581 = vpack.c.b16 %v6905, %v6903
        %v8582 = vpack.c.b16 %v6906, %v6904
        %v8583 = vpack.c.b16 %v6909, %v6907
        %v8584 = vpack.c.b16 %v6910, %v6908
        %v8585 = vpack.c.b16 %v6913, %v6911
        %v8586 = vpack.c.b16 %v6914, %v6912
        %v8587 = vpack.c.b16 %v6917, %v6915
        %v8588 = vpack.c.b16 %v6918, %v6916
        %v8589 = vpack.c.b16 %v6921, %v6919
        %v8590 = vpack.c.b16 %v6922, %v6920
        %v8591 = vpack.c.b16 %v6925, %v6923
        %v8592 = vpack.c.b16 %v6926, %v6924
        %v8593 = vpack.c.b16 %v6929, %v6927
        %v8594 = vpack.c.b16 %v6930, %v6928
        %v8595 = vpack.c.b16 %v6933, %v6931
        %v8596 = vpack.c.b16 %v6934, %v6932
        %v8597 = vpack.c.b16 %v6937, %v6935
        %v8598 = vpack.c.b16 %v6938, %v6936
        %v8599 = vpack.c.b16 %v6941, %v6939
        %v8600 = vpack.c.b16 %v6942, %v6940
        %v8601 = vpack.c.b16 %v6945, %v6943
        %v8602 = vpack.c.b16 %v6946, %v6944
        %v8603 = vpack.c.b16 %v6949, %v6947
        %v8604 = vpack.c.b16 %v6950, %v6948
        %v8605 = vpack.c.b16 %v6953, %v6951
        %v8606 = vpack.c.b16 %v6954, %v6952
        %v8607 = vpack.c.b16 %v6957, %v6955
        %v8608 = vpack.c.b16 %v6958, %v6956
        %v8609 = vpack.c.b16 %v6961, %v6959
        %v8610 = vpack.c.b16 %v6962, %v6960
        %v8611 = vpack.c.b16 %v6965, %v6963
        %v8612 = vpack.c.b16 %v6966, %v6964
        %v8613 = vpack.c.b16 %v6969, %v6967
        %v8614 = vpack.c.b16 %v6970, %v6968
        %v8615 = vpack.c.b16 %v6973, %v6971
        %v8616 = vpack.c.b16 %v6974, %v6972
        %v8617 = vpack.c.b16 %v6977, %v6975
        %v8618 = vpack.c.b16 %v6978, %v6976
        %v8619 = vpack.c.b16 %v6981, %v6979
        %v8620 = vpack.c.b16 %v6982, %v6980
        %v8621 = vpack.c.b16 %v6985, %v6983
        %v8622 = vpack.c.b16 %v6986, %v6984
        %v8623 = vpack.c.b16 %v6989, %v6987
        %v8624 = vpack.c.b16 %v6990, %v6988
        %v8625 = vpack.c.b16 %v6993, %v6991
        %v8626 = vpack.c.b16 %v6994, %v6992
        %v8627 = vpack.c.b16 %v6997, %v6995
        %v8628 = vpack.c.b16 %v6998, %v6996
        %v8629 = vpack.c.b16 %v7001, %v6999
        %v8630 = vpack.c.b16 %v7002, %v7000
        %v8631 = vpack.c.b16 %v7005, %v7003
        %v8632 = vpack.c.b16 %v7006, %v7004
        %v8633 = vpack.c.b16 %v7009, %v7007
        %v8634 = vpack.c.b16 %v7010, %v7008
        %v8635 = vpack.c.b16 %v7013, %v7011
        %v8636 = vpack.c.b16 %v7014, %v7012
        %v8637 = vpack.c.b16 %v7017, %v7015
        %v8638 = vpack.c.b16 %v7018, %v7016
        %v8639 = vpack.c.b16 %v7021, %v7019
        %v8640 = vpack.c.b16 %v7022, %v7020
        %v8641 = vpack.c.b16 %v7025, %v7023
        %v8642 = vpack.c.b16 %v7026, %v7024
        %v8643 = vpack.c.b16 %v7029, %v7027
        %v8644 = vpack.c.b16 %v7030, %v7028
        %v8645 = vpack.c.b16 %v7033, %v7031
        %v8646 = vpack.c.b16 %v7034, %v7032
        %v8647 = vpack.c.b16 %v7037, %v7035
        %v8648 = vpack.c.b16 %v7038, %v7036
        %v8649 = vpack.c.b16 %v7041, %v7039
        %v8650 = vpack.c.b16 %v7042, %v7040
        %v8651 = vpack.c.b16 %v7045, %v7043
        %v8652 = vpack.c.b16 %v7046, %v7044
        %v8653 = vpack.c.b16 %v7049, %v7047
        %v8654 = vpack.c.b16 %v7050, %v7048
        %v8655 = vpack.c.b16 %v7053, %v7051
        %v8656 = vpack.c.b16 %v7054, %v7052
        %v8657 = vpack.c.b16 %v7057, %v7055
        %v8658 = vpack.c.b16 %v7058, %v7056
        %v8659 = vpack.c.b16 %v7061, %v7059
        %v8660 = vpack.c.b16 %v7062, %v7060
        %v8661 = vpack.c.b16 %v7065, %v7063
        %v8662 = vpack.c.b16 %v7066, %v7064
        %v8663 = vpack.c.b16 %v7069, %v7067
        %v8664 = vpack.c.b16 %v7070, %v7068
        %v8665 = vpack.c.b16 %v7073, %v7071
        %v8666 = vpack.c.b16 %v7074, %v7072
        %v8667 = vpack.c.b16 %v7077, %v7075
        %v8668 = vpack.c.b16 %v7078, %v7076
        %v8669 = vpack.c.b16 %v7081, %v7079
        %v8670 = vpack.c.b16 %v7082, %v7080
        %v8671 = vpack.c.b16 %v7085, %v7083
        %v8672 = vpack.c.b16 %v7086, %v7084
        %v8673 = vpack.c.b16 %v7089, %v7087
        %v8674 = vpack.c.b16 %v7090, %v7088
        %v8675 = vpack.c.b16 %v7093, %v7091
        %v8676 = vpack.c.b16 %v7094, %v7092
        %v8677 = vpack.c.b16 %v7097, %v7095
        %v8678 = vpack.c.b16 %v7098, %v7096
        %v8679 = vpack.c.b16 %v7101, %v7099
        %v8680 = vpack.c.b16 %v7102, %v7100
        %v8681 = vpack.c.b16 %v7105, %v7103
        %v8682 = vpack.c.b16 %v7106, %v7104
        %v8683 = vpack.c.b16 %v7109, %v7107
        %v8684 = vpack.c.b16 %v7110, %v7108
        %v8685 = vpack.c.b16 %v7113, %v7111
        %v8686 = vpack.c.b16 %v7114, %v7112
        %v8687 = vpack.c.b16 %v7117, %v7115
        %v8688 = vpack.c.b16 %v7118, %v7116
        %v8689 = vpack.c.b16 %v7121, %v7119
        %v8690 = vpack.c.b16 %v7122, %v7120
        %v8691 = vpack.c.b16 %v7125, %v7123
        %v8692 = vpack.c.b16 %v7126, %v7124
        %v8693 = vpack.c.b16 %v7129, %v7127
        %v8694 = vpack.c.b16 %v7130, %v7128
        %v8695 = vpack.c.b16 %v7133, %v7131
        %v8696 = vpack.c.b16 %v7134, %v7132
        %v8697 = vpack.c.b16 %v7137, %v7135
        %v8698 = vpack.c.b16 %v7138, %v7136
        %v8699 = vpack.c.b16 %v7141, %v7139
        %v8700 = vpack.c.b16 %v7142, %v7140
        %v8701 = vpack.c.b16 %v7145, %v7143
        %v8702 = vpack.c.b16 %v7146, %v7144
        %v8703 = vpack.c.b16 %v7149, %v7147
        %v8704 = vpack.c.b16 %v7150, %v7148
        %v8705 = vpack.c.b16 %v7153, %v7151
        %v8706 = vpack.c.b16 %v7154, %v7152
        %v8707 = vpack.c.b16 %v7157, %v7155
        %v8708 = vpack.c.b16 %v7158, %v7156
        %v8709 = vpack.c.b16 %v7161, %v7159
        %v8710 = vpack.c.b16 %v7162, %v7160
        %v8711 = vpack.c.b16 %v7165, %v7163
        %v8712 = vpack.c.b16 %v7166, %v7164
        %v8713 = vpack.c.b16 %v7169, %v7167
        %v8714 = vpack.c.b16 %v7170, %v7168
        %v8715 = vpack.c.b16 %v7173, %v7171
        %v8716 = vpack.c.b16 %v7174, %v7172
        %v8717 = vpack.c.b16 %v7177, %v7175
        %v8718 = vpack.c.b16 %v7178, %v7176
        %v8719 = vpack.c.b16 %v7181, %v7179
        %v8720 = vpack.c.b16 %v7182, %v7180
        %v8721 = vpack.c.b16 %v7185, %v7183
        %v8722 = vpack.c.b16 %v7186, %v7184
        %10259 = vmatprep.subr.bf16.mxu0 %v7188
        %10260 = vmatpush1.bf16.msra.mxu0 %v7187
        %10261 = vmatprep.subr.bf16.mxu0 %v7190
        %10262 = vmatpush1.bf16.msra.mxu0 %v7189
        %10263 = vmatprep.subr.bf16.mxu0 %v7192
        %10264 = vmatpush1.bf16.msra.mxu0 %v7191
        %10265 = vmatprep.subr.bf16.mxu0 %v7194
        %10266 = vmatpush1.bf16.msra.mxu0 %v7193
        %10267 = vmatprep.subr.bf16.mxu0 %v7196
        %10268 = vmatpush1.bf16.msra.mxu0 %v7195
        %10269 = vmatprep.subr.bf16.mxu0 %v7198
        %10270 = vmatpush1.bf16.msra.mxu0 %v7197
        %10271 = vmatprep.subr.bf16.mxu0 %v7200
        %10272 = vmatpush1.bf16.msra.mxu0 %v7199
        %10273 = vmatprep.subr.bf16.mxu0 %v7202
        %10274 = vmatpush1.bf16.msra.mxu0 %v7201
        %10275 = vmatprep.subr.bf16.mxu0 %v7204
        %10276 = vmatpush1.bf16.msra.mxu0 %v7203
        %10277 = vmatprep.subr.bf16.mxu0 %v7206
        %10278 = vmatpush1.bf16.msra.mxu0 %v7205
        %10279 = vmatprep.subr.bf16.mxu0 %v7208
        %10280 = vmatpush1.bf16.msra.mxu0 %v7207
        %10281 = vmatprep.subr.bf16.mxu0 %v7210
        %10282 = vmatpush1.bf16.msra.mxu0 %v7209
        %10283 = vmatprep.subr.bf16.mxu0 %v7212
        %10284 = vmatpush1.bf16.msra.mxu0 %v7211
        %10285 = vmatprep.subr.bf16.mxu0 %v7214
        %10286 = vmatpush1.bf16.msra.mxu0 %v7213
        %10287 = vmatprep.subr.bf16.mxu0 %v7216
        %10288 = vmatpush1.bf16.msra.mxu0 %v7215
        %10289 = vmatprep.subr.bf16.mxu0 %v7218
        %10290 = vmatpush1.bf16.msra.mxu0 %v7217
        %10291 = vmatprep.mubr.bf16.mxu0 %v948
        %10292 = vmatmul.mubr.bf16.gmra.mrb[0].mxu0 %v947
        %v10293 = vpop.f32.mrb[0].mxu0
        %v10294 = vadd.f32 0.0, %v10293
        %v10295 = vpop.f32.mrb[0].mxu0
        %v10296 = vadd.f32 0.0, %v10295
        %v10297 = vpop.f32.mrb[0].mxu0
        %v10298 = vpop.f32.mrb[0].mxu0
        %10299 = vdwg.mxu0
        %10300 = vmatprep.subr.bf16.mxu0 %v7220
        %10301 = vmatpush1.bf16.msra.mxu0 %v7219
        %10302 = vmatprep.subr.bf16.mxu0 %v7222
        %10303 = vmatpush1.bf16.msra.mxu0 %v7221
        %10304 = vmatprep.subr.bf16.mxu0 %v7224
        %10305 = vmatpush1.bf16.msra.mxu0 %v7223
        %10306 = vmatprep.subr.bf16.mxu0 %v7226
        %10307 = vmatpush1.bf16.msra.mxu0 %v7225
        %10308 = vmatprep.subr.bf16.mxu0 %v7228
        %10309 = vmatpush1.bf16.msra.mxu0 %v7227
        %10310 = vmatprep.subr.bf16.mxu0 %v7230
        %10311 = vmatpush1.bf16.msra.mxu0 %v7229
        %10312 = vmatprep.subr.bf16.mxu0 %v7232
        %10313 = vmatpush1.bf16.msra.mxu0 %v7231
        %10314 = vmatprep.subr.bf16.mxu0 %v7234
        %10315 = vmatpush1.bf16.msra.mxu0 %v7233
        %10316 = vmatprep.subr.bf16.mxu0 %v7236
        %10317 = vmatpush1.bf16.msra.mxu0 %v7235
        %10318 = vmatprep.subr.bf16.mxu0 %v7238
        %10319 = vmatpush1.bf16.msra.mxu0 %v7237
        %10320 = vmatprep.subr.bf16.mxu0 %v7240
        %10321 = vmatpush1.bf16.msra.mxu0 %v7239
        %10322 = vmatprep.subr.bf16.mxu0 %v7242
        %10323 = vmatpush1.bf16.msra.mxu0 %v7241
        %10324 = vmatprep.subr.bf16.mxu0 %v7244
        %10325 = vmatpush1.bf16.msra.mxu0 %v7243
        %10326 = vmatprep.subr.bf16.mxu0 %v7246
        %10327 = vmatpush1.bf16.msra.mxu0 %v7245
        %10328 = vmatprep.subr.bf16.mxu0 %v7248
        %10329 = vmatpush1.bf16.msra.mxu0 %v7247
        %10330 = vmatprep.subr.bf16.mxu0 %v7250
        %10331 = vmatpush1.bf16.msra.mxu0 %v7249
        %10332 = vmatprep.mubr.bf16.mxu0 %v950
        %10333 = vmatmul.mubr.bf16.gmra.mrb[0].mxu0 %v949
        %v10334 = vpop.f32.mrb[0].mxu0
        %v10335 = vadd.f32 %v10294, %v10334
        %v10336 = vpop.f32.mrb[0].mxu0
        %v10337 = vadd.f32 %v10296, %v10336
        %v10338 = vpop.f32.mrb[0].mxu0
        %v10339 = vpop.f32.mrb[0].mxu0
        %10340 = vdwg.mxu0
        %10341 = vmatprep.subr.bf16.mxu0 %v7252
        %10342 = vmatpush1.bf16.msra.mxu0 %v7251
        %10343 = vmatprep.subr.bf16.mxu0 %v7254
        %10344 = vmatpush1.bf16.msra.mxu0 %v7253
        %10345 = vmatprep.subr.bf16.mxu0 %v7256
        %10346 = vmatpush1.bf16.msra.mxu0 %v7255
        %10347 = vmatprep.subr.bf16.mxu0 %v7258
        %10348 = vmatpush1.bf16.msra.mxu0 %v7257
        %10349 = vmatprep.subr.bf16.mxu0 %v7260
        %10350 = vmatpush1.bf16.msra.mxu0 %v7259
        %10351 = vmatprep.subr.bf16.mxu0 %v7262
        %10352 = vmatpush1.bf16.msra.mxu0 %v7261
        %10353 = vmatprep.subr.bf16.mxu0 %v7264
        %10354 = vmatpush1.bf16.msra.mxu0 %v7263
        %10355 = vmatprep.subr.bf16.mxu0 %v7266
        %10356 = vmatpush1.bf16.msra.mxu0 %v7265
        %10357 = vmatprep.subr.bf16.mxu0 %v7268
        %10358 = vmatpush1.bf16.msra.mxu0 %v7267
        %10359 = vmatprep.subr.bf16.mxu0 %v7270
        %10360 = vmatpush1.bf16.msra.mxu0 %v7269
        %10361 = vmatprep.subr.bf16.mxu0 %v7272
        %10362 = vmatpush1.bf16.msra.mxu0 %v7271
        %10363 = vmatprep.subr.bf16.mxu0 %v7274
        %10364 = vmatpush1.bf16.msra.mxu0 %v7273
        %10365 = vmatprep.subr.bf16.mxu0 %v7276
        %10366 = vmatpush1.bf16.msra.mxu0 %v7275
        %10367 = vmatprep.subr.bf16.mxu0 %v7278
        %10368 = vmatpush1.bf16.msra.mxu0 %v7277
        %10369 = vmatprep.subr.bf16.mxu0 %v7280
        %10370 = vmatpush1.bf16.msra.mxu0 %v7279
        %10371 = vmatprep.subr.bf16.mxu0 %v7282
        %10372 = vmatpush1.bf16.msra.mxu0 %v7281
        %10373 = vmatprep.mubr.bf16.mxu0 %v952
        %10374 = vmatmul.mubr.bf16.gmra.mrb[0].mxu0 %v951
        %v10375 = vpop.f32.mrb[0].mxu0
        %v10376 = vadd.f32 %v10335, %v10375
        %v10377 = vpop.f32.mrb[0].mxu0
        %v10378 = vadd.f32 %v10337, %v10377
        %v10379 = vpop.f32.mrb[0].mxu0
        %v10380 = vpop.f32.mrb[0].mxu0
        %10381 = vdwg.mxu0
        %10382 = vmatprep.subr.bf16.mxu0 %v7284
        %10383 = vmatpush1.bf16.msra.mxu0 %v7283
        %10384 = vmatprep.subr.bf16.mxu0 %v7286
        %10385 = vmatpush1.bf16.msra.mxu0 %v7285
        %10386 = vmatprep.subr.bf16.mxu0 %v7288
        %10387 = vmatpush1.bf16.msra.mxu0 %v7287
        %10388 = vmatprep.subr.bf16.mxu0 %v7290
        %10389 = vmatpush1.bf16.msra.mxu0 %v7289
        %10390 = vmatprep.subr.bf16.mxu0 %v7292
        %10391 = vmatpush1.bf16.msra.mxu0 %v7291
        %10392 = vmatprep.subr.bf16.mxu0 %v7294
        %10393 = vmatpush1.bf16.msra.mxu0 %v7293
        %10394 = vmatprep.subr.bf16.mxu0 %v7296
        %10395 = vmatpush1.bf16.msra.mxu0 %v7295
        %10396 = vmatprep.subr.bf16.mxu0 %v7298
        %10397 = vmatpush1.bf16.msra.mxu0 %v7297
        %10398 = vmatprep.subr.bf16.mxu0 %v7300
        %10399 = vmatpush1.bf16.msra.mxu0 %v7299
        %10400 = vmatprep.subr.bf16.mxu0 %v7302
        %10401 = vmatpush1.bf16.msra.mxu0 %v7301
        %10402 = vmatprep.subr.bf16.mxu0 %v7304
        %10403 = vmatpush1.bf16.msra.mxu0 %v7303
        %10404 = vmatprep.subr.bf16.mxu0 %v7306
        %10405 = vmatpush1.bf16.msra.mxu0 %v7305
        %10406 = vmatprep.subr.bf16.mxu0 %v7308
        %10407 = vmatpush1.bf16.msra.mxu0 %v7307
        %10408 = vmatprep.subr.bf16.mxu0 %v7310
        %10409 = vmatpush1.bf16.msra.mxu0 %v7309
        %10410 = vmatprep.subr.bf16.mxu0 %v7312
        %10411 = vmatpush1.bf16.msra.mxu0 %v7311
        %10412 = vmatprep.subr.bf16.mxu0 %v7314
        %10413 = vmatpush1.bf16.msra.mxu0 %v7313
        %10414 = vmatprep.mubr.bf16.mxu0 %v954
        %10415 = vmatmul.mubr.bf16.gmra.mrb[0].mxu0 %v953
        %v10416 = vpop.f32.mrb[0].mxu0
        %v10417 = vadd.f32 %v10376, %v10416
        %v10418 = vpop.f32.mrb[0].mxu0
        %v10419 = vadd.f32 %v10378, %v10418
        %v10420 = vpop.f32.mrb[0].mxu0
        %v10421 = vpop.f32.mrb[0].mxu0
        %10422 = vdwg.mxu0
        %10423 = vmatprep.subr.bf16.mxu0 %v7316
        %10424 = vmatpush1.bf16.msra.mxu0 %v7315
        %10425 = vmatprep.subr.bf16.mxu0 %v7318
        %10426 = vmatpush1.bf16.msra.mxu0 %v7317
        %10427 = vmatprep.subr.bf16.mxu0 %v7320
        %10428 = vmatpush1.bf16.msra.mxu0 %v7319
        %10429 = vmatprep.subr.bf16.mxu0 %v7322
        %10430 = vmatpush1.bf16.msra.mxu0 %v7321
        %10431 = vmatprep.subr.bf16.mxu0 %v7324
        %10432 = vmatpush1.bf16.msra.mxu0 %v7323
        %10433 = vmatprep.subr.bf16.mxu0 %v7326
        %10434 = vmatpush1.bf16.msra.mxu0 %v7325
        %10435 = vmatprep.subr.bf16.mxu0 %v7328
        %10436 = vmatpush1.bf16.msra.mxu0 %v7327
        %10437 = vmatprep.subr.bf16.mxu0 %v7330
        %10438 = vmatpush1.bf16.msra.mxu0 %v7329
        %10439 = vmatprep.subr.bf16.mxu0 %v7332
        %10440 = vmatpush1.bf16.msra.mxu0 %v7331
        %10441 = vmatprep.subr.bf16.mxu0 %v7334
        %10442 = vmatpush1.bf16.msra.mxu0 %v7333
        %10443 = vmatprep.subr.bf16.mxu0 %v7336
        %10444 = vmatpush1.bf16.msra.mxu0 %v7335
        %10445 = vmatprep.subr.bf16.mxu0 %v7338
        %10446 = vmatpush1.bf16.msra.mxu0 %v7337
        %10447 = vmatprep.subr.bf16.mxu0 %v7340
        %10448 = vmatpush1.bf16.msra.mxu0 %v7339
        %10449 = vmatprep.subr.bf16.mxu0 %v7342
        %10450 = vmatpush1.bf16.msra.mxu0 %v7341
        %10451 = vmatprep.subr.bf16.mxu0 %v7344
        %10452 = vmatpush1.bf16.msra.mxu0 %v7343
        %10453 = vmatprep.subr.bf16.mxu0 %v7346
        %10454 = vmatpush1.bf16.msra.mxu0 %v7345
        %10455 = vmatprep.mubr.bf16.mxu0 %v956
        %10456 = vmatmul.mubr.bf16.gmra.mrb[0].mxu0 %v955
        %v10457 = vpop.f32.mrb[0].mxu0
        %v10458 = vadd.f32 %v10417, %v10457
        %v10459 = vpop.f32.mrb[0].mxu0
        %v10460 = vadd.f32 %v10419, %v10459
        %v10461 = vpop.f32.mrb[0].mxu0
        %v10462 = vpop.f32.mrb[0].mxu0
        %10463 = vdwg.mxu0
        %10464 = vmatprep.subr.bf16.mxu0 %v7348
        %10465 = vmatpush1.bf16.msra.mxu0 %v7347
        %10466 = vmatprep.subr.bf16.mxu0 %v7350
        %10467 = vmatpush1.bf16.msra.mxu0 %v7349
        %10468 = vmatprep.subr.bf16.mxu0 %v7352
        %10469 = vmatpush1.bf16.msra.mxu0 %v7351
        %10470 = vmatprep.subr.bf16.mxu0 %v7354
        %10471 = vmatpush1.bf16.msra.mxu0 %v7353
        %10472 = vmatprep.subr.bf16.mxu0 %v7356
        %10473 = vmatpush1.bf16.msra.mxu0 %v7355
        %10474 = vmatprep.subr.bf16.mxu0 %v7358
        %10475 = vmatpush1.bf16.msra.mxu0 %v7357
        %10476 = vmatprep.subr.bf16.mxu0 %v7360
        %10477 = vmatpush1.bf16.msra.mxu0 %v7359
        %10478 = vmatprep.subr.bf16.mxu0 %v7362
        %10479 = vmatpush1.bf16.msra.mxu0 %v7361
        %10480 = vmatprep.subr.bf16.mxu0 %v7364
        %10481 = vmatpush1.bf16.msra.mxu0 %v7363
        %10482 = vmatprep.subr.bf16.mxu0 %v7366
        %10483 = vmatpush1.bf16.msra.mxu0 %v7365
        %10484 = vmatprep.subr.bf16.mxu0 %v7368
        %10485 = vmatpush1.bf16.msra.mxu0 %v7367
        %10486 = vmatprep.subr.bf16.mxu0 %v7370
        %10487 = vmatpush1.bf16.msra.mxu0 %v7369
        %10488 = vmatprep.subr.bf16.mxu0 %v7372
        %10489 = vmatpush1.bf16.msra.mxu0 %v7371
        %10490 = vmatprep.subr.bf16.mxu0 %v7374
        %10491 = vmatpush1.bf16.msra.mxu0 %v7373
        %10492 = vmatprep.subr.bf16.mxu0 %v7376
        %10493 = vmatpush1.bf16.msra.mxu0 %v7375
        %10494 = vmatprep.subr.bf16.mxu0 %v7378
        %10495 = vmatpush1.bf16.msra.mxu0 %v7377
        %10496 = vmatprep.mubr.bf16.mxu0 %v958
        %10497 = vmatmul.mubr.bf16.gmra.mrb[0].mxu0 %v957
        %v10498 = vpop.f32.mrb[0].mxu0
        %v10499 = vadd.f32 %v10458, %v10498
        %v10500 = vpop.f32.mrb[0].mxu0
        %v10501 = vadd.f32 %v10460, %v10500
        %v10502 = vpop.f32.mrb[0].mxu0
        %v10503 = vpop.f32.mrb[0].mxu0
        %10504 = vdwg.mxu0
        %10505 = vmatprep.subr.bf16.mxu0 %v7380
        %10506 = vmatpush1.bf16.msra.mxu0 %v7379
        %10507 = vmatprep.subr.bf16.mxu0 %v7382
        %10508 = vmatpush1.bf16.msra.mxu0 %v7381
        %10509 = vmatprep.subr.bf16.mxu0 %v7384
        %10510 = vmatpush1.bf16.msra.mxu0 %v7383
        %10511 = vmatprep.subr.bf16.mxu0 %v7386
        %10512 = vmatpush1.bf16.msra.mxu0 %v7385
        %10513 = vmatprep.subr.bf16.mxu0 %v7388
        %10514 = vmatpush1.bf16.msra.mxu0 %v7387
        %10515 = vmatprep.subr.bf16.mxu0 %v7390
        %10516 = vmatpush1.bf16.msra.mxu0 %v7389
        %10517 = vmatprep.subr.bf16.mxu0 %v7392
        %10518 = vmatpush1.bf16.msra.mxu0 %v7391
        %10519 = vmatprep.subr.bf16.mxu0 %v7394
        %10520 = vmatpush1.bf16.msra.mxu0 %v7393
        %10521 = vmatprep.subr.bf16.mxu0 %v7396
        %10522 = vmatpush1.bf16.msra.mxu0 %v7395
        %10523 = vmatprep.subr.bf16.mxu0 %v7398
        %10524 = vmatpush1.bf16.msra.mxu0 %v7397
        %10525 = vmatprep.subr.bf16.mxu0 %v7400
        %10526 = vmatpush1.bf16.msra.mxu0 %v7399
        %10527 = vmatprep.subr.bf16.mxu0 %v7402
        %10528 = vmatpush1.bf16.msra.mxu0 %v7401
        %10529 = vmatprep.subr.bf16.mxu0 %v7404
        %10530 = vmatpush1.bf16.msra.mxu0 %v7403
        %10531 = vmatprep.subr.bf16.mxu0 %v7406
        %10532 = vmatpush1.bf16.msra.mxu0 %v7405
        %10533 = vmatprep.subr.bf16.mxu0 %v7408
        %10534 = vmatpush1.bf16.msra.mxu0 %v7407
        %10535 = vmatprep.subr.bf16.mxu0 %v7410
        %10536 = vmatpush1.bf16.msra.mxu0 %v7409
        %10537 = vmatprep.mubr.bf16.mxu0 %v960
        %10538 = vmatmul.mubr.bf16.gmra.mrb[0].mxu0 %v959
        %v10539 = vpop.f32.mrb[0].mxu0
        %v10540 = vadd.f32 %v10499, %v10539
        %v10541 = vpop.f32.mrb[0].mxu0
        %v10542 = vadd.f32 %v10501, %v10541
        %v10543 = vpop.f32.mrb[0].mxu0
        %v10544 = vpop.f32.mrb[0].mxu0
        %10545 = vdwg.mxu0
        %10546 = vmatprep.subr.bf16.mxu0 %v7412
        %10547 = vmatpush1.bf16.msra.mxu0 %v7411
        %10548 = vmatprep.subr.bf16.mxu0 %v7414
        %10549 = vmatpush1.bf16.msra.mxu0 %v7413
        %10550 = vmatprep.subr.bf16.mxu0 %v7416
        %10551 = vmatpush1.bf16.msra.mxu0 %v7415
        %10552 = vmatprep.subr.bf16.mxu0 %v7418
        %10553 = vmatpush1.bf16.msra.mxu0 %v7417
        %10554 = vmatprep.subr.bf16.mxu0 %v7420
        %10555 = vmatpush1.bf16.msra.mxu0 %v7419
        %10556 = vmatprep.subr.bf16.mxu0 %v7422
        %10557 = vmatpush1.bf16.msra.mxu0 %v7421
        %10558 = vmatprep.subr.bf16.mxu0 %v7424
        %10559 = vmatpush1.bf16.msra.mxu0 %v7423
        %10560 = vmatprep.subr.bf16.mxu0 %v7426
        %10561 = vmatpush1.bf16.msra.mxu0 %v7425
        %10562 = vmatprep.subr.bf16.mxu0 %v7428
        %10563 = vmatpush1.bf16.msra.mxu0 %v7427
        %10564 = vmatprep.subr.bf16.mxu0 %v7430
        %10565 = vmatpush1.bf16.msra.mxu0 %v7429
        %10566 = vmatprep.subr.bf16.mxu0 %v7432
        %10567 = vmatpush1.bf16.msra.mxu0 %v7431
        %10568 = vmatprep.subr.bf16.mxu0 %v7434
        %10569 = vmatpush1.bf16.msra.mxu0 %v7433
        %10570 = vmatprep.subr.bf16.mxu0 %v7436
        %10571 = vmatpush1.bf16.msra.mxu0 %v7435
        %10572 = vmatprep.subr.bf16.mxu0 %v7438
        %10573 = vmatpush1.bf16.msra.mxu0 %v7437
        %10574 = vmatprep.subr.bf16.mxu0 %v7440
        %10575 = vmatpush1.bf16.msra.mxu0 %v7439
        %10576 = vmatprep.subr.bf16.mxu0 %v7442
        %10577 = vmatpush1.bf16.msra.mxu0 %v7441
        %10578 = vmatprep.mubr.bf16.mxu0 %v962
        %10579 = vmatmul.mubr.bf16.gmra.mrb[0].mxu0 %v961
        %v10580 = vpop.f32.mrb[0].mxu0
        %v10581 = vadd.f32 %v10540, %v10580
        %v10582 = vpop.f32.mrb[0].mxu0
        %v10583 = vadd.f32 %v10542, %v10582
        %v10584 = vpop.f32.mrb[0].mxu0
        %v10585 = vpop.f32.mrb[0].mxu0
        %10586 = vdwg.mxu0
        %10587 = vmatprep.subr.bf16.mxu0 %v7444
        %10588 = vmatpush1.bf16.msra.mxu0 %v7443
        %10589 = vmatprep.subr.bf16.mxu0 %v7446
        %10590 = vmatpush1.bf16.msra.mxu0 %v7445
        %10591 = vmatprep.subr.bf16.mxu0 %v7448
        %10592 = vmatpush1.bf16.msra.mxu0 %v7447
        %10593 = vmatprep.subr.bf16.mxu0 %v7450
        %10594 = vmatpush1.bf16.msra.mxu0 %v7449
        %10595 = vmatprep.subr.bf16.mxu0 %v7452
        %10596 = vmatpush1.bf16.msra.mxu0 %v7451
        %10597 = vmatprep.subr.bf16.mxu0 %v7454
        %10598 = vmatpush1.bf16.msra.mxu0 %v7453
        %10599 = vmatprep.subr.bf16.mxu0 %v7456
        %10600 = vmatpush1.bf16.msra.mxu0 %v7455
        %10601 = vmatprep.subr.bf16.mxu0 %v7458
        %10602 = vmatpush1.bf16.msra.mxu0 %v7457
        %10603 = vmatprep.subr.bf16.mxu0 %v7460
        %10604 = vmatpush1.bf16.msra.mxu0 %v7459
        %10605 = vmatprep.subr.bf16.mxu0 %v7462
        %10606 = vmatpush1.bf16.msra.mxu0 %v7461
        %10607 = vmatprep.subr.bf16.mxu0 %v7464
        %10608 = vmatpush1.bf16.msra.mxu0 %v7463
        %10609 = vmatprep.subr.bf16.mxu0 %v7466
        %10610 = vmatpush1.bf16.msra.mxu0 %v7465
        %10611 = vmatprep.subr.bf16.mxu0 %v7468
        %10612 = vmatpush1.bf16.msra.mxu0 %v7467
        %10613 = vmatprep.subr.bf16.mxu0 %v7470
        %10614 = vmatpush1.bf16.msra.mxu0 %v7469
        %10615 = vmatprep.subr.bf16.mxu0 %v7472
        %10616 = vmatpush1.bf16.msra.mxu0 %v7471
        %10617 = vmatprep.subr.bf16.mxu0 %v7474
        %10618 = vmatpush1.bf16.msra.mxu0 %v7473
        %10619 = vmatprep.mubr.bf16.mxu0 %v964
        %10620 = vmatmul.mubr.bf16.gmra.mrb[0].mxu0 %v963
        %v10621 = vpop.f32.mrb[0].mxu0
        %v10622 = vadd.f32 %v10581, %v10621
        %v10623 = vpop.f32.mrb[0].mxu0
        %v10624 = vadd.f32 %v10583, %v10623
        %v10625 = vpop.f32.mrb[0].mxu0
        %v10626 = vpop.f32.mrb[0].mxu0
        %10627 = vdwg.mxu0
        %10628 = vmatprep.subr.bf16.mxu0 %v7476
        %10629 = vmatpush1.bf16.msra.mxu0 %v7475
        %10630 = vmatprep.subr.bf16.mxu0 %v7478
        %10631 = vmatpush1.bf16.msra.mxu0 %v7477
        %10632 = vmatprep.subr.bf16.mxu0 %v7480
        %10633 = vmatpush1.bf16.msra.mxu0 %v7479
        %10634 = vmatprep.subr.bf16.mxu0 %v7482
        %10635 = vmatpush1.bf16.msra.mxu0 %v7481
        %10636 = vmatprep.subr.bf16.mxu0 %v7484
        %10637 = vmatpush1.bf16.msra.mxu0 %v7483
        %10638 = vmatprep.subr.bf16.mxu0 %v7486
        %10639 = vmatpush1.bf16.msra.mxu0 %v7485
        %10640 = vmatprep.subr.bf16.mxu0 %v7488
        %10641 = vmatpush1.bf16.msra.mxu0 %v7487
        %10642 = vmatprep.subr.bf16.mxu0 %v7490
        %10643 = vmatpush1.bf16.msra.mxu0 %v7489
        %10644 = vmatprep.subr.bf16.mxu0 %v7492
        %10645 = vmatpush1.bf16.msra.mxu0 %v7491
        %10646 = vmatprep.subr.bf16.mxu0 %v7494
        %10647 = vmatpush1.bf16.msra.mxu0 %v7493
        %10648 = vmatprep.subr.bf16.mxu0 %v7496
        %10649 = vmatpush1.bf16.msra.mxu0 %v7495
        %10650 = vmatprep.subr.bf16.mxu0 %v7498
        %10651 = vmatpush1.bf16.msra.mxu0 %v7497
        %10652 = vmatprep.subr.bf16.mxu0 %v7500
        %10653 = vmatpush1.bf16.msra.mxu0 %v7499
        %10654 = vmatprep.subr.bf16.mxu0 %v7502
        %10655 = vmatpush1.bf16.msra.mxu0 %v7501
        %10656 = vmatprep.subr.bf16.mxu0 %v7504
        %10657 = vmatpush1.bf16.msra.mxu0 %v7503
        %10658 = vmatprep.subr.bf16.mxu0 %v7506
        %10659 = vmatpush1.bf16.msra.mxu0 %v7505
        %10660 = vmatprep.mubr.bf16.mxu0 %v966
        %10661 = vmatmul.mubr.bf16.gmra.mrb[0].mxu0 %v965
        %v10662 = vpop.f32.mrb[0].mxu0
        %v10663 = vadd.f32 %v10622, %v10662
        %v10664 = vpop.f32.mrb[0].mxu0
        %v10665 = vadd.f32 %v10624, %v10664
        %v10666 = vpop.f32.mrb[0].mxu0
        %v10667 = vpop.f32.mrb[0].mxu0
        %10668 = vdwg.mxu0
        %10669 = vmatprep.subr.bf16.mxu0 %v7508
        %10670 = vmatpush1.bf16.msra.mxu0 %v7507
        %10671 = vmatprep.subr.bf16.mxu0 %v7510
        %10672 = vmatpush1.bf16.msra.mxu0 %v7509
        %10673 = vmatprep.subr.bf16.mxu0 %v7512
        %10674 = vmatpush1.bf16.msra.mxu0 %v7511
        %10675 = vmatprep.subr.bf16.mxu0 %v7514
        %10676 = vmatpush1.bf16.msra.mxu0 %v7513
        %10677 = vmatprep.subr.bf16.mxu0 %v7516
        %10678 = vmatpush1.bf16.msra.mxu0 %v7515
        %10679 = vmatprep.subr.bf16.mxu0 %v7518
        %10680 = vmatpush1.bf16.msra.mxu0 %v7517
        %10681 = vmatprep.subr.bf16.mxu0 %v7520
        %10682 = vmatpush1.bf16.msra.mxu0 %v7519
        %10683 = vmatprep.subr.bf16.mxu0 %v7522
        %10684 = vmatpush1.bf16.msra.mxu0 %v7521
        %10685 = vmatprep.subr.bf16.mxu0 %v7524
        %10686 = vmatpush1.bf16.msra.mxu0 %v7523
        %10687 = vmatprep.subr.bf16.mxu0 %v7526
        %10688 = vmatpush1.bf16.msra.mxu0 %v7525
        %10689 = vmatprep.subr.bf16.mxu0 %v7528
        %10690 = vmatpush1.bf16.msra.mxu0 %v7527
        %10691 = vmatprep.subr.bf16.mxu0 %v7530
        %10692 = vmatpush1.bf16.msra.mxu0 %v7529
        %10693 = vmatprep.subr.bf16.mxu0 %v7532
        %10694 = vmatpush1.bf16.msra.mxu0 %v7531
        %10695 = vmatprep.subr.bf16.mxu0 %v7534
        %10696 = vmatpush1.bf16.msra.mxu0 %v7533
        %10697 = vmatprep.subr.bf16.mxu0 %v7536
        %10698 = vmatpush1.bf16.msra.mxu0 %v7535
        %10699 = vmatprep.subr.bf16.mxu0 %v7538
        %10700 = vmatpush1.bf16.msra.mxu0 %v7537
        %10701 = vmatprep.mubr.bf16.mxu0 %v968
        %10702 = vmatmul.mubr.bf16.gmra.mrb[0].mxu0 %v967
        %v10703 = vpop.f32.mrb[0].mxu0
        %v10704 = vadd.f32 %v10663, %v10703
        %v10705 = vpop.f32.mrb[0].mxu0
        %v10706 = vadd.f32 %v10665, %v10705
        %v10707 = vpop.f32.mrb[0].mxu0
        %v10708 = vpop.f32.mrb[0].mxu0
        %10709 = vdwg.mxu0
        %10710 = vmatprep.subr.bf16.mxu0 %v7540
        %10711 = vmatpush1.bf16.msra.mxu0 %v7539
        %10712 = vmatprep.subr.bf16.mxu0 %v7542
        %10713 = vmatpush1.bf16.msra.mxu0 %v7541
        %10714 = vmatprep.subr.bf16.mxu0 %v7544
        %10715 = vmatpush1.bf16.msra.mxu0 %v7543
        %10716 = vmatprep.subr.bf16.mxu0 %v7546
        %10717 = vmatpush1.bf16.msra.mxu0 %v7545
        %10718 = vmatprep.subr.bf16.mxu0 %v7548
        %10719 = vmatpush1.bf16.msra.mxu0 %v7547
        %10720 = vmatprep.subr.bf16.mxu0 %v7550
        %10721 = vmatpush1.bf16.msra.mxu0 %v7549
        %10722 = vmatprep.subr.bf16.mxu0 %v7552
        %10723 = vmatpush1.bf16.msra.mxu0 %v7551
        %10724 = vmatprep.subr.bf16.mxu0 %v7554
        %10725 = vmatpush1.bf16.msra.mxu0 %v7553
        %10726 = vmatprep.subr.bf16.mxu0 %v7556
        %10727 = vmatpush1.bf16.msra.mxu0 %v7555
        %10728 = vmatprep.subr.bf16.mxu0 %v7558
        %10729 = vmatpush1.bf16.msra.mxu0 %v7557
        %10730 = vmatprep.subr.bf16.mxu0 %v7560
        %10731 = vmatpush1.bf16.msra.mxu0 %v7559
        %10732 = vmatprep.subr.bf16.mxu0 %v7562
        %10733 = vmatpush1.bf16.msra.mxu0 %v7561
        %10734 = vmatprep.subr.bf16.mxu0 %v7564
        %10735 = vmatpush1.bf16.msra.mxu0 %v7563
        %10736 = vmatprep.subr.bf16.mxu0 %v7566
        %10737 = vmatpush1.bf16.msra.mxu0 %v7565
        %10738 = vmatprep.subr.bf16.mxu0 %v7568
        %10739 = vmatpush1.bf16.msra.mxu0 %v7567
        %10740 = vmatprep.subr.bf16.mxu0 %v7570
        %10741 = vmatpush1.bf16.msra.mxu0 %v7569
        %10742 = vmatprep.mubr.bf16.mxu0 %v970
        %10743 = vmatmul.mubr.bf16.gmra.mrb[0].mxu0 %v969
        %v10744 = vpop.f32.mrb[0].mxu0
        %v10745 = vadd.f32 %v10704, %v10744
        %v10746 = vpop.f32.mrb[0].mxu0
        %v10747 = vadd.f32 %v10706, %v10746
        %v10748 = vpop.f32.mrb[0].mxu0
        %v10749 = vpop.f32.mrb[0].mxu0
        %10750 = vdwg.mxu0
        %10751 = vmatprep.subr.bf16.mxu0 %v7572
        %10752 = vmatpush1.bf16.msra.mxu0 %v7571
        %10753 = vmatprep.subr.bf16.mxu0 %v7574
        %10754 = vmatpush1.bf16.msra.mxu0 %v7573
        %10755 = vmatprep.subr.bf16.mxu0 %v7576
        %10756 = vmatpush1.bf16.msra.mxu0 %v7575
        %10757 = vmatprep.subr.bf16.mxu0 %v7578
        %10758 = vmatpush1.bf16.msra.mxu0 %v7577
        %10759 = vmatprep.subr.bf16.mxu0 %v7580
        %10760 = vmatpush1.bf16.msra.mxu0 %v7579
        %10761 = vmatprep.subr.bf16.mxu0 %v7582
        %10762 = vmatpush1.bf16.msra.mxu0 %v7581
        %10763 = vmatprep.subr.bf16.mxu0 %v7584
        %10764 = vmatpush1.bf16.msra.mxu0 %v7583
        %10765 = vmatprep.subr.bf16.mxu0 %v7586
        %10766 = vmatpush1.bf16.msra.mxu0 %v7585
        %10767 = vmatprep.subr.bf16.mxu0 %v7588
        %10768 = vmatpush1.bf16.msra.mxu0 %v7587
        %10769 = vmatprep.subr.bf16.mxu0 %v7590
        %10770 = vmatpush1.bf16.msra.mxu0 %v7589
        %10771 = vmatprep.subr.bf16.mxu0 %v7592
        %10772 = vmatpush1.bf16.msra.mxu0 %v7591
        %10773 = vmatprep.subr.bf16.mxu0 %v7594
        %10774 = vmatpush1.bf16.msra.mxu0 %v7593
        %10775 = vmatprep.subr.bf16.mxu0 %v7596
        %10776 = vmatpush1.bf16.msra.mxu0 %v7595
        %10777 = vmatprep.subr.bf16.mxu0 %v7598
        %10778 = vmatpush1.bf16.msra.mxu0 %v7597
        %10779 = vmatprep.subr.bf16.mxu0 %v7600
        %10780 = vmatpush1.bf16.msra.mxu0 %v7599
        %10781 = vmatprep.subr.bf16.mxu0 %v7602
        %10782 = vmatpush1.bf16.msra.mxu0 %v7601
        %10783 = vmatprep.mubr.bf16.mxu0 %v972
        %10784 = vmatmul.mubr.bf16.gmra.mrb[0].mxu0 %v971
        %v10785 = vpop.f32.mrb[0].mxu0
        %v10786 = vadd.f32 %v10745, %v10785
        %v10787 = vpop.f32.mrb[0].mxu0
        %v10788 = vadd.f32 %v10747, %v10787
        %v10789 = vpop.f32.mrb[0].mxu0
        %v10790 = vpop.f32.mrb[0].mxu0
        %10791 = vdwg.mxu0
        %10792 = vmatprep.subr.bf16.mxu0 %v7604
        %10793 = vmatpush1.bf16.msra.mxu0 %v7603
        %10794 = vmatprep.subr.bf16.mxu0 %v7606
        %10795 = vmatpush1.bf16.msra.mxu0 %v7605
        %10796 = vmatprep.subr.bf16.mxu0 %v7608
        %10797 = vmatpush1.bf16.msra.mxu0 %v7607
        %10798 = vmatprep.subr.bf16.mxu0 %v7610
        %10799 = vmatpush1.bf16.msra.mxu0 %v7609
        %10800 = vmatprep.subr.bf16.mxu0 %v7612
        %10801 = vmatpush1.bf16.msra.mxu0 %v7611
        %10802 = vmatprep.subr.bf16.mxu0 %v7614
        %10803 = vmatpush1.bf16.msra.mxu0 %v7613
        %10804 = vmatprep.subr.bf16.mxu0 %v7616
        %10805 = vmatpush1.bf16.msra.mxu0 %v7615
        %10806 = vmatprep.subr.bf16.mxu0 %v7618
        %10807 = vmatpush1.bf16.msra.mxu0 %v7617
        %10808 = vmatprep.subr.bf16.mxu0 %v7620
        %10809 = vmatpush1.bf16.msra.mxu0 %v7619
        %10810 = vmatprep.subr.bf16.mxu0 %v7622
        %10811 = vmatpush1.bf16.msra.mxu0 %v7621
        %10812 = vmatprep.subr.bf16.mxu0 %v7624
        %10813 = vmatpush1.bf16.msra.mxu0 %v7623
        %10814 = vmatprep.subr.bf16.mxu0 %v7626
        %10815 = vmatpush1.bf16.msra.mxu0 %v7625
        %10816 = vmatprep.subr.bf16.mxu0 %v7628
        %10817 = vmatpush1.bf16.msra.mxu0 %v7627
        %10818 = vmatprep.subr.bf16.mxu0 %v7630
        %10819 = vmatpush1.bf16.msra.mxu0 %v7629
        %10820 = vmatprep.subr.bf16.mxu0 %v7632
        %10821 = vmatpush1.bf16.msra.mxu0 %v7631
        %10822 = vmatprep.subr.bf16.mxu0 %v7634
        %10823 = vmatpush1.bf16.msra.mxu0 %v7633
        %10824 = vmatprep.mubr.bf16.mxu0 %v974
        %10825 = vmatmul.mubr.bf16.gmra.mrb[0].mxu0 %v973
        %v10826 = vpop.f32.mrb[0].mxu0
        %v10827 = vadd.f32 %v10786, %v10826
        %v10828 = vpop.f32.mrb[0].mxu0
        %v10829 = vadd.f32 %v10788, %v10828
        %v10830 = vpop.f32.mrb[0].mxu0
        %v10831 = vpop.f32.mrb[0].mxu0
        %10832 = vdwg.mxu0
        %10833 = vmatprep.subr.bf16.mxu0 %v7636
        %10834 = vmatpush1.bf16.msra.mxu0 %v7635
        %10835 = vmatprep.subr.bf16.mxu0 %v7638
        %10836 = vmatpush1.bf16.msra.mxu0 %v7637
        %10837 = vmatprep.subr.bf16.mxu0 %v7640
        %10838 = vmatpush1.bf16.msra.mxu0 %v7639
        %10839 = vmatprep.subr.bf16.mxu0 %v7642
        %10840 = vmatpush1.bf16.msra.mxu0 %v7641
        %10841 = vmatprep.subr.bf16.mxu0 %v7644
        %10842 = vmatpush1.bf16.msra.mxu0 %v7643
        %10843 = vmatprep.subr.bf16.mxu0 %v7646
        %10844 = vmatpush1.bf16.msra.mxu0 %v7645
        %10845 = vmatprep.subr.bf16.mxu0 %v7648
        %10846 = vmatpush1.bf16.msra.mxu0 %v7647
        %10847 = vmatprep.subr.bf16.mxu0 %v7650
        %10848 = vmatpush1.bf16.msra.mxu0 %v7649
        %10849 = vmatprep.subr.bf16.mxu0 %v7652
        %10850 = vmatpush1.bf16.msra.mxu0 %v7651
        %10851 = vmatprep.subr.bf16.mxu0 %v7654
        %10852 = vmatpush1.bf16.msra.mxu0 %v7653
        %10853 = vmatprep.subr.bf16.mxu0 %v7656
        %10854 = vmatpush1.bf16.msra.mxu0 %v7655
        %10855 = vmatprep.subr.bf16.mxu0 %v7658
        %10856 = vmatpush1.bf16.msra.mxu0 %v7657
        %10857 = vmatprep.subr.bf16.mxu0 %v7660
        %10858 = vmatpush1.bf16.msra.mxu0 %v7659
        %10859 = vmatprep.subr.bf16.mxu0 %v7662
        %10860 = vmatpush1.bf16.msra.mxu0 %v7661
        %10861 = vmatprep.subr.bf16.mxu0 %v7664
        %10862 = vmatpush1.bf16.msra.mxu0 %v7663
        %10863 = vmatprep.subr.bf16.mxu0 %v7666
        %10864 = vmatpush1.bf16.msra.mxu0 %v7665
        %10865 = vmatprep.mubr.bf16.mxu0 %v976
        %10866 = vmatmul.mubr.bf16.gmra.mrb[0].mxu0 %v975
        %v10867 = vpop.f32.mrb[0].mxu0
        %v10868 = vadd.f32 %v10827, %v10867
        %v10869 = vpop.f32.mrb[0].mxu0
        %v10870 = vadd.f32 %v10829, %v10869
        %v10871 = vpop.f32.mrb[0].mxu0
        %v10872 = vpop.f32.mrb[0].mxu0
        %10873 = vdwg.mxu0
        %10874 = vmatprep.subr.bf16.mxu0 %v7668
        %10875 = vmatpush1.bf16.msra.mxu0 %v7667
        %10876 = vmatprep.subr.bf16.mxu0 %v7670
        %10877 = vmatpush1.bf16.msra.mxu0 %v7669
        %10878 = vmatprep.subr.bf16.mxu0 %v7672
        %10879 = vmatpush1.bf16.msra.mxu0 %v7671
        %10880 = vmatprep.subr.bf16.mxu0 %v7674
        %10881 = vmatpush1.bf16.msra.mxu0 %v7673
        %10882 = vmatprep.subr.bf16.mxu0 %v7676
        %10883 = vmatpush1.bf16.msra.mxu0 %v7675
        %10884 = vmatprep.subr.bf16.mxu0 %v7678
        %10885 = vmatpush1.bf16.msra.mxu0 %v7677
        %10886 = vmatprep.subr.bf16.mxu0 %v7680
        %10887 = vmatpush1.bf16.msra.mxu0 %v7679
        %10888 = vmatprep.subr.bf16.mxu0 %v7682
        %10889 = vmatpush1.bf16.msra.mxu0 %v7681
        %10890 = vmatprep.subr.bf16.mxu0 %v7684
        %10891 = vmatpush1.bf16.msra.mxu0 %v7683
        %10892 = vmatprep.subr.bf16.mxu0 %v7686
        %10893 = vmatpush1.bf16.msra.mxu0 %v7685
        %10894 = vmatprep.subr.bf16.mxu0 %v7688
        %10895 = vmatpush1.bf16.msra.mxu0 %v7687
        %10896 = vmatprep.subr.bf16.mxu0 %v7690
        %10897 = vmatpush1.bf16.msra.mxu0 %v7689
        %10898 = vmatprep.subr.bf16.mxu0 %v7692
        %10899 = vmatpush1.bf16.msra.mxu0 %v7691
        %10900 = vmatprep.subr.bf16.mxu0 %v7694
        %10901 = vmatpush1.bf16.msra.mxu0 %v7693
        %10902 = vmatprep.subr.bf16.mxu0 %v7696
        %10903 = vmatpush1.bf16.msra.mxu0 %v7695
        %10904 = vmatprep.subr.bf16.mxu0 %v7698
        %10905 = vmatpush1.bf16.msra.mxu0 %v7697
        %10906 = vmatprep.mubr.bf16.mxu0 %v978
        %10907 = vmatmul.mubr.bf16.gmra.mrb[0].mxu0 %v977
        %v10908 = vpop.f32.mrb[0].mxu0
        %v10909 = vadd.f32 %v10868, %v10908
        %v10910 = vpop.f32.mrb[0].mxu0
        %v10911 = vadd.f32 %v10870, %v10910
        %v10912 = vpop.f32.mrb[0].mxu0
        %v10913 = vpop.f32.mrb[0].mxu0
        %10914 = vdwg.mxu0
        %10915 = vmatprep.subr.bf16.mxu0 %v7700
        %10916 = vmatpush1.bf16.msra.mxu0 %v7699
        %10917 = vmatprep.subr.bf16.mxu0 %v7702
        %10918 = vmatpush1.bf16.msra.mxu0 %v7701
        %10919 = vmatprep.subr.bf16.mxu0 %v7704
        %10920 = vmatpush1.bf16.msra.mxu0 %v7703
        %10921 = vmatprep.subr.bf16.mxu0 %v7706
        %10922 = vmatpush1.bf16.msra.mxu0 %v7705
        %10923 = vmatprep.subr.bf16.mxu0 %v7708
        %10924 = vmatpush1.bf16.msra.mxu0 %v7707
        %10925 = vmatprep.subr.bf16.mxu0 %v7710
        %10926 = vmatpush1.bf16.msra.mxu0 %v7709
        %10927 = vmatprep.subr.bf16.mxu0 %v7712
        %10928 = vmatpush1.bf16.msra.mxu0 %v7711
        %10929 = vmatprep.subr.bf16.mxu0 %v7714
        %10930 = vmatpush1.bf16.msra.mxu0 %v7713
        %10931 = vmatprep.subr.bf16.mxu0 %v7716
        %10932 = vmatpush1.bf16.msra.mxu0 %v7715
        %10933 = vmatprep.subr.bf16.mxu0 %v7718
        %10934 = vmatpush1.bf16.msra.mxu0 %v7717
        %10935 = vmatprep.subr.bf16.mxu0 %v7720
        %10936 = vmatpush1.bf16.msra.mxu0 %v7719
        %10937 = vmatprep.subr.bf16.mxu0 %v7722
        %10938 = vmatpush1.bf16.msra.mxu0 %v7721
        %10939 = vmatprep.subr.bf16.mxu0 %v7724
        %10940 = vmatpush1.bf16.msra.mxu0 %v7723
        %10941 = vmatprep.subr.bf16.mxu0 %v7726
        %10942 = vmatpush1.bf16.msra.mxu0 %v7725
        %10943 = vmatprep.subr.bf16.mxu0 %v7728
        %10944 = vmatpush1.bf16.msra.mxu0 %v7727
        %10945 = vmatprep.subr.bf16.mxu0 %v7730
        %10946 = vmatpush1.bf16.msra.mxu0 %v7729
        %10947 = vmatprep.mubr.bf16.mxu0 %v980
        %10948 = vmatmul.mubr.bf16.gmra.mrb[0].mxu0 %v979
        %v10949 = vpop.f32.mrb[0].mxu0
        %v10950 = vadd.f32 %v10909, %v10949
        %v10951 = vpop.f32.mrb[0].mxu0
        %v10952 = vadd.f32 %v10911, %v10951
        %v10953 = vpop.f32.mrb[0].mxu0
        %v10954 = vpop.f32.mrb[0].mxu0
        %10955 = vdwg.mxu0
        %10956 = vmatprep.subr.bf16.mxu0 %v7732
        %10957 = vmatpush1.bf16.msra.mxu0 %v7731
        %10958 = vmatprep.subr.bf16.mxu0 %v7734
        %10959 = vmatpush1.bf16.msra.mxu0 %v7733
        %10960 = vmatprep.subr.bf16.mxu0 %v7736
        %10961 = vmatpush1.bf16.msra.mxu0 %v7735
        %10962 = vmatprep.subr.bf16.mxu0 %v7738
        %10963 = vmatpush1.bf16.msra.mxu0 %v7737
        %10964 = vmatprep.subr.bf16.mxu0 %v7740
        %10965 = vmatpush1.bf16.msra.mxu0 %v7739
        %10966 = vmatprep.subr.bf16.mxu0 %v7742
        %10967 = vmatpush1.bf16.msra.mxu0 %v7741
        %10968 = vmatprep.subr.bf16.mxu0 %v7744
        %10969 = vmatpush1.bf16.msra.mxu0 %v7743
        %10970 = vmatprep.subr.bf16.mxu0 %v7746
        %10971 = vmatpush1.bf16.msra.mxu0 %v7745
        %10972 = vmatprep.subr.bf16.mxu0 %v7748
        %10973 = vmatpush1.bf16.msra.mxu0 %v7747
        %10974 = vmatprep.subr.bf16.mxu0 %v7750
        %10975 = vmatpush1.bf16.msra.mxu0 %v7749
        %10976 = vmatprep.subr.bf16.mxu0 %v7752
        %10977 = vmatpush1.bf16.msra.mxu0 %v7751
        %10978 = vmatprep.subr.bf16.mxu0 %v7754
        %10979 = vmatpush1.bf16.msra.mxu0 %v7753
        %10980 = vmatprep.subr.bf16.mxu0 %v7756
        %10981 = vmatpush1.bf16.msra.mxu0 %v7755
        %10982 = vmatprep.subr.bf16.mxu0 %v7758
        %10983 = vmatpush1.bf16.msra.mxu0 %v7757
        %10984 = vmatprep.subr.bf16.mxu0 %v7760
        %10985 = vmatpush1.bf16.msra.mxu0 %v7759
        %10986 = vmatprep.subr.bf16.mxu0 %v7762
        %10987 = vmatpush1.bf16.msra.mxu0 %v7761
        %10988 = vmatprep.mubr.bf16.mxu0 %v982
        %10989 = vmatmul.mubr.bf16.gmra.mrb[0].mxu0 %v981
        %v10990 = vpop.f32.mrb[0].mxu0
        %v10991 = vadd.f32 %v10950, %v10990
        %v10992 = vpop.f32.mrb[0].mxu0
        %v10993 = vadd.f32 %v10952, %v10992
        %v10994 = vpop.f32.mrb[0].mxu0
        %v10995 = vpop.f32.mrb[0].mxu0
        %10996 = vdwg.mxu0
        %10997 = vmatprep.subr.bf16.mxu0 %v7764
        %10998 = vmatpush1.bf16.msra.mxu0 %v7763
        %10999 = vmatprep.subr.bf16.mxu0 %v7766
        %11000 = vmatpush1.bf16.msra.mxu0 %v7765
        %11001 = vmatprep.subr.bf16.mxu0 %v7768
        %11002 = vmatpush1.bf16.msra.mxu0 %v7767
        %11003 = vmatprep.subr.bf16.mxu0 %v7770
        %11004 = vmatpush1.bf16.msra.mxu0 %v7769
        %11005 = vmatprep.subr.bf16.mxu0 %v7772
        %11006 = vmatpush1.bf16.msra.mxu0 %v7771
        %11007 = vmatprep.subr.bf16.mxu0 %v7774
        %11008 = vmatpush1.bf16.msra.mxu0 %v7773
        %11009 = vmatprep.subr.bf16.mxu0 %v7776
        %11010 = vmatpush1.bf16.msra.mxu0 %v7775
        %11011 = vmatprep.subr.bf16.mxu0 %v7778
        %11012 = vmatpush1.bf16.msra.mxu0 %v7777
        %11013 = vmatprep.subr.bf16.mxu0 %v7780
        %11014 = vmatpush1.bf16.msra.mxu0 %v7779
        %11015 = vmatprep.subr.bf16.mxu0 %v7782
        %11016 = vmatpush1.bf16.msra.mxu0 %v7781
        %11017 = vmatprep.subr.bf16.mxu0 %v7784
        %11018 = vmatpush1.bf16.msra.mxu0 %v7783
        %11019 = vmatprep.subr.bf16.mxu0 %v7786
        %11020 = vmatpush1.bf16.msra.mxu0 %v7785
        %11021 = vmatprep.subr.bf16.mxu0 %v7788
        %11022 = vmatpush1.bf16.msra.mxu0 %v7787
        %11023 = vmatprep.subr.bf16.mxu0 %v7790
        %11024 = vmatpush1.bf16.msra.mxu0 %v7789
        %11025 = vmatprep.subr.bf16.mxu0 %v7792
        %11026 = vmatpush1.bf16.msra.mxu0 %v7791
        %11027 = vmatprep.subr.bf16.mxu0 %v7794
        %11028 = vmatpush1.bf16.msra.mxu0 %v7793
        %11029 = vmatprep.mubr.bf16.mxu0 %v984
        %11030 = vmatmul.mubr.bf16.gmra.mrb[0].mxu0 %v983
        %v11031 = vpop.f32.mrb[0].mxu0
        %v11032 = vadd.f32 %v10991, %v11031
        %v11033 = vpop.f32.mrb[0].mxu0
        %v11034 = vadd.f32 %v10993, %v11033
        %v11035 = vpop.f32.mrb[0].mxu0
        %v11036 = vpop.f32.mrb[0].mxu0
        %11037 = vdwg.mxu0
        %11038 = vmatprep.subr.bf16.mxu0 %v7796
        %11039 = vmatpush1.bf16.msra.mxu0 %v7795
        %11040 = vmatprep.subr.bf16.mxu0 %v7798
        %11041 = vmatpush1.bf16.msra.mxu0 %v7797
        %11042 = vmatprep.subr.bf16.mxu0 %v7800
        %11043 = vmatpush1.bf16.msra.mxu0 %v7799
        %11044 = vmatprep.subr.bf16.mxu0 %v7802
        %11045 = vmatpush1.bf16.msra.mxu0 %v7801
        %11046 = vmatprep.subr.bf16.mxu0 %v7804
        %11047 = vmatpush1.bf16.msra.mxu0 %v7803
        %11048 = vmatprep.subr.bf16.mxu0 %v7806
        %11049 = vmatpush1.bf16.msra.mxu0 %v7805
        %11050 = vmatprep.subr.bf16.mxu0 %v7808
        %11051 = vmatpush1.bf16.msra.mxu0 %v7807
        %11052 = vmatprep.subr.bf16.mxu0 %v7810
        %11053 = vmatpush1.bf16.msra.mxu0 %v7809
        %11054 = vmatprep.subr.bf16.mxu0 %v7812
        %11055 = vmatpush1.bf16.msra.mxu0 %v7811
        %11056 = vmatprep.subr.bf16.mxu0 %v7814
        %11057 = vmatpush1.bf16.msra.mxu0 %v7813
        %11058 = vmatprep.subr.bf16.mxu0 %v7816
        %11059 = vmatpush1.bf16.msra.mxu0 %v7815
        %11060 = vmatprep.subr.bf16.mxu0 %v7818
        %11061 = vmatpush1.bf16.msra.mxu0 %v7817
        %11062 = vmatprep.subr.bf16.mxu0 %v7820
        %11063 = vmatpush1.bf16.msra.mxu0 %v7819
        %11064 = vmatprep.subr.bf16.mxu0 %v7822
        %11065 = vmatpush1.bf16.msra.mxu0 %v7821
        %11066 = vmatprep.subr.bf16.mxu0 %v7824
        %11067 = vmatpush1.bf16.msra.mxu0 %v7823
        %11068 = vmatprep.subr.bf16.mxu0 %v7826
        %11069 = vmatpush1.bf16.msra.mxu0 %v7825
        %11070 = vmatprep.mubr.bf16.mxu0 %v986
        %11071 = vmatmul.mubr.bf16.gmra.mrb[0].mxu0 %v985
        %v11072 = vpop.f32.mrb[0].mxu0
        %v11073 = vadd.f32 %v11032, %v11072
        %v11074 = vpop.f32.mrb[0].mxu0
        %v11075 = vadd.f32 %v11034, %v11074
        %v11076 = vpop.f32.mrb[0].mxu0
        %v11077 = vpop.f32.mrb[0].mxu0
        %11078 = vdwg.mxu0
        %11079 = vmatprep.subr.bf16.mxu0 %v7828
        %11080 = vmatpush1.bf16.msra.mxu0 %v7827
        %11081 = vmatprep.subr.bf16.mxu0 %v7830
        %11082 = vmatpush1.bf16.msra.mxu0 %v7829
        %11083 = vmatprep.subr.bf16.mxu0 %v7832
        %11084 = vmatpush1.bf16.msra.mxu0 %v7831
        %11085 = vmatprep.subr.bf16.mxu0 %v7834
        %11086 = vmatpush1.bf16.msra.mxu0 %v7833
        %11087 = vmatprep.subr.bf16.mxu0 %v7836
        %11088 = vmatpush1.bf16.msra.mxu0 %v7835
        %11089 = vmatprep.subr.bf16.mxu0 %v7838
        %11090 = vmatpush1.bf16.msra.mxu0 %v7837
        %11091 = vmatprep.subr.bf16.mxu0 %v7840
        %11092 = vmatpush1.bf16.msra.mxu0 %v7839
        %11093 = vmatprep.subr.bf16.mxu0 %v7842
        %11094 = vmatpush1.bf16.msra.mxu0 %v7841
        %11095 = vmatprep.subr.bf16.mxu0 %v7844
        %11096 = vmatpush1.bf16.msra.mxu0 %v7843
        %11097 = vmatprep.subr.bf16.mxu0 %v7846
        %11098 = vmatpush1.bf16.msra.mxu0 %v7845
        %11099 = vmatprep.subr.bf16.mxu0 %v7848
        %11100 = vmatpush1.bf16.msra.mxu0 %v7847
        %11101 = vmatprep.subr.bf16.mxu0 %v7850
        %11102 = vmatpush1.bf16.msra.mxu0 %v7849
        %11103 = vmatprep.subr.bf16.mxu0 %v7852
        %11104 = vmatpush1.bf16.msra.mxu0 %v7851
        %11105 = vmatprep.subr.bf16.mxu0 %v7854
        %11106 = vmatpush1.bf16.msra.mxu0 %v7853
        %11107 = vmatprep.subr.bf16.mxu0 %v7856
        %11108 = vmatpush1.bf16.msra.mxu0 %v7855
        %11109 = vmatprep.subr.bf16.mxu0 %v7858
        %11110 = vmatpush1.bf16.msra.mxu0 %v7857
        %11111 = vmatprep.mubr.bf16.mxu0 %v988
        %11112 = vmatmul.mubr.bf16.gmra.mrb[0].mxu0 %v987
        %v11113 = vpop.f32.mrb[0].mxu0
        %v11114 = vadd.f32 %v11073, %v11113
        %v11115 = vpop.f32.mrb[0].mxu0
        %v11116 = vadd.f32 %v11075, %v11115
        %v11117 = vpop.f32.mrb[0].mxu0
        %v11118 = vpop.f32.mrb[0].mxu0
        %11119 = vdwg.mxu0
        %11120 = vmatprep.subr.bf16.mxu0 %v7860
        %11121 = vmatpush1.bf16.msra.mxu0 %v7859
        %11122 = vmatprep.subr.bf16.mxu0 %v7862
        %11123 = vmatpush1.bf16.msra.mxu0 %v7861
        %11124 = vmatprep.subr.bf16.mxu0 %v7864
        %11125 = vmatpush1.bf16.msra.mxu0 %v7863
        %11126 = vmatprep.subr.bf16.mxu0 %v7866
        %11127 = vmatpush1.bf16.msra.mxu0 %v7865
        %11128 = vmatprep.subr.bf16.mxu0 %v7868
        %11129 = vmatpush1.bf16.msra.mxu0 %v7867
        %11130 = vmatprep.subr.bf16.mxu0 %v7870
        %11131 = vmatpush1.bf16.msra.mxu0 %v7869
        %11132 = vmatprep.subr.bf16.mxu0 %v7872
        %11133 = vmatpush1.bf16.msra.mxu0 %v7871
        %11134 = vmatprep.subr.bf16.mxu0 %v7874
        %11135 = vmatpush1.bf16.msra.mxu0 %v7873
        %11136 = vmatprep.subr.bf16.mxu0 %v7876
        %11137 = vmatpush1.bf16.msra.mxu0 %v7875
        %11138 = vmatprep.subr.bf16.mxu0 %v7878
        %11139 = vmatpush1.bf16.msra.mxu0 %v7877
        %11140 = vmatprep.subr.bf16.mxu0 %v7880
        %11141 = vmatpush1.bf16.msra.mxu0 %v7879
        %11142 = vmatprep.subr.bf16.mxu0 %v7882
        %11143 = vmatpush1.bf16.msra.mxu0 %v7881
        %11144 = vmatprep.subr.bf16.mxu0 %v7884
        %11145 = vmatpush1.bf16.msra.mxu0 %v7883
        %11146 = vmatprep.subr.bf16.mxu0 %v7886
        %11147 = vmatpush1.bf16.msra.mxu0 %v7885
        %11148 = vmatprep.subr.bf16.mxu0 %v7888
        %11149 = vmatpush1.bf16.msra.mxu0 %v7887
        %11150 = vmatprep.subr.bf16.mxu0 %v7890
        %11151 = vmatpush1.bf16.msra.mxu0 %v7889
        %11152 = vmatprep.mubr.bf16.mxu0 %v990
        %11153 = vmatmul.mubr.bf16.gmra.mrb[0].mxu0 %v989
        %v11154 = vpop.f32.mrb[0].mxu0
        %v11155 = vadd.f32 %v11114, %v11154
        %v11156 = vpop.f32.mrb[0].mxu0
        %v11157 = vadd.f32 %v11116, %v11156
        %v11158 = vpop.f32.mrb[0].mxu0
        %v11159 = vpop.f32.mrb[0].mxu0
        %11160 = vdwg.mxu0
        %11161 = vmatprep.subr.bf16.mxu0 %v7892
        %11162 = vmatpush1.bf16.msra.mxu0 %v7891
        %11163 = vmatprep.subr.bf16.mxu0 %v7894
        %11164 = vmatpush1.bf16.msra.mxu0 %v7893
        %11165 = vmatprep.subr.bf16.mxu0 %v7896
        %11166 = vmatpush1.bf16.msra.mxu0 %v7895
        %11167 = vmatprep.subr.bf16.mxu0 %v7898
        %11168 = vmatpush1.bf16.msra.mxu0 %v7897
        %11169 = vmatprep.subr.bf16.mxu0 %v7900
        %11170 = vmatpush1.bf16.msra.mxu0 %v7899
        %11171 = vmatprep.subr.bf16.mxu0 %v7902
        %11172 = vmatpush1.bf16.msra.mxu0 %v7901
        %11173 = vmatprep.subr.bf16.mxu0 %v7904
        %11174 = vmatpush1.bf16.msra.mxu0 %v7903
        %11175 = vmatprep.subr.bf16.mxu0 %v7906
        %11176 = vmatpush1.bf16.msra.mxu0 %v7905
        %11177 = vmatprep.subr.bf16.mxu0 %v7908
        %11178 = vmatpush1.bf16.msra.mxu0 %v7907
        %11179 = vmatprep.subr.bf16.mxu0 %v7910
        %11180 = vmatpush1.bf16.msra.mxu0 %v7909
        %11181 = vmatprep.subr.bf16.mxu0 %v7912
        %11182 = vmatpush1.bf16.msra.mxu0 %v7911
        %11183 = vmatprep.subr.bf16.mxu0 %v7914
        %11184 = vmatpush1.bf16.msra.mxu0 %v7913
        %11185 = vmatprep.subr.bf16.mxu0 %v7916
        %11186 = vmatpush1.bf16.msra.mxu0 %v7915
        %11187 = vmatprep.subr.bf16.mxu0 %v7918
        %11188 = vmatpush1.bf16.msra.mxu0 %v7917
        %11189 = vmatprep.subr.bf16.mxu0 %v7920
        %11190 = vmatpush1.bf16.msra.mxu0 %v7919
        %11191 = vmatprep.subr.bf16.mxu0 %v7922
        %11192 = vmatpush1.bf16.msra.mxu0 %v7921
        %11193 = vmatprep.mubr.bf16.mxu0 %v992
        %11194 = vmatmul.mubr.bf16.gmra.mrb[0].mxu0 %v991
        %v11195 = vpop.f32.mrb[0].mxu0
        %v11196 = vadd.f32 %v11155, %v11195
        %v11197 = vpop.f32.mrb[0].mxu0
        %v11198 = vadd.f32 %v11157, %v11197
        %v11199 = vpop.f32.mrb[0].mxu0
        %v11200 = vpop.f32.mrb[0].mxu0
        %11201 = vdwg.mxu0
        %11202 = vmatprep.subr.bf16.mxu0 %v7924
        %11203 = vmatpush1.bf16.msra.mxu0 %v7923
        %11204 = vmatprep.subr.bf16.mxu0 %v7926
        %11205 = vmatpush1.bf16.msra.mxu0 %v7925
        %11206 = vmatprep.subr.bf16.mxu0 %v7928
        %11207 = vmatpush1.bf16.msra.mxu0 %v7927
        %11208 = vmatprep.subr.bf16.mxu0 %v7930
        %11209 = vmatpush1.bf16.msra.mxu0 %v7929
        %11210 = vmatprep.subr.bf16.mxu0 %v7932
        %11211 = vmatpush1.bf16.msra.mxu0 %v7931
        %11212 = vmatprep.subr.bf16.mxu0 %v7934
        %11213 = vmatpush1.bf16.msra.mxu0 %v7933
        %11214 = vmatprep.subr.bf16.mxu0 %v7936
        %11215 = vmatpush1.bf16.msra.mxu0 %v7935
        %11216 = vmatprep.subr.bf16.mxu0 %v7938
        %11217 = vmatpush1.bf16.msra.mxu0 %v7937
        %11218 = vmatprep.subr.bf16.mxu0 %v7940
        %11219 = vmatpush1.bf16.msra.mxu0 %v7939
        %11220 = vmatprep.subr.bf16.mxu0 %v7942
        %11221 = vmatpush1.bf16.msra.mxu0 %v7941
        %11222 = vmatprep.subr.bf16.mxu0 %v7944
        %11223 = vmatpush1.bf16.msra.mxu0 %v7943
        %11224 = vmatprep.subr.bf16.mxu0 %v7946
        %11225 = vmatpush1.bf16.msra.mxu0 %v7945
        %11226 = vmatprep.subr.bf16.mxu0 %v7948
        %11227 = vmatpush1.bf16.msra.mxu0 %v7947
        %11228 = vmatprep.subr.bf16.mxu0 %v7950
        %11229 = vmatpush1.bf16.msra.mxu0 %v7949
        %11230 = vmatprep.subr.bf16.mxu0 %v7952
        %11231 = vmatpush1.bf16.msra.mxu0 %v7951
        %11232 = vmatprep.subr.bf16.mxu0 %v7954
        %11233 = vmatpush1.bf16.msra.mxu0 %v7953
        %11234 = vmatprep.mubr.bf16.mxu0 %v994
        %11235 = vmatmul.mubr.bf16.gmra.mrb[0].mxu0 %v993
        %v11236 = vpop.f32.mrb[0].mxu0
        %v11237 = vadd.f32 %v11196, %v11236
        %v11238 = vpop.f32.mrb[0].mxu0
        %v11239 = vadd.f32 %v11198, %v11238
        %v11240 = vpop.f32.mrb[0].mxu0
        %v11241 = vpop.f32.mrb[0].mxu0
        %11242 = vdwg.mxu0
        %11243 = vmatprep.subr.bf16.mxu0 %v7956
        %11244 = vmatpush1.bf16.msra.mxu0 %v7955
        %11245 = vmatprep.subr.bf16.mxu0 %v7958
        %11246 = vmatpush1.bf16.msra.mxu0 %v7957
        %11247 = vmatprep.subr.bf16.mxu0 %v7960
        %11248 = vmatpush1.bf16.msra.mxu0 %v7959
        %11249 = vmatprep.subr.bf16.mxu0 %v7962
        %11250 = vmatpush1.bf16.msra.mxu0 %v7961
        %11251 = vmatprep.subr.bf16.mxu0 %v7964
        %11252 = vmatpush1.bf16.msra.mxu0 %v7963
        %11253 = vmatprep.subr.bf16.mxu0 %v7966
        %11254 = vmatpush1.bf16.msra.mxu0 %v7965
        %11255 = vmatprep.subr.bf16.mxu0 %v7968
        %11256 = vmatpush1.bf16.msra.mxu0 %v7967
        %11257 = vmatprep.subr.bf16.mxu0 %v7970
        %11258 = vmatpush1.bf16.msra.mxu0 %v7969
        %11259 = vmatprep.subr.bf16.mxu0 %v7972
        %11260 = vmatpush1.bf16.msra.mxu0 %v7971
        %11261 = vmatprep.subr.bf16.mxu0 %v7974
        %11262 = vmatpush1.bf16.msra.mxu0 %v7973
        %11263 = vmatprep.subr.bf16.mxu0 %v7976
        %11264 = vmatpush1.bf16.msra.mxu0 %v7975
        %11265 = vmatprep.subr.bf16.mxu0 %v7978
        %11266 = vmatpush1.bf16.msra.mxu0 %v7977
        %11267 = vmatprep.subr.bf16.mxu0 %v7980
        %11268 = vmatpush1.bf16.msra.mxu0 %v7979
        %11269 = vmatprep.subr.bf16.mxu0 %v7982
        %11270 = vmatpush1.bf16.msra.mxu0 %v7981
        %11271 = vmatprep.subr.bf16.mxu0 %v7984
        %11272 = vmatpush1.bf16.msra.mxu0 %v7983
        %11273 = vmatprep.subr.bf16.mxu0 %v7986
        %11274 = vmatpush1.bf16.msra.mxu0 %v7985
        %11275 = vmatprep.mubr.bf16.mxu0 %v996
        %11276 = vmatmul.mubr.bf16.gmra.mrb[0].mxu0 %v995
        %v11277 = vpop.f32.mrb[0].mxu0
        %v11278 = vadd.f32 %v11237, %v11277
        %v11279 = vpop.f32.mrb[0].mxu0
        %v11280 = vadd.f32 %v11239, %v11279
        %v11281 = vpop.f32.mrb[0].mxu0
        %v11282 = vpop.f32.mrb[0].mxu0
        %11283 = vdwg.mxu0
        %11284 = vmatprep.subr.bf16.mxu0 %v7988
        %11285 = vmatpush1.bf16.msra.mxu0 %v7987
        %11286 = vmatprep.subr.bf16.mxu0 %v7990
        %11287 = vmatpush1.bf16.msra.mxu0 %v7989
        %11288 = vmatprep.subr.bf16.mxu0 %v7992
        %11289 = vmatpush1.bf16.msra.mxu0 %v7991
        %11290 = vmatprep.subr.bf16.mxu0 %v7994
        %11291 = vmatpush1.bf16.msra.mxu0 %v7993
        %11292 = vmatprep.subr.bf16.mxu0 %v7996
        %11293 = vmatpush1.bf16.msra.mxu0 %v7995
        %11294 = vmatprep.subr.bf16.mxu0 %v7998
        %11295 = vmatpush1.bf16.msra.mxu0 %v7997
        %11296 = vmatprep.subr.bf16.mxu0 %v8000
        %11297 = vmatpush1.bf16.msra.mxu0 %v7999
        %11298 = vmatprep.subr.bf16.mxu0 %v8002
        %11299 = vmatpush1.bf16.msra.mxu0 %v8001
        %11300 = vmatprep.subr.bf16.mxu0 %v8004
        %11301 = vmatpush1.bf16.msra.mxu0 %v8003
        %11302 = vmatprep.subr.bf16.mxu0 %v8006
        %11303 = vmatpush1.bf16.msra.mxu0 %v8005
        %11304 = vmatprep.subr.bf16.mxu0 %v8008
        %11305 = vmatpush1.bf16.msra.mxu0 %v8007
        %11306 = vmatprep.subr.bf16.mxu0 %v8010
        %11307 = vmatpush1.bf16.msra.mxu0 %v8009
        %11308 = vmatprep.subr.bf16.mxu0 %v8012
        %11309 = vmatpush1.bf16.msra.mxu0 %v8011
        %11310 = vmatprep.subr.bf16.mxu0 %v8014
        %11311 = vmatpush1.bf16.msra.mxu0 %v8013
        %11312 = vmatprep.subr.bf16.mxu0 %v8016
        %11313 = vmatpush1.bf16.msra.mxu0 %v8015
        %11314 = vmatprep.subr.bf16.mxu0 %v8018
        %11315 = vmatpush1.bf16.msra.mxu0 %v8017
        %11316 = vmatprep.mubr.bf16.mxu0 %v998
        %11317 = vmatmul.mubr.bf16.gmra.mrb[0].mxu0 %v997
        %v11318 = vpop.f32.mrb[0].mxu0
        %v11319 = vadd.f32 %v11278, %v11318
        %v11320 = vpop.f32.mrb[0].mxu0
        %v11321 = vadd.f32 %v11280, %v11320
        %v11322 = vpop.f32.mrb[0].mxu0
        %v11323 = vpop.f32.mrb[0].mxu0
        %11324 = vdwg.mxu0
        %11325 = vmatprep.subr.bf16.mxu0 %v8020
        %11326 = vmatpush1.bf16.msra.mxu0 %v8019
        %11327 = vmatprep.subr.bf16.mxu0 %v8022
        %11328 = vmatpush1.bf16.msra.mxu0 %v8021
        %11329 = vmatprep.subr.bf16.mxu0 %v8024
        %11330 = vmatpush1.bf16.msra.mxu0 %v8023
        %11331 = vmatprep.subr.bf16.mxu0 %v8026
        %11332 = vmatpush1.bf16.msra.mxu0 %v8025
        %11333 = vmatprep.subr.bf16.mxu0 %v8028
        %11334 = vmatpush1.bf16.msra.mxu0 %v8027
        %11335 = vmatprep.subr.bf16.mxu0 %v8030
        %11336 = vmatpush1.bf16.msra.mxu0 %v8029
        %11337 = vmatprep.subr.bf16.mxu0 %v8032
        %11338 = vmatpush1.bf16.msra.mxu0 %v8031
        %11339 = vmatprep.subr.bf16.mxu0 %v8034
        %11340 = vmatpush1.bf16.msra.mxu0 %v8033
        %11341 = vmatprep.subr.bf16.mxu0 %v8036
        %11342 = vmatpush1.bf16.msra.mxu0 %v8035
        %11343 = vmatprep.subr.bf16.mxu0 %v8038
        %11344 = vmatpush1.bf16.msra.mxu0 %v8037
        %11345 = vmatprep.subr.bf16.mxu0 %v8040
        %11346 = vmatpush1.bf16.msra.mxu0 %v8039
        %11347 = vmatprep.subr.bf16.mxu0 %v8042
        %11348 = vmatpush1.bf16.msra.mxu0 %v8041
        %11349 = vmatprep.subr.bf16.mxu0 %v8044
        %11350 = vmatpush1.bf16.msra.mxu0 %v8043
        %11351 = vmatprep.subr.bf16.mxu0 %v8046
        %11352 = vmatpush1.bf16.msra.mxu0 %v8045
        %11353 = vmatprep.subr.bf16.mxu0 %v8048
        %11354 = vmatpush1.bf16.msra.mxu0 %v8047
        %11355 = vmatprep.subr.bf16.mxu0 %v8050
        %11356 = vmatpush1.bf16.msra.mxu0 %v8049
        %11357 = vmatprep.mubr.bf16.mxu0 %v1000
        %11358 = vmatmul.mubr.bf16.gmra.mrb[0].mxu0 %v999
        %v11359 = vpop.f32.mrb[0].mxu0
        %v11360 = vadd.f32 %v11319, %v11359
        %v11361 = vpop.f32.mrb[0].mxu0
        %v11362 = vadd.f32 %v11321, %v11361
        %v11363 = vpop.f32.mrb[0].mxu0
        %v11364 = vpop.f32.mrb[0].mxu0
        %11365 = vdwg.mxu0
        %11366 = vmatprep.subr.bf16.mxu0 %v8052
        %11367 = vmatpush1.bf16.msra.mxu0 %v8051
        %11368 = vmatprep.subr.bf16.mxu0 %v8054
        %11369 = vmatpush1.bf16.msra.mxu0 %v8053
        %11370 = vmatprep.subr.bf16.mxu0 %v8056
        %11371 = vmatpush1.bf16.msra.mxu0 %v8055
        %11372 = vmatprep.subr.bf16.mxu0 %v8058
        %11373 = vmatpush1.bf16.msra.mxu0 %v8057
        %11374 = vmatprep.subr.bf16.mxu0 %v8060
        %11375 = vmatpush1.bf16.msra.mxu0 %v8059
        %11376 = vmatprep.subr.bf16.mxu0 %v8062
        %11377 = vmatpush1.bf16.msra.mxu0 %v8061
        %11378 = vmatprep.subr.bf16.mxu0 %v8064
        %11379 = vmatpush1.bf16.msra.mxu0 %v8063
        %11380 = vmatprep.subr.bf16.mxu0 %v8066
        %11381 = vmatpush1.bf16.msra.mxu0 %v8065
        %11382 = vmatprep.subr.bf16.mxu0 %v8068
        %11383 = vmatpush1.bf16.msra.mxu0 %v8067
        %11384 = vmatprep.subr.bf16.mxu0 %v8070
        %11385 = vmatpush1.bf16.msra.mxu0 %v8069
        %11386 = vmatprep.subr.bf16.mxu0 %v8072
        %11387 = vmatpush1.bf16.msra.mxu0 %v8071
        %11388 = vmatprep.subr.bf16.mxu0 %v8074
        %11389 = vmatpush1.bf16.msra.mxu0 %v8073
        %11390 = vmatprep.subr.bf16.mxu0 %v8076
        %11391 = vmatpush1.bf16.msra.mxu0 %v8075
        %11392 = vmatprep.subr.bf16.mxu0 %v8078
        %11393 = vmatpush1.bf16.msra.mxu0 %v8077
        %11394 = vmatprep.subr.bf16.mxu0 %v8080
        %11395 = vmatpush1.bf16.msra.mxu0 %v8079
        %11396 = vmatprep.subr.bf16.mxu0 %v8082
        %11397 = vmatpush1.bf16.msra.mxu0 %v8081
        %11398 = vmatprep.mubr.bf16.mxu0 %v1002
        %11399 = vmatmul.mubr.bf16.gmra.mrb[0].mxu0 %v1001
        %v11400 = vpop.f32.mrb[0].mxu0
        %v11401 = vadd.f32 %v11360, %v11400
        %v11402 = vpop.f32.mrb[0].mxu0
        %v11403 = vadd.f32 %v11362, %v11402
        %v11404 = vpop.f32.mrb[0].mxu0
        %v11405 = vpop.f32.mrb[0].mxu0
        %11406 = vdwg.mxu0
        %11407 = vmatprep.subr.bf16.mxu0 %v8084
        %11408 = vmatpush1.bf16.msra.mxu0 %v8083
        %11409 = vmatprep.subr.bf16.mxu0 %v8086
        %11410 = vmatpush1.bf16.msra.mxu0 %v8085
        %11411 = vmatprep.subr.bf16.mxu0 %v8088
        %11412 = vmatpush1.bf16.msra.mxu0 %v8087
        %11413 = vmatprep.subr.bf16.mxu0 %v8090
        %11414 = vmatpush1.bf16.msra.mxu0 %v8089
        %11415 = vmatprep.subr.bf16.mxu0 %v8092
        %11416 = vmatpush1.bf16.msra.mxu0 %v8091
        %11417 = vmatprep.subr.bf16.mxu0 %v8094
        %11418 = vmatpush1.bf16.msra.mxu0 %v8093
        %11419 = vmatprep.subr.bf16.mxu0 %v8096
        %11420 = vmatpush1.bf16.msra.mxu0 %v8095
        %11421 = vmatprep.subr.bf16.mxu0 %v8098
        %11422 = vmatpush1.bf16.msra.mxu0 %v8097
        %11423 = vmatprep.subr.bf16.mxu0 %v8100
        %11424 = vmatpush1.bf16.msra.mxu0 %v8099
        %11425 = vmatprep.subr.bf16.mxu0 %v8102
        %11426 = vmatpush1.bf16.msra.mxu0 %v8101
        %11427 = vmatprep.subr.bf16.mxu0 %v8104
        %11428 = vmatpush1.bf16.msra.mxu0 %v8103
        %11429 = vmatprep.subr.bf16.mxu0 %v8106
        %11430 = vmatpush1.bf16.msra.mxu0 %v8105
        %11431 = vmatprep.subr.bf16.mxu0 %v8108
        %11432 = vmatpush1.bf16.msra.mxu0 %v8107
        %11433 = vmatprep.subr.bf16.mxu0 %v8110
        %11434 = vmatpush1.bf16.msra.mxu0 %v8109
        %11435 = vmatprep.subr.bf16.mxu0 %v8112
        %11436 = vmatpush1.bf16.msra.mxu0 %v8111
        %11437 = vmatprep.subr.bf16.mxu0 %v8114
        %11438 = vmatpush1.bf16.msra.mxu0 %v8113
        %11439 = vmatprep.mubr.bf16.mxu0 %v1004
        %11440 = vmatmul.mubr.bf16.gmra.mrb[0].mxu0 %v1003
        %v11441 = vpop.f32.mrb[0].mxu0
        %v11442 = vadd.f32 %v11401, %v11441
        %v11443 = vpop.f32.mrb[0].mxu0
        %v11444 = vadd.f32 %v11403, %v11443
        %v11445 = vpop.f32.mrb[0].mxu0
        %v11446 = vpop.f32.mrb[0].mxu0
        %11447 = vdwg.mxu0
        %11448 = vmatprep.subr.bf16.mxu0 %v8116
        %11449 = vmatpush1.bf16.msra.mxu0 %v8115
        %11450 = vmatprep.subr.bf16.mxu0 %v8118
        %11451 = vmatpush1.bf16.msra.mxu0 %v8117
        %11452 = vmatprep.subr.bf16.mxu0 %v8120
        %11453 = vmatpush1.bf16.msra.mxu0 %v8119
        %11454 = vmatprep.subr.bf16.mxu0 %v8122
        %11455 = vmatpush1.bf16.msra.mxu0 %v8121
        %11456 = vmatprep.subr.bf16.mxu0 %v8124
        %11457 = vmatpush1.bf16.msra.mxu0 %v8123
        %11458 = vmatprep.subr.bf16.mxu0 %v8126
        %11459 = vmatpush1.bf16.msra.mxu0 %v8125
        %11460 = vmatprep.subr.bf16.mxu0 %v8128
        %11461 = vmatpush1.bf16.msra.mxu0 %v8127
        %11462 = vmatprep.subr.bf16.mxu0 %v8130
        %11463 = vmatpush1.bf16.msra.mxu0 %v8129
        %11464 = vmatprep.subr.bf16.mxu0 %v8132
        %11465 = vmatpush1.bf16.msra.mxu0 %v8131
        %11466 = vmatprep.subr.bf16.mxu0 %v8134
        %11467 = vmatpush1.bf16.msra.mxu0 %v8133
        %11468 = vmatprep.subr.bf16.mxu0 %v8136
        %11469 = vmatpush1.bf16.msra.mxu0 %v8135
        %11470 = vmatprep.subr.bf16.mxu0 %v8138
        %11471 = vmatpush1.bf16.msra.mxu0 %v8137
        %11472 = vmatprep.subr.bf16.mxu0 %v8140
        %11473 = vmatpush1.bf16.msra.mxu0 %v8139
        %11474 = vmatprep.subr.bf16.mxu0 %v8142
        %11475 = vmatpush1.bf16.msra.mxu0 %v8141
        %11476 = vmatprep.subr.bf16.mxu0 %v8144
        %11477 = vmatpush1.bf16.msra.mxu0 %v8143
        %11478 = vmatprep.subr.bf16.mxu0 %v8146
        %11479 = vmatpush1.bf16.msra.mxu0 %v8145
        %11480 = vmatprep.mubr.bf16.mxu0 %v1006
        %11481 = vmatmul.mubr.bf16.gmra.mrb[0].mxu0 %v1005
        %v11482 = vpop.f32.mrb[0].mxu0
        %v11483 = vadd.f32 %v11442, %v11482
        %v11484 = vpop.f32.mrb[0].mxu0
        %v11485 = vadd.f32 %v11444, %v11484
        %v11486 = vpop.f32.mrb[0].mxu0
        %v11487 = vpop.f32.mrb[0].mxu0
        %11488 = vdwg.mxu0
        %11489 = vmatprep.subr.bf16.mxu0 %v8148
        %11490 = vmatpush1.bf16.msra.mxu0 %v8147
        %11491 = vmatprep.subr.bf16.mxu0 %v8150
        %11492 = vmatpush1.bf16.msra.mxu0 %v8149
        %11493 = vmatprep.subr.bf16.mxu0 %v8152
        %11494 = vmatpush1.bf16.msra.mxu0 %v8151
        %11495 = vmatprep.subr.bf16.mxu0 %v8154
        %11496 = vmatpush1.bf16.msra.mxu0 %v8153
        %11497 = vmatprep.subr.bf16.mxu0 %v8156
        %11498 = vmatpush1.bf16.msra.mxu0 %v8155
        %11499 = vmatprep.subr.bf16.mxu0 %v8158
        %11500 = vmatpush1.bf16.msra.mxu0 %v8157
        %11501 = vmatprep.subr.bf16.mxu0 %v8160
        %11502 = vmatpush1.bf16.msra.mxu0 %v8159
        %11503 = vmatprep.subr.bf16.mxu0 %v8162
        %11504 = vmatpush1.bf16.msra.mxu0 %v8161
        %11505 = vmatprep.subr.bf16.mxu0 %v8164
        %11506 = vmatpush1.bf16.msra.mxu0 %v8163
        %11507 = vmatprep.subr.bf16.mxu0 %v8166
        %11508 = vmatpush1.bf16.msra.mxu0 %v8165
        %11509 = vmatprep.subr.bf16.mxu0 %v8168
        %11510 = vmatpush1.bf16.msra.mxu0 %v8167
        %11511 = vmatprep.subr.bf16.mxu0 %v8170
        %11512 = vmatpush1.bf16.msra.mxu0 %v8169
        %11513 = vmatprep.subr.bf16.mxu0 %v8172
        %11514 = vmatpush1.bf16.msra.mxu0 %v8171
        %11515 = vmatprep.subr.bf16.mxu0 %v8174
        %11516 = vmatpush1.bf16.msra.mxu0 %v8173
        %11517 = vmatprep.subr.bf16.mxu0 %v8176
        %11518 = vmatpush1.bf16.msra.mxu0 %v8175
        %11519 = vmatprep.subr.bf16.mxu0 %v8178
        %11520 = vmatpush1.bf16.msra.mxu0 %v8177
        %11521 = vmatprep.mubr.bf16.mxu0 %v1008
        %11522 = vmatmul.mubr.bf16.gmra.mrb[0].mxu0 %v1007
        %v11523 = vpop.f32.mrb[0].mxu0
        %v11524 = vadd.f32 %v11483, %v11523
        %v11525 = vpop.f32.mrb[0].mxu0
        %v11526 = vadd.f32 %v11485, %v11525
        %v11527 = vpop.f32.mrb[0].mxu0
        %v11528 = vpop.f32.mrb[0].mxu0
        %11529 = vdwg.mxu0
        %11530 = vmatprep.subr.bf16.mxu0 %v8180
        %11531 = vmatpush1.bf16.msra.mxu0 %v8179
        %11532 = vmatprep.subr.bf16.mxu0 %v8182
        %11533 = vmatpush1.bf16.msra.mxu0 %v8181
        %11534 = vmatprep.subr.bf16.mxu0 %v8184
        %11535 = vmatpush1.bf16.msra.mxu0 %v8183
        %11536 = vmatprep.subr.bf16.mxu0 %v8186
        %11537 = vmatpush1.bf16.msra.mxu0 %v8185
        %11538 = vmatprep.subr.bf16.mxu0 %v8188
        %11539 = vmatpush1.bf16.msra.mxu0 %v8187
        %11540 = vmatprep.subr.bf16.mxu0 %v8190
        %11541 = vmatpush1.bf16.msra.mxu0 %v8189
        %11542 = vmatprep.subr.bf16.mxu0 %v8192
        %11543 = vmatpush1.bf16.msra.mxu0 %v8191
        %11544 = vmatprep.subr.bf16.mxu0 %v8194
        %11545 = vmatpush1.bf16.msra.mxu0 %v8193
        %11546 = vmatprep.subr.bf16.mxu0 %v8196
        %11547 = vmatpush1.bf16.msra.mxu0 %v8195
        %11548 = vmatprep.subr.bf16.mxu0 %v8198
        %11549 = vmatpush1.bf16.msra.mxu0 %v8197
        %11550 = vmatprep.subr.bf16.mxu0 %v8200
        %11551 = vmatpush1.bf16.msra.mxu0 %v8199
        %11552 = vmatprep.subr.bf16.mxu0 %v8202
        %11553 = vmatpush1.bf16.msra.mxu0 %v8201
        %11554 = vmatprep.subr.bf16.mxu0 %v8204
        %11555 = vmatpush1.bf16.msra.mxu0 %v8203
        %11556 = vmatprep.subr.bf16.mxu0 %v8206
        %11557 = vmatpush1.bf16.msra.mxu0 %v8205
        %11558 = vmatprep.subr.bf16.mxu0 %v8208
        %11559 = vmatpush1.bf16.msra.mxu0 %v8207
        %11560 = vmatprep.subr.bf16.mxu0 %v8210
        %11561 = vmatpush1.bf16.msra.mxu0 %v8209
        %11562 = vmatprep.mubr.bf16.mxu0 %v1010
        %11563 = vmatmul.mubr.bf16.gmra.mrb[0].mxu0 %v1009
        %v11564 = vpop.f32.mrb[0].mxu0
        %v11565 = vadd.f32 %v11524, %v11564
        %v11566 = vpop.f32.mrb[0].mxu0
        %v11567 = vadd.f32 %v11526, %v11566
        %v11568 = vpop.f32.mrb[0].mxu0
        %v11569 = vpop.f32.mrb[0].mxu0
        %11570 = vdwg.mxu0
        %11571 = vmatprep.subr.bf16.mxu0 %v8212
        %11572 = vmatpush1.bf16.msra.mxu0 %v8211
        %11573 = vmatprep.subr.bf16.mxu0 %v8214
        %11574 = vmatpush1.bf16.msra.mxu0 %v8213
        %11575 = vmatprep.subr.bf16.mxu0 %v8216
        %11576 = vmatpush1.bf16.msra.mxu0 %v8215
        %11577 = vmatprep.subr.bf16.mxu0 %v8218
        %11578 = vmatpush1.bf16.msra.mxu0 %v8217
        %11579 = vmatprep.subr.bf16.mxu0 %v8220
        %11580 = vmatpush1.bf16.msra.mxu0 %v8219
        %11581 = vmatprep.subr.bf16.mxu0 %v8222
        %11582 = vmatpush1.bf16.msra.mxu0 %v8221
        %11583 = vmatprep.subr.bf16.mxu0 %v8224
        %11584 = vmatpush1.bf16.msra.mxu0 %v8223
        %11585 = vmatprep.subr.bf16.mxu0 %v8226
        %11586 = vmatpush1.bf16.msra.mxu0 %v8225
        %11587 = vmatprep.subr.bf16.mxu0 %v8228
        %11588 = vmatpush1.bf16.msra.mxu0 %v8227
        %11589 = vmatprep.subr.bf16.mxu0 %v8230
        %11590 = vmatpush1.bf16.msra.mxu0 %v8229
        %11591 = vmatprep.subr.bf16.mxu0 %v8232
        %11592 = vmatpush1.bf16.msra.mxu0 %v8231
        %11593 = vmatprep.subr.bf16.mxu0 %v8234
        %11594 = vmatpush1.bf16.msra.mxu0 %v8233
        %11595 = vmatprep.subr.bf16.mxu0 %v8236
        %11596 = vmatpush1.bf16.msra.mxu0 %v8235
        %11597 = vmatprep.subr.bf16.mxu0 %v8238
        %11598 = vmatpush1.bf16.msra.mxu0 %v8237
        %11599 = vmatprep.subr.bf16.mxu0 %v8240
        %11600 = vmatpush1.bf16.msra.mxu0 %v8239
        %11601 = vmatprep.subr.bf16.mxu0 %v8242
        %11602 = vmatpush1.bf16.msra.mxu0 %v8241
        %11603 = vmatprep.mubr.bf16.mxu0 %v1012
        %11604 = vmatmul.mubr.bf16.gmra.mrb[0].mxu0 %v1011
        %v11605 = vpop.f32.mrb[0].mxu0
        %v11606 = vadd.f32 %v11565, %v11605
        %v11607 = vpop.f32.mrb[0].mxu0
        %v11608 = vadd.f32 %v11567, %v11607
        %v11609 = vpop.f32.mrb[0].mxu0
        %v11610 = vpop.f32.mrb[0].mxu0
        %11611 = vdwg.mxu0
        %11612 = vmatprep.subr.bf16.mxu0 %v8244
        %11613 = vmatpush1.bf16.msra.mxu0 %v8243
        %11614 = vmatprep.subr.bf16.mxu0 %v8246
        %11615 = vmatpush1.bf16.msra.mxu0 %v8245
        %11616 = vmatprep.subr.bf16.mxu0 %v8248
        %11617 = vmatpush1.bf16.msra.mxu0 %v8247
        %11618 = vmatprep.subr.bf16.mxu0 %v8250
        %11619 = vmatpush1.bf16.msra.mxu0 %v8249
        %11620 = vmatprep.subr.bf16.mxu0 %v8252
        %11621 = vmatpush1.bf16.msra.mxu0 %v8251
        %11622 = vmatprep.subr.bf16.mxu0 %v8254
        %11623 = vmatpush1.bf16.msra.mxu0 %v8253
        %11624 = vmatprep.subr.bf16.mxu0 %v8256
        %11625 = vmatpush1.bf16.msra.mxu0 %v8255
        %11626 = vmatprep.subr.bf16.mxu0 %v8258
        %11627 = vmatpush1.bf16.msra.mxu0 %v8257
        %11628 = vmatprep.subr.bf16.mxu0 %v8260
        %11629 = vmatpush1.bf16.msra.mxu0 %v8259
        %11630 = vmatprep.subr.bf16.mxu0 %v8262
        %11631 = vmatpush1.bf16.msra.mxu0 %v8261
        %11632 = vmatprep.subr.bf16.mxu0 %v8264
        %11633 = vmatpush1.bf16.msra.mxu0 %v8263
        %11634 = vmatprep.subr.bf16.mxu0 %v8266
        %11635 = vmatpush1.bf16.msra.mxu0 %v8265
        %11636 = vmatprep.subr.bf16.mxu0 %v8268
        %11637 = vmatpush1.bf16.msra.mxu0 %v8267
        %11638 = vmatprep.subr.bf16.mxu0 %v8270
        %11639 = vmatpush1.bf16.msra.mxu0 %v8269
        %11640 = vmatprep.subr.bf16.mxu0 %v8272
        %11641 = vmatpush1.bf16.msra.mxu0 %v8271
        %11642 = vmatprep.subr.bf16.mxu0 %v8274
        %11643 = vmatpush1.bf16.msra.mxu0 %v8273
        %11644 = vmatprep.mubr.bf16.mxu0 %v1014
        %11645 = vmatmul.mubr.bf16.gmra.mrb[0].mxu0 %v1013
        %v11646 = vpop.f32.mrb[0].mxu0
        %v11647 = vadd.f32 %v11606, %v11646
        %v11648 = vpop.f32.mrb[0].mxu0
        %v11649 = vadd.f32 %v11608, %v11648
        %v11650 = vpop.f32.mrb[0].mxu0
        %v11651 = vpop.f32.mrb[0].mxu0
        %11652 = vdwg.mxu0
        %11653 = vmatprep.subr.bf16.mxu0 %v8276
        %11654 = vmatpush1.bf16.msra.mxu0 %v8275
        %11655 = vmatprep.subr.bf16.mxu0 %v8278
        %11656 = vmatpush1.bf16.msra.mxu0 %v8277
        %11657 = vmatprep.subr.bf16.mxu0 %v8280
        %11658 = vmatpush1.bf16.msra.mxu0 %v8279
        %11659 = vmatprep.subr.bf16.mxu0 %v8282
        %11660 = vmatpush1.bf16.msra.mxu0 %v8281
        %11661 = vmatprep.subr.bf16.mxu0 %v8284
        %11662 = vmatpush1.bf16.msra.mxu0 %v8283
        %11663 = vmatprep.subr.bf16.mxu0 %v8286
        %11664 = vmatpush1.bf16.msra.mxu0 %v8285
        %11665 = vmatprep.subr.bf16.mxu0 %v8288
        %11666 = vmatpush1.bf16.msra.mxu0 %v8287
        %11667 = vmatprep.subr.bf16.mxu0 %v8290
        %11668 = vmatpush1.bf16.msra.mxu0 %v8289
        %11669 = vmatprep.subr.bf16.mxu0 %v8292
        %11670 = vmatpush1.bf16.msra.mxu0 %v8291
        %11671 = vmatprep.subr.bf16.mxu0 %v8294
        %11672 = vmatpush1.bf16.msra.mxu0 %v8293
        %11673 = vmatprep.subr.bf16.mxu0 %v8296
        %11674 = vmatpush1.bf16.msra.mxu0 %v8295
        %11675 = vmatprep.subr.bf16.mxu0 %v8298
        %11676 = vmatpush1.bf16.msra.mxu0 %v8297
        %11677 = vmatprep.subr.bf16.mxu0 %v8300
        %11678 = vmatpush1.bf16.msra.mxu0 %v8299
        %11679 = vmatprep.subr.bf16.mxu0 %v8302
        %11680 = vmatpush1.bf16.msra.mxu0 %v8301
        %11681 = vmatprep.subr.bf16.mxu0 %v8304
        %11682 = vmatpush1.bf16.msra.mxu0 %v8303
        %11683 = vmatprep.subr.bf16.mxu0 %v8306
        %11684 = vmatpush1.bf16.msra.mxu0 %v8305
        %11685 = vmatprep.mubr.bf16.mxu0 %v1016
        %11686 = vmatmul.mubr.bf16.gmra.mrb[0].mxu0 %v1015
        %v11687 = vpop.f32.mrb[0].mxu0
        %v11688 = vadd.f32 %v11647, %v11687
        %v11689 = vpop.f32.mrb[0].mxu0
        %v11690 = vadd.f32 %v11649, %v11689
        %v11691 = vpop.f32.mrb[0].mxu0
        %v11692 = vpop.f32.mrb[0].mxu0
        %11693 = vdwg.mxu0
        %11694 = vmatprep.subr.bf16.mxu0 %v8308
        %11695 = vmatpush1.bf16.msra.mxu0 %v8307
        %11696 = vmatprep.subr.bf16.mxu0 %v8310
        %11697 = vmatpush1.bf16.msra.mxu0 %v8309
        %11698 = vmatprep.subr.bf16.mxu0 %v8312
        %11699 = vmatpush1.bf16.msra.mxu0 %v8311
        %11700 = vmatprep.subr.bf16.mxu0 %v8314
        %11701 = vmatpush1.bf16.msra.mxu0 %v8313
        %11702 = vmatprep.subr.bf16.mxu0 %v8316
        %11703 = vmatpush1.bf16.msra.mxu0 %v8315
        %11704 = vmatprep.subr.bf16.mxu0 %v8318
        %11705 = vmatpush1.bf16.msra.mxu0 %v8317
        %11706 = vmatprep.subr.bf16.mxu0 %v8320
        %11707 = vmatpush1.bf16.msra.mxu0 %v8319
        %11708 = vmatprep.subr.bf16.mxu0 %v8322
        %11709 = vmatpush1.bf16.msra.mxu0 %v8321
        %11710 = vmatprep.subr.bf16.mxu0 %v8324
        %11711 = vmatpush1.bf16.msra.mxu0 %v8323
        %11712 = vmatprep.subr.bf16.mxu0 %v8326
        %11713 = vmatpush1.bf16.msra.mxu0 %v8325
        %11714 = vmatprep.subr.bf16.mxu0 %v8328
        %11715 = vmatpush1.bf16.msra.mxu0 %v8327
        %11716 = vmatprep.subr.bf16.mxu0 %v8330
        %11717 = vmatpush1.bf16.msra.mxu0 %v8329
        %11718 = vmatprep.subr.bf16.mxu0 %v8332
        %11719 = vmatpush1.bf16.msra.mxu0 %v8331
        %11720 = vmatprep.subr.bf16.mxu0 %v8334
        %11721 = vmatpush1.bf16.msra.mxu0 %v8333
        %11722 = vmatprep.subr.bf16.mxu0 %v8336
        %11723 = vmatpush1.bf16.msra.mxu0 %v8335
        %11724 = vmatprep.subr.bf16.mxu0 %v8338
        %11725 = vmatpush1.bf16.msra.mxu0 %v8337
        %11726 = vmatprep.mubr.bf16.mxu0 %v1018
        %11727 = vmatmul.mubr.bf16.gmra.mrb[0].mxu0 %v1017
        %v11728 = vpop.f32.mrb[0].mxu0
        %v11729 = vadd.f32 %v11688, %v11728
        %v11730 = vpop.f32.mrb[0].mxu0
        %v11731 = vadd.f32 %v11690, %v11730
        %v11732 = vpop.f32.mrb[0].mxu0
        %v11733 = vpop.f32.mrb[0].mxu0
        %11734 = vdwg.mxu0
        %11735 = vmatprep.subr.bf16.mxu0 %v8340
        %11736 = vmatpush1.bf16.msra.mxu0 %v8339
        %11737 = vmatprep.subr.bf16.mxu0 %v8342
        %11738 = vmatpush1.bf16.msra.mxu0 %v8341
        %11739 = vmatprep.subr.bf16.mxu0 %v8344
        %11740 = vmatpush1.bf16.msra.mxu0 %v8343
        %11741 = vmatprep.subr.bf16.mxu0 %v8346
        %11742 = vmatpush1.bf16.msra.mxu0 %v8345
        %11743 = vmatprep.subr.bf16.mxu0 %v8348
        %11744 = vmatpush1.bf16.msra.mxu0 %v8347
        %11745 = vmatprep.subr.bf16.mxu0 %v8350
        %11746 = vmatpush1.bf16.msra.mxu0 %v8349
        %11747 = vmatprep.subr.bf16.mxu0 %v8352
        %11748 = vmatpush1.bf16.msra.mxu0 %v8351
        %11749 = vmatprep.subr.bf16.mxu0 %v8354
        %11750 = vmatpush1.bf16.msra.mxu0 %v8353
        %11751 = vmatprep.subr.bf16.mxu0 %v8356
        %11752 = vmatpush1.bf16.msra.mxu0 %v8355
        %11753 = vmatprep.subr.bf16.mxu0 %v8358
        %11754 = vmatpush1.bf16.msra.mxu0 %v8357
        %11755 = vmatprep.subr.bf16.mxu0 %v8360
        %11756 = vmatpush1.bf16.msra.mxu0 %v8359
        %11757 = vmatprep.subr.bf16.mxu0 %v8362
        %11758 = vmatpush1.bf16.msra.mxu0 %v8361
        %11759 = vmatprep.subr.bf16.mxu0 %v8364
        %11760 = vmatpush1.bf16.msra.mxu0 %v8363
        %11761 = vmatprep.subr.bf16.mxu0 %v8366
        %11762 = vmatpush1.bf16.msra.mxu0 %v8365
        %11763 = vmatprep.subr.bf16.mxu0 %v8368
        %11764 = vmatpush1.bf16.msra.mxu0 %v8367
        %11765 = vmatprep.subr.bf16.mxu0 %v8370
        %11766 = vmatpush1.bf16.msra.mxu0 %v8369
        %11767 = vmatprep.mubr.bf16.mxu0 %v1020
        %11768 = vmatmul.mubr.bf16.gmra.mrb[0].mxu0 %v1019
        %v11769 = vpop.f32.mrb[0].mxu0
        %v11770 = vadd.f32 %v11729, %v11769
        %v11771 = vpop.f32.mrb[0].mxu0
        %v11772 = vadd.f32 %v11731, %v11771
        %v11773 = vpop.f32.mrb[0].mxu0
        %v11774 = vpop.f32.mrb[0].mxu0
        %11775 = vdwg.mxu0
        %11776 = vmatprep.subr.bf16.mxu0 %v8372
        %11777 = vmatpush1.bf16.msra.mxu0 %v8371
        %11778 = vmatprep.subr.bf16.mxu0 %v8374
        %11779 = vmatpush1.bf16.msra.mxu0 %v8373
        %11780 = vmatprep.subr.bf16.mxu0 %v8376
        %11781 = vmatpush1.bf16.msra.mxu0 %v8375
        %11782 = vmatprep.subr.bf16.mxu0 %v8378
        %11783 = vmatpush1.bf16.msra.mxu0 %v8377
        %11784 = vmatprep.subr.bf16.mxu0 %v8380
        %11785 = vmatpush1.bf16.msra.mxu0 %v8379
        %11786 = vmatprep.subr.bf16.mxu0 %v8382
        %11787 = vmatpush1.bf16.msra.mxu0 %v8381
        %11788 = vmatprep.subr.bf16.mxu0 %v8384
        %11789 = vmatpush1.bf16.msra.mxu0 %v8383
        %11790 = vmatprep.subr.bf16.mxu0 %v8386
        %11791 = vmatpush1.bf16.msra.mxu0 %v8385
        %11792 = vmatprep.subr.bf16.mxu0 %v8388
        %11793 = vmatpush1.bf16.msra.mxu0 %v8387
        %11794 = vmatprep.subr.bf16.mxu0 %v8390
        %11795 = vmatpush1.bf16.msra.mxu0 %v8389
        %11796 = vmatprep.subr.bf16.mxu0 %v8392
        %11797 = vmatpush1.bf16.msra.mxu0 %v8391
        %11798 = vmatprep.subr.bf16.mxu0 %v8394
        %11799 = vmatpush1.bf16.msra.mxu0 %v8393
        %11800 = vmatprep.subr.bf16.mxu0 %v8396
        %11801 = vmatpush1.bf16.msra.mxu0 %v8395
        %11802 = vmatprep.subr.bf16.mxu0 %v8398
        %11803 = vmatpush1.bf16.msra.mxu0 %v8397
        %11804 = vmatprep.subr.bf16.mxu0 %v8400
        %11805 = vmatpush1.bf16.msra.mxu0 %v8399
        %11806 = vmatprep.subr.bf16.mxu0 %v8402
        %11807 = vmatpush1.bf16.msra.mxu0 %v8401
        %11808 = vmatprep.mubr.bf16.mxu0 %v1022
        %11809 = vmatmul.mubr.bf16.gmra.mrb[0].mxu0 %v1021
        %v11810 = vpop.f32.mrb[0].mxu0
        %v11811 = vadd.f32 %v11770, %v11810
        %v11812 = vpop.f32.mrb[0].mxu0
        %v11813 = vadd.f32 %v11772, %v11812
        %v11814 = vpop.f32.mrb[0].mxu0
        %v11815 = vpop.f32.mrb[0].mxu0
        %11816 = vdwg.mxu0
        %11817 = vmatprep.subr.bf16.mxu0 %v8404
        %11818 = vmatpush1.bf16.msra.mxu0 %v8403
        %11819 = vmatprep.subr.bf16.mxu0 %v8406
        %11820 = vmatpush1.bf16.msra.mxu0 %v8405
        %11821 = vmatprep.subr.bf16.mxu0 %v8408
        %11822 = vmatpush1.bf16.msra.mxu0 %v8407
        %11823 = vmatprep.subr.bf16.mxu0 %v8410
        %11824 = vmatpush1.bf16.msra.mxu0 %v8409
        %11825 = vmatprep.subr.bf16.mxu0 %v8412
        %11826 = vmatpush1.bf16.msra.mxu0 %v8411
        %11827 = vmatprep.subr.bf16.mxu0 %v8414
        %11828 = vmatpush1.bf16.msra.mxu0 %v8413
        %11829 = vmatprep.subr.bf16.mxu0 %v8416
        %11830 = vmatpush1.bf16.msra.mxu0 %v8415
        %11831 = vmatprep.subr.bf16.mxu0 %v8418
        %11832 = vmatpush1.bf16.msra.mxu0 %v8417
        %11833 = vmatprep.subr.bf16.mxu0 %v8420
        %11834 = vmatpush1.bf16.msra.mxu0 %v8419
        %11835 = vmatprep.subr.bf16.mxu0 %v8422
        %11836 = vmatpush1.bf16.msra.mxu0 %v8421
        %11837 = vmatprep.subr.bf16.mxu0 %v8424
        %11838 = vmatpush1.bf16.msra.mxu0 %v8423
        %11839 = vmatprep.subr.bf16.mxu0 %v8426
        %11840 = vmatpush1.bf16.msra.mxu0 %v8425
        %11841 = vmatprep.subr.bf16.mxu0 %v8428
        %11842 = vmatpush1.bf16.msra.mxu0 %v8427
        %11843 = vmatprep.subr.bf16.mxu0 %v8430
        %11844 = vmatpush1.bf16.msra.mxu0 %v8429
        %11845 = vmatprep.subr.bf16.mxu0 %v8432
        %11846 = vmatpush1.bf16.msra.mxu0 %v8431
        %11847 = vmatprep.subr.bf16.mxu0 %v8434
        %11848 = vmatpush1.bf16.msra.mxu0 %v8433
        %11849 = vmatprep.mubr.bf16.mxu0 %v1024
        %11850 = vmatmul.mubr.bf16.gmra.mrb[0].mxu0 %v1023
        %v11851 = vpop.f32.mrb[0].mxu0
        %v11852 = vadd.f32 %v11811, %v11851
        %v11853 = vpop.f32.mrb[0].mxu0
        %v11854 = vadd.f32 %v11813, %v11853
        %v11855 = vpop.f32.mrb[0].mxu0
        %v11856 = vpop.f32.mrb[0].mxu0
        %11857 = vdwg.mxu0
        %11858 = vmatprep.subr.bf16.mxu0 %v8436
        %11859 = vmatpush1.bf16.msra.mxu0 %v8435
        %11860 = vmatprep.subr.bf16.mxu0 %v8438
        %11861 = vmatpush1.bf16.msra.mxu0 %v8437
        %11862 = vmatprep.subr.bf16.mxu0 %v8440
        %11863 = vmatpush1.bf16.msra.mxu0 %v8439
        %11864 = vmatprep.subr.bf16.mxu0 %v8442
        %11865 = vmatpush1.bf16.msra.mxu0 %v8441
        %11866 = vmatprep.subr.bf16.mxu0 %v8444
        %11867 = vmatpush1.bf16.msra.mxu0 %v8443
        %11868 = vmatprep.subr.bf16.mxu0 %v8446
        %11869 = vmatpush1.bf16.msra.mxu0 %v8445
        %11870 = vmatprep.subr.bf16.mxu0 %v8448
        %11871 = vmatpush1.bf16.msra.mxu0 %v8447
        %11872 = vmatprep.subr.bf16.mxu0 %v8450
        %11873 = vmatpush1.bf16.msra.mxu0 %v8449
        %11874 = vmatprep.subr.bf16.mxu0 %v8452
        %11875 = vmatpush1.bf16.msra.mxu0 %v8451
        %11876 = vmatprep.subr.bf16.mxu0 %v8454
        %11877 = vmatpush1.bf16.msra.mxu0 %v8453
        %11878 = vmatprep.subr.bf16.mxu0 %v8456
        %11879 = vmatpush1.bf16.msra.mxu0 %v8455
        %11880 = vmatprep.subr.bf16.mxu0 %v8458
        %11881 = vmatpush1.bf16.msra.mxu0 %v8457
        %11882 = vmatprep.subr.bf16.mxu0 %v8460
        %11883 = vmatpush1.bf16.msra.mxu0 %v8459
        %11884 = vmatprep.subr.bf16.mxu0 %v8462
        %11885 = vmatpush1.bf16.msra.mxu0 %v8461
        %11886 = vmatprep.subr.bf16.mxu0 %v8464
        %11887 = vmatpush1.bf16.msra.mxu0 %v8463
        %11888 = vmatprep.subr.bf16.mxu0 %v8466
        %11889 = vmatpush1.bf16.msra.mxu0 %v8465
        %11890 = vmatprep.mubr.bf16.mxu0 %v1026
        %11891 = vmatmul.mubr.bf16.gmra.mrb[0].mxu0 %v1025
        %v11892 = vpop.f32.mrb[0].mxu0
        %v11893 = vadd.f32 %v11852, %v11892
        %v11894 = vpop.f32.mrb[0].mxu0
        %v11895 = vadd.f32 %v11854, %v11894
        %v11896 = vpop.f32.mrb[0].mxu0
        %v11897 = vpop.f32.mrb[0].mxu0
        %11898 = vdwg.mxu0
        %11899 = vmatprep.subr.bf16.mxu0 %v8468
        %11900 = vmatpush1.bf16.msra.mxu0 %v8467
        %11901 = vmatprep.subr.bf16.mxu0 %v8470
        %11902 = vmatpush1.bf16.msra.mxu0 %v8469
        %11903 = vmatprep.subr.bf16.mxu0 %v8472
        %11904 = vmatpush1.bf16.msra.mxu0 %v8471
        %11905 = vmatprep.subr.bf16.mxu0 %v8474
        %11906 = vmatpush1.bf16.msra.mxu0 %v8473
        %11907 = vmatprep.subr.bf16.mxu0 %v8476
        %11908 = vmatpush1.bf16.msra.mxu0 %v8475
        %11909 = vmatprep.subr.bf16.mxu0 %v8478
        %11910 = vmatpush1.bf16.msra.mxu0 %v8477
        %11911 = vmatprep.subr.bf16.mxu0 %v8480
        %11912 = vmatpush1.bf16.msra.mxu0 %v8479
        %11913 = vmatprep.subr.bf16.mxu0 %v8482
        %11914 = vmatpush1.bf16.msra.mxu0 %v8481
        %11915 = vmatprep.subr.bf16.mxu0 %v8484
        %11916 = vmatpush1.bf16.msra.mxu0 %v8483
        %11917 = vmatprep.subr.bf16.mxu0 %v8486
        %11918 = vmatpush1.bf16.msra.mxu0 %v8485
        %11919 = vmatprep.subr.bf16.mxu0 %v8488
        %11920 = vmatpush1.bf16.msra.mxu0 %v8487
        %11921 = vmatprep.subr.bf16.mxu0 %v8490
        %11922 = vmatpush1.bf16.msra.mxu0 %v8489
        %11923 = vmatprep.subr.bf16.mxu0 %v8492
        %11924 = vmatpush1.bf16.msra.mxu0 %v8491
        %11925 = vmatprep.subr.bf16.mxu0 %v8494
        %11926 = vmatpush1.bf16.msra.mxu0 %v8493
        %11927 = vmatprep.subr.bf16.mxu0 %v8496
        %11928 = vmatpush1.bf16.msra.mxu0 %v8495
        %11929 = vmatprep.subr.bf16.mxu0 %v8498
        %11930 = vmatpush1.bf16.msra.mxu0 %v8497
        %11931 = vmatprep.mubr.bf16.mxu0 %v1028
        %11932 = vmatmul.mubr.bf16.gmra.mrb[0].mxu0 %v1027
        %v11933 = vpop.f32.mrb[0].mxu0
        %v11934 = vadd.f32 %v11893, %v11933
        %v11935 = vpop.f32.mrb[0].mxu0
        %v11936 = vadd.f32 %v11895, %v11935
        %v11937 = vpop.f32.mrb[0].mxu0
        %v11938 = vpop.f32.mrb[0].mxu0
        %11939 = vdwg.mxu0
        %11940 = vmatprep.subr.bf16.mxu0 %v8500
        %11941 = vmatpush1.bf16.msra.mxu0 %v8499
        %11942 = vmatprep.subr.bf16.mxu0 %v8502
        %11943 = vmatpush1.bf16.msra.mxu0 %v8501
        %11944 = vmatprep.subr.bf16.mxu0 %v8504
        %11945 = vmatpush1.bf16.msra.mxu0 %v8503
        %11946 = vmatprep.subr.bf16.mxu0 %v8506
        %11947 = vmatpush1.bf16.msra.mxu0 %v8505
        %11948 = vmatprep.subr.bf16.mxu0 %v8508
        %11949 = vmatpush1.bf16.msra.mxu0 %v8507
        %11950 = vmatprep.subr.bf16.mxu0 %v8510
        %11951 = vmatpush1.bf16.msra.mxu0 %v8509
        %11952 = vmatprep.subr.bf16.mxu0 %v8512
        %11953 = vmatpush1.bf16.msra.mxu0 %v8511
        %11954 = vmatprep.subr.bf16.mxu0 %v8514
        %11955 = vmatpush1.bf16.msra.mxu0 %v8513
        %11956 = vmatprep.subr.bf16.mxu0 %v8516
        %11957 = vmatpush1.bf16.msra.mxu0 %v8515
        %11958 = vmatprep.subr.bf16.mxu0 %v8518
        %11959 = vmatpush1.bf16.msra.mxu0 %v8517
        %11960 = vmatprep.subr.bf16.mxu0 %v8520
        %11961 = vmatpush1.bf16.msra.mxu0 %v8519
        %11962 = vmatprep.subr.bf16.mxu0 %v8522
        %11963 = vmatpush1.bf16.msra.mxu0 %v8521
        %11964 = vmatprep.subr.bf16.mxu0 %v8524
        %11965 = vmatpush1.bf16.msra.mxu0 %v8523
        %11966 = vmatprep.subr.bf16.mxu0 %v8526
        %11967 = vmatpush1.bf16.msra.mxu0 %v8525
        %11968 = vmatprep.subr.bf16.mxu0 %v8528
        %11969 = vmatpush1.bf16.msra.mxu0 %v8527
        %11970 = vmatprep.subr.bf16.mxu0 %v8530
        %11971 = vmatpush1.bf16.msra.mxu0 %v8529
        %11972 = vmatprep.mubr.bf16.mxu0 %v1030
        %11973 = vmatmul.mubr.bf16.gmra.mrb[0].mxu0 %v1029
        %v11974 = vpop.f32.mrb[0].mxu0
        %v11975 = vadd.f32 %v11934, %v11974
        %v11976 = vpop.f32.mrb[0].mxu0
        %v11977 = vadd.f32 %v11936, %v11976
        %v11978 = vpop.f32.mrb[0].mxu0
        %v11979 = vpop.f32.mrb[0].mxu0
        %11980 = vdwg.mxu0
        %11981 = vmatprep.subr.bf16.mxu0 %v8532
        %11982 = vmatpush1.bf16.msra.mxu0 %v8531
        %11983 = vmatprep.subr.bf16.mxu0 %v8534
        %11984 = vmatpush1.bf16.msra.mxu0 %v8533
        %11985 = vmatprep.subr.bf16.mxu0 %v8536
        %11986 = vmatpush1.bf16.msra.mxu0 %v8535
        %11987 = vmatprep.subr.bf16.mxu0 %v8538
        %11988 = vmatpush1.bf16.msra.mxu0 %v8537
        %11989 = vmatprep.subr.bf16.mxu0 %v8540
        %11990 = vmatpush1.bf16.msra.mxu0 %v8539
        %11991 = vmatprep.subr.bf16.mxu0 %v8542
        %11992 = vmatpush1.bf16.msra.mxu0 %v8541
        %11993 = vmatprep.subr.bf16.mxu0 %v8544
        %11994 = vmatpush1.bf16.msra.mxu0 %v8543
        %11995 = vmatprep.subr.bf16.mxu0 %v8546
        %11996 = vmatpush1.bf16.msra.mxu0 %v8545
        %11997 = vmatprep.subr.bf16.mxu0 %v8548
        %11998 = vmatpush1.bf16.msra.mxu0 %v8547
        %11999 = vmatprep.subr.bf16.mxu0 %v8550
        %12000 = vmatpush1.bf16.msra.mxu0 %v8549
        %12001 = vmatprep.subr.bf16.mxu0 %v8552
        %12002 = vmatpush1.bf16.msra.mxu0 %v8551
        %12003 = vmatprep.subr.bf16.mxu0 %v8554
        %12004 = vmatpush1.bf16.msra.mxu0 %v8553
        %12005 = vmatprep.subr.bf16.mxu0 %v8556
        %12006 = vmatpush1.bf16.msra.mxu0 %v8555
        %12007 = vmatprep.subr.bf16.mxu0 %v8558
        %12008 = vmatpush1.bf16.msra.mxu0 %v8557
        %12009 = vmatprep.subr.bf16.mxu0 %v8560
        %12010 = vmatpush1.bf16.msra.mxu0 %v8559
        %12011 = vmatprep.subr.bf16.mxu0 %v8562
        %12012 = vmatpush1.bf16.msra.mxu0 %v8561
        %12013 = vmatprep.mubr.bf16.mxu0 %v1032
        %12014 = vmatmul.mubr.bf16.gmra.mrb[0].mxu0 %v1031
        %v12015 = vpop.f32.mrb[0].mxu0
        %v12016 = vadd.f32 %v11975, %v12015
        %v12017 = vpop.f32.mrb[0].mxu0
        %v12018 = vadd.f32 %v11977, %v12017
        %v12019 = vpop.f32.mrb[0].mxu0
        %v12020 = vpop.f32.mrb[0].mxu0
        %12021 = vdwg.mxu0
        %12022 = vmatprep.subr.bf16.mxu0 %v8564
        %12023 = vmatpush1.bf16.msra.mxu0 %v8563
        %12024 = vmatprep.subr.bf16.mxu0 %v8566
        %12025 = vmatpush1.bf16.msra.mxu0 %v8565
        %12026 = vmatprep.subr.bf16.mxu0 %v8568
        %12027 = vmatpush1.bf16.msra.mxu0 %v8567
        %12028 = vmatprep.subr.bf16.mxu0 %v8570
        %12029 = vmatpush1.bf16.msra.mxu0 %v8569
        %12030 = vmatprep.subr.bf16.mxu0 %v8572
        %12031 = vmatpush1.bf16.msra.mxu0 %v8571
        %12032 = vmatprep.subr.bf16.mxu0 %v8574
        %12033 = vmatpush1.bf16.msra.mxu0 %v8573
        %12034 = vmatprep.subr.bf16.mxu0 %v8576
        %12035 = vmatpush1.bf16.msra.mxu0 %v8575
        %12036 = vmatprep.subr.bf16.mxu0 %v8578
        %12037 = vmatpush1.bf16.msra.mxu0 %v8577
        %12038 = vmatprep.subr.bf16.mxu0 %v8580
        %12039 = vmatpush1.bf16.msra.mxu0 %v8579
        %12040 = vmatprep.subr.bf16.mxu0 %v8582
        %12041 = vmatpush1.bf16.msra.mxu0 %v8581
        %12042 = vmatprep.subr.bf16.mxu0 %v8584
        %12043 = vmatpush1.bf16.msra.mxu0 %v8583
        %12044 = vmatprep.subr.bf16.mxu0 %v8586
        %12045 = vmatpush1.bf16.msra.mxu0 %v8585
        %12046 = vmatprep.subr.bf16.mxu0 %v8588
        %12047 = vmatpush1.bf16.msra.mxu0 %v8587
        %12048 = vmatprep.subr.bf16.mxu0 %v8590
        %12049 = vmatpush1.bf16.msra.mxu0 %v8589
        %12050 = vmatprep.subr.bf16.mxu0 %v8592
        %12051 = vmatpush1.bf16.msra.mxu0 %v8591
        %12052 = vmatprep.subr.bf16.mxu0 %v8594
        %12053 = vmatpush1.bf16.msra.mxu0 %v8593
        %12054 = vmatprep.mubr.bf16.mxu0 %v1034
        %12055 = vmatmul.mubr.bf16.gmra.mrb[0].mxu0 %v1033
        %v12056 = vpop.f32.mrb[0].mxu0
        %v12057 = vadd.f32 %v12016, %v12056
        %v12058 = vpop.f32.mrb[0].mxu0
        %v12059 = vadd.f32 %v12018, %v12058
        %v12060 = vpop.f32.mrb[0].mxu0
        %v12061 = vpop.f32.mrb[0].mxu0
        %12062 = vdwg.mxu0
        %12063 = vmatprep.subr.bf16.mxu0 %v8596
        %12064 = vmatpush1.bf16.msra.mxu0 %v8595
        %12065 = vmatprep.subr.bf16.mxu0 %v8598
        %12066 = vmatpush1.bf16.msra.mxu0 %v8597
        %12067 = vmatprep.subr.bf16.mxu0 %v8600
        %12068 = vmatpush1.bf16.msra.mxu0 %v8599
        %12069 = vmatprep.subr.bf16.mxu0 %v8602
        %12070 = vmatpush1.bf16.msra.mxu0 %v8601
        %12071 = vmatprep.subr.bf16.mxu0 %v8604
        %12072 = vmatpush1.bf16.msra.mxu0 %v8603
        %12073 = vmatprep.subr.bf16.mxu0 %v8606
        %12074 = vmatpush1.bf16.msra.mxu0 %v8605
        %12075 = vmatprep.subr.bf16.mxu0 %v8608
        %12076 = vmatpush1.bf16.msra.mxu0 %v8607
        %12077 = vmatprep.subr.bf16.mxu0 %v8610
        %12078 = vmatpush1.bf16.msra.mxu0 %v8609
        %12079 = vmatprep.subr.bf16.mxu0 %v8612
        %12080 = vmatpush1.bf16.msra.mxu0 %v8611
        %12081 = vmatprep.subr.bf16.mxu0 %v8614
        %12082 = vmatpush1.bf16.msra.mxu0 %v8613
        %12083 = vmatprep.subr.bf16.mxu0 %v8616
        %12084 = vmatpush1.bf16.msra.mxu0 %v8615
        %12085 = vmatprep.subr.bf16.mxu0 %v8618
        %12086 = vmatpush1.bf16.msra.mxu0 %v8617
        %12087 = vmatprep.subr.bf16.mxu0 %v8620
        %12088 = vmatpush1.bf16.msra.mxu0 %v8619
        %12089 = vmatprep.subr.bf16.mxu0 %v8622
        %12090 = vmatpush1.bf16.msra.mxu0 %v8621
        %12091 = vmatprep.subr.bf16.mxu0 %v8624
        %12092 = vmatpush1.bf16.msra.mxu0 %v8623
        %12093 = vmatprep.subr.bf16.mxu0 %v8626
        %12094 = vmatpush1.bf16.msra.mxu0 %v8625
        %12095 = vmatprep.mubr.bf16.mxu0 %v1036
        %12096 = vmatmul.mubr.bf16.gmra.mrb[0].mxu0 %v1035
        %v12097 = vpop.f32.mrb[0].mxu0
        %v12098 = vadd.f32 %v12057, %v12097
        %v12099 = vpop.f32.mrb[0].mxu0
        %v12100 = vadd.f32 %v12059, %v12099
        %v12101 = vpop.f32.mrb[0].mxu0
        %v12102 = vpop.f32.mrb[0].mxu0
        %12103 = vdwg.mxu0
        %12104 = vmatprep.subr.bf16.mxu0 %v8628
        %12105 = vmatpush1.bf16.msra.mxu0 %v8627
        %12106 = vmatprep.subr.bf16.mxu0 %v8630
        %12107 = vmatpush1.bf16.msra.mxu0 %v8629
        %12108 = vmatprep.subr.bf16.mxu0 %v8632
        %12109 = vmatpush1.bf16.msra.mxu0 %v8631
        %12110 = vmatprep.subr.bf16.mxu0 %v8634
        %12111 = vmatpush1.bf16.msra.mxu0 %v8633
        %12112 = vmatprep.subr.bf16.mxu0 %v8636
        %12113 = vmatpush1.bf16.msra.mxu0 %v8635
        %12114 = vmatprep.subr.bf16.mxu0 %v8638
        %12115 = vmatpush1.bf16.msra.mxu0 %v8637
        %12116 = vmatprep.subr.bf16.mxu0 %v8640
        %12117 = vmatpush1.bf16.msra.mxu0 %v8639
        %12118 = vmatprep.subr.bf16.mxu0 %v8642
        %12119 = vmatpush1.bf16.msra.mxu0 %v8641
        %12120 = vmatprep.subr.bf16.mxu0 %v8644
        %12121 = vmatpush1.bf16.msra.mxu0 %v8643
        %12122 = vmatprep.subr.bf16.mxu0 %v8646
        %12123 = vmatpush1.bf16.msra.mxu0 %v8645
        %12124 = vmatprep.subr.bf16.mxu0 %v8648
        %12125 = vmatpush1.bf16.msra.mxu0 %v8647
        %12126 = vmatprep.subr.bf16.mxu0 %v8650
        %12127 = vmatpush1.bf16.msra.mxu0 %v8649
        %12128 = vmatprep.subr.bf16.mxu0 %v8652
        %12129 = vmatpush1.bf16.msra.mxu0 %v8651
        %12130 = vmatprep.subr.bf16.mxu0 %v8654
        %12131 = vmatpush1.bf16.msra.mxu0 %v8653
        %12132 = vmatprep.subr.bf16.mxu0 %v8656
        %12133 = vmatpush1.bf16.msra.mxu0 %v8655
        %12134 = vmatprep.subr.bf16.mxu0 %v8658
        %12135 = vmatpush1.bf16.msra.mxu0 %v8657
        %12136 = vmatprep.mubr.bf16.mxu0 %v1038
        %12137 = vmatmul.mubr.bf16.gmra.mrb[0].mxu0 %v1037
        %v12138 = vpop.f32.mrb[0].mxu0
        %v12139 = vadd.f32 %v12098, %v12138
        %v12140 = vpop.f32.mrb[0].mxu0
        %v12141 = vadd.f32 %v12100, %v12140
        %v12142 = vpop.f32.mrb[0].mxu0
        %v12143 = vpop.f32.mrb[0].mxu0
        %12144 = vdwg.mxu0
        %12145 = vmatprep.subr.bf16.mxu0 %v8660
        %12146 = vmatpush1.bf16.msra.mxu0 %v8659
        %12147 = vmatprep.subr.bf16.mxu0 %v8662
        %12148 = vmatpush1.bf16.msra.mxu0 %v8661
        %12149 = vmatprep.subr.bf16.mxu0 %v8664
        %12150 = vmatpush1.bf16.msra.mxu0 %v8663
        %12151 = vmatprep.subr.bf16.mxu0 %v8666
        %12152 = vmatpush1.bf16.msra.mxu0 %v8665
        %12153 = vmatprep.subr.bf16.mxu0 %v8668
        %12154 = vmatpush1.bf16.msra.mxu0 %v8667
        %12155 = vmatprep.subr.bf16.mxu0 %v8670
        %12156 = vmatpush1.bf16.msra.mxu0 %v8669
        %12157 = vmatprep.subr.bf16.mxu0 %v8672
        %12158 = vmatpush1.bf16.msra.mxu0 %v8671
        %12159 = vmatprep.subr.bf16.mxu0 %v8674
        %12160 = vmatpush1.bf16.msra.mxu0 %v8673
        %12161 = vmatprep.subr.bf16.mxu0 %v8676
        %12162 = vmatpush1.bf16.msra.mxu0 %v8675
        %12163 = vmatprep.subr.bf16.mxu0 %v8678
        %12164 = vmatpush1.bf16.msra.mxu0 %v8677
        %12165 = vmatprep.subr.bf16.mxu0 %v8680
        %12166 = vmatpush1.bf16.msra.mxu0 %v8679
        %12167 = vmatprep.subr.bf16.mxu0 %v8682
        %12168 = vmatpush1.bf16.msra.mxu0 %v8681
        %12169 = vmatprep.subr.bf16.mxu0 %v8684
        %12170 = vmatpush1.bf16.msra.mxu0 %v8683
        %12171 = vmatprep.subr.bf16.mxu0 %v8686
        %12172 = vmatpush1.bf16.msra.mxu0 %v8685
        %12173 = vmatprep.subr.bf16.mxu0 %v8688
        %12174 = vmatpush1.bf16.msra.mxu0 %v8687
        %12175 = vmatprep.subr.bf16.mxu0 %v8690
        %12176 = vmatpush1.bf16.msra.mxu0 %v8689
        %12177 = vmatprep.mubr.bf16.mxu0 %v1040
        %12178 = vmatmul.mubr.bf16.gmra.mrb[0].mxu0 %v1039
        %v12179 = vpop.f32.mrb[0].mxu0
        %v12180 = vadd.f32 %v12139, %v12179
        %v12181 = vpop.f32.mrb[0].mxu0
        %v12182 = vadd.f32 %v12141, %v12181
        %v12183 = vpop.f32.mrb[0].mxu0
        %v12184 = vpop.f32.mrb[0].mxu0
        %12185 = vdwg.mxu0
        %12186 = vmatprep.subr.bf16.mxu0 %v8692
        %12187 = vmatpush1.bf16.msra.mxu0 %v8691
        %12188 = vmatprep.subr.bf16.mxu0 %v8694
        %12189 = vmatpush1.bf16.msra.mxu0 %v8693
        %12190 = vmatprep.subr.bf16.mxu0 %v8696
        %12191 = vmatpush1.bf16.msra.mxu0 %v8695
        %12192 = vmatprep.subr.bf16.mxu0 %v8698
        %12193 = vmatpush1.bf16.msra.mxu0 %v8697
        %12194 = vmatprep.subr.bf16.mxu0 %v8700
        %12195 = vmatpush1.bf16.msra.mxu0 %v8699
        %12196 = vmatprep.subr.bf16.mxu0 %v8702
        %12197 = vmatpush1.bf16.msra.mxu0 %v8701
        %12198 = vmatprep.subr.bf16.mxu0 %v8704
        %12199 = vmatpush1.bf16.msra.mxu0 %v8703
        %12200 = vmatprep.subr.bf16.mxu0 %v8706
        %12201 = vmatpush1.bf16.msra.mxu0 %v8705
        %12202 = vmatprep.subr.bf16.mxu0 %v8708
        %12203 = vmatpush1.bf16.msra.mxu0 %v8707
        %12204 = vmatprep.subr.bf16.mxu0 %v8710
        %12205 = vmatpush1.bf16.msra.mxu0 %v8709
        %12206 = vmatprep.subr.bf16.mxu0 %v8712
        %12207 = vmatpush1.bf16.msra.mxu0 %v8711
        %12208 = vmatprep.subr.bf16.mxu0 %v8714
        %12209 = vmatpush1.bf16.msra.mxu0 %v8713
        %12210 = vmatprep.subr.bf16.mxu0 %v8716
        %12211 = vmatpush1.bf16.msra.mxu0 %v8715
        %12212 = vmatprep.subr.bf16.mxu0 %v8718
        %12213 = vmatpush1.bf16.msra.mxu0 %v8717
        %12214 = vmatprep.subr.bf16.mxu0 %v8720
        %12215 = vmatpush1.bf16.msra.mxu0 %v8719
        %12216 = vmatprep.subr.bf16.mxu0 %v8722
        %12217 = vmatpush1.bf16.msra.mxu0 %v8721
        %12218 = vmatprep.mubr.bf16.mxu0 %v1042
        %12219 = vmatmul.mubr.bf16.gmra.mrb[0].mxu0 %v1041
        %v12220 = vpop.f32.mrb[0].mxu0
        %v12221 = vadd.f32 %v12180, %v12220
        %v12222 = vpop.f32.mrb[0].mxu0
        %v12223 = vadd.f32 %v12182, %v12222
        %v12224 = vpop.f32.mrb[0].mxu0
        %v12225 = vpop.f32.mrb[0].mxu0
        %12226 = vdwg.mxu0
        %v12229 = vcombine.low %v12221, %v12223
        %v12231 = vunpack.c.l.s4 1983009808
        %v12232 = vunpack.c.0.s8 %v12231
        %v12233 = vlaneseq
        %v12234 = vshrl.u32 %v12233, 7
        %v12235 = vsub.s32 %v12232, %v12234
        %v12236 = vrot.slane %v12229, %v12235
        %v12238 = vadd.f32 %v394, %v12236
        %12239 = vst [vmem:[#allocation2] sm:$0xf] %v12238
        %p12240 = scmp.eq.s32.totalorder %s27, 17
        // Predicated region
        $region65: #{complex_var_encoder.1} parent=55 // pred_check
          %p12241 = pneg %p12240
        $region66: #{complex_var_encoder.1} parent=55 // pred_check_branch
          %12243 = sbr.rel (%p12241) target = $region68
        $region67: #{complex_var_encoder.1} parent=55 // pred_region
          %v12244 = vld [vmem:[#allocation2] sm:$0xf]
          %v12245 = vld [vmem:[%s2] sm:$0x3]
          %v12247 = vlaneseq
          %v12248 = vshrl.u32 %v12247, 7
          %v12249 = vsub.s32 0, %v12248
          %v12250 = vrot.slane %v12245, %v12249
          %v12251 = vlaneseq
          %v12252 = vshrl.u32 %v12251, 7
          %v12253 = vsub.s32 1, %v12252
          %v12254 = vrot.slane %v12245, %v12253
          %v12255 = vcombine.low %v12250, %v12254
          %v12257 = vunpack.c.l.s4 1983009808
          %v12258 = vunpack.c.0.s8 %v12257
          %v12259 = vlaneseq
          %v12260 = vshrl.u32 %v12259, 7
          %v12261 = vsub.s32 %v12258, %v12260
          %v12262 = vrot.slane %v12255, %v12261
          %v12264 = vadd.f32 %v12244, %v12262
          %v12265 = vmax.f32 %v12264, 0.0
          %v12266 = vld [vmem:[%s3] sm:$0xff]
          %v12267 = vld [vmem:[%s3 + $0x8] sm:$0xff]
          %v12268 = vld [vmem:[%s3 + $0x10] sm:$0xff]
          %v12269 = vld [vmem:[%s3 + $0x18] sm:$0xff]
          %v12270 = vld [vmem:[%s3 + $0x20] sm:$0xff]
          %v12271 = vld [vmem:[%s3 + $0x28] sm:$0xff]
          %v12272 = vld [vmem:[%s3 + $0x30] sm:$0xff]
          %v12273 = vld [vmem:[%s3 + $0x38] sm:$0xff]
          %v12274 = vld [vmem:[%s3 + $0x40] sm:$0xff]
          %v12275 = vld [vmem:[%s3 + $0x48] sm:$0xff]
          %v12276 = vld [vmem:[%s3 + $0x50] sm:$0xff]
          %v12277 = vld [vmem:[%s3 + $0x58] sm:$0xff]
          %v12278 = vld [vmem:[%s3 + $0x60] sm:$0xff]
          %v12279 = vld [vmem:[%s3 + $0x68] sm:$0xff]
          %v12280 = vld [vmem:[%s3 + $0x70] sm:$0xff]
          %v12281 = vld [vmem:[%s3 + $0x78] sm:$0xff]
          %v12282 = vld [vmem:[%s3 + $0x80] sm:$0xff]
          %v12283 = vld [vmem:[%s3 + $0x88] sm:$0xff]
          %v12284 = vld [vmem:[%s3 + $0x90] sm:$0xff]
          %v12285 = vld [vmem:[%s3 + $0x98] sm:$0xff]
          %v12286 = vld [vmem:[%s3 + $0xa0] sm:$0xff]
          %v12287 = vld [vmem:[%s3 + $0xa8] sm:$0xff]
          %v12288 = vld [vmem:[%s3 + $0xb0] sm:$0xff]
          %v12289 = vld [vmem:[%s3 + $0xb8] sm:$0xff]
          %v12290 = vld [vmem:[%s3 + $0xc0] sm:$0xff]
          %v12291 = vld [vmem:[%s3 + $0xc8] sm:$0xff]
          %v12292 = vld [vmem:[%s3 + $0xd0] sm:$0xff]
          %v12293 = vld [vmem:[%s3 + $0xd8] sm:$0xff]
          %v12294 = vld [vmem:[%s3 + $0xe0] sm:$0xff]
          %v12295 = vld [vmem:[%s3 + $0xe8] sm:$0xff]
          %v12296 = vld [vmem:[%s3 + $0xf0] sm:$0xff]
          %v12297 = vld [vmem:[%s3 + $0xf8] sm:$0xff]
          %v12298 = vld [vmem:[%s4] sm:$0x1]
          %v12300 = vlaneseq
          %v12301 = vshrl.u32 %v12300, 7
          %v12302 = vsub.s32 0, %v12301
          %v12303 = vrot.slane %v12298, %v12302
          %v12307 = vunpack.c.l.s4 1983009808
          %v12308 = vunpack.c.0.s8 %v12307
          %v12309 = vlaneseq
          %v12310 = vshrl.u32 %v12309, 7
          %v12311 = vsub.s32 %v12308, %v12310
          %v12312 = vrot.slane %v12265, %v12311
          %v12313 = vcombine.high %v12312, %v12312
          %12316 = vmatprep.subr.mxu0 0.0
          %12317 = vmatpush1.msra.mxu0 %v12266
          %12318 = vmatprep.subr.mxu0 0.0
          %12319 = vmatpush1.msra.mxu0 %v12267
          %12320 = vmatprep.subr.mxu0 0.0
          %12321 = vmatpush1.msra.mxu0 %v12268
          %12322 = vmatprep.subr.mxu0 0.0
          %12323 = vmatpush1.msra.mxu0 %v12269
          %12324 = vmatprep.subr.mxu0 0.0
          %12325 = vmatpush1.msra.mxu0 %v12270
          %12326 = vmatprep.subr.mxu0 0.0
          %12327 = vmatpush1.msra.mxu0 %v12271
          %12328 = vmatprep.subr.mxu0 0.0
          %12329 = vmatpush1.msra.mxu0 %v12272
          %12330 = vmatprep.subr.mxu0 0.0
          %12331 = vmatpush1.msra.mxu0 %v12273
          %12332 = vmatprep.subr.mxu0 0.0
          %12333 = vmatpush1.msra.mxu0 %v12274
          %12334 = vmatprep.subr.mxu0 0.0
          %12335 = vmatpush1.msra.mxu0 %v12275
          %12336 = vmatprep.subr.mxu0 0.0
          %12337 = vmatpush1.msra.mxu0 %v12276
          %12338 = vmatprep.subr.mxu0 0.0
          %12339 = vmatpush1.msra.mxu0 %v12277
          %12340 = vmatprep.subr.mxu0 0.0
          %12341 = vmatpush1.msra.mxu0 %v12278
          %12342 = vmatprep.subr.mxu0 0.0
          %12343 = vmatpush1.msra.mxu0 %v12279
          %12344 = vmatprep.subr.mxu0 0.0
          %12345 = vmatpush1.msra.mxu0 %v12280
          %12346 = vmatprep.subr.mxu0 0.0
          %12347 = vmatpush1.msra.mxu0 %v12281
          %12348 = vmatprep.subr.mxu0 0.0
          %12349 = vmatpush1.msra.mxu0 %v12282
          %12350 = vmatprep.subr.mxu0 0.0
          %12351 = vmatpush1.msra.mxu0 %v12283
          %12352 = vmatprep.subr.mxu0 0.0
          %12353 = vmatpush1.msra.mxu0 %v12284
          %12354 = vmatprep.subr.mxu0 0.0
          %12355 = vmatpush1.msra.mxu0 %v12285
          %12356 = vmatprep.subr.mxu0 0.0
          %12357 = vmatpush1.msra.mxu0 %v12286
          %12358 = vmatprep.subr.mxu0 0.0
          %12359 = vmatpush1.msra.mxu0 %v12287
          %12360 = vmatprep.subr.mxu0 0.0
          %12361 = vmatpush1.msra.mxu0 %v12288
          %12362 = vmatprep.subr.mxu0 0.0
          %12363 = vmatpush1.msra.mxu0 %v12289
          %12364 = vmatprep.subr.mxu0 0.0
          %12365 = vmatpush1.msra.mxu0 %v12290
          %12366 = vmatprep.subr.mxu0 0.0
          %12367 = vmatpush1.msra.mxu0 %v12291
          %12368 = vmatprep.subr.mxu0 0.0
          %12369 = vmatpush1.msra.mxu0 %v12292
          %12370 = vmatprep.subr.mxu0 0.0
          %12371 = vmatpush1.msra.mxu0 %v12293
          %12372 = vmatprep.subr.mxu0 0.0
          %12373 = vmatpush1.msra.mxu0 %v12294
          %12374 = vmatprep.subr.mxu0 0.0
          %12375 = vmatpush1.msra.mxu0 %v12295
          %12376 = vmatprep.subr.mxu0 0.0
          %12377 = vmatpush1.msra.mxu0 %v12296
          %12378 = vmatprep.subr.mxu0 0.0
          %12379 = vmatpush1.msra.mxu0 %v12297
          %12380 = vmatprep.mubr.f32.mxu0 %v12313
          %12381 = vmatmul.mubr.f32.gmra.mrb[0].mxu0 %v12312
          %v12382 = vpop.f32.mrb[0].mxu0
          %v12383 = vadd.f32 %v12303, %v12382
          %v12384 = vpop.f32.mrb[0].mxu0
          %12385 = vdwg.mxu0
          %v12386 = vmax.f32 %v12383, 0.0
          %v12387 = vld [vmem:[%s5] sm:$0xff]
          %v12388 = vld [vmem:[%s5 + $0x8] sm:$0xff]
          %v12389 = vld [vmem:[%s5 + $0x10] sm:$0xff]
          %v12390 = vld [vmem:[%s5 + $0x18] sm:$0xff]
          %v12391 = vld [vmem:[%s5 + $0x20] sm:$0xff]
          %v12392 = vld [vmem:[%s5 + $0x28] sm:$0xff]
          %v12393 = vld [vmem:[%s5 + $0x30] sm:$0xff]
          %v12394 = vld [vmem:[%s5 + $0x38] sm:$0xff]
          %v12395 = vld [vmem:[%s5 + $0x40] sm:$0xff]
          %v12396 = vld [vmem:[%s5 + $0x48] sm:$0xff]
          %v12397 = vld [vmem:[%s5 + $0x50] sm:$0xff]
          %v12398 = vld [vmem:[%s5 + $0x58] sm:$0xff]
          %v12399 = vld [vmem:[%s5 + $0x60] sm:$0xf]
          %v12400 = vld [vmem:[%s6] sm:$0x1]
          %v12402 = vlaneseq
          %v12403 = vshrl.u32 %v12402, 7
          %v12404 = vsub.s32 0, %v12403
          %v12405 = vrot.slane %v12400, %v12404
          %vm12407 = vcmask 818176
          %v12409 = vsel %vm12407, %v12386, 0
          %vm12411 = vcmask 1043456
          %v12413 = vsel %vm12411, %v12399, 0
          %12415 = vmatprep.subr.mxu0 0.0
          %12416 = vmatpush1.msra.mxu0 %v12387
          %12417 = vmatprep.subr.mxu0 0.0
          %12418 = vmatpush1.msra.mxu0 %v12388
          %12419 = vmatprep.subr.mxu0 0.0
          %12420 = vmatpush1.msra.mxu0 %v12389
          %12421 = vmatprep.subr.mxu0 0.0
          %12422 = vmatpush1.msra.mxu0 %v12390
          %12423 = vmatprep.subr.mxu0 0.0
          %12424 = vmatpush1.msra.mxu0 %v12391
          %12425 = vmatprep.subr.mxu0 0.0
          %12426 = vmatpush1.msra.mxu0 %v12392
          %12427 = vmatprep.subr.mxu0 0.0
          %12428 = vmatpush1.msra.mxu0 %v12393
          %12429 = vmatprep.subr.mxu0 0.0
          %12430 = vmatpush1.msra.mxu0 %v12394
          %12431 = vmatprep.subr.mxu0 0.0
          %12432 = vmatpush1.msra.mxu0 %v12395
          %12433 = vmatprep.subr.mxu0 0.0
          %12434 = vmatpush1.msra.mxu0 %v12396
          %12435 = vmatprep.subr.mxu0 0.0
          %12436 = vmatpush1.msra.mxu0 %v12397
          %12437 = vmatprep.subr.mxu0 0.0
          %12438 = vmatpush1.msra.mxu0 %v12398
          %12439 = vmatprep.subr.mxu0 0.0
          %12440 = vmatpush1.msra.mxu0 %v12413
          %12441 = vmatprep.subr.mxu0 0.0
          %12442 = vmatpush1.msra.mxu0 0.0
          %12443 = vmatprep.subr.mxu0 0.0
          %12444 = vmatpush1.msra.mxu0 0.0
          %12445 = vmatprep.subr.mxu0 0.0
          %12446 = vmatpush1.msra.mxu0 0.0
          %12447 = vmatprep.subr.mxu0 0.0
          %12448 = vmatpush1.msra.mxu0 0.0
          %12449 = vmatprep.subr.mxu0 0.0
          %12450 = vmatpush1.msra.mxu0 0.0
          %12451 = vmatprep.subr.mxu0 0.0
          %12452 = vmatpush1.msra.mxu0 0.0
          %12453 = vmatprep.subr.mxu0 0.0
          %12454 = vmatpush1.msra.mxu0 0.0
          %12455 = vmatprep.subr.mxu0 0.0
          %12456 = vmatpush1.msra.mxu0 0.0
          %12457 = vmatprep.subr.mxu0 0.0
          %12458 = vmatpush1.msra.mxu0 0.0
          %12459 = vmatprep.subr.mxu0 0.0
          %12460 = vmatpush1.msra.mxu0 0.0
          %12461 = vmatprep.subr.mxu0 0.0
          %12462 = vmatpush1.msra.mxu0 0.0
          %12463 = vmatprep.subr.mxu0 0.0
          %12464 = vmatpush1.msra.mxu0 0.0
          %12465 = vmatprep.subr.mxu0 0.0
          %12466 = vmatpush1.msra.mxu0 0.0
          %12467 = vmatprep.subr.mxu0 0.0
          %12468 = vmatpush1.msra.mxu0 0.0
          %12469 = vmatprep.subr.mxu0 0.0
          %12470 = vmatpush1.msra.mxu0 0.0
          %12471 = vmatprep.subr.mxu0 0.0
          %12472 = vmatpush1.msra.mxu0 0.0
          %12473 = vmatprep.subr.mxu0 0.0
          %12474 = vmatpush1.msra.mxu0 0.0
          %12475 = vmatprep.subr.mxu0 0.0
          %12476 = vmatpush1.msra.mxu0 0.0
          %12477 = vmatprep.subr.mxu0 0.0
          %12478 = vmatpush1.msra.mxu0 0.0
          %12479 = vmatprep.mubr.f32.mxu0 0.0
          %12480 = vmatmul.mubr.f32.gmra.mrb[0].mxu0 %v12409
          %v12481 = vpop.f32.mrb[0].mxu0
          %v12482 = vadd.f32 %v12405, %v12481
          %v12483 = vpop.f32.mrb[0].mxu0
          %12484 = vdwg.mxu0
          %vm12485 = vcmask 402432
          %12486 = vst.msk [vmem:[#allocation6] sm:$0x3] %vm12485, %v12482
          %v12487 = vld [vmem:[%s7] sm:$0xff]
          %v12488 = vld [vmem:[%s7 + $0x8] sm:$0xff]
          %v12489 = vld [vmem:[%s7 + $0x10] sm:$0xff]
          %v12490 = vld [vmem:[%s7 + $0x18] sm:$0xff]
          %v12491 = vld [vmem:[%s7 + $0x20] sm:$0xff]
          %v12492 = vld [vmem:[%s7 + $0x28] sm:$0xff]
          %v12493 = vld [vmem:[%s7 + $0x30] sm:$0xff]
          %v12494 = vld [vmem:[%s7 + $0x38] sm:$0xff]
          %v12495 = vld [vmem:[%s7 + $0x40] sm:$0xff]
          %v12496 = vld [vmem:[%s7 + $0x48] sm:$0xff]
          %v12497 = vld [vmem:[%s7 + $0x50] sm:$0xff]
          %v12498 = vld [vmem:[%s7 + $0x58] sm:$0xff]
          %v12499 = vld [vmem:[%s7 + $0x60] sm:$0xf]
          %v12500 = vld [vmem:[%s8] sm:$0x1]
          %v12502 = vlaneseq
          %v12503 = vshrl.u32 %v12502, 7
          %v12504 = vsub.s32 0, %v12503
          %v12505 = vrot.slane %v12500, %v12504
          %v12508 = vsel %vm12411, %v12499, 0
          %12510 = vmatprep.subr.mxu0 0.0
          %12511 = vmatpush1.msra.mxu0 %v12487
          %12512 = vmatprep.subr.mxu0 0.0
          %12513 = vmatpush1.msra.mxu0 %v12488
          %12514 = vmatprep.subr.mxu0 0.0
          %12515 = vmatpush1.msra.mxu0 %v12489
          %12516 = vmatprep.subr.mxu0 0.0
          %12517 = vmatpush1.msra.mxu0 %v12490
          %12518 = vmatprep.subr.mxu0 0.0
          %12519 = vmatpush1.msra.mxu0 %v12491
          %12520 = vmatprep.subr.mxu0 0.0
          %12521 = vmatpush1.msra.mxu0 %v12492
          %12522 = vmatprep.subr.mxu0 0.0
          %12523 = vmatpush1.msra.mxu0 %v12493
          %12524 = vmatprep.subr.mxu0 0.0
          %12525 = vmatpush1.msra.mxu0 %v12494
          %12526 = vmatprep.subr.mxu0 0.0
          %12527 = vmatpush1.msra.mxu0 %v12495
          %12528 = vmatprep.subr.mxu0 0.0
          %12529 = vmatpush1.msra.mxu0 %v12496
          %12530 = vmatprep.subr.mxu0 0.0
          %12531 = vmatpush1.msra.mxu0 %v12497
          %12532 = vmatprep.subr.mxu0 0.0
          %12533 = vmatpush1.msra.mxu0 %v12498
          %12534 = vmatprep.subr.mxu0 0.0
          %12535 = vmatpush1.msra.mxu0 %v12508
          %12536 = vmatprep.subr.mxu0 0.0
          %12537 = vmatpush1.msra.mxu0 0.0
          %12538 = vmatprep.subr.mxu0 0.0
          %12539 = vmatpush1.msra.mxu0 0.0
          %12540 = vmatprep.subr.mxu0 0.0
          %12541 = vmatpush1.msra.mxu0 0.0
          %12542 = vmatprep.subr.mxu0 0.0
          %12543 = vmatpush1.msra.mxu0 0.0
          %12544 = vmatprep.subr.mxu0 0.0
          %12545 = vmatpush1.msra.mxu0 0.0
          %12546 = vmatprep.subr.mxu0 0.0
          %12547 = vmatpush1.msra.mxu0 0.0
          %12548 = vmatprep.subr.mxu0 0.0
          %12549 = vmatpush1.msra.mxu0 0.0
          %12550 = vmatprep.subr.mxu0 0.0
          %12551 = vmatpush1.msra.mxu0 0.0
          %12552 = vmatprep.subr.mxu0 0.0
          %12553 = vmatpush1.msra.mxu0 0.0
          %12554 = vmatprep.subr.mxu0 0.0
          %12555 = vmatpush1.msra.mxu0 0.0
          %12556 = vmatprep.subr.mxu0 0.0
          %12557 = vmatpush1.msra.mxu0 0.0
          %12558 = vmatprep.subr.mxu0 0.0
          %12559 = vmatpush1.msra.mxu0 0.0
          %12560 = vmatprep.subr.mxu0 0.0
          %12561 = vmatpush1.msra.mxu0 0.0
          %12562 = vmatprep.subr.mxu0 0.0
          %12563 = vmatpush1.msra.mxu0 0.0
          %12564 = vmatprep.subr.mxu0 0.0
          %12565 = vmatpush1.msra.mxu0 0.0
          %12566 = vmatprep.subr.mxu0 0.0
          %12567 = vmatpush1.msra.mxu0 0.0
          %12568 = vmatprep.subr.mxu0 0.0
          %12569 = vmatpush1.msra.mxu0 0.0
          %12570 = vmatprep.subr.mxu0 0.0
          %12571 = vmatpush1.msra.mxu0 0.0
          %12572 = vmatprep.subr.mxu0 0.0
          %12573 = vmatpush1.msra.mxu0 0.0
          %12574 = vmatprep.mubr.f32.mxu0 0.0
          %12575 = vmatmul.mubr.f32.gmra.mrb[0].mxu0 %v12409
          %v12576 = vpop.f32.mrb[0].mxu0
          %v12577 = vadd.f32 %v12505, %v12576
          %v12578 = vpop.f32.mrb[0].mxu0
          %12579 = vdwg.mxu0
          %v12580 = vmax.f32 %v12577, -20.0
          %v12581 = vmin.f32 %v12580, 2.0
          %12582 = vst.msk [vmem:[#allocation7] sm:$0x3] %vm12485, %v12581
        $region68: #{complex_var_encoder.1} parent=55 // pred_fallthru
          _
        // Predicated region
        $region69: #{complex_var_encoder.1} parent=55 // pred_check
          %p12583 = pneg %p239
        $region70: #{complex_var_encoder.1} parent=55 // pred_check_branch
          %12585 = sbr.rel (%p12583) target = $region72
        $region71: #{complex_var_encoder.1} parent=55 // pred_region
          %s12587 = ssub.s32 32, 32
          %12588 = vsyncadd [#allocation5], %s12587
          %s12590 = sshll.u32 [#allocation6], 4
          %s12591 = int_to_ptr.vmem [resolvable:$true] %s12590
          %12593 = dma.vmem_to_hbm [thread:$0]  %s12591, 32, %s9, [#allocation5]
        $region72: #{complex_var_encoder.1} parent=55 // pred_fallthru
          _
        // Predicated region
        $region73: #{complex_var_encoder.1} parent=55 // pred_check
          %p12594 = pneg %p260
        $region74: #{complex_var_encoder.1} parent=55 // pred_check_branch
          %12596 = sbr.rel (%p12594) target = $region76
        $region75: #{complex_var_encoder.1} parent=55 // pred_region
          %s12598 = ssub.s32 32, 32
          %12599 = vsyncadd [#allocation8], %s12598
          %s12601 = sshll.u32 [#allocation7], 4
          %s12602 = int_to_ptr.vmem [resolvable:$true] %s12601
          %12604 = dma.vmem_to_hbm [thread:$0]  %s12602, 32, %s10, [#allocation8]
        $region76: #{complex_var_encoder.1} parent=55 // pred_fallthru
          _
        // Predicated region
        $region77: #{complex_var_encoder.1} parent=55 // pred_check
          %p12605 = pneg %p239
        $region78: #{complex_var_encoder.1} parent=55 // pred_check_branch
          %12607 = sbr.rel (%p12605) target = $region80
        $region79: #{complex_var_encoder.1} parent=55 // pred_region
          %12608 = dma.done [#allocation5], 32
        $region80: #{complex_var_encoder.1} parent=55 // pred_fallthru
          _
        // Predicated region
        $region81: #{complex_var_encoder.1} parent=55 // pred_check
          %p12609 = pneg %p260
        $region82: #{complex_var_encoder.1} parent=55 // pred_check_branch
          %12611 = sbr.rel (%p12609) target = $region84
        $region83: #{complex_var_encoder.1} parent=55 // pred_region
          %12612 = dma.done [#allocation8], 32
        $region84: #{complex_var_encoder.1} parent=55 // pred_fallthru
          _
      $region56: #{complex_var_encoder.1} parent=5 // pred_fallthru
        _
      %p12613 = scmp.le.s32.totalorder 2, %s22
      // Predicated region
      $region85: #{complex_var_encoder.1} parent=5 // pred_check
        %p12614 = pneg %p12613
      $region86: #{complex_var_encoder.1} parent=5 // pred_check_branch
        %12616 = sbr.rel (%p12614) target = $region88
      $region87: #{complex_var_encoder.1} parent=5 // pred_region
        %s12617 = ssub.s32 %s22, 2
      $region88: #{complex_var_encoder.1} parent=5 // pred_fallthru
        _
    $region6: #{complex_var_encoder.1} parent=1 // loop_footer
      %s26 = sadd.s32 1, %s22
    $region7: #{complex_var_encoder.1} parent=1 // loop_footer_branch
      %21 = sbr.rel target = $region3
    $region8: #{complex_var_encoder.1} parent=1 // loop_exit
      _
    %12618 = vsyncpa [#allocation4], 1
    %s12619 = scalar_lea.sflag [#allocation4], 1
    %12620 = vsyncpa %s12619, 1
    %12621 = vsyncpa [#allocation5], 1
    %s12622 = scalar_lea.sflag [#allocation5], 1
    %12623 = vsyncpa %s12622, 1
    %12624 = vsyncpa [#allocation8], 1

</llo_original>
